<compile_context>
chip_gen: v7x
topology: tpu7x:2x2x1
jax: 0.10.0
libtpu: 0.0.40
codegen_flags: <defaults>
</compile_context>

<pallas_src>
import jax
import jax.numpy as jnp
from jax.experimental import pallas as pl
from jax.experimental.pallas import tpu as pltpu

# Synthetic VGG config (small): two conv blocks, each followed by 'M' (avg pool 2x2)
CONV_CONFIGS = [8, "M", 16, "M"]
N_CLASS = 5           # model.num_classes
IN_CH = 4
SPATIAL = 16
BATCH = 2

_VMEM_SPEC = pl.BlockSpec(memory_space=pltpu.MemorySpace.VMEM)


# ---------------------------------------------------------------------------
# Kernel 1/2: fused conv3x3 (in-kernel im2col) + bias + ReLU + 2x2 avg pool
# ---------------------------------------------------------------------------
def _conv_relu_pool_kernel(x_ref, w_ref, b_ref, out_ref):
    # x_ref: (N, H+2, W+2, Cin) zero-padded NHWC input
    # w_ref: (9*Cin, Co) rows ordered (dy, dx, ci), ci fastest
    # b_ref: (1, Co)
    # out_ref: (N, H//2, W//2, Co)
    N, Hp, Wp, Cin = x_ref.shape
    H, W = Hp - 2, Wp - 2
    Co = w_ref.shape[1]

    # in-kernel im2col: 9 shifted taps of the padded tile, concatenated on lanes
    taps = [x_ref[:, dy:dy + H, dx:dx + W, :] for dy in range(3) for dx in range(3)]
    patches = jnp.concatenate(taps, axis=-1).reshape(N * H * W, 9 * Cin)

    act = jnp.dot(patches, w_ref[...], preferred_element_type=jnp.float32)
    act = jnp.maximum(act + b_ref[...], 0.0)                     # conv + bias + ReLU

    # 2x2 average pooling (rows of `act` are ordered (n, h, w)):
    #  - pair adjacent W positions (second-minor split, minor dim unchanged)
    aw = act.reshape(N, H, W // 2, 2, Co)
    sw = aw[:, :, :, 0, :] + aw[:, :, :, 1, :]                   # (N, H, W//2, Co)
    #  - pair adjacent H rows (pure leading-dim split)
    sh = sw.reshape(N, H // 2, 2, W // 2, Co)
    out_ref[...] = (sh[:, :, 0] + sh[:, :, 1]) * 0.25            # (N, H//2, W//2, Co)


def conv_relu_pool(xpad, wmat, brow):
    N, Hp, Wp, _ = xpad.shape
    Ho, Wo = (Hp - 2) // 2, (Wp - 2) // 2
    Co = wmat.shape[1]
    return pl.pallas_call(
        _conv_relu_pool_kernel,
        out_shape=jax.ShapeDtypeStruct((N, Ho, Wo, Co), jnp.float32),
        in_specs=[_VMEM_SPEC, _VMEM_SPEC, _VMEM_SPEC],
        out_specs=_VMEM_SPEC,
    )(xpad, wmat, brow)


# ---------------------------------------------------------------------------
# Kernel 3: classifier + ReLU + all module heads (block-diagonal) + sigmoid
# ---------------------------------------------------------------------------
def _heads_kernel(f_ref, wc_ref, bc_ref, w1_ref, b1_ref, w2_ref, b2_ref, out_ref):
    # f: (N, n_class*feat), wc: block-diag classifier, w1/w2: block-diag heads
    pred = jnp.dot(f_ref[...], wc_ref[...], preferred_element_type=jnp.float32)
    pred = jnp.maximum(pred + bc_ref[...], 0.0)                  # torch.relu(classifier(x))
    h = jnp.dot(pred, w1_ref[...], preferred_element_type=jnp.float32) + b1_ref[...]
    h = jnp.maximum(h, 0.0)                                      # head ReLU
    o = jnp.dot(h, w2_ref[...], preferred_element_type=jnp.float32) + b2_ref[...]
    out_ref[...] = jax.nn.sigmoid(o)                             # (N, n_class)


def classifier_heads(feats, wc_bd, bc, w1_bd, b1, w2_bd, b2):
    N = feats.shape[0]
    return pl.pallas_call(
        _heads_kernel,
        out_shape=jax.ShapeDtypeStruct((N, N_CLASS), jnp.float32),
        in_specs=[_VMEM_SPEC] * 7,
        out_specs=_VMEM_SPEC,
    )(feats, wc_bd, bc, w1_bd, b1, w2_bd, b2)


# ---------------------------------------------------------------------------
# Parameter setup (deterministic, synthetic)
# ---------------------------------------------------------------------------
def init_params(key):
    params = {}
    keys = iter(jax.random.split(key, 64))

    # Frozen VGG backbone: conv_i = Conv2d(cin, cout, 3, padding=1) + ReLU
    conv_ws, conv_bs, cin = [], [], IN_CH
    for v in CONV_CONFIGS:
        if v == "M":
            continue
        conv_ws.append(0.1 * jax.random.normal(next(keys), (3, 3, cin, v), jnp.float32))
        conv_bs.append(0.1 * jax.random.normal(next(keys), (v,), jnp.float32))
        cin = v
    params["conv_w"], params["conv_b"] = conv_ws, conv_bs

    # Frozen classifier: Linear(flatten_dim, n_class), rows in CHW-flatten order
    spatial = SPATIAL
    for v in CONV_CONFIGS:
        if v == "M":
            spatial //= 2
    feat_dim = cin * spatial * spatial
    params["cls_w"] = 0.1 * jax.random.normal(next(keys), (feat_dim, N_CLASS), jnp.float32)
    params["cls_b"] = 0.1 * jax.random.normal(next(keys), (N_CLASS,), jnp.float32)

    # Per-module learnable channel-mask params ('random' init: randn(v)) and heads
    params["module_conv"], params["module_head"] = [], []
    for _ in range(N_CLASS):
        masks = [jax.random.normal(next(keys), (v,), jnp.float32)
                 for v in CONV_CONFIGS if v != "M"]
        params["module_conv"].append(masks)
        head = dict(
            w1=0.3 * jax.random.normal(next(keys), (N_CLASS, 10), jnp.float32),
            b1=0.1 * jax.random.normal(next(keys), (10,), jnp.float32),
            w2=0.3 * jax.random.normal(next(keys), (10, 1), jnp.float32),
            b2=0.1 * jax.random.normal(next(keys), (1,), jnp.float32),
        )
        params["module_head"].append(head)
    return params


# ---------------------------------------------------------------------------
# GradSplitter.forward
# ---------------------------------------------------------------------------
def grad_splitter_forward(params, x_nchw):
    x0 = jnp.transpose(x_nchw, (0, 2, 3, 1)).astype(jnp.float32)  # NCHW -> NHWC
    N = x0.shape[0]
    C1, C2 = CONV_CONFIGS[0], CONV_CONFIGS[2]

    # MySign.forward: (param > 0).float(), stacked over modules
    mask1 = jnp.stack([(params["module_conv"][m][0] > 0).astype(jnp.float32)
                       for m in range(N_CLASS)])                  # (n_class, C1)
    mask2 = jnp.stack([(params["module_conv"][m][1] > 0).astype(jnp.float32)
                       for m in range(N_CLASS)])                  # (n_class, C2)

    # ---- Stage A: shared frozen conv1 + ReLU + avgpool (computed ONCE).
    # mask1 commutes with the per-channel avg pool, so it is applied later by
    # folding it into conv2's input-channel rows.
    w1 = params["conv_w"][0].reshape(9 * IN_CH, C1)
    b1 = params["conv_b"][0].reshape(1, C1)
    xpad = jnp.pad(x0, ((0, 0), (1, 1), (1, 1), (0, 0)))
    p1 = conv_relu_pool(xpad, w1, b1)                             # (N, 8, 8, C1)

    # ---- Stage B: conv2 for ALL modules in one matmul.
    # Fold mask1 into the (dy,dx,ci) rows and mask2 into the output columns;
    # exact because masks are {0,1} and relu(0) = 0 (== relu(z)*0).
    w2_flat = params["conv_w"][1].reshape(9 * C1, C2)
    b2 = params["conv_b"][1]
    row_mask = jnp.tile(mask1, (1, 9))                            # (n_class, 9*C1), ci fastest
    w2_stack = jnp.concatenate(
        [w2_flat * row_mask[m][:, None] * mask2[m][None, :] for m in range(N_CLASS)],
        axis=1)                                                   # (9*C1, n_class*C2)
    b2_stack = jnp.concatenate([b2 * mask2[m] for m in range(N_CLASS)]).reshape(1, -1)
    p1pad = jnp.pad(p1, ((0, 0), (1, 1), (1, 1), (0, 0)))
    p2 = conv_relu_pool(p1pad, w2_stack, b2_stack)                # (N, 4, 4, n_class*C2)

    # ---- Stage C: classifier + ReLU + heads + sigmoid, all modules at once.
    Hf = Wf = SPATIAL // 4
    feats = (p2.reshape(N, Hf, Wf, N_CLASS, C2)
               .transpose(0, 3, 1, 2, 4)
               .reshape(N, N_CLASS * Hf * Wf * C2))               # (N, n_class*feat_dim)

    # Fold torch.flatten(NCHW) order into classifier rows (CHW -> HWC permutation)
    perm = (jnp.arange(C2)[None, None, :] * (Hf * Wf)
            + jnp.arange(Hf)[:, None, None] * Wf
            + jnp.arange(Wf)[None, :, None]).reshape(-1)          # (feat_dim,)
    cls_w_perm = params["cls_w"][perm]                            # rows now in HWC order
    wc_bd = jax.scipy.linalg.block_diag(*([cls_w_perm] * N_CLASS))          # (n_class*feat, n_class^2)
    bc_cat = jnp.tile(params["cls_b"], N_CLASS).reshape(1, -1)
    w1_bd = jax.scipy.linalg.block_diag(
        *[params["module_head"][m]["w1"] for m in range(N_CLASS)])          # (n_class^2, n_class*10)
    b1_cat = jnp.concatenate(
        [params["module_head"][m]["b1"] for m in range(N_CLASS)]).reshape(1, -1)
    w2_bd = jax.scipy.linalg.block_diag(
        *[params["module_head"][m]["w2"] for m in range(N_CLASS)])          # (n_class*10, n_class)
    b2_cat = jnp.concatenate(
        [params["module_head"][m]["b2"] for m in range(N_CLASS)]).reshape(1, -1)

    return classifier_heads(feats, wc_bd, bc_cat, w1_bd, b1_cat, w2_bd, b2_cat)  # (N, n_class)


# TODO(synk): forward-only; MySign's straight-through (hardtanh) backward would
# need a jax.custom_vjp wrapper if training parity is required.

if __name__ == "__main__":
    key = jax.random.PRNGKey(0)
    pkey, xkey = jax.random.split(key)
    params = init_params(pkey)
    x = jax.random.normal(xkey, (BATCH, IN_CH, SPATIAL, SPATIAL), jnp.float32)

    forward = jax.jit(grad_splitter_forward)
    out = forward(params, x)
    out = jax.block_until_ready(out)
    assert out.shape == (BATCH, N_CLASS), out.shape
    assert bool(jnp.all((out >= 0.0) & (out <= 1.0)))  # sigmoid outputs
    print("KERNEL_OK")
</pallas_src>

<mosaic_0001>
module attributes {stable_mosaic.version = 11 : i64} {
  func.func @_conv_relu_pool_kernel(%arg0: memref<2x18x18x4xf32, #tpu.memory_space<vmem>>, %arg1: memref<36x8xf32, #tpu.memory_space<vmem>>, %arg2: memref<1x8xf32, #tpu.memory_space<vmem>>, %arg3: memref<2x8x8x8xf32, #tpu.memory_space<vmem>>) attributes {dimension_semantics = [], scalar_prefetch = 0 : i64, scratch_operands = 0 : i64, tpu.core_type = #tpu.core_type<tc>} {
    %c0 = arith.constant 0 : index
    %c0_0 = arith.constant 0 : index
    %c0_1 = arith.constant 0 : index
    %c0_2 = arith.constant 0 : index
    %0 = vector.load %arg0[%c0, %c0_0, %c0_1, %c0_2] : memref<2x18x18x4xf32, #tpu.memory_space<vmem>>, vector<2x16x16x4xf32>
    %c0_3 = arith.constant 0 : index
    %c0_4 = arith.constant 0 : index
    %c1 = arith.constant 1 : index
    %c0_5 = arith.constant 0 : index
    %1 = vector.load %arg0[%c0_3, %c0_4, %c1, %c0_5] : memref<2x18x18x4xf32, #tpu.memory_space<vmem>>, vector<2x16x16x4xf32>
    %c0_6 = arith.constant 0 : index
    %c0_7 = arith.constant 0 : index
    %c2 = arith.constant 2 : index
    %c0_8 = arith.constant 0 : index
    %2 = vector.load %arg0[%c0_6, %c0_7, %c2, %c0_8] : memref<2x18x18x4xf32, #tpu.memory_space<vmem>>, vector<2x16x16x4xf32>
    %c0_9 = arith.constant 0 : index
    %c1_10 = arith.constant 1 : index
    %c0_11 = arith.constant 0 : index
    %c0_12 = arith.constant 0 : index
    %3 = vector.load %arg0[%c0_9, %c1_10, %c0_11, %c0_12] : memref<2x18x18x4xf32, #tpu.memory_space<vmem>>, vector<2x16x16x4xf32>
    %c0_13 = arith.constant 0 : index
    %c1_14 = arith.constant 1 : index
    %c1_15 = arith.constant 1 : index
    %c0_16 = arith.constant 0 : index
    %4 = vector.load %arg0[%c0_13, %c1_14, %c1_15, %c0_16] : memref<2x18x18x4xf32, #tpu.memory_space<vmem>>, vector<2x16x16x4xf32>
    %c0_17 = arith.constant 0 : index
    %c1_18 = arith.constant 1 : index
    %c2_19 = arith.constant 2 : index
    %c0_20 = arith.constant 0 : index
    %5 = vector.load %arg0[%c0_17, %c1_18, %c2_19, %c0_20] : memref<2x18x18x4xf32, #tpu.memory_space<vmem>>, vector<2x16x16x4xf32>
    %c0_21 = arith.constant 0 : index
    %c2_22 = arith.constant 2 : index
    %c0_23 = arith.constant 0 : index
    %c0_24 = arith.constant 0 : index
    %6 = vector.load %arg0[%c0_21, %c2_22, %c0_23, %c0_24] : memref<2x18x18x4xf32, #tpu.memory_space<vmem>>, vector<2x16x16x4xf32>
    %c0_25 = arith.constant 0 : index
    %c2_26 = arith.constant 2 : index
    %c1_27 = arith.constant 1 : index
    %c0_28 = arith.constant 0 : index
    %7 = vector.load %arg0[%c0_25, %c2_26, %c1_27, %c0_28] : memref<2x18x18x4xf32, #tpu.memory_space<vmem>>, vector<2x16x16x4xf32>
    %c0_29 = arith.constant 0 : index
    %c2_30 = arith.constant 2 : index
    %c2_31 = arith.constant 2 : index
    %c0_32 = arith.constant 0 : index
    %8 = vector.load %arg0[%c0_29, %c2_30, %c2_31, %c0_32] : memref<2x18x18x4xf32, #tpu.memory_space<vmem>>, vector<2x16x16x4xf32>
    %9 = tpu.concatenate %0, %1, %2, %3, %4, %5, %6, %7, %8 in 3 : vector<2x16x16x4xf32>, vector<2x16x16x4xf32>, vector<2x16x16x4xf32>, vector<2x16x16x4xf32>, vector<2x16x16x4xf32>, vector<2x16x16x4xf32>, vector<2x16x16x4xf32>, vector<2x16x16x4xf32>, vector<2x16x16x4xf32> -> vector<2x16x16x36xf32>
    %10 = vector.shape_cast %9 : vector<2x16x16x36xf32> to vector<512x36xf32>
    %c0_33 = arith.constant 0 : index
    %c0_34 = arith.constant 0 : index
    %11 = vector.load %arg1[%c0_33, %c0_34] : memref<36x8xf32, #tpu.memory_space<vmem>>, vector<36x8xf32>
    %cst = arith.constant dense<0.000000e+00> : vector<512x8xf32>
    %12 = tpu.matmul %10, %11, %cst {dimension_numbers = #tpu.dot_dimension_numbers<[1], [0], [0], [1], [0, 0, 1, 1], [], []>} : vector<512x36xf32>, vector<36x8xf32>, vector<512x8xf32> -> vector<512x8xf32>
    %c0_35 = arith.constant 0 : index
    %c0_36 = arith.constant 0 : index
    %13 = vector.load %arg2[%c0_35, %c0_36] : memref<1x8xf32, #tpu.memory_space<vmem>>, vector<1x8xf32>
    %14 = vector.broadcast %13 : vector<1x8xf32> to vector<512x8xf32>
    %15 = arith.addf %12, %14 : vector<512x8xf32>
    %cst_37 = arith.constant 0.000000e+00 : f32
    %16 = vector.broadcast %cst_37 : f32 to vector<512x8xf32>
    %17 = arith.maximumf %15, %16 : vector<512x8xf32>
    %18 = vector.shape_cast %17 : vector<512x8xf32> to vector<2x16x8x2x8xf32>
    %19 = vector.extract_strided_slice %18 {offsets = [0, 0, 0, 0, 0], sizes = [2, 16, 8, 1, 8], strides = [1, 1, 1, 1, 1]} : vector<2x16x8x2x8xf32> to vector<2x16x8x1x8xf32>
    %20 = vector.shape_cast %19 : vector<2x16x8x1x8xf32> to vector<2x16x8x8xf32>
    %21 = vector.extract_strided_slice %18 {offsets = [0, 0, 0, 1, 0], sizes = [2, 16, 8, 1, 8], strides = [1, 1, 1, 1, 1]} : vector<2x16x8x2x8xf32> to vector<2x16x8x1x8xf32>
    %22 = vector.shape_cast %21 : vector<2x16x8x1x8xf32> to vector<2x16x8x8xf32>
    %23 = arith.addf %20, %22 : vector<2x16x8x8xf32>
    %24 = vector.shape_cast %23 : vector<2x16x8x8xf32> to vector<2x8x2x8x8xf32>
    %25 = vector.extract_strided_slice %24 {offsets = [0, 0, 0, 0, 0], sizes = [2, 8, 1, 8, 8], strides = [1, 1, 1, 1, 1]} : vector<2x8x2x8x8xf32> to vector<2x8x1x8x8xf32>
    %26 = vector.shape_cast %25 : vector<2x8x1x8x8xf32> to vector<2x8x8x8xf32>
    %27 = vector.extract_strided_slice %24 {offsets = [0, 0, 1, 0, 0], sizes = [2, 8, 1, 8, 8], strides = [1, 1, 1, 1, 1]} : vector<2x8x2x8x8xf32> to vector<2x8x1x8x8xf32>
    %28 = vector.shape_cast %27 : vector<2x8x1x8x8xf32> to vector<2x8x8x8xf32>
    %29 = arith.addf %26, %28 : vector<2x8x8x8xf32>
    %cst_38 = arith.constant 2.500000e-01 : f32
    %30 = vector.broadcast %cst_38 : f32 to vector<2x8x8x8xf32>
    %31 = arith.mulf %29, %30 : vector<2x8x8x8xf32>
    %c0_39 = arith.constant 0 : index
    %c0_40 = arith.constant 0 : index
    %c0_41 = arith.constant 0 : index
    %c0_42 = arith.constant 0 : index
    %32 = vector.load %arg3[%c0_39, %c0_40, %c0_41, %c0_42] : memref<2x8x8x8xf32, #tpu.memory_space<vmem>>, vector<2x8x8x8xf32>
    tpu.vector_store %arg3[%c0_39, %c0_40, %c0_41, %c0_42], %31 {strides = array<i32>} : memref<2x8x8x8xf32, #tpu.memory_space<vmem>>, vector<2x8x8x8xf32>,
    return
  }
}

module attributes {stable_mosaic.version = 11 : i64} {
  func.func @_conv_relu_pool_kernel(%arg0: memref<2x10x10x8xf32, #tpu.memory_space<vmem>>, %arg1: memref<72x80xf32, #tpu.memory_space<vmem>>, %arg2: memref<1x80xf32, #tpu.memory_space<vmem>>, %arg3: memref<2x4x4x80xf32, #tpu.memory_space<vmem>>) attributes {dimension_semantics = [], scalar_prefetch = 0 : i64, scratch_operands = 0 : i64, tpu.core_type = #tpu.core_type<tc>} {
    %c0 = arith.constant 0 : index
    %c0_0 = arith.constant 0 : index
    %c0_1 = arith.constant 0 : index
    %c0_2 = arith.constant 0 : index
    %0 = vector.load %arg0[%c0, %c0_0, %c0_1, %c0_2] : memref<2x10x10x8xf32, #tpu.memory_space<vmem>>, vector<2x8x8x8xf32>
    %c0_3 = arith.constant 0 : index
    %c0_4 = arith.constant 0 : index
    %c1 = arith.constant 1 : index
    %c0_5 = arith.constant 0 : index
    %1 = vector.load %arg0[%c0_3, %c0_4, %c1, %c0_5] : memref<2x10x10x8xf32, #tpu.memory_space<vmem>>, vector<2x8x8x8xf32>
    %c0_6 = arith.constant 0 : index
    %c0_7 = arith.constant 0 : index
    %c2 = arith.constant 2 : index
    %c0_8 = arith.constant 0 : index
    %2 = vector.load %arg0[%c0_6, %c0_7, %c2, %c0_8] : memref<2x10x10x8xf32, #tpu.memory_space<vmem>>, vector<2x8x8x8xf32>
    %c0_9 = arith.constant 0 : index
    %c1_10 = arith.constant 1 : index
    %c0_11 = arith.constant 0 : index
    %c0_12 = arith.constant 0 : index
    %3 = vector.load %arg0[%c0_9, %c1_10, %c0_11, %c0_12] : memref<2x10x10x8xf32, #tpu.memory_space<vmem>>, vector<2x8x8x8xf32>
    %c0_13 = arith.constant 0 : index
    %c1_14 = arith.constant 1 : index
    %c1_15 = arith.constant 1 : index
    %c0_16 = arith.constant 0 : index
    %4 = vector.load %arg0[%c0_13, %c1_14, %c1_15, %c0_16] : memref<2x10x10x8xf32, #tpu.memory_space<vmem>>, vector<2x8x8x8xf32>
    %c0_17 = arith.constant 0 : index
    %c1_18 = arith.constant 1 : index
    %c2_19 = arith.constant 2 : index
    %c0_20 = arith.constant 0 : index
    %5 = vector.load %arg0[%c0_17, %c1_18, %c2_19, %c0_20] : memref<2x10x10x8xf32, #tpu.memory_space<vmem>>, vector<2x8x8x8xf32>
    %c0_21 = arith.constant 0 : index
    %c2_22 = arith.constant 2 : index
    %c0_23 = arith.constant 0 : index
    %c0_24 = arith.constant 0 : index
    %6 = vector.load %arg0[%c0_21, %c2_22, %c0_23, %c0_24] : memref<2x10x10x8xf32, #tpu.memory_space<vmem>>, vector<2x8x8x8xf32>
    %c0_25 = arith.constant 0 : index
    %c2_26 = arith.constant 2 : index
    %c1_27 = arith.constant 1 : index
    %c0_28 = arith.constant 0 : index
    %7 = vector.load %arg0[%c0_25, %c2_26, %c1_27, %c0_28] : memref<2x10x10x8xf32, #tpu.memory_space<vmem>>, vector<2x8x8x8xf32>
    %c0_29 = arith.constant 0 : index
    %c2_30 = arith.constant 2 : index
    %c2_31 = arith.constant 2 : index
    %c0_32 = arith.constant 0 : index
    %8 = vector.load %arg0[%c0_29, %c2_30, %c2_31, %c0_32] : memref<2x10x10x8xf32, #tpu.memory_space<vmem>>, vector<2x8x8x8xf32>
    %9 = tpu.concatenate %0, %1, %2, %3, %4, %5, %6, %7, %8 in 3 : vector<2x8x8x8xf32>, vector<2x8x8x8xf32>, vector<2x8x8x8xf32>, vector<2x8x8x8xf32>, vector<2x8x8x8xf32>, vector<2x8x8x8xf32>, vector<2x8x8x8xf32>, vector<2x8x8x8xf32>, vector<2x8x8x8xf32> -> vector<2x8x8x72xf32>
    %10 = vector.shape_cast %9 : vector<2x8x8x72xf32> to vector<128x72xf32>
    %c0_33 = arith.constant 0 : index
    %c0_34 = arith.constant 0 : index
    %11 = vector.load %arg1[%c0_33, %c0_34] : memref<72x80xf32, #tpu.memory_space<vmem>>, vector<72x80xf32>
    %cst = arith.constant dense<0.000000e+00> : vector<128x80xf32>
    %12 = tpu.matmul %10, %11, %cst {dimension_numbers = #tpu.dot_dimension_numbers<[1], [0], [0], [1], [0, 0, 1, 1], [], []>} : vector<128x72xf32>, vector<72x80xf32>, vector<128x80xf32> -> vector<128x80xf32>
    %c0_35 = arith.constant 0 : index
    %c0_36 = arith.constant 0 : index
    %13 = vector.load %arg2[%c0_35, %c0_36] : memref<1x80xf32, #tpu.memory_space<vmem>>, vector<1x80xf32>
    %14 = vector.broadcast %13 : vector<1x80xf32> to vector<128x80xf32>
    %15 = arith.addf %12, %14 : vector<128x80xf32>
    %cst_37 = arith.constant 0.000000e+00 : f32
    %16 = vector.broadcast %cst_37 : f32 to vector<128x80xf32>
    %17 = arith.maximumf %15, %16 : vector<128x80xf32>
    %18 = vector.shape_cast %17 : vector<128x80xf32> to vector<2x8x4x2x80xf32>
    %19 = vector.extract_strided_slice %18 {offsets = [0, 0, 0, 0, 0], sizes = [2, 8, 4, 1, 80], strides = [1, 1, 1, 1, 1]} : vector<2x8x4x2x80xf32> to vector<2x8x4x1x80xf32>
    %20 = vector.shape_cast %19 : vector<2x8x4x1x80xf32> to vector<2x8x4x80xf32>
    %21 = vector.extract_strided_slice %18 {offsets = [0, 0, 0, 1, 0], sizes = [2, 8, 4, 1, 80], strides = [1, 1, 1, 1, 1]} : vector<2x8x4x2x80xf32> to vector<2x8x4x1x80xf32>
    %22 = vector.shape_cast %21 : vector<2x8x4x1x80xf32> to vector<2x8x4x80xf32>
    %23 = arith.addf %20, %22 : vector<2x8x4x80xf32>
    %24 = vector.shape_cast %23 : vector<2x8x4x80xf32> to vector<2x4x2x4x80xf32>
    %25 = vector.extract_strided_slice %24 {offsets = [0, 0, 0, 0, 0], sizes = [2, 4, 1, 4, 80], strides = [1, 1, 1, 1, 1]} : vector<2x4x2x4x80xf32> to vector<2x4x1x4x80xf32>
    %26 = vector.shape_cast %25 : vector<2x4x1x4x80xf32> to vector<2x4x4x80xf32>
    %27 = vector.extract_strided_slice %24 {offsets = [0, 0, 1, 0, 0], sizes = [2, 4, 1, 4, 80], strides = [1, 1, 1, 1, 1]} : vector<2x4x2x4x80xf32> to vector<2x4x1x4x80xf32>
    %28 = vector.shape_cast %27 : vector<2x4x1x4x80xf32> to vector<2x4x4x80xf32>
    %29 = arith.addf %26, %28 : vector<2x4x4x80xf32>
    %cst_38 = arith.constant 2.500000e-01 : f32
    %30 = vector.broadcast %cst_38 : f32 to vector<2x4x4x80xf32>
    %31 = arith.mulf %29, %30 : vector<2x4x4x80xf32>
    %c0_39 = arith.constant 0 : index
    %c0_40 = arith.constant 0 : index
    %c0_41 = arith.constant 0 : index
    %c0_42 = arith.constant 0 : index
    %32 = vector.load %arg3[%c0_39, %c0_40, %c0_41, %c0_42] : memref<2x4x4x80xf32, #tpu.memory_space<vmem>>, vector<2x4x4x80xf32>
    tpu.vector_store %arg3[%c0_39, %c0_40, %c0_41, %c0_42], %31 {strides = array<i32>} : memref<2x4x4x80xf32, #tpu.memory_space<vmem>>, vector<2x4x4x80xf32>,
    return
  }
}

module attributes {stable_mosaic.version = 11 : i64} {
  func.func @_heads_kernel(%arg0: memref<2x1280xf32, #tpu.memory_space<vmem>>, %arg1: memref<1280x25xf32, #tpu.memory_space<vmem>>, %arg2: memref<1x25xf32, #tpu.memory_space<vmem>>, %arg3: memref<25x50xf32, #tpu.memory_space<vmem>>, %arg4: memref<1x50xf32, #tpu.memory_space<vmem>>, %arg5: memref<50x5xf32, #tpu.memory_space<vmem>>, %arg6: memref<1x5xf32, #tpu.memory_space<vmem>>, %arg7: memref<2x5xf32, #tpu.memory_space<vmem>>) attributes {dimension_semantics = [], scalar_prefetch = 0 : i64, scratch_operands = 0 : i64, tpu.core_type = #tpu.core_type<tc>} {
    %c0 = arith.constant 0 : index
    %c0_0 = arith.constant 0 : index
    %0 = vector.load %arg0[%c0, %c0_0] : memref<2x1280xf32, #tpu.memory_space<vmem>>, vector<2x1280xf32>
    %c0_1 = arith.constant 0 : index
    %c0_2 = arith.constant 0 : index
    %1 = vector.load %arg1[%c0_1, %c0_2] : memref<1280x25xf32, #tpu.memory_space<vmem>>, vector<1280x25xf32>
    %cst = arith.constant dense<0.000000e+00> : vector<2x25xf32>
    %2 = tpu.matmul %0, %1, %cst {dimension_numbers = #tpu.dot_dimension_numbers<[1], [0], [0], [1], [0, 0, 1, 1], [], []>} : vector<2x1280xf32>, vector<1280x25xf32>, vector<2x25xf32> -> vector<2x25xf32>
    %c0_3 = arith.constant 0 : index
    %c0_4 = arith.constant 0 : index
    %3 = vector.load %arg2[%c0_3, %c0_4] : memref<1x25xf32, #tpu.memory_space<vmem>>, vector<1x25xf32>
    %4 = vector.broadcast %3 : vector<1x25xf32> to vector<2x25xf32>
    %5 = arith.addf %2, %4 : vector<2x25xf32>
    %cst_5 = arith.constant 0.000000e+00 : f32
    %6 = vector.broadcast %cst_5 : f32 to vector<2x25xf32>
    %7 = arith.maximumf %5, %6 : vector<2x25xf32>
    %c0_6 = arith.constant 0 : index
    %c0_7 = arith.constant 0 : index
    %8 = vector.load %arg3[%c0_6, %c0_7] : memref<25x50xf32, #tpu.memory_space<vmem>>, vector<25x50xf32>
    %cst_8 = arith.constant dense<0.000000e+00> : vector<2x50xf32>
    %9 = tpu.matmul %7, %8, %cst_8 {dimension_numbers = #tpu.dot_dimension_numbers<[1], [0], [0], [1], [0, 0, 1, 1], [], []>} : vector<2x25xf32>, vector<25x50xf32>, vector<2x50xf32> -> vector<2x50xf32>
    %c0_9 = arith.constant 0 : index
    %c0_10 = arith.constant 0 : index
    %10 = vector.load %arg4[%c0_9, %c0_10] : memref<1x50xf32, #tpu.memory_space<vmem>>, vector<1x50xf32>
    %11 = vector.broadcast %10 : vector<1x50xf32> to vector<2x50xf32>
    %12 = arith.addf %9, %11 : vector<2x50xf32>
    %cst_11 = arith.constant 0.000000e+00 : f32
    %13 = vector.broadcast %cst_11 : f32 to vector<2x50xf32>
    %14 = arith.maximumf %12, %13 : vector<2x50xf32>
    %c0_12 = arith.constant 0 : index
    %c0_13 = arith.constant 0 : index
    %15 = vector.load %arg5[%c0_12, %c0_13] : memref<50x5xf32, #tpu.memory_space<vmem>>, vector<50x5xf32>
    %cst_14 = arith.constant dense<0.000000e+00> : vector<2x5xf32>
    %16 = tpu.matmul %14, %15, %cst_14 {dimension_numbers = #tpu.dot_dimension_numbers<[1], [0], [0], [1], [0, 0, 1, 1], [], []>} : vector<2x50xf32>, vector<50x5xf32>, vector<2x5xf32> -> vector<2x5xf32>
    %c0_15 = arith.constant 0 : index
    %c0_16 = arith.constant 0 : index
    %17 = vector.load %arg6[%c0_15, %c0_16] : memref<1x5xf32, #tpu.memory_space<vmem>>, vector<1x5xf32>
    %18 = vector.broadcast %17 : vector<1x5xf32> to vector<2x5xf32>
    %19 = arith.addf %16, %18 : vector<2x5xf32>
    %20 = arith.negf %19 : vector<2x5xf32>
    %21 = math.exp %20 : vector<2x5xf32>
    %cst_17 = arith.constant 1.000000e+00 : f32
    %22 = vector.broadcast %cst_17 : f32 to vector<2x5xf32>
    %23 = arith.addf %22, %21 : vector<2x5xf32>
    %24 = arith.divf %22, %23 : vector<2x5xf32>
    %c0_18 = arith.constant 0 : index
    %c0_19 = arith.constant 0 : index
    %25 = vector.load %arg7[%c0_18, %c0_19] : memref<2x5xf32, #tpu.memory_space<vmem>>, vector<2x5xf32>
    tpu.vector_store %arg7[%c0_18, %c0_19], %24 {strides = array<i32>} : memref<2x5xf32, #tpu.memory_space<vmem>>, vector<2x5xf32>,
    return
  }
}

</mosaic_0001>

<llo_original>
// kernel: tile.14
$region0: #{tile.14}
  %s0 = inlined_call_operand.vmem [shape: f32[5,9,8], index: 0, kind: input, shape index: {}]
  %s1 = inlined_call_operand.vmem [shape: f32[5,72], index: 1, kind: output, shape index: {}]
  %s2 = smov 3
  %v3 = vld [vmem:[%s0] ss:$16 sm:%s2]
  %s4 = smov 12
  %v5 = vld [vmem:[%s0] ss:$16 sm:%s4]
  %vm6 = vcmask 1043458
  %v7 = vsel %vm6, %v5, %v3
  %s8 = scalar_lea.vmem %s0, 60
  %v9 = vld [vmem:[%s8] sm:$0x10]
  %vm10 = vcmask 1044484
  %v11 = vsel %vm10, %v9, %v7
  %vm12 = vcmask 64512
  %13 = vst.msk [vmem:[%s1] sm:$0x1f] %vm12, %v11
  %s14 = scalar_lea.vmem %s0, 8
  %s15 = smov 3
  %v16 = vld [vmem:[%s14] ss:$16 sm:%s15]
  %s17 = scalar_lea.vmem %s0, 8
  %s18 = smov 12
  %v19 = vld [vmem:[%s17] ss:$16 sm:%s18]
  %vm20 = vcmask 1043458
  %v21 = vsel %vm20, %v19, %v16
  %s22 = scalar_lea.vmem %s0, 68
  %v23 = vld [vmem:[%s22] sm:$0x10]
  %vm24 = vcmask 1044484
  %v25 = vsel %vm24, %v23, %v21
  %26 = vrot.lane.b32.xlu0 %v25, 64
  %v27 = vpop.permute.xlu0 %26
  %vm28 = vcmask 589312
  %29 = vst.msk [vmem:[%s1] sm:$0x1f] %vm28, %v27
  %s30 = scalar_lea.vmem %s0, 7
  %s31 = smov 3
  %v32 = vld [vmem:[%s30] ss:$16 sm:%s31]
  %s33 = scalar_lea.vmem %s0, 7
  %s34 = smov 12
  %v35 = vld [vmem:[%s33] ss:$16 sm:%s34]
  %vm36 = vcmask 1043458
  %v37 = vsel %vm36, %v35, %v32
  %s38 = scalar_lea.vmem %s0, 67
  %v39 = vld [vmem:[%s38] sm:$0x10]
  %vm40 = vcmask 1044484
  %v41 = vsel %vm40, %v39, %v37
  %42 = vrot.lane.b32.xlu0 %v41, 56
  %v43 = vpop.permute.xlu0 %42
  %vm44 = vcmask 523712
  %45 = vst.msk [vmem:[%s1] sm:$0x1f] %vm44, %v43
  %s46 = scalar_lea.vmem %s0, 6
  %s47 = smov 3
  %v48 = vld [vmem:[%s46] ss:$16 sm:%s47]
  %s49 = scalar_lea.vmem %s0, 6
  %s50 = smov 12
  %v51 = vld [vmem:[%s49] ss:$16 sm:%s50]
  %vm52 = vcmask 1043458
  %v53 = vsel %vm52, %v51, %v48
  %s54 = scalar_lea.vmem %s0, 66
  %v55 = vld [vmem:[%s54] sm:$0x10]
  %vm56 = vcmask 1044484
  %v57 = vsel %vm56, %v55, %v53
  %58 = vrot.lane.b32.xlu0 %v57, 48
  %v59 = vpop.permute.xlu0 %58
  %vm60 = vcmask 458112
  %61 = vst.msk [vmem:[%s1] sm:$0x1f] %vm60, %v59
  %s62 = scalar_lea.vmem %s0, 5
  %s63 = smov 3
  %v64 = vld [vmem:[%s62] ss:$16 sm:%s63]
  %s65 = scalar_lea.vmem %s0, 5
  %s66 = smov 12
  %v67 = vld [vmem:[%s65] ss:$16 sm:%s66]
  %vm68 = vcmask 1043458
  %v69 = vsel %vm68, %v67, %v64
  %s70 = scalar_lea.vmem %s0, 65
  %v71 = vld [vmem:[%s70] sm:$0x10]
  %vm72 = vcmask 1044484
  %v73 = vsel %vm72, %v71, %v69
  %74 = vrot.lane.b32.xlu0 %v73, 40
  %v75 = vpop.permute.xlu0 %74
  %vm76 = vcmask 392512
  %77 = vst.msk [vmem:[%s1] sm:$0x1f] %vm76, %v75
  %s78 = scalar_lea.vmem %s0, 4
  %s79 = smov 3
  %v80 = vld [vmem:[%s78] ss:$16 sm:%s79]
  %s81 = scalar_lea.vmem %s0, 4
  %s82 = smov 12
  %v83 = vld [vmem:[%s81] ss:$16 sm:%s82]
  %vm84 = vcmask 1043458
  %v85 = vsel %vm84, %v83, %v80
  %s86 = scalar_lea.vmem %s0, 64
  %v87 = vld [vmem:[%s86] sm:$0x10]
  %vm88 = vcmask 1044484
  %v89 = vsel %vm88, %v87, %v85
  %90 = vrot.lane.b32.xlu0 %v89, 32
  %v91 = vpop.permute.xlu0 %90
  %vm92 = vcmask 326912
  %93 = vst.msk [vmem:[%s1] sm:$0x1f] %vm92, %v91
  %s94 = scalar_lea.vmem %s0, 3
  %s95 = smov 3
  %v96 = vld [vmem:[%s94] ss:$16 sm:%s95]
  %s97 = scalar_lea.vmem %s0, 3
  %s98 = smov 12
  %v99 = vld [vmem:[%s97] ss:$16 sm:%s98]
  %vm100 = vcmask 1043458
  %v101 = vsel %vm100, %v99, %v96
  %s102 = scalar_lea.vmem %s0, 63
  %v103 = vld [vmem:[%s102] sm:$0x10]
  %vm104 = vcmask 1044484
  %v105 = vsel %vm104, %v103, %v101
  %106 = vrot.lane.b32.xlu0 %v105, 24
  %v107 = vpop.permute.xlu0 %106
  %vm108 = vcmask 261312
  %109 = vst.msk [vmem:[%s1] sm:$0x1f] %vm108, %v107
  %s110 = scalar_lea.vmem %s0, 2
  %s111 = smov 3
  %v112 = vld [vmem:[%s110] ss:$16 sm:%s111]
  %s113 = scalar_lea.vmem %s0, 2
  %s114 = smov 12
  %v115 = vld [vmem:[%s113] ss:$16 sm:%s114]
  %vm116 = vcmask 1043458
  %v117 = vsel %vm116, %v115, %v112
  %s118 = scalar_lea.vmem %s0, 62
  %v119 = vld [vmem:[%s118] sm:$0x10]
  %vm120 = vcmask 1044484
  %v121 = vsel %vm120, %v119, %v117
  %122 = vrot.lane.b32.xlu0 %v121, 16
  %v123 = vpop.permute.xlu0 %122
  %vm124 = vcmask 195712
  %125 = vst.msk [vmem:[%s1] sm:$0x1f] %vm124, %v123
  %s126 = scalar_lea.vmem %s0, 1
  %s127 = smov 3
  %v128 = vld [vmem:[%s126] ss:$16 sm:%s127]
  %s129 = scalar_lea.vmem %s0, 1
  %s130 = smov 12
  %v131 = vld [vmem:[%s129] ss:$16 sm:%s130]
  %vm132 = vcmask 1043458
  %v133 = vsel %vm132, %v131, %v128
  %s134 = scalar_lea.vmem %s0, 61
  %v135 = vld [vmem:[%s134] sm:$0x10]
  %vm136 = vcmask 1044484
  %v137 = vsel %vm136, %v135, %v133
  %138 = vrot.lane.b32.xlu0 %v137, 8
  %v139 = vpop.permute.xlu0 %138
  %vm140 = vcmask 130112
  %141 = vst.msk [vmem:[%s1] sm:$0x1f] %vm140, %v139

// kernel: mul.48
$region0: #{mul.48}
  %s0 = inlined_call_operand.vmem [shape: f32[9,8], index: 0, kind: input, shape index: {}]
  %s1 = inlined_call_operand.vmem [shape: f32[72], index: 1, kind: output, shape index: {}]
  $region1: #{mul.48} parent=0
    #allocation0 [shape = 'u8[4096]{0}', space=vmem, size = 0x1000, scoped, tag = 'scoped mem for output reshape']
    %v2 = vld [vmem:[%s0] sm:$0x1]
    %vm3 = vcmask 64512
    %4 = vst.msk [vmem:[#allocation0] sm:$0x1] %vm3, %v2
    %s5 = scalar_lea.vmem %s0, 8
    %v6 = vld [vmem:[%s5] sm:$0x1]
    %7 = vrot.lane.b32.xlu0 %v6, 64
    %v8 = vpop.permute.xlu0 %7
    %vm9 = vcmask 589312
    %10 = vst.msk [vmem:[#allocation0] sm:$0x1] %vm9, %v8
    %s11 = scalar_lea.vmem %s0, 7
    %v12 = vld [vmem:[%s11] sm:$0x1]
    %13 = vrot.lane.b32.xlu0 %v12, 56
    %v14 = vpop.permute.xlu0 %13
    %vm15 = vcmask 523712
    %16 = vst.msk [vmem:[#allocation0] sm:$0x1] %vm15, %v14
    %s17 = scalar_lea.vmem %s0, 6
    %v18 = vld [vmem:[%s17] sm:$0x1]
    %19 = vrot.lane.b32.xlu0 %v18, 48
    %v20 = vpop.permute.xlu0 %19
    %vm21 = vcmask 458112
    %22 = vst.msk [vmem:[#allocation0] sm:$0x1] %vm21, %v20
    %s23 = scalar_lea.vmem %s0, 5
    %v24 = vld [vmem:[%s23] sm:$0x1]
    %25 = vrot.lane.b32.xlu0 %v24, 40
    %v26 = vpop.permute.xlu0 %25
    %vm27 = vcmask 392512
    %28 = vst.msk [vmem:[#allocation0] sm:$0x1] %vm27, %v26
    %s29 = scalar_lea.vmem %s0, 4
    %v30 = vld [vmem:[%s29] sm:$0x1]
    %31 = vrot.lane.b32.xlu0 %v30, 32
    %v32 = vpop.permute.xlu0 %31
    %vm33 = vcmask 326912
    %34 = vst.msk [vmem:[#allocation0] sm:$0x1] %vm33, %v32
    %s35 = scalar_lea.vmem %s0, 3
    %v36 = vld [vmem:[%s35] sm:$0x1]
    %37 = vrot.lane.b32.xlu0 %v36, 24
    %v38 = vpop.permute.xlu0 %37
    %vm39 = vcmask 261312
    %40 = vst.msk [vmem:[#allocation0] sm:$0x1] %vm39, %v38
    %s41 = scalar_lea.vmem %s0, 2
    %v42 = vld [vmem:[%s41] sm:$0x1]
    %43 = vrot.lane.b32.xlu0 %v42, 16
    %v44 = vpop.permute.xlu0 %43
    %vm45 = vcmask 195712
    %46 = vst.msk [vmem:[#allocation0] sm:$0x1] %vm45, %v44
    %s47 = scalar_lea.vmem %s0, 1
    %v48 = vld [vmem:[%s47] sm:$0x1]
    %49 = vrot.lane.b32.xlu0 %v48, 8
    %v50 = vpop.permute.xlu0 %49
    %vm51 = vcmask 130112
    %52 = vst.msk [vmem:[#allocation0] sm:$0x1] %vm51, %v50
    %s54 = sshllo.u32 0, 1
    %v56 = vld [vmem:[#allocation0] sm:%s54]
    %s57 = sshllo.u32 0, 1
    %58 = vst [vmem:[%s1] sm:%s57] %v56

// kernel: grad_splitter_forward.4
$region0: #{grad_splitter_forward.4}
  #allocation0 [shape = 'u32[]', space=smem, size = 0x4, offset = 0x4, fixed_abs, tag = 'smem constant byte address 0x4 - core index']
  #allocation1 [shape = 'u32[144,128]{1,0:T(1,128)}', space=vmem, size = 0x12000, scoped, tag = 'internal scratch']
  %s0 = inlined_call_operand.vmem [shape: f32[2,10,10,8], index: 0, kind: input, shape index: {}]
  %s1 = inlined_call_operand.vmem [shape: f32[72,80], index: 1, kind: input, shape index: {}]
  %s2 = inlined_call_operand.vmem [shape: f32[1,80], index: 2, kind: input, shape index: {}]
  %s3 = inlined_call_operand.vmem [shape: f32[2,4,4,80], index: 3, kind: output, shape index: {}]
  %s4 = sld [smem:[#allocation0]]
  $region22: #{grad_splitter_forward.4} parent=0
    _
  %s6 = ssub.s32 1, %s4
  %s7 = scalar_select 0, %s6, %s4
  // Predicated region
  $region2: #{grad_splitter_forward.4} parent=0 // pred_check
    _
  $region3: #{grad_splitter_forward.4} parent=0 // pred_check_branch
    %9 = sbr.rel (0) target = $region5
  $region4: #{grad_splitter_forward.4} parent=0 // pred_region
    _
  $region5: #{grad_splitter_forward.4} parent=0 // pred_fallthru
    _
  // Predicated region
  $region6: #{grad_splitter_forward.4} parent=0 // pred_check
    _
  $region7: #{grad_splitter_forward.4} parent=0 // pred_check_branch
    %11 = sbr.rel (0) target = $region9
  $region8: #{grad_splitter_forward.4} parent=0 // pred_region
    _
  $region9: #{grad_splitter_forward.4} parent=0 // pred_fallthru
    _
  // Predicated region
  $region10: #{grad_splitter_forward.4} parent=0 // pred_check
    _
  $region11: #{grad_splitter_forward.4} parent=0 // pred_check_branch
    %13 = sbr.rel (0) target = $region13
  $region12: #{grad_splitter_forward.4} parent=0 // pred_region
    _
  $region13: #{grad_splitter_forward.4} parent=0 // pred_fallthru
    _
  %v14 = vld [vmem:[%s0] sm:$0xff]
  %v15 = vld [vmem:[%s0 + $0x10] sm:$0xff]
  %v16 = vld [vmem:[%s0 + $0x20] sm:$0xff]
  %v17 = vld [vmem:[%s0 + $0x30] sm:$0xff]
  %v18 = vld [vmem:[%s0 + $0x40] sm:$0xff]
  %v19 = vld [vmem:[%s0 + $0x50] sm:$0xff]
  %v20 = vld [vmem:[%s0 + $0x60] sm:$0xff]
  %v21 = vld [vmem:[%s0 + $0x70] sm:$0xff]
  %v22 = vld [vmem:[%s0 + $0xa0] sm:$0xff]
  %v23 = vld [vmem:[%s0 + $0xb0] sm:$0xff]
  %v24 = vld [vmem:[%s0 + $0xc0] sm:$0xff]
  %v25 = vld [vmem:[%s0 + $0xd0] sm:$0xff]
  %v26 = vld [vmem:[%s0 + $0xe0] sm:$0xff]
  %v27 = vld [vmem:[%s0 + $0xf0] sm:$0xff]
  %v28 = vld [vmem:[%s0 + $0x100] sm:$0xff]
  %v29 = vld [vmem:[%s0 + $0x110] sm:$0xff]
  %v30 = vld [vmem:[%s0 + $0x1] sm:$0xff]
  %v31 = vld [vmem:[%s0 + $0x11] sm:$0xff]
  %v32 = vld [vmem:[%s0 + $0x21] sm:$0xff]
  %v33 = vld [vmem:[%s0 + $0x31] sm:$0xff]
  %v34 = vld [vmem:[%s0 + $0x41] sm:$0xff]
  %v35 = vld [vmem:[%s0 + $0x51] sm:$0xff]
  %v36 = vld [vmem:[%s0 + $0x61] sm:$0xff]
  %v37 = vld [vmem:[%s0 + $0x71] sm:$0xff]
  %v38 = vld [vmem:[%s0 + $0xa1] sm:$0xff]
  %v39 = vld [vmem:[%s0 + $0xb1] sm:$0xff]
  %v40 = vld [vmem:[%s0 + $0xc1] sm:$0xff]
  %v41 = vld [vmem:[%s0 + $0xd1] sm:$0xff]
  %v42 = vld [vmem:[%s0 + $0xe1] sm:$0xff]
  %v43 = vld [vmem:[%s0 + $0xf1] sm:$0xff]
  %v44 = vld [vmem:[%s0 + $0x101] sm:$0xff]
  %v45 = vld [vmem:[%s0 + $0x111] sm:$0xff]
  %v46 = vld [vmem:[%s0 + $0x2] sm:$0xff]
  %v47 = vld [vmem:[%s0 + $0x12] sm:$0xff]
  %v48 = vld [vmem:[%s0 + $0x22] sm:$0xff]
  %v49 = vld [vmem:[%s0 + $0x32] sm:$0xff]
  %v50 = vld [vmem:[%s0 + $0x42] sm:$0xff]
  %v51 = vld [vmem:[%s0 + $0x52] sm:$0xff]
  %v52 = vld [vmem:[%s0 + $0x62] sm:$0xff]
  %v53 = vld [vmem:[%s0 + $0x72] sm:$0xff]
  %v54 = vld [vmem:[%s0 + $0xa2] sm:$0xff]
  %v55 = vld [vmem:[%s0 + $0xb2] sm:$0xff]
  %v56 = vld [vmem:[%s0 + $0xc2] sm:$0xff]
  %v57 = vld [vmem:[%s0 + $0xd2] sm:$0xff]
  %v58 = vld [vmem:[%s0 + $0xe2] sm:$0xff]
  %v59 = vld [vmem:[%s0 + $0xf2] sm:$0xff]
  %v60 = vld [vmem:[%s0 + $0x102] sm:$0xff]
  %v61 = vld [vmem:[%s0 + $0x112] sm:$0xff]
  %s62 = scalar_lea.vmem %s0, 16
  %v63 = vld [vmem:[%s62] sm:$0xff]
  %v64 = vld [vmem:[%s62 + $0x10] sm:$0xff]
  %v65 = vld [vmem:[%s62 + $0x20] sm:$0xff]
  %v66 = vld [vmem:[%s62 + $0x30] sm:$0xff]
  %v67 = vld [vmem:[%s62 + $0x40] sm:$0xff]
  %v68 = vld [vmem:[%s62 + $0x50] sm:$0xff]
  %v69 = vld [vmem:[%s62 + $0x60] sm:$0xff]
  %v70 = vld [vmem:[%s62 + $0x70] sm:$0xff]
  %v71 = vld [vmem:[%s62 + $0xa0] sm:$0xff]
  %v72 = vld [vmem:[%s62 + $0xb0] sm:$0xff]
  %v73 = vld [vmem:[%s62 + $0xc0] sm:$0xff]
  %v74 = vld [vmem:[%s62 + $0xd0] sm:$0xff]
  %v75 = vld [vmem:[%s62 + $0xe0] sm:$0xff]
  %v76 = vld [vmem:[%s62 + $0xf0] sm:$0xff]
  %v77 = vld [vmem:[%s62 + $0x100] sm:$0xff]
  %v78 = vld [vmem:[%s62 + $0x110] sm:$0xff]
  %v79 = vld [vmem:[%s62 + $0x1] sm:$0xff]
  %v80 = vld [vmem:[%s62 + $0x11] sm:$0xff]
  %v81 = vld [vmem:[%s62 + $0x21] sm:$0xff]
  %v82 = vld [vmem:[%s62 + $0x31] sm:$0xff]
  %v83 = vld [vmem:[%s62 + $0x41] sm:$0xff]
  %v84 = vld [vmem:[%s62 + $0x51] sm:$0xff]
  %v85 = vld [vmem:[%s62 + $0x61] sm:$0xff]
  %v86 = vld [vmem:[%s62 + $0x71] sm:$0xff]
  %v87 = vld [vmem:[%s62 + $0xa1] sm:$0xff]
  %v88 = vld [vmem:[%s62 + $0xb1] sm:$0xff]
  %v89 = vld [vmem:[%s62 + $0xc1] sm:$0xff]
  %v90 = vld [vmem:[%s62 + $0xd1] sm:$0xff]
  %v91 = vld [vmem:[%s62 + $0xe1] sm:$0xff]
  %v92 = vld [vmem:[%s62 + $0xf1] sm:$0xff]
  %v93 = vld [vmem:[%s62 + $0x101] sm:$0xff]
  %v94 = vld [vmem:[%s62 + $0x111] sm:$0xff]
  %v95 = vld [vmem:[%s62 + $0x2] sm:$0xff]
  %v96 = vld [vmem:[%s62 + $0x12] sm:$0xff]
  %v97 = vld [vmem:[%s62 + $0x22] sm:$0xff]
  %v98 = vld [vmem:[%s62 + $0x32] sm:$0xff]
  %v99 = vld [vmem:[%s62 + $0x42] sm:$0xff]
  %v100 = vld [vmem:[%s62 + $0x52] sm:$0xff]
  %v101 = vld [vmem:[%s62 + $0x62] sm:$0xff]
  %v102 = vld [vmem:[%s62 + $0x72] sm:$0xff]
  %v103 = vld [vmem:[%s62 + $0xa2] sm:$0xff]
  %v104 = vld [vmem:[%s62 + $0xb2] sm:$0xff]
  %v105 = vld [vmem:[%s62 + $0xc2] sm:$0xff]
  %v106 = vld [vmem:[%s62 + $0xd2] sm:$0xff]
  %v107 = vld [vmem:[%s62 + $0xe2] sm:$0xff]
  %v108 = vld [vmem:[%s62 + $0xf2] sm:$0xff]
  %v109 = vld [vmem:[%s62 + $0x102] sm:$0xff]
  %v110 = vld [vmem:[%s62 + $0x112] sm:$0xff]
  %s111 = scalar_lea.vmem %s0, 32
  %v112 = vld [vmem:[%s111] sm:$0xff]
  %v113 = vld [vmem:[%s111 + $0x10] sm:$0xff]
  %v114 = vld [vmem:[%s111 + $0x20] sm:$0xff]
  %v115 = vld [vmem:[%s111 + $0x30] sm:$0xff]
  %v116 = vld [vmem:[%s111 + $0x40] sm:$0xff]
  %v117 = vld [vmem:[%s111 + $0x50] sm:$0xff]
  %v118 = vld [vmem:[%s111 + $0x60] sm:$0xff]
  %v119 = vld [vmem:[%s111 + $0x70] sm:$0xff]
  %v120 = vld [vmem:[%s111 + $0xa0] sm:$0xff]
  %v121 = vld [vmem:[%s111 + $0xb0] sm:$0xff]
  %v122 = vld [vmem:[%s111 + $0xc0] sm:$0xff]
  %v123 = vld [vmem:[%s111 + $0xd0] sm:$0xff]
  %v124 = vld [vmem:[%s111 + $0xe0] sm:$0xff]
  %v125 = vld [vmem:[%s111 + $0xf0] sm:$0xff]
  %v126 = vld [vmem:[%s111 + $0x100] sm:$0xff]
  %v127 = vld [vmem:[%s111 + $0x110] sm:$0xff]
  %v128 = vld [vmem:[%s111 + $0x1] sm:$0xff]
  %v129 = vld [vmem:[%s111 + $0x11] sm:$0xff]
  %v130 = vld [vmem:[%s111 + $0x21] sm:$0xff]
  %v131 = vld [vmem:[%s111 + $0x31] sm:$0xff]
  %v132 = vld [vmem:[%s111 + $0x41] sm:$0xff]
  %v133 = vld [vmem:[%s111 + $0x51] sm:$0xff]
  %v134 = vld [vmem:[%s111 + $0x61] sm:$0xff]
  %v135 = vld [vmem:[%s111 + $0x71] sm:$0xff]
  %v136 = vld [vmem:[%s111 + $0xa1] sm:$0xff]
  %v137 = vld [vmem:[%s111 + $0xb1] sm:$0xff]
  %v138 = vld [vmem:[%s111 + $0xc1] sm:$0xff]
  %v139 = vld [vmem:[%s111 + $0xd1] sm:$0xff]
  %v140 = vld [vmem:[%s111 + $0xe1] sm:$0xff]
  %v141 = vld [vmem:[%s111 + $0xf1] sm:$0xff]
  %v142 = vld [vmem:[%s111 + $0x101] sm:$0xff]
  %v143 = vld [vmem:[%s111 + $0x111] sm:$0xff]
  %v144 = vld [vmem:[%s111 + $0x2] sm:$0xff]
  %v145 = vld [vmem:[%s111 + $0x12] sm:$0xff]
  %v146 = vld [vmem:[%s111 + $0x22] sm:$0xff]
  %v147 = vld [vmem:[%s111 + $0x32] sm:$0xff]
  %v148 = vld [vmem:[%s111 + $0x42] sm:$0xff]
  %v149 = vld [vmem:[%s111 + $0x52] sm:$0xff]
  %v150 = vld [vmem:[%s111 + $0x62] sm:$0xff]
  %v151 = vld [vmem:[%s111 + $0x72] sm:$0xff]
  %v152 = vld [vmem:[%s111 + $0xa2] sm:$0xff]
  %v153 = vld [vmem:[%s111 + $0xb2] sm:$0xff]
  %v154 = vld [vmem:[%s111 + $0xc2] sm:$0xff]
  %v155 = vld [vmem:[%s111 + $0xd2] sm:$0xff]
  %v156 = vld [vmem:[%s111 + $0xe2] sm:$0xff]
  %v157 = vld [vmem:[%s111 + $0xf2] sm:$0xff]
  %v158 = vld [vmem:[%s111 + $0x102] sm:$0xff]
  %v159 = vld [vmem:[%s111 + $0x112] sm:$0xff]
  %176 = vrot.lane.b32.xlu0 %v30, 8
  %v177 = vpop.permute.xlu0 %176
  %178 = vrot.lane.b32.xlu0 %v31, 8
  %v179 = vpop.permute.xlu0 %178
  %180 = vrot.lane.b32.xlu0 %v32, 8
  %v181 = vpop.permute.xlu0 %180
  %182 = vrot.lane.b32.xlu0 %v33, 8
  %v183 = vpop.permute.xlu0 %182
  %184 = vrot.lane.b32.xlu0 %v34, 8
  %v185 = vpop.permute.xlu0 %184
  %186 = vrot.lane.b32.xlu0 %v35, 8
  %v187 = vpop.permute.xlu0 %186
  %188 = vrot.lane.b32.xlu0 %v36, 8
  %v189 = vpop.permute.xlu0 %188
  %190 = vrot.lane.b32.xlu0 %v37, 8
  %v191 = vpop.permute.xlu0 %190
  %192 = vrot.lane.b32.xlu0 %v38, 8
  %v193 = vpop.permute.xlu0 %192
  %194 = vrot.lane.b32.xlu0 %v39, 8
  %v195 = vpop.permute.xlu0 %194
  %196 = vrot.lane.b32.xlu0 %v40, 8
  %v197 = vpop.permute.xlu0 %196
  %198 = vrot.lane.b32.xlu0 %v41, 8
  %v199 = vpop.permute.xlu0 %198
  %200 = vrot.lane.b32.xlu0 %v42, 8
  %v201 = vpop.permute.xlu0 %200
  %202 = vrot.lane.b32.xlu0 %v43, 8
  %v203 = vpop.permute.xlu0 %202
  %204 = vrot.lane.b32.xlu0 %v44, 8
  %v205 = vpop.permute.xlu0 %204
  %206 = vrot.lane.b32.xlu0 %v45, 8
  %v207 = vpop.permute.xlu0 %206
  %240 = vrot.lane.b32.xlu0 %v46, 16
  %v241 = vpop.permute.xlu0 %240
  %242 = vrot.lane.b32.xlu0 %v47, 16
  %v243 = vpop.permute.xlu0 %242
  %244 = vrot.lane.b32.xlu0 %v48, 16
  %v245 = vpop.permute.xlu0 %244
  %246 = vrot.lane.b32.xlu0 %v49, 16
  %v247 = vpop.permute.xlu0 %246
  %248 = vrot.lane.b32.xlu0 %v50, 16
  %v249 = vpop.permute.xlu0 %248
  %250 = vrot.lane.b32.xlu0 %v51, 16
  %v251 = vpop.permute.xlu0 %250
  %252 = vrot.lane.b32.xlu0 %v52, 16
  %v253 = vpop.permute.xlu0 %252
  %254 = vrot.lane.b32.xlu0 %v53, 16
  %v255 = vpop.permute.xlu0 %254
  %256 = vrot.lane.b32.xlu0 %v54, 16
  %v257 = vpop.permute.xlu0 %256
  %258 = vrot.lane.b32.xlu0 %v55, 16
  %v259 = vpop.permute.xlu0 %258
  %260 = vrot.lane.b32.xlu0 %v56, 16
  %v261 = vpop.permute.xlu0 %260
  %262 = vrot.lane.b32.xlu0 %v57, 16
  %v263 = vpop.permute.xlu0 %262
  %264 = vrot.lane.b32.xlu0 %v58, 16
  %v265 = vpop.permute.xlu0 %264
  %266 = vrot.lane.b32.xlu0 %v59, 16
  %v267 = vpop.permute.xlu0 %266
  %268 = vrot.lane.b32.xlu0 %v60, 16
  %v269 = vpop.permute.xlu0 %268
  %270 = vrot.lane.b32.xlu0 %v61, 16
  %v271 = vpop.permute.xlu0 %270
  %304 = vrot.lane.b32.xlu0 %v63, 24
  %v305 = vpop.permute.xlu0 %304
  %306 = vrot.lane.b32.xlu0 %v64, 24
  %v307 = vpop.permute.xlu0 %306
  %308 = vrot.lane.b32.xlu0 %v65, 24
  %v309 = vpop.permute.xlu0 %308
  %310 = vrot.lane.b32.xlu0 %v66, 24
  %v311 = vpop.permute.xlu0 %310
  %312 = vrot.lane.b32.xlu0 %v67, 24
  %v313 = vpop.permute.xlu0 %312
  %314 = vrot.lane.b32.xlu0 %v68, 24
  %v315 = vpop.permute.xlu0 %314
  %316 = vrot.lane.b32.xlu0 %v69, 24
  %v317 = vpop.permute.xlu0 %316
  %318 = vrot.lane.b32.xlu0 %v70, 24
  %v319 = vpop.permute.xlu0 %318
  %320 = vrot.lane.b32.xlu0 %v71, 24
  %v321 = vpop.permute.xlu0 %320
  %322 = vrot.lane.b32.xlu0 %v72, 24
  %v323 = vpop.permute.xlu0 %322
  %324 = vrot.lane.b32.xlu0 %v73, 24
  %v325 = vpop.permute.xlu0 %324
  %326 = vrot.lane.b32.xlu0 %v74, 24
  %v327 = vpop.permute.xlu0 %326
  %328 = vrot.lane.b32.xlu0 %v75, 24
  %v329 = vpop.permute.xlu0 %328
  %330 = vrot.lane.b32.xlu0 %v76, 24
  %v331 = vpop.permute.xlu0 %330
  %332 = vrot.lane.b32.xlu0 %v77, 24
  %v333 = vpop.permute.xlu0 %332
  %334 = vrot.lane.b32.xlu0 %v78, 24
  %v335 = vpop.permute.xlu0 %334
  %368 = vrot.lane.b32.xlu0 %v79, 32
  %v369 = vpop.permute.xlu0 %368
  %370 = vrot.lane.b32.xlu0 %v80, 32
  %v371 = vpop.permute.xlu0 %370
  %372 = vrot.lane.b32.xlu0 %v81, 32
  %v373 = vpop.permute.xlu0 %372
  %374 = vrot.lane.b32.xlu0 %v82, 32
  %v375 = vpop.permute.xlu0 %374
  %376 = vrot.lane.b32.xlu0 %v83, 32
  %v377 = vpop.permute.xlu0 %376
  %378 = vrot.lane.b32.xlu0 %v84, 32
  %v379 = vpop.permute.xlu0 %378
  %380 = vrot.lane.b32.xlu0 %v85, 32
  %v381 = vpop.permute.xlu0 %380
  %382 = vrot.lane.b32.xlu0 %v86, 32
  %v383 = vpop.permute.xlu0 %382
  %384 = vrot.lane.b32.xlu0 %v87, 32
  %v385 = vpop.permute.xlu0 %384
  %386 = vrot.lane.b32.xlu0 %v88, 32
  %v387 = vpop.permute.xlu0 %386
  %388 = vrot.lane.b32.xlu0 %v89, 32
  %v389 = vpop.permute.xlu0 %388
  %390 = vrot.lane.b32.xlu0 %v90, 32
  %v391 = vpop.permute.xlu0 %390
  %392 = vrot.lane.b32.xlu0 %v91, 32
  %v393 = vpop.permute.xlu0 %392
  %394 = vrot.lane.b32.xlu0 %v92, 32
  %v395 = vpop.permute.xlu0 %394
  %396 = vrot.lane.b32.xlu0 %v93, 32
  %v397 = vpop.permute.xlu0 %396
  %398 = vrot.lane.b32.xlu0 %v94, 32
  %v399 = vpop.permute.xlu0 %398
  %432 = vrot.lane.b32.xlu0 %v95, 40
  %v433 = vpop.permute.xlu0 %432
  %434 = vrot.lane.b32.xlu0 %v96, 40
  %v435 = vpop.permute.xlu0 %434
  %436 = vrot.lane.b32.xlu0 %v97, 40
  %v437 = vpop.permute.xlu0 %436
  %438 = vrot.lane.b32.xlu0 %v98, 40
  %v439 = vpop.permute.xlu0 %438
  %440 = vrot.lane.b32.xlu0 %v99, 40
  %v441 = vpop.permute.xlu0 %440
  %442 = vrot.lane.b32.xlu0 %v100, 40
  %v443 = vpop.permute.xlu0 %442
  %444 = vrot.lane.b32.xlu0 %v101, 40
  %v445 = vpop.permute.xlu0 %444
  %446 = vrot.lane.b32.xlu0 %v102, 40
  %v447 = vpop.permute.xlu0 %446
  %448 = vrot.lane.b32.xlu0 %v103, 40
  %v449 = vpop.permute.xlu0 %448
  %450 = vrot.lane.b32.xlu0 %v104, 40
  %v451 = vpop.permute.xlu0 %450
  %452 = vrot.lane.b32.xlu0 %v105, 40
  %v453 = vpop.permute.xlu0 %452
  %454 = vrot.lane.b32.xlu0 %v106, 40
  %v455 = vpop.permute.xlu0 %454
  %456 = vrot.lane.b32.xlu0 %v107, 40
  %v457 = vpop.permute.xlu0 %456
  %458 = vrot.lane.b32.xlu0 %v108, 40
  %v459 = vpop.permute.xlu0 %458
  %460 = vrot.lane.b32.xlu0 %v109, 40
  %v461 = vpop.permute.xlu0 %460
  %462 = vrot.lane.b32.xlu0 %v110, 40
  %v463 = vpop.permute.xlu0 %462
  %496 = vrot.lane.b32.xlu0 %v112, 48
  %v497 = vpop.permute.xlu0 %496
  %498 = vrot.lane.b32.xlu0 %v113, 48
  %v499 = vpop.permute.xlu0 %498
  %500 = vrot.lane.b32.xlu0 %v114, 48
  %v501 = vpop.permute.xlu0 %500
  %502 = vrot.lane.b32.xlu0 %v115, 48
  %v503 = vpop.permute.xlu0 %502
  %504 = vrot.lane.b32.xlu0 %v116, 48
  %v505 = vpop.permute.xlu0 %504
  %506 = vrot.lane.b32.xlu0 %v117, 48
  %v507 = vpop.permute.xlu0 %506
  %508 = vrot.lane.b32.xlu0 %v118, 48
  %v509 = vpop.permute.xlu0 %508
  %510 = vrot.lane.b32.xlu0 %v119, 48
  %v511 = vpop.permute.xlu0 %510
  %512 = vrot.lane.b32.xlu0 %v120, 48
  %v513 = vpop.permute.xlu0 %512
  %514 = vrot.lane.b32.xlu0 %v121, 48
  %v515 = vpop.permute.xlu0 %514
  %516 = vrot.lane.b32.xlu0 %v122, 48
  %v517 = vpop.permute.xlu0 %516
  %518 = vrot.lane.b32.xlu0 %v123, 48
  %v519 = vpop.permute.xlu0 %518
  %520 = vrot.lane.b32.xlu0 %v124, 48
  %v521 = vpop.permute.xlu0 %520
  %522 = vrot.lane.b32.xlu0 %v125, 48
  %v523 = vpop.permute.xlu0 %522
  %524 = vrot.lane.b32.xlu0 %v126, 48
  %v525 = vpop.permute.xlu0 %524
  %526 = vrot.lane.b32.xlu0 %v127, 48
  %v527 = vpop.permute.xlu0 %526
  %560 = vrot.lane.b32.xlu0 %v128, 56
  %v561 = vpop.permute.xlu0 %560
  %562 = vrot.lane.b32.xlu0 %v129, 56
  %v563 = vpop.permute.xlu0 %562
  %564 = vrot.lane.b32.xlu0 %v130, 56
  %v565 = vpop.permute.xlu0 %564
  %566 = vrot.lane.b32.xlu0 %v131, 56
  %v567 = vpop.permute.xlu0 %566
  %568 = vrot.lane.b32.xlu0 %v132, 56
  %v569 = vpop.permute.xlu0 %568
  %570 = vrot.lane.b32.xlu0 %v133, 56
  %v571 = vpop.permute.xlu0 %570
  %572 = vrot.lane.b32.xlu0 %v134, 56
  %v573 = vpop.permute.xlu0 %572
  %574 = vrot.lane.b32.xlu0 %v135, 56
  %v575 = vpop.permute.xlu0 %574
  %576 = vrot.lane.b32.xlu0 %v136, 56
  %v577 = vpop.permute.xlu0 %576
  %578 = vrot.lane.b32.xlu0 %v137, 56
  %v579 = vpop.permute.xlu0 %578
  %580 = vrot.lane.b32.xlu0 %v138, 56
  %v581 = vpop.permute.xlu0 %580
  %582 = vrot.lane.b32.xlu0 %v139, 56
  %v583 = vpop.permute.xlu0 %582
  %584 = vrot.lane.b32.xlu0 %v140, 56
  %v585 = vpop.permute.xlu0 %584
  %586 = vrot.lane.b32.xlu0 %v141, 56
  %v587 = vpop.permute.xlu0 %586
  %588 = vrot.lane.b32.xlu0 %v142, 56
  %v589 = vpop.permute.xlu0 %588
  %590 = vrot.lane.b32.xlu0 %v143, 56
  %v591 = vpop.permute.xlu0 %590
  %624 = vrot.lane.b32.xlu0 %v144, 64
  %v625 = vpop.permute.xlu0 %624
  %626 = vrot.lane.b32.xlu0 %v145, 64
  %v627 = vpop.permute.xlu0 %626
  %628 = vrot.lane.b32.xlu0 %v146, 64
  %v629 = vpop.permute.xlu0 %628
  %630 = vrot.lane.b32.xlu0 %v147, 64
  %v631 = vpop.permute.xlu0 %630
  %632 = vrot.lane.b32.xlu0 %v148, 64
  %v633 = vpop.permute.xlu0 %632
  %634 = vrot.lane.b32.xlu0 %v149, 64
  %v635 = vpop.permute.xlu0 %634
  %636 = vrot.lane.b32.xlu0 %v150, 64
  %v637 = vpop.permute.xlu0 %636
  %638 = vrot.lane.b32.xlu0 %v151, 64
  %v639 = vpop.permute.xlu0 %638
  %640 = vrot.lane.b32.xlu0 %v152, 64
  %v641 = vpop.permute.xlu0 %640
  %642 = vrot.lane.b32.xlu0 %v153, 64
  %v643 = vpop.permute.xlu0 %642
  %644 = vrot.lane.b32.xlu0 %v154, 64
  %v645 = vpop.permute.xlu0 %644
  %646 = vrot.lane.b32.xlu0 %v155, 64
  %v647 = vpop.permute.xlu0 %646
  %648 = vrot.lane.b32.xlu0 %v156, 64
  %v649 = vpop.permute.xlu0 %648
  %650 = vrot.lane.b32.xlu0 %v157, 64
  %v651 = vpop.permute.xlu0 %650
  %652 = vrot.lane.b32.xlu0 %v158, 64
  %v653 = vpop.permute.xlu0 %652
  %654 = vrot.lane.b32.xlu0 %v159, 64
  %v655 = vpop.permute.xlu0 %654
  %vm672 = vcmask 64512
  %v673 = vsel %vm672, %v14, %v177
  %v674 = vsel %vm672, %v15, %v179
  %v675 = vsel %vm672, %v16, %v181
  %v676 = vsel %vm672, %v17, %v183
  %v677 = vsel %vm672, %v18, %v185
  %v678 = vsel %vm672, %v19, %v187
  %v679 = vsel %vm672, %v20, %v189
  %v680 = vsel %vm672, %v21, %v191
  %v681 = vsel %vm672, %v22, %v193
  %v682 = vsel %vm672, %v23, %v195
  %v683 = vsel %vm672, %v24, %v197
  %v684 = vsel %vm672, %v25, %v199
  %v685 = vsel %vm672, %v26, %v201
  %v686 = vsel %vm672, %v27, %v203
  %v687 = vsel %vm672, %v28, %v205
  %v688 = vsel %vm672, %v29, %v207
  %vm689 = vcmask 130048
  %v690 = vsel %vm689, %v673, %v241
  %v691 = vsel %vm689, %v674, %v243
  %v692 = vsel %vm689, %v675, %v245
  %v693 = vsel %vm689, %v676, %v247
  %v694 = vsel %vm689, %v677, %v249
  %v695 = vsel %vm689, %v678, %v251
  %v696 = vsel %vm689, %v679, %v253
  %v697 = vsel %vm689, %v680, %v255
  %v698 = vsel %vm689, %v681, %v257
  %v699 = vsel %vm689, %v682, %v259
  %v700 = vsel %vm689, %v683, %v261
  %v701 = vsel %vm689, %v684, %v263
  %v702 = vsel %vm689, %v685, %v265
  %v703 = vsel %vm689, %v686, %v267
  %v704 = vsel %vm689, %v687, %v269
  %v705 = vsel %vm689, %v688, %v271
  %vm706 = vcmask 195584
  %v707 = vsel %vm706, %v690, %v305
  %v708 = vsel %vm706, %v691, %v307
  %v709 = vsel %vm706, %v692, %v309
  %v710 = vsel %vm706, %v693, %v311
  %v711 = vsel %vm706, %v694, %v313
  %v712 = vsel %vm706, %v695, %v315
  %v713 = vsel %vm706, %v696, %v317
  %v714 = vsel %vm706, %v697, %v319
  %v715 = vsel %vm706, %v698, %v321
  %v716 = vsel %vm706, %v699, %v323
  %v717 = vsel %vm706, %v700, %v325
  %v718 = vsel %vm706, %v701, %v327
  %v719 = vsel %vm706, %v702, %v329
  %v720 = vsel %vm706, %v703, %v331
  %v721 = vsel %vm706, %v704, %v333
  %v722 = vsel %vm706, %v705, %v335
  %vm723 = vcmask 261120
  %v724 = vsel %vm723, %v707, %v369
  %v725 = vsel %vm723, %v708, %v371
  %v726 = vsel %vm723, %v709, %v373
  %v727 = vsel %vm723, %v710, %v375
  %v728 = vsel %vm723, %v711, %v377
  %v729 = vsel %vm723, %v712, %v379
  %v730 = vsel %vm723, %v713, %v381
  %v731 = vsel %vm723, %v714, %v383
  %v732 = vsel %vm723, %v715, %v385
  %v733 = vsel %vm723, %v716, %v387
  %v734 = vsel %vm723, %v717, %v389
  %v735 = vsel %vm723, %v718, %v391
  %v736 = vsel %vm723, %v719, %v393
  %v737 = vsel %vm723, %v720, %v395
  %v738 = vsel %vm723, %v721, %v397
  %v739 = vsel %vm723, %v722, %v399
  %vm740 = vcmask 326656
  %v741 = vsel %vm740, %v724, %v433
  %v742 = vsel %vm740, %v725, %v435
  %v743 = vsel %vm740, %v726, %v437
  %v744 = vsel %vm740, %v727, %v439
  %v745 = vsel %vm740, %v728, %v441
  %v746 = vsel %vm740, %v729, %v443
  %v747 = vsel %vm740, %v730, %v445
  %v748 = vsel %vm740, %v731, %v447
  %v749 = vsel %vm740, %v732, %v449
  %v750 = vsel %vm740, %v733, %v451
  %v751 = vsel %vm740, %v734, %v453
  %v752 = vsel %vm740, %v735, %v455
  %v753 = vsel %vm740, %v736, %v457
  %v754 = vsel %vm740, %v737, %v459
  %v755 = vsel %vm740, %v738, %v461
  %v756 = vsel %vm740, %v739, %v463
  %vm757 = vcmask 392192
  %v758 = vsel %vm757, %v741, %v497
  %v759 = vsel %vm757, %v742, %v499
  %v760 = vsel %vm757, %v743, %v501
  %v761 = vsel %vm757, %v744, %v503
  %v762 = vsel %vm757, %v745, %v505
  %v763 = vsel %vm757, %v746, %v507
  %v764 = vsel %vm757, %v747, %v509
  %v765 = vsel %vm757, %v748, %v511
  %v766 = vsel %vm757, %v749, %v513
  %v767 = vsel %vm757, %v750, %v515
  %v768 = vsel %vm757, %v751, %v517
  %v769 = vsel %vm757, %v752, %v519
  %v770 = vsel %vm757, %v753, %v521
  %v771 = vsel %vm757, %v754, %v523
  %v772 = vsel %vm757, %v755, %v525
  %v773 = vsel %vm757, %v756, %v527
  %vm774 = vcmask 457728
  %v775 = vsel %vm774, %v758, %v561
  %v776 = vsel %vm774, %v759, %v563
  %v777 = vsel %vm774, %v760, %v565
  %v778 = vsel %vm774, %v761, %v567
  %v779 = vsel %vm774, %v762, %v569
  %v780 = vsel %vm774, %v763, %v571
  %v781 = vsel %vm774, %v764, %v573
  %v782 = vsel %vm774, %v765, %v575
  %v783 = vsel %vm774, %v766, %v577
  %v784 = vsel %vm774, %v767, %v579
  %v785 = vsel %vm774, %v768, %v581
  %v786 = vsel %vm774, %v769, %v583
  %v787 = vsel %vm774, %v770, %v585
  %v788 = vsel %vm774, %v771, %v587
  %v789 = vsel %vm774, %v772, %v589
  %v790 = vsel %vm774, %v773, %v591
  %vm791 = vcmask 523264
  %v792 = vsel %vm791, %v775, %v625
  %v793 = vsel %vm791, %v776, %v627
  %v794 = vsel %vm791, %v777, %v629
  %v795 = vsel %vm791, %v778, %v631
  %v796 = vsel %vm791, %v779, %v633
  %v797 = vsel %vm791, %v780, %v635
  %v798 = vsel %vm791, %v781, %v637
  %v799 = vsel %vm791, %v782, %v639
  %v800 = vsel %vm791, %v783, %v641
  %v801 = vsel %vm791, %v784, %v643
  %v802 = vsel %vm791, %v785, %v645
  %v803 = vsel %vm791, %v786, %v647
  %v804 = vsel %vm791, %v787, %v649
  %v805 = vsel %vm791, %v788, %v651
  %v806 = vsel %vm791, %v789, %v653
  %v807 = vsel %vm791, %v790, %v655
  %v808 = vld [vmem:[%s1] sm:$0xff]
  %v809 = vld [vmem:[%s1 + $0x8] sm:$0xff]
  %v810 = vld [vmem:[%s1 + $0x10] sm:$0xff]
  %v811 = vld [vmem:[%s1 + $0x18] sm:$0xff]
  %v812 = vld [vmem:[%s1 + $0x20] sm:$0xff]
  %v813 = vld [vmem:[%s1 + $0x28] sm:$0xff]
  %v814 = vld [vmem:[%s1 + $0x30] sm:$0xff]
  %v815 = vld [vmem:[%s1 + $0x38] sm:$0xff]
  %v816 = vld [vmem:[%s1 + $0x40] sm:$0xff]
  %v817 = vld [vmem:[%s2] sm:$0x1]
  %v819 = vlaneseq
  %v820 = vshrl.u32 %v819, 7
  %v821 = vsub.s32 0, %v820
  %v822 = vrot.slane %v817, %v821
  %vm824 = vcmask 588800
  %v826 = vsel %vm824, %v792, 0
  %v829 = vsel %vm824, %v793, 0
  %v832 = vsel %vm824, %v794, 0
  %v835 = vsel %vm824, %v795, 0
  %v838 = vsel %vm824, %v796, 0
  %v841 = vsel %vm824, %v797, 0
  %v844 = vsel %vm824, %v798, 0
  %v847 = vsel %vm824, %v799, 0
  %v850 = vsel %vm824, %v800, 0
  %v853 = vsel %vm824, %v801, 0
  %v856 = vsel %vm824, %v802, 0
  %v859 = vsel %vm824, %v803, 0
  %v862 = vsel %vm824, %v804, 0
  %v865 = vsel %vm824, %v805, 0
  %v868 = vsel %vm824, %v806, 0
  %v871 = vsel %vm824, %v807, 0
  %873 = vmatprep.subr.mxu0 0.0
  %874 = vmatpush1.msra.mxu0 %v808
  %875 = vmatprep.subr.mxu0 0.0
  %876 = vmatpush1.msra.mxu0 %v809
  %877 = vmatprep.subr.mxu0 0.0
  %878 = vmatpush1.msra.mxu0 %v810
  %879 = vmatprep.subr.mxu0 0.0
  %880 = vmatpush1.msra.mxu0 %v811
  %881 = vmatprep.subr.mxu0 0.0
  %882 = vmatpush1.msra.mxu0 %v812
  %883 = vmatprep.subr.mxu0 0.0
  %884 = vmatpush1.msra.mxu0 %v813
  %885 = vmatprep.subr.mxu0 0.0
  %886 = vmatpush1.msra.mxu0 %v814
  %887 = vmatprep.subr.mxu0 0.0
  %888 = vmatpush1.msra.mxu0 %v815
  %889 = vmatprep.subr.mxu0 0.0
  %890 = vmatpush1.msra.mxu0 %v816
  %891 = vmatprep.subr.mxu0 0.0
  %892 = vmatpush1.msra.mxu0 0.0
  %893 = vmatprep.subr.mxu0 0.0
  %894 = vmatpush1.msra.mxu0 0.0
  %895 = vmatprep.subr.mxu0 0.0
  %896 = vmatpush1.msra.mxu0 0.0
  %897 = vmatprep.subr.mxu0 0.0
  %898 = vmatpush1.msra.mxu0 0.0
  %899 = vmatprep.subr.mxu0 0.0
  %900 = vmatpush1.msra.mxu0 0.0
  %901 = vmatprep.subr.mxu0 0.0
  %902 = vmatpush1.msra.mxu0 0.0
  %903 = vmatprep.subr.mxu0 0.0
  %904 = vmatpush1.msra.mxu0 0.0
  %905 = vmatprep.subr.mxu0 0.0
  %906 = vmatpush1.msra.mxu0 0.0
  %907 = vmatprep.subr.mxu0 0.0
  %908 = vmatpush1.msra.mxu0 0.0
  %909 = vmatprep.subr.mxu0 0.0
  %910 = vmatpush1.msra.mxu0 0.0
  %911 = vmatprep.subr.mxu0 0.0
  %912 = vmatpush1.msra.mxu0 0.0
  %913 = vmatprep.subr.mxu0 0.0
  %914 = vmatpush1.msra.mxu0 0.0
  %915 = vmatprep.subr.mxu0 0.0
  %916 = vmatpush1.msra.mxu0 0.0
  %917 = vmatprep.subr.mxu0 0.0
  %918 = vmatpush1.msra.mxu0 0.0
  %919 = vmatprep.subr.mxu0 0.0
  %920 = vmatpush1.msra.mxu0 0.0
  %921 = vmatprep.subr.mxu0 0.0
  %922 = vmatpush1.msra.mxu0 0.0
  %923 = vmatprep.subr.mxu0 0.0
  %924 = vmatpush1.msra.mxu0 0.0
  %925 = vmatprep.subr.mxu0 0.0
  %926 = vmatpush1.msra.mxu0 0.0
  %927 = vmatprep.subr.mxu0 0.0
  %928 = vmatpush1.msra.mxu0 0.0
  %929 = vmatprep.subr.mxu0 0.0
  %930 = vmatpush1.msra.mxu0 0.0
  %931 = vmatprep.subr.mxu0 0.0
  %932 = vmatpush1.msra.mxu0 0.0
  %933 = vmatprep.subr.mxu0 0.0
  %934 = vmatpush1.msra.mxu0 0.0
  %935 = vmatprep.subr.mxu0 0.0
  %936 = vmatpush1.msra.mxu0 0.0
  %937 = vmatprep.mubr.f32.mxu0 0.0
  %938 = vmatmul.mubr.f32.gmra.mrb[0].mxu0 %v826
  %v939 = vpop.f32.mrb[0].mxu0
  %v940 = vadd.f32 %v822, %v939
  %v941 = vpop.f32.mrb[0].mxu0
  %942 = vmatprep.mubr.f32.mxu0 0.0
  %943 = vmatmul.mubr.f32.gmra.mrb[0].mxu0 %v829
  %v944 = vpop.f32.mrb[0].mxu0
  %v945 = vadd.f32 %v822, %v944
  %v946 = vpop.f32.mrb[0].mxu0
  %947 = vmatprep.mubr.f32.mxu0 0.0
  %948 = vmatmul.mubr.f32.gmra.mrb[0].mxu0 %v832
  %v949 = vpop.f32.mrb[0].mxu0
  %v950 = vadd.f32 %v822, %v949
  %v951 = vpop.f32.mrb[0].mxu0
  %952 = vmatprep.mubr.f32.mxu0 0.0
  %953 = vmatmul.mubr.f32.gmra.mrb[0].mxu0 %v835
  %v954 = vpop.f32.mrb[0].mxu0
  %v955 = vadd.f32 %v822, %v954
  %v956 = vpop.f32.mrb[0].mxu0
  %957 = vmatprep.mubr.f32.mxu0 0.0
  %958 = vmatmul.mubr.f32.gmra.mrb[0].mxu0 %v838
  %v959 = vpop.f32.mrb[0].mxu0
  %v960 = vadd.f32 %v822, %v959
  %v961 = vpop.f32.mrb[0].mxu0
  %962 = vmatprep.mubr.f32.mxu0 0.0
  %963 = vmatmul.mubr.f32.gmra.mrb[0].mxu0 %v841
  %v964 = vpop.f32.mrb[0].mxu0
  %v965 = vadd.f32 %v822, %v964
  %v966 = vpop.f32.mrb[0].mxu0
  %967 = vmatprep.mubr.f32.mxu0 0.0
  %968 = vmatmul.mubr.f32.gmra.mrb[0].mxu0 %v844
  %v969 = vpop.f32.mrb[0].mxu0
  %v970 = vadd.f32 %v822, %v969
  %v971 = vpop.f32.mrb[0].mxu0
  %972 = vmatprep.mubr.f32.mxu0 0.0
  %973 = vmatmul.mubr.f32.gmra.mrb[0].mxu0 %v847
  %v974 = vpop.f32.mrb[0].mxu0
  %v975 = vadd.f32 %v822, %v974
  %v976 = vpop.f32.mrb[0].mxu0
  %977 = vmatprep.mubr.f32.mxu0 0.0
  %978 = vmatmul.mubr.f32.gmra.mrb[0].mxu0 %v850
  %v979 = vpop.f32.mrb[0].mxu0
  %v980 = vadd.f32 %v822, %v979
  %v981 = vpop.f32.mrb[0].mxu0
  %982 = vmatprep.mubr.f32.mxu0 0.0
  %983 = vmatmul.mubr.f32.gmra.mrb[0].mxu0 %v853
  %v984 = vpop.f32.mrb[0].mxu0
  %v985 = vadd.f32 %v822, %v984
  %v986 = vpop.f32.mrb[0].mxu0
  %987 = vmatprep.mubr.f32.mxu0 0.0
  %988 = vmatmul.mubr.f32.gmra.mrb[0].mxu0 %v856
  %v989 = vpop.f32.mrb[0].mxu0
  %v990 = vadd.f32 %v822, %v989
  %v991 = vpop.f32.mrb[0].mxu0
  %992 = vmatprep.mubr.f32.mxu0 0.0
  %993 = vmatmul.mubr.f32.gmra.mrb[0].mxu0 %v859
  %v994 = vpop.f32.mrb[0].mxu0
  %v995 = vadd.f32 %v822, %v994
  %v996 = vpop.f32.mrb[0].mxu0
  %997 = vmatprep.mubr.f32.mxu0 0.0
  %998 = vmatmul.mubr.f32.gmra.mrb[0].mxu0 %v862
  %v999 = vpop.f32.mrb[0].mxu0
  %v1000 = vadd.f32 %v822, %v999
  %v1001 = vpop.f32.mrb[0].mxu0
  %1002 = vmatprep.mubr.f32.mxu0 0.0
  %1003 = vmatmul.mubr.f32.gmra.mrb[0].mxu0 %v865
  %v1004 = vpop.f32.mrb[0].mxu0
  %v1005 = vadd.f32 %v822, %v1004
  %v1006 = vpop.f32.mrb[0].mxu0
  %1007 = vmatprep.mubr.f32.mxu0 0.0
  %1008 = vmatmul.mubr.f32.gmra.mrb[0].mxu0 %v868
  %v1009 = vpop.f32.mrb[0].mxu0
  %v1010 = vadd.f32 %v822, %v1009
  %v1011 = vpop.f32.mrb[0].mxu0
  %1012 = vmatprep.mubr.f32.mxu0 0.0
  %1013 = vmatmul.mubr.f32.gmra.mrb[0].mxu0 %v871
  %v1014 = vpop.f32.mrb[0].mxu0
  %v1015 = vadd.f32 %v822, %v1014
  %v1016 = vpop.f32.mrb[0].mxu0
  %1017 = vdwg.mxu0
  %v1018 = vmax.f32 %v940, 0.0
  %v1019 = vmax.f32 %v945, 0.0
  %v1020 = vmax.f32 %v950, 0.0
  %v1021 = vmax.f32 %v955, 0.0
  %v1022 = vmax.f32 %v960, 0.0
  %v1023 = vmax.f32 %v965, 0.0
  %v1024 = vmax.f32 %v970, 0.0
  %v1025 = vmax.f32 %v975, 0.0
  %v1026 = vmax.f32 %v980, 0.0
  %v1027 = vmax.f32 %v985, 0.0
  %v1028 = vmax.f32 %v990, 0.0
  %v1029 = vmax.f32 %v995, 0.0
  %v1030 = vmax.f32 %v1000, 0.0
  %v1031 = vmax.f32 %v1005, 0.0
  %v1032 = vmax.f32 %v1010, 0.0
  %v1033 = vmax.f32 %v1015, 0.0
  %v1050 = vcombine.high %v1018, %v1018
  %v1052 = vunpack.c.l.s4 1983009808
  %v1053 = vunpack.c.0.s8 %v1052
  %v1054 = vlaneseq
  %v1055 = vshrl.u32 %v1054, 7
  %v1056 = vsub.s32 %v1053, %v1055
  %v1057 = vrot.slane %v1018, %v1056
  %v1059 = vunpack.c.l.s4 1983009808
  %v1060 = vunpack.c.0.s8 %v1059
  %v1061 = vlaneseq
  %v1062 = vshrl.u32 %v1061, 7
  %v1063 = vsub.s32 %v1060, %v1062
  %v1064 = vrot.slane %v1050, %v1063
  %v1065 = vcombine.high %v1057, %v1057
  %v1066 = vcombine.high %v1064, %v1064
  %v1067 = vcombine.high %v1019, %v1019
  %v1069 = vunpack.c.l.s4 1983009808
  %v1070 = vunpack.c.0.s8 %v1069
  %v1071 = vlaneseq
  %v1072 = vshrl.u32 %v1071, 7
  %v1073 = vsub.s32 %v1070, %v1072
  %v1074 = vrot.slane %v1019, %v1073
  %v1076 = vunpack.c.l.s4 1983009808
  %v1077 = vunpack.c.0.s8 %v1076
  %v1078 = vlaneseq
  %v1079 = vshrl.u32 %v1078, 7
  %v1080 = vsub.s32 %v1077, %v1079
  %v1081 = vrot.slane %v1067, %v1080
  %v1082 = vcombine.high %v1074, %v1074
  %v1083 = vcombine.high %v1081, %v1081
  %v1084 = vcombine.high %v1020, %v1020
  %v1086 = vunpack.c.l.s4 1983009808
  %v1087 = vunpack.c.0.s8 %v1086
  %v1088 = vlaneseq
  %v1089 = vshrl.u32 %v1088, 7
  %v1090 = vsub.s32 %v1087, %v1089
  %v1091 = vrot.slane %v1020, %v1090
  %v1093 = vunpack.c.l.s4 1983009808
  %v1094 = vunpack.c.0.s8 %v1093
  %v1095 = vlaneseq
  %v1096 = vshrl.u32 %v1095, 7
  %v1097 = vsub.s32 %v1094, %v1096
  %v1098 = vrot.slane %v1084, %v1097
  %v1099 = vcombine.high %v1091, %v1091
  %v1100 = vcombine.high %v1098, %v1098
  %v1101 = vcombine.high %v1021, %v1021
  %v1103 = vunpack.c.l.s4 1983009808
  %v1104 = vunpack.c.0.s8 %v1103
  %v1105 = vlaneseq
  %v1106 = vshrl.u32 %v1105, 7
  %v1107 = vsub.s32 %v1104, %v1106
  %v1108 = vrot.slane %v1021, %v1107
  %v1110 = vunpack.c.l.s4 1983009808
  %v1111 = vunpack.c.0.s8 %v1110
  %v1112 = vlaneseq
  %v1113 = vshrl.u32 %v1112, 7
  %v1114 = vsub.s32 %v1111, %v1113
  %v1115 = vrot.slane %v1101, %v1114
  %v1116 = vcombine.high %v1108, %v1108
  %v1117 = vcombine.high %v1115, %v1115
  %v1118 = vcombine.high %v1022, %v1022
  %v1120 = vunpack.c.l.s4 1983009808
  %v1121 = vunpack.c.0.s8 %v1120
  %v1122 = vlaneseq
  %v1123 = vshrl.u32 %v1122, 7
  %v1124 = vsub.s32 %v1121, %v1123
  %v1125 = vrot.slane %v1022, %v1124
  %v1127 = vunpack.c.l.s4 1983009808
  %v1128 = vunpack.c.0.s8 %v1127
  %v1129 = vlaneseq
  %v1130 = vshrl.u32 %v1129, 7
  %v1131 = vsub.s32 %v1128, %v1130
  %v1132 = vrot.slane %v1118, %v1131
  %v1133 = vcombine.high %v1125, %v1125
  %v1134 = vcombine.high %v1132, %v1132
  %v1135 = vcombine.high %v1023, %v1023
  %v1137 = vunpack.c.l.s4 1983009808
  %v1138 = vunpack.c.0.s8 %v1137
  %v1139 = vlaneseq
  %v1140 = vshrl.u32 %v1139, 7
  %v1141 = vsub.s32 %v1138, %v1140
  %v1142 = vrot.slane %v1023, %v1141
  %v1144 = vunpack.c.l.s4 1983009808
  %v1145 = vunpack.c.0.s8 %v1144
  %v1146 = vlaneseq
  %v1147 = vshrl.u32 %v1146, 7
  %v1148 = vsub.s32 %v1145, %v1147
  %v1149 = vrot.slane %v1135, %v1148
  %v1150 = vcombine.high %v1142, %v1142
  %v1151 = vcombine.high %v1149, %v1149
  %v1152 = vcombine.high %v1024, %v1024
  %v1154 = vunpack.c.l.s4 1983009808
  %v1155 = vunpack.c.0.s8 %v1154
  %v1156 = vlaneseq
  %v1157 = vshrl.u32 %v1156, 7
  %v1158 = vsub.s32 %v1155, %v1157
  %v1159 = vrot.slane %v1024, %v1158
  %v1161 = vunpack.c.l.s4 1983009808
  %v1162 = vunpack.c.0.s8 %v1161
  %v1163 = vlaneseq
  %v1164 = vshrl.u32 %v1163, 7
  %v1165 = vsub.s32 %v1162, %v1164
  %v1166 = vrot.slane %v1152, %v1165
  %v1167 = vcombine.high %v1159, %v1159
  %v1168 = vcombine.high %v1166, %v1166
  %v1169 = vcombine.high %v1025, %v1025
  %v1171 = vunpack.c.l.s4 1983009808
  %v1172 = vunpack.c.0.s8 %v1171
  %v1173 = vlaneseq
  %v1174 = vshrl.u32 %v1173, 7
  %v1175 = vsub.s32 %v1172, %v1174
  %v1176 = vrot.slane %v1025, %v1175
  %v1178 = vunpack.c.l.s4 1983009808
  %v1179 = vunpack.c.0.s8 %v1178
  %v1180 = vlaneseq
  %v1181 = vshrl.u32 %v1180, 7
  %v1182 = vsub.s32 %v1179, %v1181
  %v1183 = vrot.slane %v1169, %v1182
  %v1184 = vcombine.high %v1176, %v1176
  %v1185 = vcombine.high %v1183, %v1183
  %v1186 = vcombine.high %v1026, %v1026
  %v1188 = vunpack.c.l.s4 1983009808
  %v1189 = vunpack.c.0.s8 %v1188
  %v1190 = vlaneseq
  %v1191 = vshrl.u32 %v1190, 7
  %v1192 = vsub.s32 %v1189, %v1191
  %v1193 = vrot.slane %v1026, %v1192
  %v1195 = vunpack.c.l.s4 1983009808
  %v1196 = vunpack.c.0.s8 %v1195
  %v1197 = vlaneseq
  %v1198 = vshrl.u32 %v1197, 7
  %v1199 = vsub.s32 %v1196, %v1198
  %v1200 = vrot.slane %v1186, %v1199
  %v1201 = vcombine.high %v1193, %v1193
  %v1202 = vcombine.high %v1200, %v1200
  %v1203 = vcombine.high %v1027, %v1027
  %v1205 = vunpack.c.l.s4 1983009808
  %v1206 = vunpack.c.0.s8 %v1205
  %v1207 = vlaneseq
  %v1208 = vshrl.u32 %v1207, 7
  %v1209 = vsub.s32 %v1206, %v1208
  %v1210 = vrot.slane %v1027, %v1209
  %v1212 = vunpack.c.l.s4 1983009808
  %v1213 = vunpack.c.0.s8 %v1212
  %v1214 = vlaneseq
  %v1215 = vshrl.u32 %v1214, 7
  %v1216 = vsub.s32 %v1213, %v1215
  %v1217 = vrot.slane %v1203, %v1216
  %v1218 = vcombine.high %v1210, %v1210
  %v1219 = vcombine.high %v1217, %v1217
  %v1220 = vcombine.high %v1028, %v1028
  %v1222 = vunpack.c.l.s4 1983009808
  %v1223 = vunpack.c.0.s8 %v1222
  %v1224 = vlaneseq
  %v1225 = vshrl.u32 %v1224, 7
  %v1226 = vsub.s32 %v1223, %v1225
  %v1227 = vrot.slane %v1028, %v1226
  %v1229 = vunpack.c.l.s4 1983009808
  %v1230 = vunpack.c.0.s8 %v1229
  %v1231 = vlaneseq
  %v1232 = vshrl.u32 %v1231, 7
  %v1233 = vsub.s32 %v1230, %v1232
  %v1234 = vrot.slane %v1220, %v1233
  %v1235 = vcombine.high %v1227, %v1227
  %v1236 = vcombine.high %v1234, %v1234
  %v1237 = vcombine.high %v1029, %v1029
  %v1239 = vunpack.c.l.s4 1983009808
  %v1240 = vunpack.c.0.s8 %v1239
  %v1241 = vlaneseq
  %v1242 = vshrl.u32 %v1241, 7
  %v1243 = vsub.s32 %v1240, %v1242
  %v1244 = vrot.slane %v1029, %v1243
  %v1246 = vunpack.c.l.s4 1983009808
  %v1247 = vunpack.c.0.s8 %v1246
  %v1248 = vlaneseq
  %v1249 = vshrl.u32 %v1248, 7
  %v1250 = vsub.s32 %v1247, %v1249
  %v1251 = vrot.slane %v1237, %v1250
  %v1252 = vcombine.high %v1244, %v1244
  %v1253 = vcombine.high %v1251, %v1251
  %v1254 = vcombine.high %v1030, %v1030
  %v1256 = vunpack.c.l.s4 1983009808
  %v1257 = vunpack.c.0.s8 %v1256
  %v1258 = vlaneseq
  %v1259 = vshrl.u32 %v1258, 7
  %v1260 = vsub.s32 %v1257, %v1259
  %v1261 = vrot.slane %v1030, %v1260
  %v1263 = vunpack.c.l.s4 1983009808
  %v1264 = vunpack.c.0.s8 %v1263
  %v1265 = vlaneseq
  %v1266 = vshrl.u32 %v1265, 7
  %v1267 = vsub.s32 %v1264, %v1266
  %v1268 = vrot.slane %v1254, %v1267
  %v1269 = vcombine.high %v1261, %v1261
  %v1270 = vcombine.high %v1268, %v1268
  %v1271 = vcombine.high %v1031, %v1031
  %v1273 = vunpack.c.l.s4 1983009808
  %v1274 = vunpack.c.0.s8 %v1273
  %v1275 = vlaneseq
  %v1276 = vshrl.u32 %v1275, 7
  %v1277 = vsub.s32 %v1274, %v1276
  %v1278 = vrot.slane %v1031, %v1277
  %v1280 = vunpack.c.l.s4 1983009808
  %v1281 = vunpack.c.0.s8 %v1280
  %v1282 = vlaneseq
  %v1283 = vshrl.u32 %v1282, 7
  %v1284 = vsub.s32 %v1281, %v1283
  %v1285 = vrot.slane %v1271, %v1284
  %v1286 = vcombine.high %v1278, %v1278
  %v1287 = vcombine.high %v1285, %v1285
  %v1288 = vcombine.high %v1032, %v1032
  %v1290 = vunpack.c.l.s4 1983009808
  %v1291 = vunpack.c.0.s8 %v1290
  %v1292 = vlaneseq
  %v1293 = vshrl.u32 %v1292, 7
  %v1294 = vsub.s32 %v1291, %v1293
  %v1295 = vrot.slane %v1032, %v1294
  %v1297 = vunpack.c.l.s4 1983009808
  %v1298 = vunpack.c.0.s8 %v1297
  %v1299 = vlaneseq
  %v1300 = vshrl.u32 %v1299, 7
  %v1301 = vsub.s32 %v1298, %v1300
  %v1302 = vrot.slane %v1288, %v1301
  %v1303 = vcombine.high %v1295, %v1295
  %v1304 = vcombine.high %v1302, %v1302
  %v1305 = vcombine.high %v1033, %v1033
  %v1307 = vunpack.c.l.s4 1983009808
  %v1308 = vunpack.c.0.s8 %v1307
  %v1309 = vlaneseq
  %v1310 = vshrl.u32 %v1309, 7
  %v1311 = vsub.s32 %v1308, %v1310
  %v1312 = vrot.slane %v1033, %v1311
  %v1314 = vunpack.c.l.s4 1983009808
  %v1315 = vunpack.c.0.s8 %v1314
  %v1316 = vlaneseq
  %v1317 = vshrl.u32 %v1316, 7
  %v1318 = vsub.s32 %v1315, %v1317
  %v1319 = vrot.slane %v1305, %v1318
  %v1320 = vcombine.high %v1312, %v1312
  %v1321 = vcombine.high %v1319, %v1319
  %v1386 = vrot.slane %v1057, 7
  %v1387 = vrot.slane %v1386, 2
  %v1388 = vrot.slane %v1065, 7
  %v1389 = vrot.slane %v1388, 2
  %v1390 = vrot.slane %v1064, 7
  %v1391 = vrot.slane %v1390, 2
  %v1392 = vrot.slane %v1066, 7
  %v1393 = vrot.slane %v1392, 2
  %v1394 = vrot.slane %v1074, 7
  %v1395 = vrot.slane %v1394, 2
  %v1396 = vrot.slane %v1082, 7
  %v1397 = vrot.slane %v1396, 2
  %v1398 = vrot.slane %v1081, 7
  %v1399 = vrot.slane %v1398, 2
  %v1400 = vrot.slane %v1083, 7
  %v1401 = vrot.slane %v1400, 2
  %v1402 = vrot.slane %v1091, 7
  %v1403 = vrot.slane %v1402, 2
  %v1404 = vrot.slane %v1099, 7
  %v1405 = vrot.slane %v1404, 2
  %v1406 = vrot.slane %v1098, 7
  %v1407 = vrot.slane %v1406, 2
  %v1408 = vrot.slane %v1100, 7
  %v1409 = vrot.slane %v1408, 2
  %v1410 = vrot.slane %v1108, 7
  %v1411 = vrot.slane %v1410, 2
  %v1412 = vrot.slane %v1116, 7
  %v1413 = vrot.slane %v1412, 2
  %v1414 = vrot.slane %v1115, 7
  %v1415 = vrot.slane %v1414, 2
  %v1416 = vrot.slane %v1117, 7
  %v1417 = vrot.slane %v1416, 2
  %v1418 = vrot.slane %v1125, 7
  %v1419 = vrot.slane %v1418, 2
  %v1420 = vrot.slane %v1133, 7
  %v1421 = vrot.slane %v1420, 2
  %v1422 = vrot.slane %v1132, 7
  %v1423 = vrot.slane %v1422, 2
  %v1424 = vrot.slane %v1134, 7
  %v1425 = vrot.slane %v1424, 2
  %v1426 = vrot.slane %v1142, 7
  %v1427 = vrot.slane %v1426, 2
  %v1428 = vrot.slane %v1150, 7
  %v1429 = vrot.slane %v1428, 2
  %v1430 = vrot.slane %v1149, 7
  %v1431 = vrot.slane %v1430, 2
  %v1432 = vrot.slane %v1151, 7
  %v1433 = vrot.slane %v1432, 2
  %v1434 = vrot.slane %v1159, 7
  %v1435 = vrot.slane %v1434, 2
  %v1436 = vrot.slane %v1167, 7
  %v1437 = vrot.slane %v1436, 2
  %v1438 = vrot.slane %v1166, 7
  %v1439 = vrot.slane %v1438, 2
  %v1440 = vrot.slane %v1168, 7
  %v1441 = vrot.slane %v1440, 2
  %v1442 = vrot.slane %v1176, 7
  %v1443 = vrot.slane %v1442, 2
  %v1444 = vrot.slane %v1184, 7
  %v1445 = vrot.slane %v1444, 2
  %v1446 = vrot.slane %v1183, 7
  %v1447 = vrot.slane %v1446, 2
  %v1448 = vrot.slane %v1185, 7
  %v1449 = vrot.slane %v1448, 2
  %v1450 = vrot.slane %v1193, 7
  %v1451 = vrot.slane %v1450, 2
  %v1452 = vrot.slane %v1201, 7
  %v1453 = vrot.slane %v1452, 2
  %v1454 = vrot.slane %v1200, 7
  %v1455 = vrot.slane %v1454, 2
  %v1456 = vrot.slane %v1202, 7
  %v1457 = vrot.slane %v1456, 2
  %v1458 = vrot.slane %v1210, 7
  %v1459 = vrot.slane %v1458, 2
  %v1460 = vrot.slane %v1218, 7
  %v1461 = vrot.slane %v1460, 2
  %v1462 = vrot.slane %v1217, 7
  %v1463 = vrot.slane %v1462, 2
  %v1464 = vrot.slane %v1219, 7
  %v1465 = vrot.slane %v1464, 2
  %v1466 = vrot.slane %v1227, 7
  %v1467 = vrot.slane %v1466, 2
  %v1468 = vrot.slane %v1235, 7
  %v1469 = vrot.slane %v1468, 2
  %v1470 = vrot.slane %v1234, 7
  %v1471 = vrot.slane %v1470, 2
  %v1472 = vrot.slane %v1236, 7
  %v1473 = vrot.slane %v1472, 2
  %v1474 = vrot.slane %v1244, 7
  %v1475 = vrot.slane %v1474, 2
  %v1476 = vrot.slane %v1252, 7
  %v1477 = vrot.slane %v1476, 2
  %v1478 = vrot.slane %v1251, 7
  %v1479 = vrot.slane %v1478, 2
  %v1480 = vrot.slane %v1253, 7
  %v1481 = vrot.slane %v1480, 2
  %v1482 = vrot.slane %v1261, 7
  %v1483 = vrot.slane %v1482, 2
  %v1484 = vrot.slane %v1269, 7
  %v1485 = vrot.slane %v1484, 2
  %v1486 = vrot.slane %v1268, 7
  %v1487 = vrot.slane %v1486, 2
  %v1488 = vrot.slane %v1270, 7
  %v1489 = vrot.slane %v1488, 2
  %v1490 = vrot.slane %v1278, 7
  %v1491 = vrot.slane %v1490, 2
  %v1492 = vrot.slane %v1286, 7
  %v1493 = vrot.slane %v1492, 2
  %v1494 = vrot.slane %v1285, 7
  %v1495 = vrot.slane %v1494, 2
  %v1496 = vrot.slane %v1287, 7
  %v1497 = vrot.slane %v1496, 2
  %v1498 = vrot.slane %v1295, 7
  %v1499 = vrot.slane %v1498, 2
  %v1500 = vrot.slane %v1303, 7
  %v1501 = vrot.slane %v1500, 2
  %v1502 = vrot.slane %v1302, 7
  %v1503 = vrot.slane %v1502, 2
  %v1504 = vrot.slane %v1304, 7
  %v1505 = vrot.slane %v1504, 2
  %v1506 = vrot.slane %v1312, 7
  %v1507 = vrot.slane %v1506, 2
  %v1508 = vrot.slane %v1320, 7
  %v1509 = vrot.slane %v1508, 2
  %v1510 = vrot.slane %v1319, 7
  %v1511 = vrot.slane %v1510, 2
  %v1512 = vrot.slane %v1321, 7
  %v1513 = vrot.slane %v1512, 2
  %v1578 = vadd.f32 %v1057, %v1387
  %v1579 = vadd.f32 %v1065, %v1389
  %v1580 = vadd.f32 %v1064, %v1391
  %v1581 = vadd.f32 %v1066, %v1393
  %v1582 = vadd.f32 %v1074, %v1395
  %v1583 = vadd.f32 %v1082, %v1397
  %v1584 = vadd.f32 %v1081, %v1399
  %v1585 = vadd.f32 %v1083, %v1401
  %v1586 = vadd.f32 %v1091, %v1403
  %v1587 = vadd.f32 %v1099, %v1405
  %v1588 = vadd.f32 %v1098, %v1407
  %v1589 = vadd.f32 %v1100, %v1409
  %v1590 = vadd.f32 %v1108, %v1411
  %v1591 = vadd.f32 %v1116, %v1413
  %v1592 = vadd.f32 %v1115, %v1415
  %v1593 = vadd.f32 %v1117, %v1417
  %v1594 = vadd.f32 %v1125, %v1419
  %v1595 = vadd.f32 %v1133, %v1421
  %v1596 = vadd.f32 %v1132, %v1423
  %v1597 = vadd.f32 %v1134, %v1425
  %v1598 = vadd.f32 %v1142, %v1427
  %v1599 = vadd.f32 %v1150, %v1429
  %v1600 = vadd.f32 %v1149, %v1431
  %v1601 = vadd.f32 %v1151, %v1433
  %v1602 = vadd.f32 %v1159, %v1435
  %v1603 = vadd.f32 %v1167, %v1437
  %v1604 = vadd.f32 %v1166, %v1439
  %v1605 = vadd.f32 %v1168, %v1441
  %v1606 = vadd.f32 %v1176, %v1443
  %v1607 = vadd.f32 %v1184, %v1445
  %v1608 = vadd.f32 %v1183, %v1447
  %v1609 = vadd.f32 %v1185, %v1449
  %v1610 = vadd.f32 %v1193, %v1451
  %v1611 = vadd.f32 %v1201, %v1453
  %v1612 = vadd.f32 %v1200, %v1455
  %v1613 = vadd.f32 %v1202, %v1457
  %v1614 = vadd.f32 %v1210, %v1459
  %v1615 = vadd.f32 %v1218, %v1461
  %v1616 = vadd.f32 %v1217, %v1463
  %v1617 = vadd.f32 %v1219, %v1465
  %v1618 = vadd.f32 %v1227, %v1467
  %v1619 = vadd.f32 %v1235, %v1469
  %v1620 = vadd.f32 %v1234, %v1471
  %v1621 = vadd.f32 %v1236, %v1473
  %v1622 = vadd.f32 %v1244, %v1475
  %v1623 = vadd.f32 %v1252, %v1477
  %v1624 = vadd.f32 %v1251, %v1479
  %v1625 = vadd.f32 %v1253, %v1481
  %v1626 = vadd.f32 %v1261, %v1483
  %v1627 = vadd.f32 %v1269, %v1485
  %v1628 = vadd.f32 %v1268, %v1487
  %v1629 = vadd.f32 %v1270, %v1489
  %v1630 = vadd.f32 %v1278, %v1491
  %v1631 = vadd.f32 %v1286, %v1493
  %v1632 = vadd.f32 %v1285, %v1495
  %v1633 = vadd.f32 %v1287, %v1497
  %v1634 = vadd.f32 %v1295, %v1499
  %v1635 = vadd.f32 %v1303, %v1501
  %v1636 = vadd.f32 %v1302, %v1503
  %v1637 = vadd.f32 %v1304, %v1505
  %v1638 = vadd.f32 %v1312, %v1507
  %v1639 = vadd.f32 %v1320, %v1509
  %v1640 = vadd.f32 %v1319, %v1511
  %v1641 = vadd.f32 %v1321, %v1513
  %v1642 = vadd.f32 %v1578, %v1582
  %v1643 = vadd.f32 %v1579, %v1583
  %v1644 = vadd.f32 %v1580, %v1584
  %v1645 = vadd.f32 %v1581, %v1585
  %v1646 = vadd.f32 %v1586, %v1590
  %v1647 = vadd.f32 %v1587, %v1591
  %v1648 = vadd.f32 %v1588, %v1592
  %v1649 = vadd.f32 %v1589, %v1593
  %v1650 = vadd.f32 %v1594, %v1598
  %v1651 = vadd.f32 %v1595, %v1599
  %v1652 = vadd.f32 %v1596, %v1600
  %v1653 = vadd.f32 %v1597, %v1601
  %v1654 = vadd.f32 %v1602, %v1606
  %v1655 = vadd.f32 %v1603, %v1607
  %v1656 = vadd.f32 %v1604, %v1608
  %v1657 = vadd.f32 %v1605, %v1609
  %v1658 = vadd.f32 %v1610, %v1614
  %v1659 = vadd.f32 %v1611, %v1615
  %v1660 = vadd.f32 %v1612, %v1616
  %v1661 = vadd.f32 %v1613, %v1617
  %v1662 = vadd.f32 %v1618, %v1622
  %v1663 = vadd.f32 %v1619, %v1623
  %v1664 = vadd.f32 %v1620, %v1624
  %v1665 = vadd.f32 %v1621, %v1625
  %v1666 = vadd.f32 %v1626, %v1630
  %v1667 = vadd.f32 %v1627, %v1631
  %v1668 = vadd.f32 %v1628, %v1632
  %v1669 = vadd.f32 %v1629, %v1633
  %v1670 = vadd.f32 %v1634, %v1638
  %v1671 = vadd.f32 %v1635, %v1639
  %v1672 = vadd.f32 %v1636, %v1640
  %v1673 = vadd.f32 %v1637, %v1641
  %v1674 = vmul.f32 %v1642, 0.25
  %v1675 = vmul.f32 %v1643, 0.25
  %v1676 = vmul.f32 %v1644, 0.25
  %v1677 = vmul.f32 %v1645, 0.25
  %v1678 = vmul.f32 %v1646, 0.25
  %v1679 = vmul.f32 %v1647, 0.25
  %v1680 = vmul.f32 %v1648, 0.25
  %v1681 = vmul.f32 %v1649, 0.25
  %v1682 = vmul.f32 %v1650, 0.25
  %v1683 = vmul.f32 %v1651, 0.25
  %v1684 = vmul.f32 %v1652, 0.25
  %v1685 = vmul.f32 %v1653, 0.25
  %v1686 = vmul.f32 %v1654, 0.25
  %v1687 = vmul.f32 %v1655, 0.25
  %v1688 = vmul.f32 %v1656, 0.25
  %v1689 = vmul.f32 %v1657, 0.25
  %v1690 = vmul.f32 %v1658, 0.25
  %v1691 = vmul.f32 %v1659, 0.25
  %v1692 = vmul.f32 %v1660, 0.25
  %v1693 = vmul.f32 %v1661, 0.25
  %v1694 = vmul.f32 %v1662, 0.25
  %v1695 = vmul.f32 %v1663, 0.25
  %v1696 = vmul.f32 %v1664, 0.25
  %v1697 = vmul.f32 %v1665, 0.25
  %v1698 = vmul.f32 %v1666, 0.25
  %v1699 = vmul.f32 %v1667, 0.25
  %v1700 = vmul.f32 %v1668, 0.25
  %v1701 = vmul.f32 %v1669, 0.25
  %v1702 = vmul.f32 %v1670, 0.25
  %v1703 = vmul.f32 %v1671, 0.25
  %v1704 = vmul.f32 %v1672, 0.25
  %v1705 = vmul.f32 %v1673, 0.25
  %v1738 = vlaneseq
  %v1739 = vshrl.u32 %v1738, 7
  %v1740 = vsub.s32 0, %v1739
  %v1741 = vrot.slane %v1674, %v1740
  %v1742 = vlaneseq
  %v1743 = vshrl.u32 %v1742, 7
  %v1744 = vsub.s32 0, %v1743
  %v1745 = vrot.slane %v1675, %v1744
  %v1746 = vlaneseq
  %v1747 = vshrl.u32 %v1746, 7
  %v1748 = vsub.s32 0, %v1747
  %v1749 = vrot.slane %v1676, %v1748
  %v1750 = vlaneseq
  %v1751 = vshrl.u32 %v1750, 7
  %v1752 = vsub.s32 0, %v1751
  %v1753 = vrot.slane %v1677, %v1752
  %v1754 = vlaneseq
  %v1755 = vshrl.u32 %v1754, 7
  %v1756 = vsub.s32 0, %v1755
  %v1757 = vrot.slane %v1678, %v1756
  %v1758 = vlaneseq
  %v1759 = vshrl.u32 %v1758, 7
  %v1760 = vsub.s32 0, %v1759
  %v1761 = vrot.slane %v1679, %v1760
  %v1762 = vlaneseq
  %v1763 = vshrl.u32 %v1762, 7
  %v1764 = vsub.s32 0, %v1763
  %v1765 = vrot.slane %v1680, %v1764
  %v1766 = vlaneseq
  %v1767 = vshrl.u32 %v1766, 7
  %v1768 = vsub.s32 0, %v1767
  %v1769 = vrot.slane %v1681, %v1768
  %v1770 = vlaneseq
  %v1771 = vshrl.u32 %v1770, 7
  %v1772 = vsub.s32 0, %v1771
  %v1773 = vrot.slane %v1682, %v1772
  %v1774 = vlaneseq
  %v1775 = vshrl.u32 %v1774, 7
  %v1776 = vsub.s32 0, %v1775
  %v1777 = vrot.slane %v1683, %v1776
  %v1778 = vlaneseq
  %v1779 = vshrl.u32 %v1778, 7
  %v1780 = vsub.s32 0, %v1779
  %v1781 = vrot.slane %v1684, %v1780
  %v1782 = vlaneseq
  %v1783 = vshrl.u32 %v1782, 7
  %v1784 = vsub.s32 0, %v1783
  %v1785 = vrot.slane %v1685, %v1784
  %v1786 = vlaneseq
  %v1787 = vshrl.u32 %v1786, 7
  %v1788 = vsub.s32 0, %v1787
  %v1789 = vrot.slane %v1686, %v1788
  %v1790 = vlaneseq
  %v1791 = vshrl.u32 %v1790, 7
  %v1792 = vsub.s32 0, %v1791
  %v1793 = vrot.slane %v1687, %v1792
  %v1794 = vlaneseq
  %v1795 = vshrl.u32 %v1794, 7
  %v1796 = vsub.s32 0, %v1795
  %v1797 = vrot.slane %v1688, %v1796
  %v1798 = vlaneseq
  %v1799 = vshrl.u32 %v1798, 7
  %v1800 = vsub.s32 0, %v1799
  %v1801 = vrot.slane %v1689, %v1800
  %v1802 = vlaneseq
  %v1803 = vshrl.u32 %v1802, 7
  %v1804 = vsub.s32 0, %v1803
  %v1805 = vrot.slane %v1690, %v1804
  %v1806 = vlaneseq
  %v1807 = vshrl.u32 %v1806, 7
  %v1808 = vsub.s32 0, %v1807
  %v1809 = vrot.slane %v1691, %v1808
  %v1810 = vlaneseq
  %v1811 = vshrl.u32 %v1810, 7
  %v1812 = vsub.s32 0, %v1811
  %v1813 = vrot.slane %v1692, %v1812
  %v1814 = vlaneseq
  %v1815 = vshrl.u32 %v1814, 7
  %v1816 = vsub.s32 0, %v1815
  %v1817 = vrot.slane %v1693, %v1816
  %v1818 = vlaneseq
  %v1819 = vshrl.u32 %v1818, 7
  %v1820 = vsub.s32 0, %v1819
  %v1821 = vrot.slane %v1694, %v1820
  %v1822 = vlaneseq
  %v1823 = vshrl.u32 %v1822, 7
  %v1824 = vsub.s32 0, %v1823
  %v1825 = vrot.slane %v1695, %v1824
  %v1826 = vlaneseq
  %v1827 = vshrl.u32 %v1826, 7
  %v1828 = vsub.s32 0, %v1827
  %v1829 = vrot.slane %v1696, %v1828
  %v1830 = vlaneseq
  %v1831 = vshrl.u32 %v1830, 7
  %v1832 = vsub.s32 0, %v1831
  %v1833 = vrot.slane %v1697, %v1832
  %v1834 = vlaneseq
  %v1835 = vshrl.u32 %v1834, 7
  %v1836 = vsub.s32 0, %v1835
  %v1837 = vrot.slane %v1698, %v1836
  %v1838 = vlaneseq
  %v1839 = vshrl.u32 %v1838, 7
  %v1840 = vsub.s32 0, %v1839
  %v1841 = vrot.slane %v1699, %v1840
  %v1842 = vlaneseq
  %v1843 = vshrl.u32 %v1842, 7
  %v1844 = vsub.s32 0, %v1843
  %v1845 = vrot.slane %v1700, %v1844
  %v1846 = vlaneseq
  %v1847 = vshrl.u32 %v1846, 7
  %v1848 = vsub.s32 0, %v1847
  %v1849 = vrot.slane %v1701, %v1848
  %v1850 = vlaneseq
  %v1851 = vshrl.u32 %v1850, 7
  %v1852 = vsub.s32 0, %v1851
  %v1853 = vrot.slane %v1702, %v1852
  %v1854 = vlaneseq
  %v1855 = vshrl.u32 %v1854, 7
  %v1856 = vsub.s32 0, %v1855
  %v1857 = vrot.slane %v1703, %v1856
  %v1858 = vlaneseq
  %v1859 = vshrl.u32 %v1858, 7
  %v1860 = vsub.s32 0, %v1859
  %v1861 = vrot.slane %v1704, %v1860
  %v1862 = vlaneseq
  %v1863 = vshrl.u32 %v1862, 7
  %v1864 = vsub.s32 0, %v1863
  %v1865 = vrot.slane %v1705, %v1864
  %vm1866 = vcmask 1041409
  %v1867 = vsel %vm1866, %v1745, %v1741
  %vm1868 = vcmask 1042434
  %v1869 = vsel %vm1868, %v1749, %v1867
  %vm1870 = vcmask 1043459
  %v1871 = vsel %vm1870, %v1753, %v1869
  %v1872 = vsel %vm1866, %v1761, %v1757
  %v1873 = vsel %vm1868, %v1765, %v1872
  %v1874 = vsel %vm1870, %v1769, %v1873
  %v1875 = vsel %vm1866, %v1777, %v1773
  %v1876 = vsel %vm1868, %v1781, %v1875
  %v1877 = vsel %vm1870, %v1785, %v1876
  %v1878 = vsel %vm1866, %v1793, %v1789
  %v1879 = vsel %vm1868, %v1797, %v1878
  %v1880 = vsel %vm1870, %v1801, %v1879
  %v1881 = vsel %vm1866, %v1809, %v1805
  %v1882 = vsel %vm1868, %v1813, %v1881
  %v1883 = vsel %vm1870, %v1817, %v1882
  %v1884 = vsel %vm1866, %v1825, %v1821
  %v1885 = vsel %vm1868, %v1829, %v1884
  %v1886 = vsel %vm1870, %v1833, %v1885
  %v1887 = vsel %vm1866, %v1841, %v1837
  %v1888 = vsel %vm1868, %v1845, %v1887
  %v1889 = vsel %vm1870, %v1849, %v1888
  %v1890 = vsel %vm1866, %v1857, %v1853
  %v1891 = vsel %vm1868, %v1861, %v1890
  %v1892 = vsel %vm1870, %v1865, %v1891
  %vm1901 = vcmask 650240
  %1902 = vst.msk [vmem:[%s3] sm:$0xf] %vm1901, %v1871
  %1903 = vst.msk [vmem:[%s3 + $0x4] sm:$0xf] %vm1901, %v1874
  %1904 = vst.msk [vmem:[%s3 + $0x8] sm:$0xf] %vm1901, %v1877
  %1905 = vst.msk [vmem:[%s3 + $0xc] sm:$0xf] %vm1901, %v1880
  %1906 = vst.msk [vmem:[%s3 + $0x10] sm:$0xf] %vm1901, %v1883
  %1907 = vst.msk [vmem:[%s3 + $0x14] sm:$0xf] %vm1901, %v1886
  %1908 = vst.msk [vmem:[%s3 + $0x18] sm:$0xf] %vm1901, %v1889
  %1909 = vst.msk [vmem:[%s3 + $0x1c] sm:$0xf] %vm1901, %v1892
  // Predicated region
  $region14: #{grad_splitter_forward.4} parent=0 // pred_check
    _
  $region15: #{grad_splitter_forward.4} parent=0 // pred_check_branch
    %1911 = sbr.rel (0) target = $region17
  $region16: #{grad_splitter_forward.4} parent=0 // pred_region
    _
  $region17: #{grad_splitter_forward.4} parent=0 // pred_fallthru
    _
  // Predicated region
  $region18: #{grad_splitter_forward.4} parent=0 // pred_check
    _
  $region19: #{grad_splitter_forward.4} parent=0 // pred_check_branch
    %1913 = sbr.rel (0) target = $region21
  $region20: #{grad_splitter_forward.4} parent=0 // pred_region
    _
  $region21: #{grad_splitter_forward.4} parent=0 // pred_fallthru
    _

// kernel: tile.18
$region0: #{tile.18}
  #allocation0 [shape = 's32[1]{0}', space=sflag, size = 0x4, scoped, tag = 'scoped memory for tile.18']
  %s0 = inlined_call_operand.vmem [shape: f32[5], index: 0, kind: input, shape index: {}]
  %s1 = inlined_call_operand.vmem [shape: f32[5,5], index: 1, kind: output, shape index: {}]
  // Predicated region
  $region2: #{tile.18} parent=0 // pred_check
    _
  $region3: #{tile.18} parent=0 // pred_check_branch
    %3 = sbr.rel (0) target = $region5
  $region4: #{tile.18} parent=0 // pred_region
    _
  $region5: #{tile.18} parent=0 // pred_fallthru
    _
  %v4 = vld [vmem:[%s0] ss:$0 sm:$0xff]
  %5 = vst [vmem:[%s1] sm:$0xff] %v4

// kernel: tile.19
$region0: #{tile.19}
  %s0 = inlined_call_operand.vmem [shape: f32[5,5], index: 0, kind: input, shape index: {}]
  %s1 = inlined_call_operand.vmem [shape: f32[1,25], index: 1, kind: output, shape index: {}]
  $region1: #{tile.19} parent=0
    #allocation0 [shape = 'u8[4096]{0}', space=vmem, size = 0x1000, scoped, tag = 'scoped mem for output reshape']
    %v2 = vld [vmem:[%s0] sm:$0x1]
    %vm3 = vcmask 39936
    %4 = vst.msk [vmem:[#allocation0] sm:$0x1] %vm3, %v2
    %s5 = scalar_lea.vmem %s0, 4
    %v6 = vld [vmem:[%s5] sm:$0x1]
    %7 = vrot.lane.b32.xlu0 %v6, 20
    %v8 = vpop.permute.xlu0 %7
    %vm9 = vcmask 203936
    %10 = vst.msk [vmem:[#allocation0] sm:$0x1] %vm9, %v8
    %s11 = scalar_lea.vmem %s0, 3
    %v12 = vld [vmem:[%s11] sm:$0x1]
    %13 = vrot.lane.b32.xlu0 %v12, 15
    %v14 = vpop.permute.xlu0 %13
    %vm15 = vcmask 162936
    %16 = vst.msk [vmem:[#allocation0] sm:$0x1] %vm15, %v14
    %s17 = scalar_lea.vmem %s0, 2
    %v18 = vld [vmem:[%s17] sm:$0x1]
    %19 = vrot.lane.b32.xlu0 %v18, 10
    %v20 = vpop.permute.xlu0 %19
    %vm21 = vcmask 121936
    %22 = vst.msk [vmem:[#allocation0] sm:$0x1] %vm21, %v20
    %s23 = scalar_lea.vmem %s0, 1
    %v24 = vld [vmem:[%s23] sm:$0x1]
    %25 = vrot.lane.b32.xlu0 %v24, 5
    %v26 = vpop.permute.xlu0 %25
    %vm27 = vcmask 80936
    %28 = vst.msk [vmem:[#allocation0] sm:$0x1] %vm27, %v26
    %s30 = sshllo.u32 0, 1
    %v32 = vld [vmem:[#allocation0] sm:%s30]
    %s33 = sshllo.u32 0, 1
    %34 = vst [vmem:[%s1] sm:%s33] %v32

// kernel: grad_splitter_forward.5
$region0: #{grad_splitter_forward.5}
  #allocation0 [shape = 'u32[]', space=smem, size = 0x4, offset = 0x4, fixed_abs, tag = 'smem constant byte address 0x4 - core index']
  #allocation1 [shape = 'u32[144,128]{1,0:T(1,128)}', space=vmem, size = 0x12000, scoped, tag = 'internal scratch']
  %s0 = inlined_call_operand.vmem [shape: f32[2,1280], index: 0, kind: input, shape index: {}]
  %s1 = inlined_call_operand.vmem [shape: f32[1280,25], index: 1, kind: input, shape index: {}]
  %s2 = inlined_call_operand.vmem [shape: f32[1,25], index: 2, kind: input, shape index: {}]
  %s3 = inlined_call_operand.vmem [shape: f32[25,50], index: 3, kind: input, shape index: {}]
  %s4 = inlined_call_operand.vmem [shape: f32[1,50], index: 4, kind: input, shape index: {}]
  %s5 = inlined_call_operand.vmem [shape: f32[50,5], index: 5, kind: input, shape index: {}]
  %s6 = inlined_call_operand.vmem [shape: f32[1,5], index: 6, kind: input, shape index: {}]
  %s7 = inlined_call_operand.hbm [shape: f32[2,5], index: 7, kind: output, shape index: {}]
  %s8 = sld [smem:[#allocation0]]
  $region38: #{grad_splitter_forward.5} parent=0
    _
  %s10 = ssub.s32 1, %s8
  %s11 = scalar_select 0, %s10, %s8
  $region1: #{grad_splitter_forward.5} parent=0
    #allocation2 [shape = 'u8[1024]{0}', space=vmem, size = 0x400, scoped, tag = 'output window, operand 0, single buffered']
    #allocation3 [shape = 's32[1]{0}', space=sflag, size = 0x4, scoped, tag = 'scoped memory for grad_splitter_forward.5']
    %12 = vsyncpa [#allocation3], 0
    // Predicated region
    $region2: #{grad_splitter_forward.5} parent=1 // pred_check
      _
    $region3: #{grad_splitter_forward.5} parent=1 // pred_check_branch
      %14 = sbr.rel (0) target = $region5
    $region4: #{grad_splitter_forward.5} parent=1 // pred_region
      _
    $region5: #{grad_splitter_forward.5} parent=1 // pred_fallthru
      _
    // Predicated region
    $region6: #{grad_splitter_forward.5} parent=1 // pred_check
      _
    $region7: #{grad_splitter_forward.5} parent=1 // pred_check_branch
      %16 = sbr.rel (0) target = $region9
    $region8: #{grad_splitter_forward.5} parent=1 // pred_region
      _
    $region9: #{grad_splitter_forward.5} parent=1 // pred_fallthru
      _
    // Predicated region
    $region10: #{grad_splitter_forward.5} parent=1 // pred_check
      _
    $region11: #{grad_splitter_forward.5} parent=1 // pred_check_branch
      %18 = sbr.rel (0) target = $region13
    $region12: #{grad_splitter_forward.5} parent=1 // pred_region
      _
    $region13: #{grad_splitter_forward.5} parent=1 // pred_fallthru
      _
    // Predicated region
    $region14: #{grad_splitter_forward.5} parent=1 // pred_check
      _
    $region15: #{grad_splitter_forward.5} parent=1 // pred_check_branch
      %20 = sbr.rel (0) target = $region17
    $region16: #{grad_splitter_forward.5} parent=1 // pred_region
      _
    $region17: #{grad_splitter_forward.5} parent=1 // pred_fallthru
      _
    // Predicated region
    $region18: #{grad_splitter_forward.5} parent=1 // pred_check
      _
    $region19: #{grad_splitter_forward.5} parent=1 // pred_check_branch
      %22 = sbr.rel (0) target = $region21
    $region20: #{grad_splitter_forward.5} parent=1 // pred_region
      _
    $region21: #{grad_splitter_forward.5} parent=1 // pred_fallthru
      _
    // Predicated region
    $region22: #{grad_splitter_forward.5} parent=1 // pred_check
      _
    $region23: #{grad_splitter_forward.5} parent=1 // pred_check_branch
      %24 = sbr.rel (0) target = $region25
    $region24: #{grad_splitter_forward.5} parent=1 // pred_region
      _
    $region25: #{grad_splitter_forward.5} parent=1 // pred_fallthru
      _
    // Predicated region
    $region26: #{grad_splitter_forward.5} parent=1 // pred_check
      _
    $region27: #{grad_splitter_forward.5} parent=1 // pred_check_branch
      %26 = sbr.rel (0) target = $region29
    $region28: #{grad_splitter_forward.5} parent=1 // pred_region
      _
    $region29: #{grad_splitter_forward.5} parent=1 // pred_fallthru
      _
    %v27 = vld [vmem:[%s0] sm:$0xff]
    %v28 = vld [vmem:[%s0 + $0x8] sm:$0xff]
    %v29 = vld [vmem:[%s0 + $0x10] sm:$0xf]
    %v30 = vld [vmem:[%s1] sm:$0xff]
    %v31 = vld [vmem:[%s1 + $0x8] sm:$0xff]
    %v32 = vld [vmem:[%s1 + $0x10] sm:$0xff]
    %v33 = vld [vmem:[%s1 + $0x18] sm:$0xff]
    %v34 = vld [vmem:[%s1 + $0x20] sm:$0xff]
    %v35 = vld [vmem:[%s1 + $0x28] sm:$0xff]
    %v36 = vld [vmem:[%s1 + $0x30] sm:$0xff]
    %v37 = vld [vmem:[%s1 + $0x38] sm:$0xff]
    %v38 = vld [vmem:[%s1 + $0x40] sm:$0xff]
    %v39 = vld [vmem:[%s1 + $0x48] sm:$0xff]
    %v40 = vld [vmem:[%s1 + $0x50] sm:$0xff]
    %v41 = vld [vmem:[%s1 + $0x58] sm:$0xff]
    %v42 = vld [vmem:[%s1 + $0x60] sm:$0xff]
    %v43 = vld [vmem:[%s1 + $0x68] sm:$0xff]
    %v44 = vld [vmem:[%s1 + $0x70] sm:$0xff]
    %v45 = vld [vmem:[%s1 + $0x78] sm:$0xff]
    %v46 = vld [vmem:[%s1 + $0x80] sm:$0xff]
    %v47 = vld [vmem:[%s1 + $0x88] sm:$0xff]
    %v48 = vld [vmem:[%s1 + $0x90] sm:$0xff]
    %v49 = vld [vmem:[%s1 + $0x98] sm:$0xff]
    %v50 = vld [vmem:[%s1 + $0xa0] sm:$0xff]
    %v51 = vld [vmem:[%s1 + $0xa8] sm:$0xff]
    %v52 = vld [vmem:[%s1 + $0xb0] sm:$0xff]
    %v53 = vld [vmem:[%s1 + $0xb8] sm:$0xff]
    %v54 = vld [vmem:[%s1 + $0xc0] sm:$0xff]
    %v55 = vld [vmem:[%s1 + $0xc8] sm:$0xff]
    %v56 = vld [vmem:[%s1 + $0xd0] sm:$0xff]
    %v57 = vld [vmem:[%s1 + $0xd8] sm:$0xff]
    %v58 = vld [vmem:[%s1 + $0xe0] sm:$0xff]
    %v59 = vld [vmem:[%s1 + $0xe8] sm:$0xff]
    %v60 = vld [vmem:[%s1 + $0xf0] sm:$0xff]
    %v61 = vld [vmem:[%s1 + $0xf8] sm:$0xff]
    %v62 = vld [vmem:[%s1 + $0x100] sm:$0xff]
    %v63 = vld [vmem:[%s1 + $0x108] sm:$0xff]
    %v64 = vld [vmem:[%s1 + $0x110] sm:$0xff]
    %v65 = vld [vmem:[%s1 + $0x118] sm:$0xff]
    %v66 = vld [vmem:[%s1 + $0x120] sm:$0xff]
    %v67 = vld [vmem:[%s1 + $0x128] sm:$0xff]
    %v68 = vld [vmem:[%s1 + $0x130] sm:$0xff]
    %v69 = vld [vmem:[%s1 + $0x138] sm:$0xff]
    %v70 = vld [vmem:[%s1 + $0x140] sm:$0xff]
    %v71 = vld [vmem:[%s1 + $0x148] sm:$0xff]
    %v72 = vld [vmem:[%s1 + $0x150] sm:$0xff]
    %v73 = vld [vmem:[%s1 + $0x158] sm:$0xff]
    %v74 = vld [vmem:[%s1 + $0x160] sm:$0xff]
    %v75 = vld [vmem:[%s1 + $0x168] sm:$0xff]
    %v76 = vld [vmem:[%s1 + $0x170] sm:$0xff]
    %v77 = vld [vmem:[%s1 + $0x178] sm:$0xff]
    %v78 = vld [vmem:[%s1 + $0x180] sm:$0xff]
    %v79 = vld [vmem:[%s1 + $0x188] sm:$0xff]
    %v80 = vld [vmem:[%s1 + $0x190] sm:$0xff]
    %v81 = vld [vmem:[%s1 + $0x198] sm:$0xff]
    %v82 = vld [vmem:[%s1 + $0x1a0] sm:$0xff]
    %v83 = vld [vmem:[%s1 + $0x1a8] sm:$0xff]
    %v84 = vld [vmem:[%s1 + $0x1b0] sm:$0xff]
    %v85 = vld [vmem:[%s1 + $0x1b8] sm:$0xff]
    %v86 = vld [vmem:[%s1 + $0x1c0] sm:$0xff]
    %v87 = vld [vmem:[%s1 + $0x1c8] sm:$0xff]
    %v88 = vld [vmem:[%s1 + $0x1d0] sm:$0xff]
    %v89 = vld [vmem:[%s1 + $0x1d8] sm:$0xff]
    %v90 = vld [vmem:[%s1 + $0x1e0] sm:$0xff]
    %v91 = vld [vmem:[%s1 + $0x1e8] sm:$0xff]
    %v92 = vld [vmem:[%s1 + $0x1f0] sm:$0xff]
    %v93 = vld [vmem:[%s1 + $0x1f8] sm:$0xff]
    %v94 = vld [vmem:[%s1 + $0x200] sm:$0xff]
    %v95 = vld [vmem:[%s1 + $0x208] sm:$0xff]
    %v96 = vld [vmem:[%s1 + $0x210] sm:$0xff]
    %v97 = vld [vmem:[%s1 + $0x218] sm:$0xff]
    %v98 = vld [vmem:[%s1 + $0x220] sm:$0xff]
    %v99 = vld [vmem:[%s1 + $0x228] sm:$0xff]
    %v100 = vld [vmem:[%s1 + $0x230] sm:$0xff]
    %v101 = vld [vmem:[%s1 + $0x238] sm:$0xff]
    %v102 = vld [vmem:[%s1 + $0x240] sm:$0xff]
    %v103 = vld [vmem:[%s1 + $0x248] sm:$0xff]
    %v104 = vld [vmem:[%s1 + $0x250] sm:$0xff]
    %v105 = vld [vmem:[%s1 + $0x258] sm:$0xff]
    %v106 = vld [vmem:[%s1 + $0x260] sm:$0xff]
    %v107 = vld [vmem:[%s1 + $0x268] sm:$0xff]
    %v108 = vld [vmem:[%s1 + $0x270] sm:$0xff]
    %v109 = vld [vmem:[%s1 + $0x278] sm:$0xff]
    %v110 = vld [vmem:[%s1 + $0x280] sm:$0xff]
    %v111 = vld [vmem:[%s1 + $0x288] sm:$0xff]
    %v112 = vld [vmem:[%s1 + $0x290] sm:$0xff]
    %v113 = vld [vmem:[%s1 + $0x298] sm:$0xff]
    %v114 = vld [vmem:[%s1 + $0x2a0] sm:$0xff]
    %v115 = vld [vmem:[%s1 + $0x2a8] sm:$0xff]
    %v116 = vld [vmem:[%s1 + $0x2b0] sm:$0xff]
    %v117 = vld [vmem:[%s1 + $0x2b8] sm:$0xff]
    %v118 = vld [vmem:[%s1 + $0x2c0] sm:$0xff]
    %v119 = vld [vmem:[%s1 + $0x2c8] sm:$0xff]
    %v120 = vld [vmem:[%s1 + $0x2d0] sm:$0xff]
    %v121 = vld [vmem:[%s1 + $0x2d8] sm:$0xff]
    %v122 = vld [vmem:[%s1 + $0x2e0] sm:$0xff]
    %v123 = vld [vmem:[%s1 + $0x2e8] sm:$0xff]
    %v124 = vld [vmem:[%s1 + $0x2f0] sm:$0xff]
    %v125 = vld [vmem:[%s1 + $0x2f8] sm:$0xff]
    %v126 = vld [vmem:[%s1 + $0x300] sm:$0xff]
    %v127 = vld [vmem:[%s1 + $0x308] sm:$0xff]
    %v128 = vld [vmem:[%s1 + $0x310] sm:$0xff]
    %v129 = vld [vmem:[%s1 + $0x318] sm:$0xff]
    %v130 = vld [vmem:[%s1 + $0x320] sm:$0xff]
    %v131 = vld [vmem:[%s1 + $0x328] sm:$0xff]
    %v132 = vld [vmem:[%s1 + $0x330] sm:$0xff]
    %v133 = vld [vmem:[%s1 + $0x338] sm:$0xff]
    %v134 = vld [vmem:[%s1 + $0x340] sm:$0xff]
    %v135 = vld [vmem:[%s1 + $0x348] sm:$0xff]
    %v136 = vld [vmem:[%s1 + $0x350] sm:$0xff]
    %v137 = vld [vmem:[%s1 + $0x358] sm:$0xff]
    %v138 = vld [vmem:[%s1 + $0x360] sm:$0xff]
    %v139 = vld [vmem:[%s1 + $0x368] sm:$0xff]
    %v140 = vld [vmem:[%s1 + $0x370] sm:$0xff]
    %v141 = vld [vmem:[%s1 + $0x378] sm:$0xff]
    %v142 = vld [vmem:[%s1 + $0x380] sm:$0xff]
    %v143 = vld [vmem:[%s1 + $0x388] sm:$0xff]
    %v144 = vld [vmem:[%s1 + $0x390] sm:$0xff]
    %v145 = vld [vmem:[%s1 + $0x398] sm:$0xff]
    %v146 = vld [vmem:[%s1 + $0x3a0] sm:$0xff]
    %v147 = vld [vmem:[%s1 + $0x3a8] sm:$0xff]
    %v148 = vld [vmem:[%s1 + $0x3b0] sm:$0xff]
    %v149 = vld [vmem:[%s1 + $0x3b8] sm:$0xff]
    %v150 = vld [vmem:[%s1 + $0x3c0] sm:$0xff]
    %v151 = vld [vmem:[%s1 + $0x3c8] sm:$0xff]
    %v152 = vld [vmem:[%s1 + $0x3d0] sm:$0xff]
    %v153 = vld [vmem:[%s1 + $0x3d8] sm:$0xff]
    %v154 = vld [vmem:[%s1 + $0x3e0] sm:$0xff]
    %v155 = vld [vmem:[%s1 + $0x3e8] sm:$0xff]
    %v156 = vld [vmem:[%s1 + $0x3f0] sm:$0xff]
    %v157 = vld [vmem:[%s1 + $0x3f8] sm:$0xff]
    %v158 = vld [vmem:[%s1 + $0x400] sm:$0xff]
    %v159 = vld [vmem:[%s1 + $0x408] sm:$0xff]
    %v160 = vld [vmem:[%s1 + $0x410] sm:$0xff]
    %v161 = vld [vmem:[%s1 + $0x418] sm:$0xff]
    %v162 = vld [vmem:[%s1 + $0x420] sm:$0xff]
    %v163 = vld [vmem:[%s1 + $0x428] sm:$0xff]
    %v164 = vld [vmem:[%s1 + $0x430] sm:$0xff]
    %v165 = vld [vmem:[%s1 + $0x438] sm:$0xff]
    %v166 = vld [vmem:[%s1 + $0x440] sm:$0xff]
    %v167 = vld [vmem:[%s1 + $0x448] sm:$0xff]
    %v168 = vld [vmem:[%s1 + $0x450] sm:$0xff]
    %v169 = vld [vmem:[%s1 + $0x458] sm:$0xff]
    %v170 = vld [vmem:[%s1 + $0x460] sm:$0xff]
    %v171 = vld [vmem:[%s1 + $0x468] sm:$0xff]
    %v172 = vld [vmem:[%s1 + $0x470] sm:$0xff]
    %v173 = vld [vmem:[%s1 + $0x478] sm:$0xff]
    %v174 = vld [vmem:[%s1 + $0x480] sm:$0xff]
    %v175 = vld [vmem:[%s1 + $0x488] sm:$0xff]
    %v176 = vld [vmem:[%s1 + $0x490] sm:$0xff]
    %v177 = vld [vmem:[%s1 + $0x498] sm:$0xff]
    %v178 = vld [vmem:[%s1 + $0x4a0] sm:$0xff]
    %v179 = vld [vmem:[%s1 + $0x4a8] sm:$0xff]
    %v180 = vld [vmem:[%s1 + $0x4b0] sm:$0xff]
    %v181 = vld [vmem:[%s1 + $0x4b8] sm:$0xff]
    %v182 = vld [vmem:[%s1 + $0x4c0] sm:$0xff]
    %v183 = vld [vmem:[%s1 + $0x4c8] sm:$0xff]
    %v184 = vld [vmem:[%s1 + $0x4d0] sm:$0xff]
    %v185 = vld [vmem:[%s1 + $0x4d8] sm:$0xff]
    %v186 = vld [vmem:[%s1 + $0x4e0] sm:$0xff]
    %v187 = vld [vmem:[%s1 + $0x4e8] sm:$0xff]
    %v188 = vld [vmem:[%s1 + $0x4f0] sm:$0xff]
    %v189 = vld [vmem:[%s1 + $0x4f8] sm:$0xff]
    %v190 = vld [vmem:[%s2] sm:$0x1]
    %v192 = vlaneseq
    %v193 = vshrl.u32 %v192, 7
    %v194 = vsub.s32 0, %v193
    %v195 = vrot.slane %v190, %v194
    %v200 = vcombine.high %v27, %v27
    %v202 = vunpack.c.l.s4 1983009808
    %v203 = vunpack.c.0.s8 %v202
    %v204 = vlaneseq
    %v205 = vshrl.u32 %v204, 7
    %v206 = vsub.s32 %v203, %v205
    %v207 = vrot.slane %v27, %v206
    %v209 = vunpack.c.l.s4 1983009808
    %v210 = vunpack.c.0.s8 %v209
    %v211 = vlaneseq
    %v212 = vshrl.u32 %v211, 7
    %v213 = vsub.s32 %v210, %v212
    %v214 = vrot.slane %v200, %v213
    %v215 = vcombine.high %v207, %v207
    %v216 = vcombine.high %v214, %v214
    %v217 = vcombine.high %v28, %v28
    %v219 = vunpack.c.l.s4 1983009808
    %v220 = vunpack.c.0.s8 %v219
    %v221 = vlaneseq
    %v222 = vshrl.u32 %v221, 7
    %v223 = vsub.s32 %v220, %v222
    %v224 = vrot.slane %v28, %v223
    %v226 = vunpack.c.l.s4 1983009808
    %v227 = vunpack.c.0.s8 %v226
    %v228 = vlaneseq
    %v229 = vshrl.u32 %v228, 7
    %v230 = vsub.s32 %v227, %v229
    %v231 = vrot.slane %v217, %v230
    %v232 = vcombine.high %v224, %v224
    %v233 = vcombine.high %v231, %v231
    %v235 = vunpack.c.l.s4 1983009808
    %v236 = vunpack.c.0.s8 %v235
    %v237 = vlaneseq
    %v238 = vshrl.u32 %v237, 7
    %v239 = vsub.s32 %v236, %v238
    %v240 = vrot.slane %v29, %v239
    %v241 = vcombine.high %v240, %v240
    %252 = vmatprep.subr.mxu0 0.0
    %253 = vmatpush1.msra.mxu0 %v30
    %254 = vmatprep.subr.mxu0 0.0
    %255 = vmatpush1.msra.mxu0 %v31
    %256 = vmatprep.subr.mxu0 0.0
    %257 = vmatpush1.msra.mxu0 %v32
    %258 = vmatprep.subr.mxu0 0.0
    %259 = vmatpush1.msra.mxu0 %v33
    %260 = vmatprep.subr.mxu0 0.0
    %261 = vmatpush1.msra.mxu0 %v34
    %262 = vmatprep.subr.mxu0 0.0
    %263 = vmatpush1.msra.mxu0 %v35
    %264 = vmatprep.subr.mxu0 0.0
    %265 = vmatpush1.msra.mxu0 %v36
    %266 = vmatprep.subr.mxu0 0.0
    %267 = vmatpush1.msra.mxu0 %v37
    %268 = vmatprep.subr.mxu0 0.0
    %269 = vmatpush1.msra.mxu0 %v38
    %270 = vmatprep.subr.mxu0 0.0
    %271 = vmatpush1.msra.mxu0 %v39
    %272 = vmatprep.subr.mxu0 0.0
    %273 = vmatpush1.msra.mxu0 %v40
    %274 = vmatprep.subr.mxu0 0.0
    %275 = vmatpush1.msra.mxu0 %v41
    %276 = vmatprep.subr.mxu0 0.0
    %277 = vmatpush1.msra.mxu0 %v42
    %278 = vmatprep.subr.mxu0 0.0
    %279 = vmatpush1.msra.mxu0 %v43
    %280 = vmatprep.subr.mxu0 0.0
    %281 = vmatpush1.msra.mxu0 %v44
    %282 = vmatprep.subr.mxu0 0.0
    %283 = vmatpush1.msra.mxu0 %v45
    %284 = vmatprep.subr.mxu0 0.0
    %285 = vmatpush1.msra.mxu0 %v46
    %286 = vmatprep.subr.mxu0 0.0
    %287 = vmatpush1.msra.mxu0 %v47
    %288 = vmatprep.subr.mxu0 0.0
    %289 = vmatpush1.msra.mxu0 %v48
    %290 = vmatprep.subr.mxu0 0.0
    %291 = vmatpush1.msra.mxu0 %v49
    %292 = vmatprep.subr.mxu0 0.0
    %293 = vmatpush1.msra.mxu0 %v50
    %294 = vmatprep.subr.mxu0 0.0
    %295 = vmatpush1.msra.mxu0 %v51
    %296 = vmatprep.subr.mxu0 0.0
    %297 = vmatpush1.msra.mxu0 %v52
    %298 = vmatprep.subr.mxu0 0.0
    %299 = vmatpush1.msra.mxu0 %v53
    %300 = vmatprep.subr.mxu0 0.0
    %301 = vmatpush1.msra.mxu0 %v54
    %302 = vmatprep.subr.mxu0 0.0
    %303 = vmatpush1.msra.mxu0 %v55
    %304 = vmatprep.subr.mxu0 0.0
    %305 = vmatpush1.msra.mxu0 %v56
    %306 = vmatprep.subr.mxu0 0.0
    %307 = vmatpush1.msra.mxu0 %v57
    %308 = vmatprep.subr.mxu0 0.0
    %309 = vmatpush1.msra.mxu0 %v58
    %310 = vmatprep.subr.mxu0 0.0
    %311 = vmatpush1.msra.mxu0 %v59
    %312 = vmatprep.subr.mxu0 0.0
    %313 = vmatpush1.msra.mxu0 %v60
    %314 = vmatprep.subr.mxu0 0.0
    %315 = vmatpush1.msra.mxu0 %v61
    %316 = vmatprep.mubr.f32.mxu0 %v215
    %317 = vmatmul.mubr.f32.gmra.mrb[0].mxu0 %v207
    %v318 = vpop.f32.mrb[0].mxu0
    %v319 = vadd.f32 %v195, %v318
    %v320 = vpop.f32.mrb[0].mxu0
    %321 = vdwg.mxu0
    %322 = vmatprep.subr.mxu0 0.0
    %323 = vmatpush1.msra.mxu0 %v62
    %324 = vmatprep.subr.mxu0 0.0
    %325 = vmatpush1.msra.mxu0 %v63
    %326 = vmatprep.subr.mxu0 0.0
    %327 = vmatpush1.msra.mxu0 %v64
    %328 = vmatprep.subr.mxu0 0.0
    %329 = vmatpush1.msra.mxu0 %v65
    %330 = vmatprep.subr.mxu0 0.0
    %331 = vmatpush1.msra.mxu0 %v66
    %332 = vmatprep.subr.mxu0 0.0
    %333 = vmatpush1.msra.mxu0 %v67
    %334 = vmatprep.subr.mxu0 0.0
    %335 = vmatpush1.msra.mxu0 %v68
    %336 = vmatprep.subr.mxu0 0.0
    %337 = vmatpush1.msra.mxu0 %v69
    %338 = vmatprep.subr.mxu0 0.0
    %339 = vmatpush1.msra.mxu0 %v70
    %340 = vmatprep.subr.mxu0 0.0
    %341 = vmatpush1.msra.mxu0 %v71
    %342 = vmatprep.subr.mxu0 0.0
    %343 = vmatpush1.msra.mxu0 %v72
    %344 = vmatprep.subr.mxu0 0.0
    %345 = vmatpush1.msra.mxu0 %v73
    %346 = vmatprep.subr.mxu0 0.0
    %347 = vmatpush1.msra.mxu0 %v74
    %348 = vmatprep.subr.mxu0 0.0
    %349 = vmatpush1.msra.mxu0 %v75
    %350 = vmatprep.subr.mxu0 0.0
    %351 = vmatpush1.msra.mxu0 %v76
    %352 = vmatprep.subr.mxu0 0.0
    %353 = vmatpush1.msra.mxu0 %v77
    %354 = vmatprep.subr.mxu0 0.0
    %355 = vmatpush1.msra.mxu0 %v78
    %356 = vmatprep.subr.mxu0 0.0
    %357 = vmatpush1.msra.mxu0 %v79
    %358 = vmatprep.subr.mxu0 0.0
    %359 = vmatpush1.msra.mxu0 %v80
    %360 = vmatprep.subr.mxu0 0.0
    %361 = vmatpush1.msra.mxu0 %v81
    %362 = vmatprep.subr.mxu0 0.0
    %363 = vmatpush1.msra.mxu0 %v82
    %364 = vmatprep.subr.mxu0 0.0
    %365 = vmatpush1.msra.mxu0 %v83
    %366 = vmatprep.subr.mxu0 0.0
    %367 = vmatpush1.msra.mxu0 %v84
    %368 = vmatprep.subr.mxu0 0.0
    %369 = vmatpush1.msra.mxu0 %v85
    %370 = vmatprep.subr.mxu0 0.0
    %371 = vmatpush1.msra.mxu0 %v86
    %372 = vmatprep.subr.mxu0 0.0
    %373 = vmatpush1.msra.mxu0 %v87
    %374 = vmatprep.subr.mxu0 0.0
    %375 = vmatpush1.msra.mxu0 %v88
    %376 = vmatprep.subr.mxu0 0.0
    %377 = vmatpush1.msra.mxu0 %v89
    %378 = vmatprep.subr.mxu0 0.0
    %379 = vmatpush1.msra.mxu0 %v90
    %380 = vmatprep.subr.mxu0 0.0
    %381 = vmatpush1.msra.mxu0 %v91
    %382 = vmatprep.subr.mxu0 0.0
    %383 = vmatpush1.msra.mxu0 %v92
    %384 = vmatprep.subr.mxu0 0.0
    %385 = vmatpush1.msra.mxu0 %v93
    %386 = vmatprep.mubr.f32.mxu0 %v216
    %387 = vmatmul.mubr.f32.gmra.mrb[0].mxu0 %v214
    %v388 = vpop.f32.mrb[0].mxu0
    %v389 = vadd.f32 %v319, %v388
    %v390 = vpop.f32.mrb[0].mxu0
    %391 = vdwg.mxu0
    %392 = vmatprep.subr.mxu0 0.0
    %393 = vmatpush1.msra.mxu0 %v94
    %394 = vmatprep.subr.mxu0 0.0
    %395 = vmatpush1.msra.mxu0 %v95
    %396 = vmatprep.subr.mxu0 0.0
    %397 = vmatpush1.msra.mxu0 %v96
    %398 = vmatprep.subr.mxu0 0.0
    %399 = vmatpush1.msra.mxu0 %v97
    %400 = vmatprep.subr.mxu0 0.0
    %401 = vmatpush1.msra.mxu0 %v98
    %402 = vmatprep.subr.mxu0 0.0
    %403 = vmatpush1.msra.mxu0 %v99
    %404 = vmatprep.subr.mxu0 0.0
    %405 = vmatpush1.msra.mxu0 %v100
    %406 = vmatprep.subr.mxu0 0.0
    %407 = vmatpush1.msra.mxu0 %v101
    %408 = vmatprep.subr.mxu0 0.0
    %409 = vmatpush1.msra.mxu0 %v102
    %410 = vmatprep.subr.mxu0 0.0
    %411 = vmatpush1.msra.mxu0 %v103
    %412 = vmatprep.subr.mxu0 0.0
    %413 = vmatpush1.msra.mxu0 %v104
    %414 = vmatprep.subr.mxu0 0.0
    %415 = vmatpush1.msra.mxu0 %v105
    %416 = vmatprep.subr.mxu0 0.0
    %417 = vmatpush1.msra.mxu0 %v106
    %418 = vmatprep.subr.mxu0 0.0
    %419 = vmatpush1.msra.mxu0 %v107
    %420 = vmatprep.subr.mxu0 0.0
    %421 = vmatpush1.msra.mxu0 %v108
    %422 = vmatprep.subr.mxu0 0.0
    %423 = vmatpush1.msra.mxu0 %v109
    %424 = vmatprep.subr.mxu0 0.0
    %425 = vmatpush1.msra.mxu0 %v110
    %426 = vmatprep.subr.mxu0 0.0
    %427 = vmatpush1.msra.mxu0 %v111
    %428 = vmatprep.subr.mxu0 0.0
    %429 = vmatpush1.msra.mxu0 %v112
    %430 = vmatprep.subr.mxu0 0.0
    %431 = vmatpush1.msra.mxu0 %v113
    %432 = vmatprep.subr.mxu0 0.0
    %433 = vmatpush1.msra.mxu0 %v114
    %434 = vmatprep.subr.mxu0 0.0
    %435 = vmatpush1.msra.mxu0 %v115
    %436 = vmatprep.subr.mxu0 0.0
    %437 = vmatpush1.msra.mxu0 %v116
    %438 = vmatprep.subr.mxu0 0.0
    %439 = vmatpush1.msra.mxu0 %v117
    %440 = vmatprep.subr.mxu0 0.0
    %441 = vmatpush1.msra.mxu0 %v118
    %442 = vmatprep.subr.mxu0 0.0
    %443 = vmatpush1.msra.mxu0 %v119
    %444 = vmatprep.subr.mxu0 0.0
    %445 = vmatpush1.msra.mxu0 %v120
    %446 = vmatprep.subr.mxu0 0.0
    %447 = vmatpush1.msra.mxu0 %v121
    %448 = vmatprep.subr.mxu0 0.0
    %449 = vmatpush1.msra.mxu0 %v122
    %450 = vmatprep.subr.mxu0 0.0
    %451 = vmatpush1.msra.mxu0 %v123
    %452 = vmatprep.subr.mxu0 0.0
    %453 = vmatpush1.msra.mxu0 %v124
    %454 = vmatprep.subr.mxu0 0.0
    %455 = vmatpush1.msra.mxu0 %v125
    %456 = vmatprep.mubr.f32.mxu0 %v232
    %457 = vmatmul.mubr.f32.gmra.mrb[0].mxu0 %v224
    %v458 = vpop.f32.mrb[0].mxu0
    %v459 = vadd.f32 %v389, %v458
    %v460 = vpop.f32.mrb[0].mxu0
    %461 = vdwg.mxu0
    %462 = vmatprep.subr.mxu0 0.0
    %463 = vmatpush1.msra.mxu0 %v126
    %464 = vmatprep.subr.mxu0 0.0
    %465 = vmatpush1.msra.mxu0 %v127
    %466 = vmatprep.subr.mxu0 0.0
    %467 = vmatpush1.msra.mxu0 %v128
    %468 = vmatprep.subr.mxu0 0.0
    %469 = vmatpush1.msra.mxu0 %v129
    %470 = vmatprep.subr.mxu0 0.0
    %471 = vmatpush1.msra.mxu0 %v130
    %472 = vmatprep.subr.mxu0 0.0
    %473 = vmatpush1.msra.mxu0 %v131
    %474 = vmatprep.subr.mxu0 0.0
    %475 = vmatpush1.msra.mxu0 %v132
    %476 = vmatprep.subr.mxu0 0.0
    %477 = vmatpush1.msra.mxu0 %v133
    %478 = vmatprep.subr.mxu0 0.0
    %479 = vmatpush1.msra.mxu0 %v134
    %480 = vmatprep.subr.mxu0 0.0
    %481 = vmatpush1.msra.mxu0 %v135
    %482 = vmatprep.subr.mxu0 0.0
    %483 = vmatpush1.msra.mxu0 %v136
    %484 = vmatprep.subr.mxu0 0.0
    %485 = vmatpush1.msra.mxu0 %v137
    %486 = vmatprep.subr.mxu0 0.0
    %487 = vmatpush1.msra.mxu0 %v138
    %488 = vmatprep.subr.mxu0 0.0
    %489 = vmatpush1.msra.mxu0 %v139
    %490 = vmatprep.subr.mxu0 0.0
    %491 = vmatpush1.msra.mxu0 %v140
    %492 = vmatprep.subr.mxu0 0.0
    %493 = vmatpush1.msra.mxu0 %v141
    %494 = vmatprep.subr.mxu0 0.0
    %495 = vmatpush1.msra.mxu0 %v142
    %496 = vmatprep.subr.mxu0 0.0
    %497 = vmatpush1.msra.mxu0 %v143
    %498 = vmatprep.subr.mxu0 0.0
    %499 = vmatpush1.msra.mxu0 %v144
    %500 = vmatprep.subr.mxu0 0.0
    %501 = vmatpush1.msra.mxu0 %v145
    %502 = vmatprep.subr.mxu0 0.0
    %503 = vmatpush1.msra.mxu0 %v146
    %504 = vmatprep.subr.mxu0 0.0
    %505 = vmatpush1.msra.mxu0 %v147
    %506 = vmatprep.subr.mxu0 0.0
    %507 = vmatpush1.msra.mxu0 %v148
    %508 = vmatprep.subr.mxu0 0.0
    %509 = vmatpush1.msra.mxu0 %v149
    %510 = vmatprep.subr.mxu0 0.0
    %511 = vmatpush1.msra.mxu0 %v150
    %512 = vmatprep.subr.mxu0 0.0
    %513 = vmatpush1.msra.mxu0 %v151
    %514 = vmatprep.subr.mxu0 0.0
    %515 = vmatpush1.msra.mxu0 %v152
    %516 = vmatprep.subr.mxu0 0.0
    %517 = vmatpush1.msra.mxu0 %v153
    %518 = vmatprep.subr.mxu0 0.0
    %519 = vmatpush1.msra.mxu0 %v154
    %520 = vmatprep.subr.mxu0 0.0
    %521 = vmatpush1.msra.mxu0 %v155
    %522 = vmatprep.subr.mxu0 0.0
    %523 = vmatpush1.msra.mxu0 %v156
    %524 = vmatprep.subr.mxu0 0.0
    %525 = vmatpush1.msra.mxu0 %v157
    %526 = vmatprep.mubr.f32.mxu0 %v233
    %527 = vmatmul.mubr.f32.gmra.mrb[0].mxu0 %v231
    %v528 = vpop.f32.mrb[0].mxu0
    %v529 = vadd.f32 %v459, %v528
    %v530 = vpop.f32.mrb[0].mxu0
    %531 = vdwg.mxu0
    %532 = vmatprep.subr.mxu0 0.0
    %533 = vmatpush1.msra.mxu0 %v158
    %534 = vmatprep.subr.mxu0 0.0
    %535 = vmatpush1.msra.mxu0 %v159
    %536 = vmatprep.subr.mxu0 0.0
    %537 = vmatpush1.msra.mxu0 %v160
    %538 = vmatprep.subr.mxu0 0.0
    %539 = vmatpush1.msra.mxu0 %v161
    %540 = vmatprep.subr.mxu0 0.0
    %541 = vmatpush1.msra.mxu0 %v162
    %542 = vmatprep.subr.mxu0 0.0
    %543 = vmatpush1.msra.mxu0 %v163
    %544 = vmatprep.subr.mxu0 0.0
    %545 = vmatpush1.msra.mxu0 %v164
    %546 = vmatprep.subr.mxu0 0.0
    %547 = vmatpush1.msra.mxu0 %v165
    %548 = vmatprep.subr.mxu0 0.0
    %549 = vmatpush1.msra.mxu0 %v166
    %550 = vmatprep.subr.mxu0 0.0
    %551 = vmatpush1.msra.mxu0 %v167
    %552 = vmatprep.subr.mxu0 0.0
    %553 = vmatpush1.msra.mxu0 %v168
    %554 = vmatprep.subr.mxu0 0.0
    %555 = vmatpush1.msra.mxu0 %v169
    %556 = vmatprep.subr.mxu0 0.0
    %557 = vmatpush1.msra.mxu0 %v170
    %558 = vmatprep.subr.mxu0 0.0
    %559 = vmatpush1.msra.mxu0 %v171
    %560 = vmatprep.subr.mxu0 0.0
    %561 = vmatpush1.msra.mxu0 %v172
    %562 = vmatprep.subr.mxu0 0.0
    %563 = vmatpush1.msra.mxu0 %v173
    %564 = vmatprep.subr.mxu0 0.0
    %565 = vmatpush1.msra.mxu0 %v174
    %566 = vmatprep.subr.mxu0 0.0
    %567 = vmatpush1.msra.mxu0 %v175
    %568 = vmatprep.subr.mxu0 0.0
    %569 = vmatpush1.msra.mxu0 %v176
    %570 = vmatprep.subr.mxu0 0.0
    %571 = vmatpush1.msra.mxu0 %v177
    %572 = vmatprep.subr.mxu0 0.0
    %573 = vmatpush1.msra.mxu0 %v178
    %574 = vmatprep.subr.mxu0 0.0
    %575 = vmatpush1.msra.mxu0 %v179
    %576 = vmatprep.subr.mxu0 0.0
    %577 = vmatpush1.msra.mxu0 %v180
    %578 = vmatprep.subr.mxu0 0.0
    %579 = vmatpush1.msra.mxu0 %v181
    %580 = vmatprep.subr.mxu0 0.0
    %581 = vmatpush1.msra.mxu0 %v182
    %582 = vmatprep.subr.mxu0 0.0
    %583 = vmatpush1.msra.mxu0 %v183
    %584 = vmatprep.subr.mxu0 0.0
    %585 = vmatpush1.msra.mxu0 %v184
    %586 = vmatprep.subr.mxu0 0.0
    %587 = vmatpush1.msra.mxu0 %v185
    %588 = vmatprep.subr.mxu0 0.0
    %589 = vmatpush1.msra.mxu0 %v186
    %590 = vmatprep.subr.mxu0 0.0
    %591 = vmatpush1.msra.mxu0 %v187
    %592 = vmatprep.subr.mxu0 0.0
    %593 = vmatpush1.msra.mxu0 %v188
    %594 = vmatprep.subr.mxu0 0.0
    %595 = vmatpush1.msra.mxu0 %v189
    %596 = vmatprep.mubr.f32.mxu0 %v241
    %597 = vmatmul.mubr.f32.gmra.mrb[0].mxu0 %v240
    %v598 = vpop.f32.mrb[0].mxu0
    %v599 = vadd.f32 %v529, %v598
    %v600 = vpop.f32.mrb[0].mxu0
    %601 = vdwg.mxu0
    %v602 = vmax.f32 %v599, 0.0
    %v603 = vld [vmem:[%s3] sm:$0xff]
    %v604 = vld [vmem:[%s3 + $0x8] sm:$0xff]
    %v605 = vld [vmem:[%s3 + $0x10] sm:$0xff]
    %v606 = vld [vmem:[%s3 + $0x18] sm:$0x1]
    %v607 = vld [vmem:[%s4] sm:$0x1]
    %v609 = vlaneseq
    %v610 = vshrl.u32 %v609, 7
    %v611 = vsub.s32 0, %v610
    %v612 = vrot.slane %v607, %v611
    %vm614 = vcmask 203776
    %v616 = vsel %vm614, %v602, 0
    %vm618 = vcmask 1040384
    %v620 = vsel %vm618, %v606, 0
    %622 = vmatprep.subr.mxu0 0.0
    %623 = vmatpush1.msra.mxu0 %v603
    %624 = vmatprep.subr.mxu0 0.0
    %625 = vmatpush1.msra.mxu0 %v604
    %626 = vmatprep.subr.mxu0 0.0
    %627 = vmatpush1.msra.mxu0 %v605
    %628 = vmatprep.subr.mxu0 0.0
    %629 = vmatpush1.msra.mxu0 %v620
    %630 = vmatprep.subr.mxu0 0.0
    %631 = vmatpush1.msra.mxu0 0.0
    %632 = vmatprep.subr.mxu0 0.0
    %633 = vmatpush1.msra.mxu0 0.0
    %634 = vmatprep.subr.mxu0 0.0
    %635 = vmatpush1.msra.mxu0 0.0
    %636 = vmatprep.subr.mxu0 0.0
    %637 = vmatpush1.msra.mxu0 0.0
    %638 = vmatprep.subr.mxu0 0.0
    %639 = vmatpush1.msra.mxu0 0.0
    %640 = vmatprep.subr.mxu0 0.0
    %641 = vmatpush1.msra.mxu0 0.0
    %642 = vmatprep.subr.mxu0 0.0
    %643 = vmatpush1.msra.mxu0 0.0
    %644 = vmatprep.subr.mxu0 0.0
    %645 = vmatpush1.msra.mxu0 0.0
    %646 = vmatprep.subr.mxu0 0.0
    %647 = vmatpush1.msra.mxu0 0.0
    %648 = vmatprep.subr.mxu0 0.0
    %649 = vmatpush1.msra.mxu0 0.0
    %650 = vmatprep.subr.mxu0 0.0
    %651 = vmatpush1.msra.mxu0 0.0
    %652 = vmatprep.subr.mxu0 0.0
    %653 = vmatpush1.msra.mxu0 0.0
    %654 = vmatprep.subr.mxu0 0.0
    %655 = vmatpush1.msra.mxu0 0.0
    %656 = vmatprep.subr.mxu0 0.0
    %657 = vmatpush1.msra.mxu0 0.0
    %658 = vmatprep.subr.mxu0 0.0
    %659 = vmatpush1.msra.mxu0 0.0
    %660 = vmatprep.subr.mxu0 0.0
    %661 = vmatpush1.msra.mxu0 0.0
    %662 = vmatprep.subr.mxu0 0.0
    %663 = vmatpush1.msra.mxu0 0.0
    %664 = vmatprep.subr.mxu0 0.0
    %665 = vmatpush1.msra.mxu0 0.0
    %666 = vmatprep.subr.mxu0 0.0
    %667 = vmatpush1.msra.mxu0 0.0
    %668 = vmatprep.subr.mxu0 0.0
    %669 = vmatpush1.msra.mxu0 0.0
    %670 = vmatprep.subr.mxu0 0.0
    %671 = vmatpush1.msra.mxu0 0.0
    %672 = vmatprep.subr.mxu0 0.0
    %673 = vmatpush1.msra.mxu0 0.0
    %674 = vmatprep.subr.mxu0 0.0
    %675 = vmatpush1.msra.mxu0 0.0
    %676 = vmatprep.subr.mxu0 0.0
    %677 = vmatpush1.msra.mxu0 0.0
    %678 = vmatprep.subr.mxu0 0.0
    %679 = vmatpush1.msra.mxu0 0.0
    %680 = vmatprep.subr.mxu0 0.0
    %681 = vmatpush1.msra.mxu0 0.0
    %682 = vmatprep.subr.mxu0 0.0
    %683 = vmatpush1.msra.mxu0 0.0
    %684 = vmatprep.subr.mxu0 0.0
    %685 = vmatpush1.msra.mxu0 0.0
    %686 = vmatprep.mubr.f32.mxu0 0.0
    %687 = vmatmul.mubr.f32.gmra.mrb[0].mxu0 %v616
    %v688 = vpop.f32.mrb[0].mxu0
    %v689 = vadd.f32 %v612, %v688
    %v690 = vpop.f32.mrb[0].mxu0
    %691 = vdwg.mxu0
    %v692 = vmax.f32 %v689, 0.0
    %v693 = vld [vmem:[%s5] sm:$0xff]
    %v694 = vld [vmem:[%s5 + $0x8] sm:$0xff]
    %v695 = vld [vmem:[%s5 + $0x10] sm:$0xff]
    %v696 = vld [vmem:[%s5 + $0x18] sm:$0xff]
    %v697 = vld [vmem:[%s5 + $0x20] sm:$0xff]
    %v698 = vld [vmem:[%s5 + $0x28] sm:$0xff]
    %v699 = vld [vmem:[%s5 + $0x30] sm:$0x3]
    %v700 = vld [vmem:[%s6] sm:$0x1]
    %v702 = vlaneseq
    %v703 = vshrl.u32 %v702, 7
    %v704 = vsub.s32 0, %v703
    %v705 = vrot.slane %v700, %v704
    %vm707 = vcmask 408576
    %v709 = vsel %vm707, %v692, 0
    %vm711 = vcmask 1041408
    %v713 = vsel %vm711, %v699, 0
    %715 = vmatprep.subr.mxu0 0.0
    %716 = vmatpush1.msra.mxu0 %v693
    %717 = vmatprep.subr.mxu0 0.0
    %718 = vmatpush1.msra.mxu0 %v694
    %719 = vmatprep.subr.mxu0 0.0
    %720 = vmatpush1.msra.mxu0 %v695
    %721 = vmatprep.subr.mxu0 0.0
    %722 = vmatpush1.msra.mxu0 %v696
    %723 = vmatprep.subr.mxu0 0.0
    %724 = vmatpush1.msra.mxu0 %v697
    %725 = vmatprep.subr.mxu0 0.0
    %726 = vmatpush1.msra.mxu0 %v698
    %727 = vmatprep.subr.mxu0 0.0
    %728 = vmatpush1.msra.mxu0 %v713
    %729 = vmatprep.subr.mxu0 0.0
    %730 = vmatpush1.msra.mxu0 0.0
    %731 = vmatprep.subr.mxu0 0.0
    %732 = vmatpush1.msra.mxu0 0.0
    %733 = vmatprep.subr.mxu0 0.0
    %734 = vmatpush1.msra.mxu0 0.0
    %735 = vmatprep.subr.mxu0 0.0
    %736 = vmatpush1.msra.mxu0 0.0
    %737 = vmatprep.subr.mxu0 0.0
    %738 = vmatpush1.msra.mxu0 0.0
    %739 = vmatprep.subr.mxu0 0.0
    %740 = vmatpush1.msra.mxu0 0.0
    %741 = vmatprep.subr.mxu0 0.0
    %742 = vmatpush1.msra.mxu0 0.0
    %743 = vmatprep.subr.mxu0 0.0
    %744 = vmatpush1.msra.mxu0 0.0
    %745 = vmatprep.subr.mxu0 0.0
    %746 = vmatpush1.msra.mxu0 0.0
    %747 = vmatprep.subr.mxu0 0.0
    %748 = vmatpush1.msra.mxu0 0.0
    %749 = vmatprep.subr.mxu0 0.0
    %750 = vmatpush1.msra.mxu0 0.0
    %751 = vmatprep.subr.mxu0 0.0
    %752 = vmatpush1.msra.mxu0 0.0
    %753 = vmatprep.subr.mxu0 0.0
    %754 = vmatpush1.msra.mxu0 0.0
    %755 = vmatprep.subr.mxu0 0.0
    %756 = vmatpush1.msra.mxu0 0.0
    %757 = vmatprep.subr.mxu0 0.0
    %758 = vmatpush1.msra.mxu0 0.0
    %759 = vmatprep.subr.mxu0 0.0
    %760 = vmatpush1.msra.mxu0 0.0
    %761 = vmatprep.subr.mxu0 0.0
    %762 = vmatpush1.msra.mxu0 0.0
    %763 = vmatprep.subr.mxu0 0.0
    %764 = vmatpush1.msra.mxu0 0.0
    %765 = vmatprep.subr.mxu0 0.0
    %766 = vmatpush1.msra.mxu0 0.0
    %767 = vmatprep.subr.mxu0 0.0
    %768 = vmatpush1.msra.mxu0 0.0
    %769 = vmatprep.subr.mxu0 0.0
    %770 = vmatpush1.msra.mxu0 0.0
    %771 = vmatprep.subr.mxu0 0.0
    %772 = vmatpush1.msra.mxu0 0.0
    %773 = vmatprep.subr.mxu0 0.0
    %774 = vmatpush1.msra.mxu0 0.0
    %775 = vmatprep.subr.mxu0 0.0
    %776 = vmatpush1.msra.mxu0 0.0
    %777 = vmatprep.subr.mxu0 0.0
    %778 = vmatpush1.msra.mxu0 0.0
    %779 = vmatprep.mubr.f32.mxu0 0.0
    %780 = vmatmul.mubr.f32.gmra.mrb[0].mxu0 %v709
    %v781 = vpop.f32.mrb[0].mxu0
    %v782 = vadd.f32 %v705, %v781
    %v783 = vpop.f32.mrb[0].mxu0
    %784 = vdwg.mxu0
    %v785 = vxor.u32 %v782, 2147483648
    %v786 = vmul.f32 %v785, 1.442695
    %v787 = vpow.pop %v786
    %v788 = vadd.f32 %v787, 1.0
    %v789 = vrcp.pop %v788
    %v790 = vmul.f32 1.0, %v789
    %vm791 = vcmask 33792
    %792 = vst.msk [vmem:[#allocation2] sm:$0x3] %vm791, %v790
    // Predicated region
    $region30: #{grad_splitter_forward.5} parent=1 // pred_check
      _
    $region31: #{grad_splitter_forward.5} parent=1 // pred_check_branch
      %794 = sbr.rel (0) target = $region33
    $region32: #{grad_splitter_forward.5} parent=1 // pred_region
      %s796 = ssub.s32 32, 32
      %797 = vsyncadd [#allocation3], %s796
      %s799 = sshll.u32 [#allocation2], 4
      %s800 = int_to_ptr.vmem [resolvable:$true] %s799
      %802 = dma.vmem_to_hbm [thread:$0]  %s800, 32, %s7, [#allocation3]
    $region33: #{grad_splitter_forward.5} parent=1 // pred_fallthru
      _
    // Predicated region
    $region34: #{grad_splitter_forward.5} parent=1 // pred_check
      _
    $region35: #{grad_splitter_forward.5} parent=1 // pred_check_branch
      %804 = sbr.rel (0) target = $region37
    $region36: #{grad_splitter_forward.5} parent=1 // pred_region
      %805 = dma.done [#allocation3], 32
    $region37: #{grad_splitter_forward.5} parent=1 // pred_fallthru
      _
    %806 = vsyncpa [#allocation3], 1

// kernel: grad_splitter_forward.3
$region0: #{grad_splitter_forward.3}
  #allocation0 [shape = 'u32[]', space=smem, size = 0x4, offset = 0x4, fixed_abs, tag = 'smem constant byte address 0x4 - core index']
  #allocation1 [shape = 'u32[144,128]{1,0:T(1,128)}', space=vmem, size = 0x12000, scoped, tag = 'internal scratch']
  %s0 = inlined_call_operand.vmem [shape: f32[2,18,18,4], index: 0, kind: input, shape index: {}]
  %s1 = inlined_call_operand.vmem [shape: f32[36,8], index: 1, kind: input, shape index: {}]
  %s2 = inlined_call_operand.vmem [shape: f32[1,8], index: 2, kind: input, shape index: {}]
  %s3 = inlined_call_operand.vmem [shape: f32[2,8,8,8], index: 3, kind: output, shape index: {}]
  %s4 = sld [smem:[#allocation0]]
  $region22: #{grad_splitter_forward.3} parent=0
    _
  %s6 = ssub.s32 1, %s4
  %s7 = scalar_select 0, %s6, %s4
  // Predicated region
  $region2: #{grad_splitter_forward.3} parent=0 // pred_check
    _
  $region3: #{grad_splitter_forward.3} parent=0 // pred_check_branch
    %9 = sbr.rel (0) target = $region5
  $region4: #{grad_splitter_forward.3} parent=0 // pred_region
    _
  $region5: #{grad_splitter_forward.3} parent=0 // pred_fallthru
    _
  // Predicated region
  $region6: #{grad_splitter_forward.3} parent=0 // pred_check
    _
  $region7: #{grad_splitter_forward.3} parent=0 // pred_check_branch
    %11 = sbr.rel (0) target = $region9
  $region8: #{grad_splitter_forward.3} parent=0 // pred_region
    _
  $region9: #{grad_splitter_forward.3} parent=0 // pred_fallthru
    _
  // Predicated region
  $region10: #{grad_splitter_forward.3} parent=0 // pred_check
    _
  $region11: #{grad_splitter_forward.3} parent=0 // pred_check_branch
    %13 = sbr.rel (0) target = $region13
  $region12: #{grad_splitter_forward.3} parent=0 // pred_region
    _
  $region13: #{grad_splitter_forward.3} parent=0 // pred_fallthru
    _
  %v14 = vld [vmem:[%s0] sm:$0xff]
  %v15 = vld [vmem:[%s0 + $0x8] sm:$0xff]
  %v16 = vld [vmem:[%s0 + $0x18] sm:$0xff]
  %v17 = vld [vmem:[%s0 + $0x20] sm:$0xff]
  %v18 = vld [vmem:[%s0 + $0x30] sm:$0xff]
  %v19 = vld [vmem:[%s0 + $0x38] sm:$0xff]
  %v20 = vld [vmem:[%s0 + $0x48] sm:$0xff]
  %v21 = vld [vmem:[%s0 + $0x50] sm:$0xff]
  %v22 = vld [vmem:[%s0 + $0x60] sm:$0xff]
  %v23 = vld [vmem:[%s0 + $0x68] sm:$0xff]
  %v24 = vld [vmem:[%s0 + $0x78] sm:$0xff]
  %v25 = vld [vmem:[%s0 + $0x80] sm:$0xff]
  %v26 = vld [vmem:[%s0 + $0x90] sm:$0xff]
  %v27 = vld [vmem:[%s0 + $0x98] sm:$0xff]
  %v28 = vld [vmem:[%s0 + $0xa8] sm:$0xff]
  %v29 = vld [vmem:[%s0 + $0xb0] sm:$0xff]
  %v30 = vld [vmem:[%s0 + $0xc0] sm:$0xff]
  %v31 = vld [vmem:[%s0 + $0xc8] sm:$0xff]
  %v32 = vld [vmem:[%s0 + $0xd8] sm:$0xff]
  %v33 = vld [vmem:[%s0 + $0xe0] sm:$0xff]
  %v34 = vld [vmem:[%s0 + $0xf0] sm:$0xff]
  %v35 = vld [vmem:[%s0 + $0xf8] sm:$0xff]
  %v36 = vld [vmem:[%s0 + $0x108] sm:$0xff]
  %v37 = vld [vmem:[%s0 + $0x110] sm:$0xff]
  %v38 = vld [vmem:[%s0 + $0x120] sm:$0xff]
  %v39 = vld [vmem:[%s0 + $0x128] sm:$0xff]
  %v40 = vld [vmem:[%s0 + $0x138] sm:$0xff]
  %v41 = vld [vmem:[%s0 + $0x140] sm:$0xff]
  %v42 = vld [vmem:[%s0 + $0x150] sm:$0xff]
  %v43 = vld [vmem:[%s0 + $0x158] sm:$0xff]
  %v44 = vld [vmem:[%s0 + $0x168] sm:$0xff]
  %v45 = vld [vmem:[%s0 + $0x170] sm:$0xff]
  %v46 = vld [vmem:[%s0 + $0x1b0] sm:$0xff]
  %v47 = vld [vmem:[%s0 + $0x1b8] sm:$0xff]
  %v48 = vld [vmem:[%s0 + $0x1c8] sm:$0xff]
  %v49 = vld [vmem:[%s0 + $0x1d0] sm:$0xff]
  %v50 = vld [vmem:[%s0 + $0x1e0] sm:$0xff]
  %v51 = vld [vmem:[%s0 + $0x1e8] sm:$0xff]
  %v52 = vld [vmem:[%s0 + $0x1f8] sm:$0xff]
  %v53 = vld [vmem:[%s0 + $0x200] sm:$0xff]
  %v54 = vld [vmem:[%s0 + $0x210] sm:$0xff]
  %v55 = vld [vmem:[%s0 + $0x218] sm:$0xff]
  %v56 = vld [vmem:[%s0 + $0x228] sm:$0xff]
  %v57 = vld [vmem:[%s0 + $0x230] sm:$0xff]
  %v58 = vld [vmem:[%s0 + $0x240] sm:$0xff]
  %v59 = vld [vmem:[%s0 + $0x248] sm:$0xff]
  %v60 = vld [vmem:[%s0 + $0x258] sm:$0xff]
  %v61 = vld [vmem:[%s0 + $0x260] sm:$0xff]
  %v62 = vld [vmem:[%s0 + $0x270] sm:$0xff]
  %v63 = vld [vmem:[%s0 + $0x278] sm:$0xff]
  %v64 = vld [vmem:[%s0 + $0x288] sm:$0xff]
  %v65 = vld [vmem:[%s0 + $0x290] sm:$0xff]
  %v66 = vld [vmem:[%s0 + $0x2a0] sm:$0xff]
  %v67 = vld [vmem:[%s0 + $0x2a8] sm:$0xff]
  %v68 = vld [vmem:[%s0 + $0x2b8] sm:$0xff]
  %v69 = vld [vmem:[%s0 + $0x2c0] sm:$0xff]
  %v70 = vld [vmem:[%s0 + $0x2d0] sm:$0xff]
  %v71 = vld [vmem:[%s0 + $0x2d8] sm:$0xff]
  %v72 = vld [vmem:[%s0 + $0x2e8] sm:$0xff]
  %v73 = vld [vmem:[%s0 + $0x2f0] sm:$0xff]
  %v74 = vld [vmem:[%s0 + $0x300] sm:$0xff]
  %v75 = vld [vmem:[%s0 + $0x308] sm:$0xff]
  %v76 = vld [vmem:[%s0 + $0x318] sm:$0xff]
  %v77 = vld [vmem:[%s0 + $0x320] sm:$0xff]
  %v78 = vld [vmem:[%s0 + $0x1] sm:$0xff]
  %v79 = vld [vmem:[%s0 + $0x9] sm:$0xff]
  %v80 = vld [vmem:[%s0 + $0x19] sm:$0xff]
  %v81 = vld [vmem:[%s0 + $0x21] sm:$0xff]
  %v82 = vld [vmem:[%s0 + $0x31] sm:$0xff]
  %v83 = vld [vmem:[%s0 + $0x39] sm:$0xff]
  %v84 = vld [vmem:[%s0 + $0x49] sm:$0xff]
  %v85 = vld [vmem:[%s0 + $0x51] sm:$0xff]
  %v86 = vld [vmem:[%s0 + $0x61] sm:$0xff]
  %v87 = vld [vmem:[%s0 + $0x69] sm:$0xff]
  %v88 = vld [vmem:[%s0 + $0x79] sm:$0xff]
  %v89 = vld [vmem:[%s0 + $0x81] sm:$0xff]
  %v90 = vld [vmem:[%s0 + $0x91] sm:$0xff]
  %v91 = vld [vmem:[%s0 + $0x99] sm:$0xff]
  %v92 = vld [vmem:[%s0 + $0xa9] sm:$0xff]
  %v93 = vld [vmem:[%s0 + $0xb1] sm:$0xff]
  %v94 = vld [vmem:[%s0 + $0xc1] sm:$0xff]
  %v95 = vld [vmem:[%s0 + $0xc9] sm:$0xff]
  %v96 = vld [vmem:[%s0 + $0xd9] sm:$0xff]
  %v97 = vld [vmem:[%s0 + $0xe1] sm:$0xff]
  %v98 = vld [vmem:[%s0 + $0xf1] sm:$0xff]
  %v99 = vld [vmem:[%s0 + $0xf9] sm:$0xff]
  %v100 = vld [vmem:[%s0 + $0x109] sm:$0xff]
  %v101 = vld [vmem:[%s0 + $0x111] sm:$0xff]
  %v102 = vld [vmem:[%s0 + $0x121] sm:$0xff]
  %v103 = vld [vmem:[%s0 + $0x129] sm:$0xff]
  %v104 = vld [vmem:[%s0 + $0x139] sm:$0xff]
  %v105 = vld [vmem:[%s0 + $0x141] sm:$0xff]
  %v106 = vld [vmem:[%s0 + $0x151] sm:$0xff]
  %v107 = vld [vmem:[%s0 + $0x159] sm:$0xff]
  %v108 = vld [vmem:[%s0 + $0x169] sm:$0xff]
  %v109 = vld [vmem:[%s0 + $0x171] sm:$0xff]
  %v110 = vld [vmem:[%s0 + $0x1b1] sm:$0xff]
  %v111 = vld [vmem:[%s0 + $0x1b9] sm:$0xff]
  %v112 = vld [vmem:[%s0 + $0x1c9] sm:$0xff]
  %v113 = vld [vmem:[%s0 + $0x1d1] sm:$0xff]
  %v114 = vld [vmem:[%s0 + $0x1e1] sm:$0xff]
  %v115 = vld [vmem:[%s0 + $0x1e9] sm:$0xff]
  %v116 = vld [vmem:[%s0 + $0x1f9] sm:$0xff]
  %v117 = vld [vmem:[%s0 + $0x201] sm:$0xff]
  %v118 = vld [vmem:[%s0 + $0x211] sm:$0xff]
  %v119 = vld [vmem:[%s0 + $0x219] sm:$0xff]
  %v120 = vld [vmem:[%s0 + $0x229] sm:$0xff]
  %v121 = vld [vmem:[%s0 + $0x231] sm:$0xff]
  %v122 = vld [vmem:[%s0 + $0x241] sm:$0xff]
  %v123 = vld [vmem:[%s0 + $0x249] sm:$0xff]
  %v124 = vld [vmem:[%s0 + $0x259] sm:$0xff]
  %v125 = vld [vmem:[%s0 + $0x261] sm:$0xff]
  %v126 = vld [vmem:[%s0 + $0x271] sm:$0xff]
  %v127 = vld [vmem:[%s0 + $0x279] sm:$0xff]
  %v128 = vld [vmem:[%s0 + $0x289] sm:$0xff]
  %v129 = vld [vmem:[%s0 + $0x291] sm:$0xff]
  %v130 = vld [vmem:[%s0 + $0x2a1] sm:$0xff]
  %v131 = vld [vmem:[%s0 + $0x2a9] sm:$0xff]
  %v132 = vld [vmem:[%s0 + $0x2b9] sm:$0xff]
  %v133 = vld [vmem:[%s0 + $0x2c1] sm:$0xff]
  %v134 = vld [vmem:[%s0 + $0x2d1] sm:$0xff]
  %v135 = vld [vmem:[%s0 + $0x2d9] sm:$0xff]
  %v136 = vld [vmem:[%s0 + $0x2e9] sm:$0xff]
  %v137 = vld [vmem:[%s0 + $0x2f1] sm:$0xff]
  %v138 = vld [vmem:[%s0 + $0x301] sm:$0xff]
  %v139 = vld [vmem:[%s0 + $0x309] sm:$0xff]
  %v140 = vld [vmem:[%s0 + $0x319] sm:$0xff]
  %v141 = vld [vmem:[%s0 + $0x321] sm:$0xff]
  %v142 = vld [vmem:[%s0 + $0x2] sm:$0xff]
  %v143 = vld [vmem:[%s0 + $0xa] sm:$0xff]
  %v144 = vld [vmem:[%s0 + $0x1a] sm:$0xff]
  %v145 = vld [vmem:[%s0 + $0x22] sm:$0xff]
  %v146 = vld [vmem:[%s0 + $0x32] sm:$0xff]
  %v147 = vld [vmem:[%s0 + $0x3a] sm:$0xff]
  %v148 = vld [vmem:[%s0 + $0x4a] sm:$0xff]
  %v149 = vld [vmem:[%s0 + $0x52] sm:$0xff]
  %v150 = vld [vmem:[%s0 + $0x62] sm:$0xff]
  %v151 = vld [vmem:[%s0 + $0x6a] sm:$0xff]
  %v152 = vld [vmem:[%s0 + $0x7a] sm:$0xff]
  %v153 = vld [vmem:[%s0 + $0x82] sm:$0xff]
  %v154 = vld [vmem:[%s0 + $0x92] sm:$0xff]
  %v155 = vld [vmem:[%s0 + $0x9a] sm:$0xff]
  %v156 = vld [vmem:[%s0 + $0xaa] sm:$0xff]
  %v157 = vld [vmem:[%s0 + $0xb2] sm:$0xff]
  %v158 = vld [vmem:[%s0 + $0xc2] sm:$0xff]
  %v159 = vld [vmem:[%s0 + $0xca] sm:$0xff]
  %v160 = vld [vmem:[%s0 + $0xda] sm:$0xff]
  %v161 = vld [vmem:[%s0 + $0xe2] sm:$0xff]
  %v162 = vld [vmem:[%s0 + $0xf2] sm:$0xff]
  %v163 = vld [vmem:[%s0 + $0xfa] sm:$0xff]
  %v164 = vld [vmem:[%s0 + $0x10a] sm:$0xff]
  %v165 = vld [vmem:[%s0 + $0x112] sm:$0xff]
  %v166 = vld [vmem:[%s0 + $0x122] sm:$0xff]
  %v167 = vld [vmem:[%s0 + $0x12a] sm:$0xff]
  %v168 = vld [vmem:[%s0 + $0x13a] sm:$0xff]
  %v169 = vld [vmem:[%s0 + $0x142] sm:$0xff]
  %v170 = vld [vmem:[%s0 + $0x152] sm:$0xff]
  %v171 = vld [vmem:[%s0 + $0x15a] sm:$0xff]
  %v172 = vld [vmem:[%s0 + $0x16a] sm:$0xff]
  %v173 = vld [vmem:[%s0 + $0x172] sm:$0xff]
  %v174 = vld [vmem:[%s0 + $0x1b2] sm:$0xff]
  %v175 = vld [vmem:[%s0 + $0x1ba] sm:$0xff]
  %v176 = vld [vmem:[%s0 + $0x1ca] sm:$0xff]
  %v177 = vld [vmem:[%s0 + $0x1d2] sm:$0xff]
  %v178 = vld [vmem:[%s0 + $0x1e2] sm:$0xff]
  %v179 = vld [vmem:[%s0 + $0x1ea] sm:$0xff]
  %v180 = vld [vmem:[%s0 + $0x1fa] sm:$0xff]
  %v181 = vld [vmem:[%s0 + $0x202] sm:$0xff]
  %v182 = vld [vmem:[%s0 + $0x212] sm:$0xff]
  %v183 = vld [vmem:[%s0 + $0x21a] sm:$0xff]
  %v184 = vld [vmem:[%s0 + $0x22a] sm:$0xff]
  %v185 = vld [vmem:[%s0 + $0x232] sm:$0xff]
  %v186 = vld [vmem:[%s0 + $0x242] sm:$0xff]
  %v187 = vld [vmem:[%s0 + $0x24a] sm:$0xff]
  %v188 = vld [vmem:[%s0 + $0x25a] sm:$0xff]
  %v189 = vld [vmem:[%s0 + $0x262] sm:$0xff]
  %v190 = vld [vmem:[%s0 + $0x272] sm:$0xff]
  %v191 = vld [vmem:[%s0 + $0x27a] sm:$0xff]
  %v192 = vld [vmem:[%s0 + $0x28a] sm:$0xff]
  %v193 = vld [vmem:[%s0 + $0x292] sm:$0xff]
  %v194 = vld [vmem:[%s0 + $0x2a2] sm:$0xff]
  %v195 = vld [vmem:[%s0 + $0x2aa] sm:$0xff]
  %v196 = vld [vmem:[%s0 + $0x2ba] sm:$0xff]
  %v197 = vld [vmem:[%s0 + $0x2c2] sm:$0xff]
  %v198 = vld [vmem:[%s0 + $0x2d2] sm:$0xff]
  %v199 = vld [vmem:[%s0 + $0x2da] sm:$0xff]
  %v200 = vld [vmem:[%s0 + $0x2ea] sm:$0xff]
  %v201 = vld [vmem:[%s0 + $0x2f2] sm:$0xff]
  %v202 = vld [vmem:[%s0 + $0x302] sm:$0xff]
  %v203 = vld [vmem:[%s0 + $0x30a] sm:$0xff]
  %v204 = vld [vmem:[%s0 + $0x31a] sm:$0xff]
  %v205 = vld [vmem:[%s0 + $0x322] sm:$0xff]
  %s206 = scalar_lea.vmem %s0, 24
  %v207 = vld [vmem:[%s206] sm:$0xff]
  %v208 = vld [vmem:[%s206 + $0x8] sm:$0xff]
  %v209 = vld [vmem:[%s206 + $0x18] sm:$0xff]
  %v210 = vld [vmem:[%s206 + $0x20] sm:$0xff]
  %v211 = vld [vmem:[%s206 + $0x30] sm:$0xff]
  %v212 = vld [vmem:[%s206 + $0x38] sm:$0xff]
  %v213 = vld [vmem:[%s206 + $0x48] sm:$0xff]
  %v214 = vld [vmem:[%s206 + $0x50] sm:$0xff]
  %v215 = vld [vmem:[%s206 + $0x60] sm:$0xff]
  %v216 = vld [vmem:[%s206 + $0x68] sm:$0xff]
  %v217 = vld [vmem:[%s206 + $0x78] sm:$0xff]
  %v218 = vld [vmem:[%s206 + $0x80] sm:$0xff]
  %v219 = vld [vmem:[%s206 + $0x90] sm:$0xff]
  %v220 = vld [vmem:[%s206 + $0x98] sm:$0xff]
  %v221 = vld [vmem:[%s206 + $0xa8] sm:$0xff]
  %v222 = vld [vmem:[%s206 + $0xb0] sm:$0xff]
  %v223 = vld [vmem:[%s206 + $0xc0] sm:$0xff]
  %v224 = vld [vmem:[%s206 + $0xc8] sm:$0xff]
  %v225 = vld [vmem:[%s206 + $0xd8] sm:$0xff]
  %v226 = vld [vmem:[%s206 + $0xe0] sm:$0xff]
  %v227 = vld [vmem:[%s206 + $0xf0] sm:$0xff]
  %v228 = vld [vmem:[%s206 + $0xf8] sm:$0xff]
  %v229 = vld [vmem:[%s206 + $0x108] sm:$0xff]
  %v230 = vld [vmem:[%s206 + $0x110] sm:$0xff]
  %v231 = vld [vmem:[%s206 + $0x120] sm:$0xff]
  %v232 = vld [vmem:[%s206 + $0x128] sm:$0xff]
  %v233 = vld [vmem:[%s206 + $0x138] sm:$0xff]
  %v234 = vld [vmem:[%s206 + $0x140] sm:$0xff]
  %v235 = vld [vmem:[%s206 + $0x150] sm:$0xff]
  %v236 = vld [vmem:[%s206 + $0x158] sm:$0xff]
  %v237 = vld [vmem:[%s206 + $0x168] sm:$0xff]
  %v238 = vld [vmem:[%s206 + $0x170] sm:$0xff]
  %v239 = vld [vmem:[%s206 + $0x1b0] sm:$0xff]
  %v240 = vld [vmem:[%s206 + $0x1b8] sm:$0xff]
  %v241 = vld [vmem:[%s206 + $0x1c8] sm:$0xff]
  %v242 = vld [vmem:[%s206 + $0x1d0] sm:$0xff]
  %v243 = vld [vmem:[%s206 + $0x1e0] sm:$0xff]
  %v244 = vld [vmem:[%s206 + $0x1e8] sm:$0xff]
  %v245 = vld [vmem:[%s206 + $0x1f8] sm:$0xff]
  %v246 = vld [vmem:[%s206 + $0x200] sm:$0xff]
  %v247 = vld [vmem:[%s206 + $0x210] sm:$0xff]
  %v248 = vld [vmem:[%s206 + $0x218] sm:$0xff]
  %v249 = vld [vmem:[%s206 + $0x228] sm:$0xff]
  %v250 = vld [vmem:[%s206 + $0x230] sm:$0xff]
  %v251 = vld [vmem:[%s206 + $0x240] sm:$0xff]
  %v252 = vld [vmem:[%s206 + $0x248] sm:$0xff]
  %v253 = vld [vmem:[%s206 + $0x258] sm:$0xff]
  %v254 = vld [vmem:[%s206 + $0x260] sm:$0xff]
  %v255 = vld [vmem:[%s206 + $0x270] sm:$0xff]
  %v256 = vld [vmem:[%s206 + $0x278] sm:$0xff]
  %v257 = vld [vmem:[%s206 + $0x288] sm:$0xff]
  %v258 = vld [vmem:[%s206 + $0x290] sm:$0xff]
  %v259 = vld [vmem:[%s206 + $0x2a0] sm:$0xff]
  %v260 = vld [vmem:[%s206 + $0x2a8] sm:$0xff]
  %v261 = vld [vmem:[%s206 + $0x2b8] sm:$0xff]
  %v262 = vld [vmem:[%s206 + $0x2c0] sm:$0xff]
  %v263 = vld [vmem:[%s206 + $0x2d0] sm:$0xff]
  %v264 = vld [vmem:[%s206 + $0x2d8] sm:$0xff]
  %v265 = vld [vmem:[%s206 + $0x2e8] sm:$0xff]
  %v266 = vld [vmem:[%s206 + $0x2f0] sm:$0xff]
  %v267 = vld [vmem:[%s206 + $0x300] sm:$0xff]
  %v268 = vld [vmem:[%s206 + $0x308] sm:$0xff]
  %v269 = vld [vmem:[%s206 + $0x318] sm:$0xff]
  %v270 = vld [vmem:[%s206 + $0x320] sm:$0xff]
  %v271 = vld [vmem:[%s206 + $0x1] sm:$0xff]
  %v272 = vld [vmem:[%s206 + $0x9] sm:$0xff]
  %v273 = vld [vmem:[%s206 + $0x19] sm:$0xff]
  %v274 = vld [vmem:[%s206 + $0x21] sm:$0xff]
  %v275 = vld [vmem:[%s206 + $0x31] sm:$0xff]
  %v276 = vld [vmem:[%s206 + $0x39] sm:$0xff]
  %v277 = vld [vmem:[%s206 + $0x49] sm:$0xff]
  %v278 = vld [vmem:[%s206 + $0x51] sm:$0xff]
  %v279 = vld [vmem:[%s206 + $0x61] sm:$0xff]
  %v280 = vld [vmem:[%s206 + $0x69] sm:$0xff]
  %v281 = vld [vmem:[%s206 + $0x79] sm:$0xff]
  %v282 = vld [vmem:[%s206 + $0x81] sm:$0xff]
  %v283 = vld [vmem:[%s206 + $0x91] sm:$0xff]
  %v284 = vld [vmem:[%s206 + $0x99] sm:$0xff]
  %v285 = vld [vmem:[%s206 + $0xa9] sm:$0xff]
  %v286 = vld [vmem:[%s206 + $0xb1] sm:$0xff]
  %v287 = vld [vmem:[%s206 + $0xc1] sm:$0xff]
  %v288 = vld [vmem:[%s206 + $0xc9] sm:$0xff]
  %v289 = vld [vmem:[%s206 + $0xd9] sm:$0xff]
  %v290 = vld [vmem:[%s206 + $0xe1] sm:$0xff]
  %v291 = vld [vmem:[%s206 + $0xf1] sm:$0xff]
  %v292 = vld [vmem:[%s206 + $0xf9] sm:$0xff]
  %v293 = vld [vmem:[%s206 + $0x109] sm:$0xff]
  %v294 = vld [vmem:[%s206 + $0x111] sm:$0xff]
  %v295 = vld [vmem:[%s206 + $0x121] sm:$0xff]
  %v296 = vld [vmem:[%s206 + $0x129] sm:$0xff]
  %v297 = vld [vmem:[%s206 + $0x139] sm:$0xff]
  %v298 = vld [vmem:[%s206 + $0x141] sm:$0xff]
  %v299 = vld [vmem:[%s206 + $0x151] sm:$0xff]
  %v300 = vld [vmem:[%s206 + $0x159] sm:$0xff]
  %v301 = vld [vmem:[%s206 + $0x169] sm:$0xff]
  %v302 = vld [vmem:[%s206 + $0x171] sm:$0xff]
  %v303 = vld [vmem:[%s206 + $0x1b1] sm:$0xff]
  %v304 = vld [vmem:[%s206 + $0x1b9] sm:$0xff]
  %v305 = vld [vmem:[%s206 + $0x1c9] sm:$0xff]
  %v306 = vld [vmem:[%s206 + $0x1d1] sm:$0xff]
  %v307 = vld [vmem:[%s206 + $0x1e1] sm:$0xff]
  %v308 = vld [vmem:[%s206 + $0x1e9] sm:$0xff]
  %v309 = vld [vmem:[%s206 + $0x1f9] sm:$0xff]
  %v310 = vld [vmem:[%s206 + $0x201] sm:$0xff]
  %v311 = vld [vmem:[%s206 + $0x211] sm:$0xff]
  %v312 = vld [vmem:[%s206 + $0x219] sm:$0xff]
  %v313 = vld [vmem:[%s206 + $0x229] sm:$0xff]
  %v314 = vld [vmem:[%s206 + $0x231] sm:$0xff]
  %v315 = vld [vmem:[%s206 + $0x241] sm:$0xff]
  %v316 = vld [vmem:[%s206 + $0x249] sm:$0xff]
  %v317 = vld [vmem:[%s206 + $0x259] sm:$0xff]
  %v318 = vld [vmem:[%s206 + $0x261] sm:$0xff]
  %v319 = vld [vmem:[%s206 + $0x271] sm:$0xff]
  %v320 = vld [vmem:[%s206 + $0x279] sm:$0xff]
  %v321 = vld [vmem:[%s206 + $0x289] sm:$0xff]
  %v322 = vld [vmem:[%s206 + $0x291] sm:$0xff]
  %v323 = vld [vmem:[%s206 + $0x2a1] sm:$0xff]
  %v324 = vld [vmem:[%s206 + $0x2a9] sm:$0xff]
  %v325 = vld [vmem:[%s206 + $0x2b9] sm:$0xff]
  %v326 = vld [vmem:[%s206 + $0x2c1] sm:$0xff]
  %v327 = vld [vmem:[%s206 + $0x2d1] sm:$0xff]
  %v328 = vld [vmem:[%s206 + $0x2d9] sm:$0xff]
  %v329 = vld [vmem:[%s206 + $0x2e9] sm:$0xff]
  %v330 = vld [vmem:[%s206 + $0x2f1] sm:$0xff]
  %v331 = vld [vmem:[%s206 + $0x301] sm:$0xff]
  %v332 = vld [vmem:[%s206 + $0x309] sm:$0xff]
  %v333 = vld [vmem:[%s206 + $0x319] sm:$0xff]
  %v334 = vld [vmem:[%s206 + $0x321] sm:$0xff]
  %v335 = vld [vmem:[%s206 + $0x2] sm:$0xff]
  %v336 = vld [vmem:[%s206 + $0xa] sm:$0xff]
  %v337 = vld [vmem:[%s206 + $0x1a] sm:$0xff]
  %v338 = vld [vmem:[%s206 + $0x22] sm:$0xff]
  %v339 = vld [vmem:[%s206 + $0x32] sm:$0xff]
  %v340 = vld [vmem:[%s206 + $0x3a] sm:$0xff]
  %v341 = vld [vmem:[%s206 + $0x4a] sm:$0xff]
  %v342 = vld [vmem:[%s206 + $0x52] sm:$0xff]
  %v343 = vld [vmem:[%s206 + $0x62] sm:$0xff]
  %v344 = vld [vmem:[%s206 + $0x6a] sm:$0xff]
  %v345 = vld [vmem:[%s206 + $0x7a] sm:$0xff]
  %v346 = vld [vmem:[%s206 + $0x82] sm:$0xff]
  %v347 = vld [vmem:[%s206 + $0x92] sm:$0xff]
  %v348 = vld [vmem:[%s206 + $0x9a] sm:$0xff]
  %v349 = vld [vmem:[%s206 + $0xaa] sm:$0xff]
  %v350 = vld [vmem:[%s206 + $0xb2] sm:$0xff]
  %v351 = vld [vmem:[%s206 + $0xc2] sm:$0xff]
  %v352 = vld [vmem:[%s206 + $0xca] sm:$0xff]
  %v353 = vld [vmem:[%s206 + $0xda] sm:$0xff]
  %v354 = vld [vmem:[%s206 + $0xe2] sm:$0xff]
  %v355 = vld [vmem:[%s206 + $0xf2] sm:$0xff]
  %v356 = vld [vmem:[%s206 + $0xfa] sm:$0xff]
  %v357 = vld [vmem:[%s206 + $0x10a] sm:$0xff]
  %v358 = vld [vmem:[%s206 + $0x112] sm:$0xff]
  %v359 = vld [vmem:[%s206 + $0x122] sm:$0xff]
  %v360 = vld [vmem:[%s206 + $0x12a] sm:$0xff]
  %v361 = vld [vmem:[%s206 + $0x13a] sm:$0xff]
  %v362 = vld [vmem:[%s206 + $0x142] sm:$0xff]
  %v363 = vld [vmem:[%s206 + $0x152] sm:$0xff]
  %v364 = vld [vmem:[%s206 + $0x15a] sm:$0xff]
  %v365 = vld [vmem:[%s206 + $0x16a] sm:$0xff]
  %v366 = vld [vmem:[%s206 + $0x172] sm:$0xff]
  %v367 = vld [vmem:[%s206 + $0x1b2] sm:$0xff]
  %v368 = vld [vmem:[%s206 + $0x1ba] sm:$0xff]
  %v369 = vld [vmem:[%s206 + $0x1ca] sm:$0xff]
  %v370 = vld [vmem:[%s206 + $0x1d2] sm:$0xff]
  %v371 = vld [vmem:[%s206 + $0x1e2] sm:$0xff]
  %v372 = vld [vmem:[%s206 + $0x1ea] sm:$0xff]
  %v373 = vld [vmem:[%s206 + $0x1fa] sm:$0xff]
  %v374 = vld [vmem:[%s206 + $0x202] sm:$0xff]
  %v375 = vld [vmem:[%s206 + $0x212] sm:$0xff]
  %v376 = vld [vmem:[%s206 + $0x21a] sm:$0xff]
  %v377 = vld [vmem:[%s206 + $0x22a] sm:$0xff]
  %v378 = vld [vmem:[%s206 + $0x232] sm:$0xff]
  %v379 = vld [vmem:[%s206 + $0x242] sm:$0xff]
  %v380 = vld [vmem:[%s206 + $0x24a] sm:$0xff]
  %v381 = vld [vmem:[%s206 + $0x25a] sm:$0xff]
  %v382 = vld [vmem:[%s206 + $0x262] sm:$0xff]
  %v383 = vld [vmem:[%s206 + $0x272] sm:$0xff]
  %v384 = vld [vmem:[%s206 + $0x27a] sm:$0xff]
  %v385 = vld [vmem:[%s206 + $0x28a] sm:$0xff]
  %v386 = vld [vmem:[%s206 + $0x292] sm:$0xff]
  %v387 = vld [vmem:[%s206 + $0x2a2] sm:$0xff]
  %v388 = vld [vmem:[%s206 + $0x2aa] sm:$0xff]
  %v389 = vld [vmem:[%s206 + $0x2ba] sm:$0xff]
  %v390 = vld [vmem:[%s206 + $0x2c2] sm:$0xff]
  %v391 = vld [vmem:[%s206 + $0x2d2] sm:$0xff]
  %v392 = vld [vmem:[%s206 + $0x2da] sm:$0xff]
  %v393 = vld [vmem:[%s206 + $0x2ea] sm:$0xff]
  %v394 = vld [vmem:[%s206 + $0x2f2] sm:$0xff]
  %v395 = vld [vmem:[%s206 + $0x302] sm:$0xff]
  %v396 = vld [vmem:[%s206 + $0x30a] sm:$0xff]
  %v397 = vld [vmem:[%s206 + $0x31a] sm:$0xff]
  %v398 = vld [vmem:[%s206 + $0x322] sm:$0xff]
  %s399 = scalar_lea.vmem %s0, 48
  %v400 = vld [vmem:[%s399] sm:$0xff]
  %v401 = vld [vmem:[%s399 + $0x8] sm:$0xff]
  %v402 = vld [vmem:[%s399 + $0x18] sm:$0xff]
  %v403 = vld [vmem:[%s399 + $0x20] sm:$0xff]
  %v404 = vld [vmem:[%s399 + $0x30] sm:$0xff]
  %v405 = vld [vmem:[%s399 + $0x38] sm:$0xff]
  %v406 = vld [vmem:[%s399 + $0x48] sm:$0xff]
  %v407 = vld [vmem:[%s399 + $0x50] sm:$0xff]
  %v408 = vld [vmem:[%s399 + $0x60] sm:$0xff]
  %v409 = vld [vmem:[%s399 + $0x68] sm:$0xff]
  %v410 = vld [vmem:[%s399 + $0x78] sm:$0xff]
  %v411 = vld [vmem:[%s399 + $0x80] sm:$0xff]
  %v412 = vld [vmem:[%s399 + $0x90] sm:$0xff]
  %v413 = vld [vmem:[%s399 + $0x98] sm:$0xff]
  %v414 = vld [vmem:[%s399 + $0xa8] sm:$0xff]
  %v415 = vld [vmem:[%s399 + $0xb0] sm:$0xff]
  %v416 = vld [vmem:[%s399 + $0xc0] sm:$0xff]
  %v417 = vld [vmem:[%s399 + $0xc8] sm:$0xff]
  %v418 = vld [vmem:[%s399 + $0xd8] sm:$0xff]
  %v419 = vld [vmem:[%s399 + $0xe0] sm:$0xff]
  %v420 = vld [vmem:[%s399 + $0xf0] sm:$0xff]
  %v421 = vld [vmem:[%s399 + $0xf8] sm:$0xff]
  %v422 = vld [vmem:[%s399 + $0x108] sm:$0xff]
  %v423 = vld [vmem:[%s399 + $0x110] sm:$0xff]
  %v424 = vld [vmem:[%s399 + $0x120] sm:$0xff]
  %v425 = vld [vmem:[%s399 + $0x128] sm:$0xff]
  %v426 = vld [vmem:[%s399 + $0x138] sm:$0xff]
  %v427 = vld [vmem:[%s399 + $0x140] sm:$0xff]
  %v428 = vld [vmem:[%s399 + $0x150] sm:$0xff]
  %v429 = vld [vmem:[%s399 + $0x158] sm:$0xff]
  %v430 = vld [vmem:[%s399 + $0x168] sm:$0xff]
  %v431 = vld [vmem:[%s399 + $0x170] sm:$0xff]
  %v432 = vld [vmem:[%s399 + $0x1b0] sm:$0xff]
  %v433 = vld [vmem:[%s399 + $0x1b8] sm:$0xff]
  %v434 = vld [vmem:[%s399 + $0x1c8] sm:$0xff]
  %v435 = vld [vmem:[%s399 + $0x1d0] sm:$0xff]
  %v436 = vld [vmem:[%s399 + $0x1e0] sm:$0xff]
  %v437 = vld [vmem:[%s399 + $0x1e8] sm:$0xff]
  %v438 = vld [vmem:[%s399 + $0x1f8] sm:$0xff]
  %v439 = vld [vmem:[%s399 + $0x200] sm:$0xff]
  %v440 = vld [vmem:[%s399 + $0x210] sm:$0xff]
  %v441 = vld [vmem:[%s399 + $0x218] sm:$0xff]
  %v442 = vld [vmem:[%s399 + $0x228] sm:$0xff]
  %v443 = vld [vmem:[%s399 + $0x230] sm:$0xff]
  %v444 = vld [vmem:[%s399 + $0x240] sm:$0xff]
  %v445 = vld [vmem:[%s399 + $0x248] sm:$0xff]
  %v446 = vld [vmem:[%s399 + $0x258] sm:$0xff]
  %v447 = vld [vmem:[%s399 + $0x260] sm:$0xff]
  %v448 = vld [vmem:[%s399 + $0x270] sm:$0xff]
  %v449 = vld [vmem:[%s399 + $0x278] sm:$0xff]
  %v450 = vld [vmem:[%s399 + $0x288] sm:$0xff]
  %v451 = vld [vmem:[%s399 + $0x290] sm:$0xff]
  %v452 = vld [vmem:[%s399 + $0x2a0] sm:$0xff]
  %v453 = vld [vmem:[%s399 + $0x2a8] sm:$0xff]
  %v454 = vld [vmem:[%s399 + $0x2b8] sm:$0xff]
  %v455 = vld [vmem:[%s399 + $0x2c0] sm:$0xff]
  %v456 = vld [vmem:[%s399 + $0x2d0] sm:$0xff]
  %v457 = vld [vmem:[%s399 + $0x2d8] sm:$0xff]
  %v458 = vld [vmem:[%s399 + $0x2e8] sm:$0xff]
  %v459 = vld [vmem:[%s399 + $0x2f0] sm:$0xff]
  %v460 = vld [vmem:[%s399 + $0x300] sm:$0xff]
  %v461 = vld [vmem:[%s399 + $0x308] sm:$0xff]
  %v462 = vld [vmem:[%s399 + $0x318] sm:$0xff]
  %v463 = vld [vmem:[%s399 + $0x320] sm:$0xff]
  %v464 = vld [vmem:[%s399 + $0x1] sm:$0xff]
  %v465 = vld [vmem:[%s399 + $0x9] sm:$0xff]
  %v466 = vld [vmem:[%s399 + $0x19] sm:$0xff]
  %v467 = vld [vmem:[%s399 + $0x21] sm:$0xff]
  %v468 = vld [vmem:[%s399 + $0x31] sm:$0xff]
  %v469 = vld [vmem:[%s399 + $0x39] sm:$0xff]
  %v470 = vld [vmem:[%s399 + $0x49] sm:$0xff]
  %v471 = vld [vmem:[%s399 + $0x51] sm:$0xff]
  %v472 = vld [vmem:[%s399 + $0x61] sm:$0xff]
  %v473 = vld [vmem:[%s399 + $0x69] sm:$0xff]
  %v474 = vld [vmem:[%s399 + $0x79] sm:$0xff]
  %v475 = vld [vmem:[%s399 + $0x81] sm:$0xff]
  %v476 = vld [vmem:[%s399 + $0x91] sm:$0xff]
  %v477 = vld [vmem:[%s399 + $0x99] sm:$0xff]
  %v478 = vld [vmem:[%s399 + $0xa9] sm:$0xff]
  %v479 = vld [vmem:[%s399 + $0xb1] sm:$0xff]
  %v480 = vld [vmem:[%s399 + $0xc1] sm:$0xff]
  %v481 = vld [vmem:[%s399 + $0xc9] sm:$0xff]
  %v482 = vld [vmem:[%s399 + $0xd9] sm:$0xff]
  %v483 = vld [vmem:[%s399 + $0xe1] sm:$0xff]
  %v484 = vld [vmem:[%s399 + $0xf1] sm:$0xff]
  %v485 = vld [vmem:[%s399 + $0xf9] sm:$0xff]
  %v486 = vld [vmem:[%s399 + $0x109] sm:$0xff]
  %v487 = vld [vmem:[%s399 + $0x111] sm:$0xff]
  %v488 = vld [vmem:[%s399 + $0x121] sm:$0xff]
  %v489 = vld [vmem:[%s399 + $0x129] sm:$0xff]
  %v490 = vld [vmem:[%s399 + $0x139] sm:$0xff]
  %v491 = vld [vmem:[%s399 + $0x141] sm:$0xff]
  %v492 = vld [vmem:[%s399 + $0x151] sm:$0xff]
  %v493 = vld [vmem:[%s399 + $0x159] sm:$0xff]
  %v494 = vld [vmem:[%s399 + $0x169] sm:$0xff]
  %v495 = vld [vmem:[%s399 + $0x171] sm:$0xff]
  %v496 = vld [vmem:[%s399 + $0x1b1] sm:$0xff]
  %v497 = vld [vmem:[%s399 + $0x1b9] sm:$0xff]
  %v498 = vld [vmem:[%s399 + $0x1c9] sm:$0xff]
  %v499 = vld [vmem:[%s399 + $0x1d1] sm:$0xff]
  %v500 = vld [vmem:[%s399 + $0x1e1] sm:$0xff]
  %v501 = vld [vmem:[%s399 + $0x1e9] sm:$0xff]
  %v502 = vld [vmem:[%s399 + $0x1f9] sm:$0xff]
  %v503 = vld [vmem:[%s399 + $0x201] sm:$0xff]
  %v504 = vld [vmem:[%s399 + $0x211] sm:$0xff]
  %v505 = vld [vmem:[%s399 + $0x219] sm:$0xff]
  %v506 = vld [vmem:[%s399 + $0x229] sm:$0xff]
  %v507 = vld [vmem:[%s399 + $0x231] sm:$0xff]
  %v508 = vld [vmem:[%s399 + $0x241] sm:$0xff]
  %v509 = vld [vmem:[%s399 + $0x249] sm:$0xff]
  %v510 = vld [vmem:[%s399 + $0x259] sm:$0xff]
  %v511 = vld [vmem:[%s399 + $0x261] sm:$0xff]
  %v512 = vld [vmem:[%s399 + $0x271] sm:$0xff]
  %v513 = vld [vmem:[%s399 + $0x279] sm:$0xff]
  %v514 = vld [vmem:[%s399 + $0x289] sm:$0xff]
  %v515 = vld [vmem:[%s399 + $0x291] sm:$0xff]
  %v516 = vld [vmem:[%s399 + $0x2a1] sm:$0xff]
  %v517 = vld [vmem:[%s399 + $0x2a9] sm:$0xff]
  %v518 = vld [vmem:[%s399 + $0x2b9] sm:$0xff]
  %v519 = vld [vmem:[%s399 + $0x2c1] sm:$0xff]
  %v520 = vld [vmem:[%s399 + $0x2d1] sm:$0xff]
  %v521 = vld [vmem:[%s399 + $0x2d9] sm:$0xff]
  %v522 = vld [vmem:[%s399 + $0x2e9] sm:$0xff]
  %v523 = vld [vmem:[%s399 + $0x2f1] sm:$0xff]
  %v524 = vld [vmem:[%s399 + $0x301] sm:$0xff]
  %v525 = vld [vmem:[%s399 + $0x309] sm:$0xff]
  %v526 = vld [vmem:[%s399 + $0x319] sm:$0xff]
  %v527 = vld [vmem:[%s399 + $0x321] sm:$0xff]
  %v528 = vld [vmem:[%s399 + $0x2] sm:$0xff]
  %v529 = vld [vmem:[%s399 + $0xa] sm:$0xff]
  %v530 = vld [vmem:[%s399 + $0x1a] sm:$0xff]
  %v531 = vld [vmem:[%s399 + $0x22] sm:$0xff]
  %v532 = vld [vmem:[%s399 + $0x32] sm:$0xff]
  %v533 = vld [vmem:[%s399 + $0x3a] sm:$0xff]
  %v534 = vld [vmem:[%s399 + $0x4a] sm:$0xff]
  %v535 = vld [vmem:[%s399 + $0x52] sm:$0xff]
  %v536 = vld [vmem:[%s399 + $0x62] sm:$0xff]
  %v537 = vld [vmem:[%s399 + $0x6a] sm:$0xff]
  %v538 = vld [vmem:[%s399 + $0x7a] sm:$0xff]
  %v539 = vld [vmem:[%s399 + $0x82] sm:$0xff]
  %v540 = vld [vmem:[%s399 + $0x92] sm:$0xff]
  %v541 = vld [vmem:[%s399 + $0x9a] sm:$0xff]
  %v542 = vld [vmem:[%s399 + $0xaa] sm:$0xff]
  %v543 = vld [vmem:[%s399 + $0xb2] sm:$0xff]
  %v544 = vld [vmem:[%s399 + $0xc2] sm:$0xff]
  %v545 = vld [vmem:[%s399 + $0xca] sm:$0xff]
  %v546 = vld [vmem:[%s399 + $0xda] sm:$0xff]
  %v547 = vld [vmem:[%s399 + $0xe2] sm:$0xff]
  %v548 = vld [vmem:[%s399 + $0xf2] sm:$0xff]
  %v549 = vld [vmem:[%s399 + $0xfa] sm:$0xff]
  %v550 = vld [vmem:[%s399 + $0x10a] sm:$0xff]
  %v551 = vld [vmem:[%s399 + $0x112] sm:$0xff]
  %v552 = vld [vmem:[%s399 + $0x122] sm:$0xff]
  %v553 = vld [vmem:[%s399 + $0x12a] sm:$0xff]
  %v554 = vld [vmem:[%s399 + $0x13a] sm:$0xff]
  %v555 = vld [vmem:[%s399 + $0x142] sm:$0xff]
  %v556 = vld [vmem:[%s399 + $0x152] sm:$0xff]
  %v557 = vld [vmem:[%s399 + $0x15a] sm:$0xff]
  %v558 = vld [vmem:[%s399 + $0x16a] sm:$0xff]
  %v559 = vld [vmem:[%s399 + $0x172] sm:$0xff]
  %v560 = vld [vmem:[%s399 + $0x1b2] sm:$0xff]
  %v561 = vld [vmem:[%s399 + $0x1ba] sm:$0xff]
  %v562 = vld [vmem:[%s399 + $0x1ca] sm:$0xff]
  %v563 = vld [vmem:[%s399 + $0x1d2] sm:$0xff]
  %v564 = vld [vmem:[%s399 + $0x1e2] sm:$0xff]
  %v565 = vld [vmem:[%s399 + $0x1ea] sm:$0xff]
  %v566 = vld [vmem:[%s399 + $0x1fa] sm:$0xff]
  %v567 = vld [vmem:[%s399 + $0x202] sm:$0xff]
  %v568 = vld [vmem:[%s399 + $0x212] sm:$0xff]
  %v569 = vld [vmem:[%s399 + $0x21a] sm:$0xff]
  %v570 = vld [vmem:[%s399 + $0x22a] sm:$0xff]
  %v571 = vld [vmem:[%s399 + $0x232] sm:$0xff]
  %v572 = vld [vmem:[%s399 + $0x242] sm:$0xff]
  %v573 = vld [vmem:[%s399 + $0x24a] sm:$0xff]
  %v574 = vld [vmem:[%s399 + $0x25a] sm:$0xff]
  %v575 = vld [vmem:[%s399 + $0x262] sm:$0xff]
  %v576 = vld [vmem:[%s399 + $0x272] sm:$0xff]
  %v577 = vld [vmem:[%s399 + $0x27a] sm:$0xff]
  %v578 = vld [vmem:[%s399 + $0x28a] sm:$0xff]
  %v579 = vld [vmem:[%s399 + $0x292] sm:$0xff]
  %v580 = vld [vmem:[%s399 + $0x2a2] sm:$0xff]
  %v581 = vld [vmem:[%s399 + $0x2aa] sm:$0xff]
  %v582 = vld [vmem:[%s399 + $0x2ba] sm:$0xff]
  %v583 = vld [vmem:[%s399 + $0x2c2] sm:$0xff]
  %v584 = vld [vmem:[%s399 + $0x2d2] sm:$0xff]
  %v585 = vld [vmem:[%s399 + $0x2da] sm:$0xff]
  %v586 = vld [vmem:[%s399 + $0x2ea] sm:$0xff]
  %v587 = vld [vmem:[%s399 + $0x2f2] sm:$0xff]
  %v588 = vld [vmem:[%s399 + $0x302] sm:$0xff]
  %v589 = vld [vmem:[%s399 + $0x30a] sm:$0xff]
  %v590 = vld [vmem:[%s399 + $0x31a] sm:$0xff]
  %v591 = vld [vmem:[%s399 + $0x322] sm:$0xff]
  %656 = vrot.lane.b32.xlu0 %v78, 4
  %v657 = vpop.permute.xlu0 %656
  %658 = vrot.lane.b32.xlu0 %v79, 4
  %v659 = vpop.permute.xlu0 %658
  %660 = vrot.lane.b32.xlu0 %v80, 4
  %v661 = vpop.permute.xlu0 %660
  %662 = vrot.lane.b32.xlu0 %v81, 4
  %v663 = vpop.permute.xlu0 %662
  %664 = vrot.lane.b32.xlu0 %v82, 4
  %v665 = vpop.permute.xlu0 %664
  %666 = vrot.lane.b32.xlu0 %v83, 4
  %v667 = vpop.permute.xlu0 %666
  %668 = vrot.lane.b32.xlu0 %v84, 4
  %v669 = vpop.permute.xlu0 %668
  %670 = vrot.lane.b32.xlu0 %v85, 4
  %v671 = vpop.permute.xlu0 %670
  %672 = vrot.lane.b32.xlu0 %v86, 4
  %v673 = vpop.permute.xlu0 %672
  %674 = vrot.lane.b32.xlu0 %v87, 4
  %v675 = vpop.permute.xlu0 %674
  %676 = vrot.lane.b32.xlu0 %v88, 4
  %v677 = vpop.permute.xlu0 %676
  %678 = vrot.lane.b32.xlu0 %v89, 4
  %v679 = vpop.permute.xlu0 %678
  %680 = vrot.lane.b32.xlu0 %v90, 4
  %v681 = vpop.permute.xlu0 %680
  %682 = vrot.lane.b32.xlu0 %v91, 4
  %v683 = vpop.permute.xlu0 %682
  %684 = vrot.lane.b32.xlu0 %v92, 4
  %v685 = vpop.permute.xlu0 %684
  %686 = vrot.lane.b32.xlu0 %v93, 4
  %v687 = vpop.permute.xlu0 %686
  %688 = vrot.lane.b32.xlu0 %v94, 4
  %v689 = vpop.permute.xlu0 %688
  %690 = vrot.lane.b32.xlu0 %v95, 4
  %v691 = vpop.permute.xlu0 %690
  %692 = vrot.lane.b32.xlu0 %v96, 4
  %v693 = vpop.permute.xlu0 %692
  %694 = vrot.lane.b32.xlu0 %v97, 4
  %v695 = vpop.permute.xlu0 %694
  %696 = vrot.lane.b32.xlu0 %v98, 4
  %v697 = vpop.permute.xlu0 %696
  %698 = vrot.lane.b32.xlu0 %v99, 4
  %v699 = vpop.permute.xlu0 %698
  %700 = vrot.lane.b32.xlu0 %v100, 4
  %v701 = vpop.permute.xlu0 %700
  %702 = vrot.lane.b32.xlu0 %v101, 4
  %v703 = vpop.permute.xlu0 %702
  %704 = vrot.lane.b32.xlu0 %v102, 4
  %v705 = vpop.permute.xlu0 %704
  %706 = vrot.lane.b32.xlu0 %v103, 4
  %v707 = vpop.permute.xlu0 %706
  %708 = vrot.lane.b32.xlu0 %v104, 4
  %v709 = vpop.permute.xlu0 %708
  %710 = vrot.lane.b32.xlu0 %v105, 4
  %v711 = vpop.permute.xlu0 %710
  %712 = vrot.lane.b32.xlu0 %v106, 4
  %v713 = vpop.permute.xlu0 %712
  %714 = vrot.lane.b32.xlu0 %v107, 4
  %v715 = vpop.permute.xlu0 %714
  %716 = vrot.lane.b32.xlu0 %v108, 4
  %v717 = vpop.permute.xlu0 %716
  %718 = vrot.lane.b32.xlu0 %v109, 4
  %v719 = vpop.permute.xlu0 %718
  %720 = vrot.lane.b32.xlu0 %v110, 4
  %v721 = vpop.permute.xlu0 %720
  %722 = vrot.lane.b32.xlu0 %v111, 4
  %v723 = vpop.permute.xlu0 %722
  %724 = vrot.lane.b32.xlu0 %v112, 4
  %v725 = vpop.permute.xlu0 %724
  %726 = vrot.lane.b32.xlu0 %v113, 4
  %v727 = vpop.permute.xlu0 %726
  %728 = vrot.lane.b32.xlu0 %v114, 4
  %v729 = vpop.permute.xlu0 %728
  %730 = vrot.lane.b32.xlu0 %v115, 4
  %v731 = vpop.permute.xlu0 %730
  %732 = vrot.lane.b32.xlu0 %v116, 4
  %v733 = vpop.permute.xlu0 %732
  %734 = vrot.lane.b32.xlu0 %v117, 4
  %v735 = vpop.permute.xlu0 %734
  %736 = vrot.lane.b32.xlu0 %v118, 4
  %v737 = vpop.permute.xlu0 %736
  %738 = vrot.lane.b32.xlu0 %v119, 4
  %v739 = vpop.permute.xlu0 %738
  %740 = vrot.lane.b32.xlu0 %v120, 4
  %v741 = vpop.permute.xlu0 %740
  %742 = vrot.lane.b32.xlu0 %v121, 4
  %v743 = vpop.permute.xlu0 %742
  %744 = vrot.lane.b32.xlu0 %v122, 4
  %v745 = vpop.permute.xlu0 %744
  %746 = vrot.lane.b32.xlu0 %v123, 4
  %v747 = vpop.permute.xlu0 %746
  %748 = vrot.lane.b32.xlu0 %v124, 4
  %v749 = vpop.permute.xlu0 %748
  %750 = vrot.lane.b32.xlu0 %v125, 4
  %v751 = vpop.permute.xlu0 %750
  %752 = vrot.lane.b32.xlu0 %v126, 4
  %v753 = vpop.permute.xlu0 %752
  %754 = vrot.lane.b32.xlu0 %v127, 4
  %v755 = vpop.permute.xlu0 %754
  %756 = vrot.lane.b32.xlu0 %v128, 4
  %v757 = vpop.permute.xlu0 %756
  %758 = vrot.lane.b32.xlu0 %v129, 4
  %v759 = vpop.permute.xlu0 %758
  %760 = vrot.lane.b32.xlu0 %v130, 4
  %v761 = vpop.permute.xlu0 %760
  %762 = vrot.lane.b32.xlu0 %v131, 4
  %v763 = vpop.permute.xlu0 %762
  %764 = vrot.lane.b32.xlu0 %v132, 4
  %v765 = vpop.permute.xlu0 %764
  %766 = vrot.lane.b32.xlu0 %v133, 4
  %v767 = vpop.permute.xlu0 %766
  %768 = vrot.lane.b32.xlu0 %v134, 4
  %v769 = vpop.permute.xlu0 %768
  %770 = vrot.lane.b32.xlu0 %v135, 4
  %v771 = vpop.permute.xlu0 %770
  %772 = vrot.lane.b32.xlu0 %v136, 4
  %v773 = vpop.permute.xlu0 %772
  %774 = vrot.lane.b32.xlu0 %v137, 4
  %v775 = vpop.permute.xlu0 %774
  %776 = vrot.lane.b32.xlu0 %v138, 4
  %v777 = vpop.permute.xlu0 %776
  %778 = vrot.lane.b32.xlu0 %v139, 4
  %v779 = vpop.permute.xlu0 %778
  %780 = vrot.lane.b32.xlu0 %v140, 4
  %v781 = vpop.permute.xlu0 %780
  %782 = vrot.lane.b32.xlu0 %v141, 4
  %v783 = vpop.permute.xlu0 %782
  %912 = vrot.lane.b32.xlu0 %v142, 8
  %v913 = vpop.permute.xlu0 %912
  %914 = vrot.lane.b32.xlu0 %v143, 8
  %v915 = vpop.permute.xlu0 %914
  %916 = vrot.lane.b32.xlu0 %v144, 8
  %v917 = vpop.permute.xlu0 %916
  %918 = vrot.lane.b32.xlu0 %v145, 8
  %v919 = vpop.permute.xlu0 %918
  %920 = vrot.lane.b32.xlu0 %v146, 8
  %v921 = vpop.permute.xlu0 %920
  %922 = vrot.lane.b32.xlu0 %v147, 8
  %v923 = vpop.permute.xlu0 %922
  %924 = vrot.lane.b32.xlu0 %v148, 8
  %v925 = vpop.permute.xlu0 %924
  %926 = vrot.lane.b32.xlu0 %v149, 8
  %v927 = vpop.permute.xlu0 %926
  %928 = vrot.lane.b32.xlu0 %v150, 8
  %v929 = vpop.permute.xlu0 %928
  %930 = vrot.lane.b32.xlu0 %v151, 8
  %v931 = vpop.permute.xlu0 %930
  %932 = vrot.lane.b32.xlu0 %v152, 8
  %v933 = vpop.permute.xlu0 %932
  %934 = vrot.lane.b32.xlu0 %v153, 8
  %v935 = vpop.permute.xlu0 %934
  %936 = vrot.lane.b32.xlu0 %v154, 8
  %v937 = vpop.permute.xlu0 %936
  %938 = vrot.lane.b32.xlu0 %v155, 8
  %v939 = vpop.permute.xlu0 %938
  %940 = vrot.lane.b32.xlu0 %v156, 8
  %v941 = vpop.permute.xlu0 %940
  %942 = vrot.lane.b32.xlu0 %v157, 8
  %v943 = vpop.permute.xlu0 %942
  %944 = vrot.lane.b32.xlu0 %v158, 8
  %v945 = vpop.permute.xlu0 %944
  %946 = vrot.lane.b32.xlu0 %v159, 8
  %v947 = vpop.permute.xlu0 %946
  %948 = vrot.lane.b32.xlu0 %v160, 8
  %v949 = vpop.permute.xlu0 %948
  %950 = vrot.lane.b32.xlu0 %v161, 8
  %v951 = vpop.permute.xlu0 %950
  %952 = vrot.lane.b32.xlu0 %v162, 8
  %v953 = vpop.permute.xlu0 %952
  %954 = vrot.lane.b32.xlu0 %v163, 8
  %v955 = vpop.permute.xlu0 %954
  %956 = vrot.lane.b32.xlu0 %v164, 8
  %v957 = vpop.permute.xlu0 %956
  %958 = vrot.lane.b32.xlu0 %v165, 8
  %v959 = vpop.permute.xlu0 %958
  %960 = vrot.lane.b32.xlu0 %v166, 8
  %v961 = vpop.permute.xlu0 %960
  %962 = vrot.lane.b32.xlu0 %v167, 8
  %v963 = vpop.permute.xlu0 %962
  %964 = vrot.lane.b32.xlu0 %v168, 8
  %v965 = vpop.permute.xlu0 %964
  %966 = vrot.lane.b32.xlu0 %v169, 8
  %v967 = vpop.permute.xlu0 %966
  %968 = vrot.lane.b32.xlu0 %v170, 8
  %v969 = vpop.permute.xlu0 %968
  %970 = vrot.lane.b32.xlu0 %v171, 8
  %v971 = vpop.permute.xlu0 %970
  %972 = vrot.lane.b32.xlu0 %v172, 8
  %v973 = vpop.permute.xlu0 %972
  %974 = vrot.lane.b32.xlu0 %v173, 8
  %v975 = vpop.permute.xlu0 %974
  %976 = vrot.lane.b32.xlu0 %v174, 8
  %v977 = vpop.permute.xlu0 %976
  %978 = vrot.lane.b32.xlu0 %v175, 8
  %v979 = vpop.permute.xlu0 %978
  %980 = vrot.lane.b32.xlu0 %v176, 8
  %v981 = vpop.permute.xlu0 %980
  %982 = vrot.lane.b32.xlu0 %v177, 8
  %v983 = vpop.permute.xlu0 %982
  %984 = vrot.lane.b32.xlu0 %v178, 8
  %v985 = vpop.permute.xlu0 %984
  %986 = vrot.lane.b32.xlu0 %v179, 8
  %v987 = vpop.permute.xlu0 %986
  %988 = vrot.lane.b32.xlu0 %v180, 8
  %v989 = vpop.permute.xlu0 %988
  %990 = vrot.lane.b32.xlu0 %v181, 8
  %v991 = vpop.permute.xlu0 %990
  %992 = vrot.lane.b32.xlu0 %v182, 8
  %v993 = vpop.permute.xlu0 %992
  %994 = vrot.lane.b32.xlu0 %v183, 8
  %v995 = vpop.permute.xlu0 %994
  %996 = vrot.lane.b32.xlu0 %v184, 8
  %v997 = vpop.permute.xlu0 %996
  %998 = vrot.lane.b32.xlu0 %v185, 8
  %v999 = vpop.permute.xlu0 %998
  %1000 = vrot.lane.b32.xlu0 %v186, 8
  %v1001 = vpop.permute.xlu0 %1000
  %1002 = vrot.lane.b32.xlu0 %v187, 8
  %v1003 = vpop.permute.xlu0 %1002
  %1004 = vrot.lane.b32.xlu0 %v188, 8
  %v1005 = vpop.permute.xlu0 %1004
  %1006 = vrot.lane.b32.xlu0 %v189, 8
  %v1007 = vpop.permute.xlu0 %1006
  %1008 = vrot.lane.b32.xlu0 %v190, 8
  %v1009 = vpop.permute.xlu0 %1008
  %1010 = vrot.lane.b32.xlu0 %v191, 8
  %v1011 = vpop.permute.xlu0 %1010
  %1012 = vrot.lane.b32.xlu0 %v192, 8
  %v1013 = vpop.permute.xlu0 %1012
  %1014 = vrot.lane.b32.xlu0 %v193, 8
  %v1015 = vpop.permute.xlu0 %1014
  %1016 = vrot.lane.b32.xlu0 %v194, 8
  %v1017 = vpop.permute.xlu0 %1016
  %1018 = vrot.lane.b32.xlu0 %v195, 8
  %v1019 = vpop.permute.xlu0 %1018
  %1020 = vrot.lane.b32.xlu0 %v196, 8
  %v1021 = vpop.permute.xlu0 %1020
  %1022 = vrot.lane.b32.xlu0 %v197, 8
  %v1023 = vpop.permute.xlu0 %1022
  %1024 = vrot.lane.b32.xlu0 %v198, 8
  %v1025 = vpop.permute.xlu0 %1024
  %1026 = vrot.lane.b32.xlu0 %v199, 8
  %v1027 = vpop.permute.xlu0 %1026
  %1028 = vrot.lane.b32.xlu0 %v200, 8
  %v1029 = vpop.permute.xlu0 %1028
  %1030 = vrot.lane.b32.xlu0 %v201, 8
  %v1031 = vpop.permute.xlu0 %1030
  %1032 = vrot.lane.b32.xlu0 %v202, 8
  %v1033 = vpop.permute.xlu0 %1032
  %1034 = vrot.lane.b32.xlu0 %v203, 8
  %v1035 = vpop.permute.xlu0 %1034
  %1036 = vrot.lane.b32.xlu0 %v204, 8
  %v1037 = vpop.permute.xlu0 %1036
  %1038 = vrot.lane.b32.xlu0 %v205, 8
  %v1039 = vpop.permute.xlu0 %1038
  %1168 = vrot.lane.b32.xlu0 %v207, 12
  %v1169 = vpop.permute.xlu0 %1168
  %1170 = vrot.lane.b32.xlu0 %v208, 12
  %v1171 = vpop.permute.xlu0 %1170
  %1172 = vrot.lane.b32.xlu0 %v209, 12
  %v1173 = vpop.permute.xlu0 %1172
  %1174 = vrot.lane.b32.xlu0 %v210, 12
  %v1175 = vpop.permute.xlu0 %1174
  %1176 = vrot.lane.b32.xlu0 %v211, 12
  %v1177 = vpop.permute.xlu0 %1176
  %1178 = vrot.lane.b32.xlu0 %v212, 12
  %v1179 = vpop.permute.xlu0 %1178
  %1180 = vrot.lane.b32.xlu0 %v213, 12
  %v1181 = vpop.permute.xlu0 %1180
  %1182 = vrot.lane.b32.xlu0 %v214, 12
  %v1183 = vpop.permute.xlu0 %1182
  %1184 = vrot.lane.b32.xlu0 %v215, 12
  %v1185 = vpop.permute.xlu0 %1184
  %1186 = vrot.lane.b32.xlu0 %v216, 12
  %v1187 = vpop.permute.xlu0 %1186
  %1188 = vrot.lane.b32.xlu0 %v217, 12
  %v1189 = vpop.permute.xlu0 %1188
  %1190 = vrot.lane.b32.xlu0 %v218, 12
  %v1191 = vpop.permute.xlu0 %1190
  %1192 = vrot.lane.b32.xlu0 %v219, 12
  %v1193 = vpop.permute.xlu0 %1192
  %1194 = vrot.lane.b32.xlu0 %v220, 12
  %v1195 = vpop.permute.xlu0 %1194
  %1196 = vrot.lane.b32.xlu0 %v221, 12
  %v1197 = vpop.permute.xlu0 %1196
  %1198 = vrot.lane.b32.xlu0 %v222, 12
  %v1199 = vpop.permute.xlu0 %1198
  %1200 = vrot.lane.b32.xlu0 %v223, 12
  %v1201 = vpop.permute.xlu0 %1200
  %1202 = vrot.lane.b32.xlu0 %v224, 12
  %v1203 = vpop.permute.xlu0 %1202
  %1204 = vrot.lane.b32.xlu0 %v225, 12
  %v1205 = vpop.permute.xlu0 %1204
  %1206 = vrot.lane.b32.xlu0 %v226, 12
  %v1207 = vpop.permute.xlu0 %1206
  %1208 = vrot.lane.b32.xlu0 %v227, 12
  %v1209 = vpop.permute.xlu0 %1208
  %1210 = vrot.lane.b32.xlu0 %v228, 12
  %v1211 = vpop.permute.xlu0 %1210
  %1212 = vrot.lane.b32.xlu0 %v229, 12
  %v1213 = vpop.permute.xlu0 %1212
  %1214 = vrot.lane.b32.xlu0 %v230, 12
  %v1215 = vpop.permute.xlu0 %1214
  %1216 = vrot.lane.b32.xlu0 %v231, 12
  %v1217 = vpop.permute.xlu0 %1216
  %1218 = vrot.lane.b32.xlu0 %v232, 12
  %v1219 = vpop.permute.xlu0 %1218
  %1220 = vrot.lane.b32.xlu0 %v233, 12
  %v1221 = vpop.permute.xlu0 %1220
  %1222 = vrot.lane.b32.xlu0 %v234, 12
  %v1223 = vpop.permute.xlu0 %1222
  %1224 = vrot.lane.b32.xlu0 %v235, 12
  %v1225 = vpop.permute.xlu0 %1224
  %1226 = vrot.lane.b32.xlu0 %v236, 12
  %v1227 = vpop.permute.xlu0 %1226
  %1228 = vrot.lane.b32.xlu0 %v237, 12
  %v1229 = vpop.permute.xlu0 %1228
  %1230 = vrot.lane.b32.xlu0 %v238, 12
  %v1231 = vpop.permute.xlu0 %1230
  %1232 = vrot.lane.b32.xlu0 %v239, 12
  %v1233 = vpop.permute.xlu0 %1232
  %1234 = vrot.lane.b32.xlu0 %v240, 12
  %v1235 = vpop.permute.xlu0 %1234
  %1236 = vrot.lane.b32.xlu0 %v241, 12
  %v1237 = vpop.permute.xlu0 %1236
  %1238 = vrot.lane.b32.xlu0 %v242, 12
  %v1239 = vpop.permute.xlu0 %1238
  %1240 = vrot.lane.b32.xlu0 %v243, 12
  %v1241 = vpop.permute.xlu0 %1240
  %1242 = vrot.lane.b32.xlu0 %v244, 12
  %v1243 = vpop.permute.xlu0 %1242
  %1244 = vrot.lane.b32.xlu0 %v245, 12
  %v1245 = vpop.permute.xlu0 %1244
  %1246 = vrot.lane.b32.xlu0 %v246, 12
  %v1247 = vpop.permute.xlu0 %1246
  %1248 = vrot.lane.b32.xlu0 %v247, 12
  %v1249 = vpop.permute.xlu0 %1248
  %1250 = vrot.lane.b32.xlu0 %v248, 12
  %v1251 = vpop.permute.xlu0 %1250
  %1252 = vrot.lane.b32.xlu0 %v249, 12
  %v1253 = vpop.permute.xlu0 %1252
  %1254 = vrot.lane.b32.xlu0 %v250, 12
  %v1255 = vpop.permute.xlu0 %1254
  %1256 = vrot.lane.b32.xlu0 %v251, 12
  %v1257 = vpop.permute.xlu0 %1256
  %1258 = vrot.lane.b32.xlu0 %v252, 12
  %v1259 = vpop.permute.xlu0 %1258
  %1260 = vrot.lane.b32.xlu0 %v253, 12
  %v1261 = vpop.permute.xlu0 %1260
  %1262 = vrot.lane.b32.xlu0 %v254, 12
  %v1263 = vpop.permute.xlu0 %1262
  %1264 = vrot.lane.b32.xlu0 %v255, 12
  %v1265 = vpop.permute.xlu0 %1264
  %1266 = vrot.lane.b32.xlu0 %v256, 12
  %v1267 = vpop.permute.xlu0 %1266
  %1268 = vrot.lane.b32.xlu0 %v257, 12
  %v1269 = vpop.permute.xlu0 %1268
  %1270 = vrot.lane.b32.xlu0 %v258, 12
  %v1271 = vpop.permute.xlu0 %1270
  %1272 = vrot.lane.b32.xlu0 %v259, 12
  %v1273 = vpop.permute.xlu0 %1272
  %1274 = vrot.lane.b32.xlu0 %v260, 12
  %v1275 = vpop.permute.xlu0 %1274
  %1276 = vrot.lane.b32.xlu0 %v261, 12
  %v1277 = vpop.permute.xlu0 %1276
  %1278 = vrot.lane.b32.xlu0 %v262, 12
  %v1279 = vpop.permute.xlu0 %1278
  %1280 = vrot.lane.b32.xlu0 %v263, 12
  %v1281 = vpop.permute.xlu0 %1280
  %1282 = vrot.lane.b32.xlu0 %v264, 12
  %v1283 = vpop.permute.xlu0 %1282
  %1284 = vrot.lane.b32.xlu0 %v265, 12
  %v1285 = vpop.permute.xlu0 %1284
  %1286 = vrot.lane.b32.xlu0 %v266, 12
  %v1287 = vpop.permute.xlu0 %1286
  %1288 = vrot.lane.b32.xlu0 %v267, 12
  %v1289 = vpop.permute.xlu0 %1288
  %1290 = vrot.lane.b32.xlu0 %v268, 12
  %v1291 = vpop.permute.xlu0 %1290
  %1292 = vrot.lane.b32.xlu0 %v269, 12
  %v1293 = vpop.permute.xlu0 %1292
  %1294 = vrot.lane.b32.xlu0 %v270, 12
  %v1295 = vpop.permute.xlu0 %1294
  %1424 = vrot.lane.b32.xlu0 %v271, 16
  %v1425 = vpop.permute.xlu0 %1424
  %1426 = vrot.lane.b32.xlu0 %v272, 16
  %v1427 = vpop.permute.xlu0 %1426
  %1428 = vrot.lane.b32.xlu0 %v273, 16
  %v1429 = vpop.permute.xlu0 %1428
  %1430 = vrot.lane.b32.xlu0 %v274, 16
  %v1431 = vpop.permute.xlu0 %1430
  %1432 = vrot.lane.b32.xlu0 %v275, 16
  %v1433 = vpop.permute.xlu0 %1432
  %1434 = vrot.lane.b32.xlu0 %v276, 16
  %v1435 = vpop.permute.xlu0 %1434
  %1436 = vrot.lane.b32.xlu0 %v277, 16
  %v1437 = vpop.permute.xlu0 %1436
  %1438 = vrot.lane.b32.xlu0 %v278, 16
  %v1439 = vpop.permute.xlu0 %1438
  %1440 = vrot.lane.b32.xlu0 %v279, 16
  %v1441 = vpop.permute.xlu0 %1440
  %1442 = vrot.lane.b32.xlu0 %v280, 16
  %v1443 = vpop.permute.xlu0 %1442
  %1444 = vrot.lane.b32.xlu0 %v281, 16
  %v1445 = vpop.permute.xlu0 %1444
  %1446 = vrot.lane.b32.xlu0 %v282, 16
  %v1447 = vpop.permute.xlu0 %1446
  %1448 = vrot.lane.b32.xlu0 %v283, 16
  %v1449 = vpop.permute.xlu0 %1448
  %1450 = vrot.lane.b32.xlu0 %v284, 16
  %v1451 = vpop.permute.xlu0 %1450
  %1452 = vrot.lane.b32.xlu0 %v285, 16
  %v1453 = vpop.permute.xlu0 %1452
  %1454 = vrot.lane.b32.xlu0 %v286, 16
  %v1455 = vpop.permute.xlu0 %1454
  %1456 = vrot.lane.b32.xlu0 %v287, 16
  %v1457 = vpop.permute.xlu0 %1456
  %1458 = vrot.lane.b32.xlu0 %v288, 16
  %v1459 = vpop.permute.xlu0 %1458
  %1460 = vrot.lane.b32.xlu0 %v289, 16
  %v1461 = vpop.permute.xlu0 %1460
  %1462 = vrot.lane.b32.xlu0 %v290, 16
  %v1463 = vpop.permute.xlu0 %1462
  %1464 = vrot.lane.b32.xlu0 %v291, 16
  %v1465 = vpop.permute.xlu0 %1464
  %1466 = vrot.lane.b32.xlu0 %v292, 16
  %v1467 = vpop.permute.xlu0 %1466
  %1468 = vrot.lane.b32.xlu0 %v293, 16
  %v1469 = vpop.permute.xlu0 %1468
  %1470 = vrot.lane.b32.xlu0 %v294, 16
  %v1471 = vpop.permute.xlu0 %1470
  %1472 = vrot.lane.b32.xlu0 %v295, 16
  %v1473 = vpop.permute.xlu0 %1472
  %1474 = vrot.lane.b32.xlu0 %v296, 16
  %v1475 = vpop.permute.xlu0 %1474
  %1476 = vrot.lane.b32.xlu0 %v297, 16
  %v1477 = vpop.permute.xlu0 %1476
  %1478 = vrot.lane.b32.xlu0 %v298, 16
  %v1479 = vpop.permute.xlu0 %1478
  %1480 = vrot.lane.b32.xlu0 %v299, 16
  %v1481 = vpop.permute.xlu0 %1480
  %1482 = vrot.lane.b32.xlu0 %v300, 16
  %v1483 = vpop.permute.xlu0 %1482
  %1484 = vrot.lane.b32.xlu0 %v301, 16
  %v1485 = vpop.permute.xlu0 %1484
  %1486 = vrot.lane.b32.xlu0 %v302, 16
  %v1487 = vpop.permute.xlu0 %1486
  %1488 = vrot.lane.b32.xlu0 %v303, 16
  %v1489 = vpop.permute.xlu0 %1488
  %1490 = vrot.lane.b32.xlu0 %v304, 16
  %v1491 = vpop.permute.xlu0 %1490
  %1492 = vrot.lane.b32.xlu0 %v305, 16
  %v1493 = vpop.permute.xlu0 %1492
  %1494 = vrot.lane.b32.xlu0 %v306, 16
  %v1495 = vpop.permute.xlu0 %1494
  %1496 = vrot.lane.b32.xlu0 %v307, 16
  %v1497 = vpop.permute.xlu0 %1496
  %1498 = vrot.lane.b32.xlu0 %v308, 16
  %v1499 = vpop.permute.xlu0 %1498
  %1500 = vrot.lane.b32.xlu0 %v309, 16
  %v1501 = vpop.permute.xlu0 %1500
  %1502 = vrot.lane.b32.xlu0 %v310, 16
  %v1503 = vpop.permute.xlu0 %1502
  %1504 = vrot.lane.b32.xlu0 %v311, 16
  %v1505 = vpop.permute.xlu0 %1504
  %1506 = vrot.lane.b32.xlu0 %v312, 16
  %v1507 = vpop.permute.xlu0 %1506
  %1508 = vrot.lane.b32.xlu0 %v313, 16
  %v1509 = vpop.permute.xlu0 %1508
  %1510 = vrot.lane.b32.xlu0 %v314, 16
  %v1511 = vpop.permute.xlu0 %1510
  %1512 = vrot.lane.b32.xlu0 %v315, 16
  %v1513 = vpop.permute.xlu0 %1512
  %1514 = vrot.lane.b32.xlu0 %v316, 16
  %v1515 = vpop.permute.xlu0 %1514
  %1516 = vrot.lane.b32.xlu0 %v317, 16
  %v1517 = vpop.permute.xlu0 %1516
  %1518 = vrot.lane.b32.xlu0 %v318, 16
  %v1519 = vpop.permute.xlu0 %1518
  %1520 = vrot.lane.b32.xlu0 %v319, 16
  %v1521 = vpop.permute.xlu0 %1520
  %1522 = vrot.lane.b32.xlu0 %v320, 16
  %v1523 = vpop.permute.xlu0 %1522
  %1524 = vrot.lane.b32.xlu0 %v321, 16
  %v1525 = vpop.permute.xlu0 %1524
  %1526 = vrot.lane.b32.xlu0 %v322, 16
  %v1527 = vpop.permute.xlu0 %1526
  %1528 = vrot.lane.b32.xlu0 %v323, 16
  %v1529 = vpop.permute.xlu0 %1528
  %1530 = vrot.lane.b32.xlu0 %v324, 16
  %v1531 = vpop.permute.xlu0 %1530
  %1532 = vrot.lane.b32.xlu0 %v325, 16
  %v1533 = vpop.permute.xlu0 %1532
  %1534 = vrot.lane.b32.xlu0 %v326, 16
  %v1535 = vpop.permute.xlu0 %1534
  %1536 = vrot.lane.b32.xlu0 %v327, 16
  %v1537 = vpop.permute.xlu0 %1536
  %1538 = vrot.lane.b32.xlu0 %v328, 16
  %v1539 = vpop.permute.xlu0 %1538
  %1540 = vrot.lane.b32.xlu0 %v329, 16
  %v1541 = vpop.permute.xlu0 %1540
  %1542 = vrot.lane.b32.xlu0 %v330, 16
  %v1543 = vpop.permute.xlu0 %1542
  %1544 = vrot.lane.b32.xlu0 %v331, 16
  %v1545 = vpop.permute.xlu0 %1544
  %1546 = vrot.lane.b32.xlu0 %v332, 16
  %v1547 = vpop.permute.xlu0 %1546
  %1548 = vrot.lane.b32.xlu0 %v333, 16
  %v1549 = vpop.permute.xlu0 %1548
  %1550 = vrot.lane.b32.xlu0 %v334, 16
  %v1551 = vpop.permute.xlu0 %1550
  %1680 = vrot.lane.b32.xlu0 %v335, 20
  %v1681 = vpop.permute.xlu0 %1680
  %1682 = vrot.lane.b32.xlu0 %v336, 20
  %v1683 = vpop.permute.xlu0 %1682
  %1684 = vrot.lane.b32.xlu0 %v337, 20
  %v1685 = vpop.permute.xlu0 %1684
  %1686 = vrot.lane.b32.xlu0 %v338, 20
  %v1687 = vpop.permute.xlu0 %1686
  %1688 = vrot.lane.b32.xlu0 %v339, 20
  %v1689 = vpop.permute.xlu0 %1688
  %1690 = vrot.lane.b32.xlu0 %v340, 20
  %v1691 = vpop.permute.xlu0 %1690
  %1692 = vrot.lane.b32.xlu0 %v341, 20
  %v1693 = vpop.permute.xlu0 %1692
  %1694 = vrot.lane.b32.xlu0 %v342, 20
  %v1695 = vpop.permute.xlu0 %1694
  %1696 = vrot.lane.b32.xlu0 %v343, 20
  %v1697 = vpop.permute.xlu0 %1696
  %1698 = vrot.lane.b32.xlu0 %v344, 20
  %v1699 = vpop.permute.xlu0 %1698
  %1700 = vrot.lane.b32.xlu0 %v345, 20
  %v1701 = vpop.permute.xlu0 %1700
  %1702 = vrot.lane.b32.xlu0 %v346, 20
  %v1703 = vpop.permute.xlu0 %1702
  %1704 = vrot.lane.b32.xlu0 %v347, 20
  %v1705 = vpop.permute.xlu0 %1704
  %1706 = vrot.lane.b32.xlu0 %v348, 20
  %v1707 = vpop.permute.xlu0 %1706
  %1708 = vrot.lane.b32.xlu0 %v349, 20
  %v1709 = vpop.permute.xlu0 %1708
  %1710 = vrot.lane.b32.xlu0 %v350, 20
  %v1711 = vpop.permute.xlu0 %1710
  %1712 = vrot.lane.b32.xlu0 %v351, 20
  %v1713 = vpop.permute.xlu0 %1712
  %1714 = vrot.lane.b32.xlu0 %v352, 20
  %v1715 = vpop.permute.xlu0 %1714
  %1716 = vrot.lane.b32.xlu0 %v353, 20
  %v1717 = vpop.permute.xlu0 %1716
  %1718 = vrot.lane.b32.xlu0 %v354, 20
  %v1719 = vpop.permute.xlu0 %1718
  %1720 = vrot.lane.b32.xlu0 %v355, 20
  %v1721 = vpop.permute.xlu0 %1720
  %1722 = vrot.lane.b32.xlu0 %v356, 20
  %v1723 = vpop.permute.xlu0 %1722
  %1724 = vrot.lane.b32.xlu0 %v357, 20
  %v1725 = vpop.permute.xlu0 %1724
  %1726 = vrot.lane.b32.xlu0 %v358, 20
  %v1727 = vpop.permute.xlu0 %1726
  %1728 = vrot.lane.b32.xlu0 %v359, 20
  %v1729 = vpop.permute.xlu0 %1728
  %1730 = vrot.lane.b32.xlu0 %v360, 20
  %v1731 = vpop.permute.xlu0 %1730
  %1732 = vrot.lane.b32.xlu0 %v361, 20
  %v1733 = vpop.permute.xlu0 %1732
  %1734 = vrot.lane.b32.xlu0 %v362, 20
  %v1735 = vpop.permute.xlu0 %1734
  %1736 = vrot.lane.b32.xlu0 %v363, 20
  %v1737 = vpop.permute.xlu0 %1736
  %1738 = vrot.lane.b32.xlu0 %v364, 20
  %v1739 = vpop.permute.xlu0 %1738
  %1740 = vrot.lane.b32.xlu0 %v365, 20
  %v1741 = vpop.permute.xlu0 %1740
  %1742 = vrot.lane.b32.xlu0 %v366, 20
  %v1743 = vpop.permute.xlu0 %1742
  %1744 = vrot.lane.b32.xlu0 %v367, 20
  %v1745 = vpop.permute.xlu0 %1744
  %1746 = vrot.lane.b32.xlu0 %v368, 20
  %v1747 = vpop.permute.xlu0 %1746
  %1748 = vrot.lane.b32.xlu0 %v369, 20
  %v1749 = vpop.permute.xlu0 %1748
  %1750 = vrot.lane.b32.xlu0 %v370, 20
  %v1751 = vpop.permute.xlu0 %1750
  %1752 = vrot.lane.b32.xlu0 %v371, 20
  %v1753 = vpop.permute.xlu0 %1752
  %1754 = vrot.lane.b32.xlu0 %v372, 20
  %v1755 = vpop.permute.xlu0 %1754
  %1756 = vrot.lane.b32.xlu0 %v373, 20
  %v1757 = vpop.permute.xlu0 %1756
  %1758 = vrot.lane.b32.xlu0 %v374, 20
  %v1759 = vpop.permute.xlu0 %1758
  %1760 = vrot.lane.b32.xlu0 %v375, 20
  %v1761 = vpop.permute.xlu0 %1760
  %1762 = vrot.lane.b32.xlu0 %v376, 20
  %v1763 = vpop.permute.xlu0 %1762
  %1764 = vrot.lane.b32.xlu0 %v377, 20
  %v1765 = vpop.permute.xlu0 %1764
  %1766 = vrot.lane.b32.xlu0 %v378, 20
  %v1767 = vpop.permute.xlu0 %1766
  %1768 = vrot.lane.b32.xlu0 %v379, 20
  %v1769 = vpop.permute.xlu0 %1768
  %1770 = vrot.lane.b32.xlu0 %v380, 20
  %v1771 = vpop.permute.xlu0 %1770
  %1772 = vrot.lane.b32.xlu0 %v381, 20
  %v1773 = vpop.permute.xlu0 %1772
  %1774 = vrot.lane.b32.xlu0 %v382, 20
  %v1775 = vpop.permute.xlu0 %1774
  %1776 = vrot.lane.b32.xlu0 %v383, 20
  %v1777 = vpop.permute.xlu0 %1776
  %1778 = vrot.lane.b32.xlu0 %v384, 20
  %v1779 = vpop.permute.xlu0 %1778
  %1780 = vrot.lane.b32.xlu0 %v385, 20
  %v1781 = vpop.permute.xlu0 %1780
  %1782 = vrot.lane.b32.xlu0 %v386, 20
  %v1783 = vpop.permute.xlu0 %1782
  %1784 = vrot.lane.b32.xlu0 %v387, 20
  %v1785 = vpop.permute.xlu0 %1784
  %1786 = vrot.lane.b32.xlu0 %v388, 20
  %v1787 = vpop.permute.xlu0 %1786
  %1788 = vrot.lane.b32.xlu0 %v389, 20
  %v1789 = vpop.permute.xlu0 %1788
  %1790 = vrot.lane.b32.xlu0 %v390, 20
  %v1791 = vpop.permute.xlu0 %1790
  %1792 = vrot.lane.b32.xlu0 %v391, 20
  %v1793 = vpop.permute.xlu0 %1792
  %1794 = vrot.lane.b32.xlu0 %v392, 20
  %v1795 = vpop.permute.xlu0 %1794
  %1796 = vrot.lane.b32.xlu0 %v393, 20
  %v1797 = vpop.permute.xlu0 %1796
  %1798 = vrot.lane.b32.xlu0 %v394, 20
  %v1799 = vpop.permute.xlu0 %1798
  %1800 = vrot.lane.b32.xlu0 %v395, 20
  %v1801 = vpop.permute.xlu0 %1800
  %1802 = vrot.lane.b32.xlu0 %v396, 20
  %v1803 = vpop.permute.xlu0 %1802
  %1804 = vrot.lane.b32.xlu0 %v397, 20
  %v1805 = vpop.permute.xlu0 %1804
  %1806 = vrot.lane.b32.xlu0 %v398, 20
  %v1807 = vpop.permute.xlu0 %1806
  %1936 = vrot.lane.b32.xlu0 %v400, 24
  %v1937 = vpop.permute.xlu0 %1936
  %1938 = vrot.lane.b32.xlu0 %v401, 24
  %v1939 = vpop.permute.xlu0 %1938
  %1940 = vrot.lane.b32.xlu0 %v402, 24
  %v1941 = vpop.permute.xlu0 %1940
  %1942 = vrot.lane.b32.xlu0 %v403, 24
  %v1943 = vpop.permute.xlu0 %1942
  %1944 = vrot.lane.b32.xlu0 %v404, 24
  %v1945 = vpop.permute.xlu0 %1944
  %1946 = vrot.lane.b32.xlu0 %v405, 24
  %v1947 = vpop.permute.xlu0 %1946
  %1948 = vrot.lane.b32.xlu0 %v406, 24
  %v1949 = vpop.permute.xlu0 %1948
  %1950 = vrot.lane.b32.xlu0 %v407, 24
  %v1951 = vpop.permute.xlu0 %1950
  %1952 = vrot.lane.b32.xlu0 %v408, 24
  %v1953 = vpop.permute.xlu0 %1952
  %1954 = vrot.lane.b32.xlu0 %v409, 24
  %v1955 = vpop.permute.xlu0 %1954
  %1956 = vrot.lane.b32.xlu0 %v410, 24
  %v1957 = vpop.permute.xlu0 %1956
  %1958 = vrot.lane.b32.xlu0 %v411, 24
  %v1959 = vpop.permute.xlu0 %1958
  %1960 = vrot.lane.b32.xlu0 %v412, 24
  %v1961 = vpop.permute.xlu0 %1960
  %1962 = vrot.lane.b32.xlu0 %v413, 24
  %v1963 = vpop.permute.xlu0 %1962
  %1964 = vrot.lane.b32.xlu0 %v414, 24
  %v1965 = vpop.permute.xlu0 %1964
  %1966 = vrot.lane.b32.xlu0 %v415, 24
  %v1967 = vpop.permute.xlu0 %1966
  %1968 = vrot.lane.b32.xlu0 %v416, 24
  %v1969 = vpop.permute.xlu0 %1968
  %1970 = vrot.lane.b32.xlu0 %v417, 24
  %v1971 = vpop.permute.xlu0 %1970
  %1972 = vrot.lane.b32.xlu0 %v418, 24
  %v1973 = vpop.permute.xlu0 %1972
  %1974 = vrot.lane.b32.xlu0 %v419, 24
  %v1975 = vpop.permute.xlu0 %1974
  %1976 = vrot.lane.b32.xlu0 %v420, 24
  %v1977 = vpop.permute.xlu0 %1976
  %1978 = vrot.lane.b32.xlu0 %v421, 24
  %v1979 = vpop.permute.xlu0 %1978
  %1980 = vrot.lane.b32.xlu0 %v422, 24
  %v1981 = vpop.permute.xlu0 %1980
  %1982 = vrot.lane.b32.xlu0 %v423, 24
  %v1983 = vpop.permute.xlu0 %1982
  %1984 = vrot.lane.b32.xlu0 %v424, 24
  %v1985 = vpop.permute.xlu0 %1984
  %1986 = vrot.lane.b32.xlu0 %v425, 24
  %v1987 = vpop.permute.xlu0 %1986
  %1988 = vrot.lane.b32.xlu0 %v426, 24
  %v1989 = vpop.permute.xlu0 %1988
  %1990 = vrot.lane.b32.xlu0 %v427, 24
  %v1991 = vpop.permute.xlu0 %1990
  %1992 = vrot.lane.b32.xlu0 %v428, 24
  %v1993 = vpop.permute.xlu0 %1992
  %1994 = vrot.lane.b32.xlu0 %v429, 24
  %v1995 = vpop.permute.xlu0 %1994
  %1996 = vrot.lane.b32.xlu0 %v430, 24
  %v1997 = vpop.permute.xlu0 %1996
  %1998 = vrot.lane.b32.xlu0 %v431, 24
  %v1999 = vpop.permute.xlu0 %1998
  %2000 = vrot.lane.b32.xlu0 %v432, 24
  %v2001 = vpop.permute.xlu0 %2000
  %2002 = vrot.lane.b32.xlu0 %v433, 24
  %v2003 = vpop.permute.xlu0 %2002
  %2004 = vrot.lane.b32.xlu0 %v434, 24
  %v2005 = vpop.permute.xlu0 %2004
  %2006 = vrot.lane.b32.xlu0 %v435, 24
  %v2007 = vpop.permute.xlu0 %2006
  %2008 = vrot.lane.b32.xlu0 %v436, 24
  %v2009 = vpop.permute.xlu0 %2008
  %2010 = vrot.lane.b32.xlu0 %v437, 24
  %v2011 = vpop.permute.xlu0 %2010
  %2012 = vrot.lane.b32.xlu0 %v438, 24
  %v2013 = vpop.permute.xlu0 %2012
  %2014 = vrot.lane.b32.xlu0 %v439, 24
  %v2015 = vpop.permute.xlu0 %2014
  %2016 = vrot.lane.b32.xlu0 %v440, 24
  %v2017 = vpop.permute.xlu0 %2016
  %2018 = vrot.lane.b32.xlu0 %v441, 24
  %v2019 = vpop.permute.xlu0 %2018
  %2020 = vrot.lane.b32.xlu0 %v442, 24
  %v2021 = vpop.permute.xlu0 %2020
  %2022 = vrot.lane.b32.xlu0 %v443, 24
  %v2023 = vpop.permute.xlu0 %2022
  %2024 = vrot.lane.b32.xlu0 %v444, 24
  %v2025 = vpop.permute.xlu0 %2024
  %2026 = vrot.lane.b32.xlu0 %v445, 24
  %v2027 = vpop.permute.xlu0 %2026
  %2028 = vrot.lane.b32.xlu0 %v446, 24
  %v2029 = vpop.permute.xlu0 %2028
  %2030 = vrot.lane.b32.xlu0 %v447, 24
  %v2031 = vpop.permute.xlu0 %2030
  %2032 = vrot.lane.b32.xlu0 %v448, 24
  %v2033 = vpop.permute.xlu0 %2032
  %2034 = vrot.lane.b32.xlu0 %v449, 24
  %v2035 = vpop.permute.xlu0 %2034
  %2036 = vrot.lane.b32.xlu0 %v450, 24
  %v2037 = vpop.permute.xlu0 %2036
  %2038 = vrot.lane.b32.xlu0 %v451, 24
  %v2039 = vpop.permute.xlu0 %2038
  %2040 = vrot.lane.b32.xlu0 %v452, 24
  %v2041 = vpop.permute.xlu0 %2040
  %2042 = vrot.lane.b32.xlu0 %v453, 24
  %v2043 = vpop.permute.xlu0 %2042
  %2044 = vrot.lane.b32.xlu0 %v454, 24
  %v2045 = vpop.permute.xlu0 %2044
  %2046 = vrot.lane.b32.xlu0 %v455, 24
  %v2047 = vpop.permute.xlu0 %2046
  %2048 = vrot.lane.b32.xlu0 %v456, 24
  %v2049 = vpop.permute.xlu0 %2048
  %2050 = vrot.lane.b32.xlu0 %v457, 24
  %v2051 = vpop.permute.xlu0 %2050
  %2052 = vrot.lane.b32.xlu0 %v458, 24
  %v2053 = vpop.permute.xlu0 %2052
  %2054 = vrot.lane.b32.xlu0 %v459, 24
  %v2055 = vpop.permute.xlu0 %2054
  %2056 = vrot.lane.b32.xlu0 %v460, 24
  %v2057 = vpop.permute.xlu0 %2056
  %2058 = vrot.lane.b32.xlu0 %v461, 24
  %v2059 = vpop.permute.xlu0 %2058
  %2060 = vrot.lane.b32.xlu0 %v462, 24
  %v2061 = vpop.permute.xlu0 %2060
  %2062 = vrot.lane.b32.xlu0 %v463, 24
  %v2063 = vpop.permute.xlu0 %2062
  %2192 = vrot.lane.b32.xlu0 %v464, 28
  %v2193 = vpop.permute.xlu0 %2192
  %2194 = vrot.lane.b32.xlu0 %v465, 28
  %v2195 = vpop.permute.xlu0 %2194
  %2196 = vrot.lane.b32.xlu0 %v466, 28
  %v2197 = vpop.permute.xlu0 %2196
  %2198 = vrot.lane.b32.xlu0 %v467, 28
  %v2199 = vpop.permute.xlu0 %2198
  %2200 = vrot.lane.b32.xlu0 %v468, 28
  %v2201 = vpop.permute.xlu0 %2200
  %2202 = vrot.lane.b32.xlu0 %v469, 28
  %v2203 = vpop.permute.xlu0 %2202
  %2204 = vrot.lane.b32.xlu0 %v470, 28
  %v2205 = vpop.permute.xlu0 %2204
  %2206 = vrot.lane.b32.xlu0 %v471, 28
  %v2207 = vpop.permute.xlu0 %2206
  %2208 = vrot.lane.b32.xlu0 %v472, 28
  %v2209 = vpop.permute.xlu0 %2208
  %2210 = vrot.lane.b32.xlu0 %v473, 28
  %v2211 = vpop.permute.xlu0 %2210
  %2212 = vrot.lane.b32.xlu0 %v474, 28
  %v2213 = vpop.permute.xlu0 %2212
  %2214 = vrot.lane.b32.xlu0 %v475, 28
  %v2215 = vpop.permute.xlu0 %2214
  %2216 = vrot.lane.b32.xlu0 %v476, 28
  %v2217 = vpop.permute.xlu0 %2216
  %2218 = vrot.lane.b32.xlu0 %v477, 28
  %v2219 = vpop.permute.xlu0 %2218
  %2220 = vrot.lane.b32.xlu0 %v478, 28
  %v2221 = vpop.permute.xlu0 %2220
  %2222 = vrot.lane.b32.xlu0 %v479, 28
  %v2223 = vpop.permute.xlu0 %2222
  %2224 = vrot.lane.b32.xlu0 %v480, 28
  %v2225 = vpop.permute.xlu0 %2224
  %2226 = vrot.lane.b32.xlu0 %v481, 28
  %v2227 = vpop.permute.xlu0 %2226
  %2228 = vrot.lane.b32.xlu0 %v482, 28
  %v2229 = vpop.permute.xlu0 %2228
  %2230 = vrot.lane.b32.xlu0 %v483, 28
  %v2231 = vpop.permute.xlu0 %2230
  %2232 = vrot.lane.b32.xlu0 %v484, 28
  %v2233 = vpop.permute.xlu0 %2232
  %2234 = vrot.lane.b32.xlu0 %v485, 28
  %v2235 = vpop.permute.xlu0 %2234
  %2236 = vrot.lane.b32.xlu0 %v486, 28
  %v2237 = vpop.permute.xlu0 %2236
  %2238 = vrot.lane.b32.xlu0 %v487, 28
  %v2239 = vpop.permute.xlu0 %2238
  %2240 = vrot.lane.b32.xlu0 %v488, 28
  %v2241 = vpop.permute.xlu0 %2240
  %2242 = vrot.lane.b32.xlu0 %v489, 28
  %v2243 = vpop.permute.xlu0 %2242
  %2244 = vrot.lane.b32.xlu0 %v490, 28
  %v2245 = vpop.permute.xlu0 %2244
  %2246 = vrot.lane.b32.xlu0 %v491, 28
  %v2247 = vpop.permute.xlu0 %2246
  %2248 = vrot.lane.b32.xlu0 %v492, 28
  %v2249 = vpop.permute.xlu0 %2248
  %2250 = vrot.lane.b32.xlu0 %v493, 28
  %v2251 = vpop.permute.xlu0 %2250
  %2252 = vrot.lane.b32.xlu0 %v494, 28
  %v2253 = vpop.permute.xlu0 %2252
  %2254 = vrot.lane.b32.xlu0 %v495, 28
  %v2255 = vpop.permute.xlu0 %2254
  %2256 = vrot.lane.b32.xlu0 %v496, 28
  %v2257 = vpop.permute.xlu0 %2256
  %2258 = vrot.lane.b32.xlu0 %v497, 28
  %v2259 = vpop.permute.xlu0 %2258
  %2260 = vrot.lane.b32.xlu0 %v498, 28
  %v2261 = vpop.permute.xlu0 %2260
  %2262 = vrot.lane.b32.xlu0 %v499, 28
  %v2263 = vpop.permute.xlu0 %2262
  %2264 = vrot.lane.b32.xlu0 %v500, 28
  %v2265 = vpop.permute.xlu0 %2264
  %2266 = vrot.lane.b32.xlu0 %v501, 28
  %v2267 = vpop.permute.xlu0 %2266
  %2268 = vrot.lane.b32.xlu0 %v502, 28
  %v2269 = vpop.permute.xlu0 %2268
  %2270 = vrot.lane.b32.xlu0 %v503, 28
  %v2271 = vpop.permute.xlu0 %2270
  %2272 = vrot.lane.b32.xlu0 %v504, 28
  %v2273 = vpop.permute.xlu0 %2272
  %2274 = vrot.lane.b32.xlu0 %v505, 28
  %v2275 = vpop.permute.xlu0 %2274
  %2276 = vrot.lane.b32.xlu0 %v506, 28
  %v2277 = vpop.permute.xlu0 %2276
  %2278 = vrot.lane.b32.xlu0 %v507, 28
  %v2279 = vpop.permute.xlu0 %2278
  %2280 = vrot.lane.b32.xlu0 %v508, 28
  %v2281 = vpop.permute.xlu0 %2280
  %2282 = vrot.lane.b32.xlu0 %v509, 28
  %v2283 = vpop.permute.xlu0 %2282
  %2284 = vrot.lane.b32.xlu0 %v510, 28
  %v2285 = vpop.permute.xlu0 %2284
  %2286 = vrot.lane.b32.xlu0 %v511, 28
  %v2287 = vpop.permute.xlu0 %2286
  %2288 = vrot.lane.b32.xlu0 %v512, 28
  %v2289 = vpop.permute.xlu0 %2288
  %2290 = vrot.lane.b32.xlu0 %v513, 28
  %v2291 = vpop.permute.xlu0 %2290
  %2292 = vrot.lane.b32.xlu0 %v514, 28
  %v2293 = vpop.permute.xlu0 %2292
  %2294 = vrot.lane.b32.xlu0 %v515, 28
  %v2295 = vpop.permute.xlu0 %2294
  %2296 = vrot.lane.b32.xlu0 %v516, 28
  %v2297 = vpop.permute.xlu0 %2296
  %2298 = vrot.lane.b32.xlu0 %v517, 28
  %v2299 = vpop.permute.xlu0 %2298
  %2300 = vrot.lane.b32.xlu0 %v518, 28
  %v2301 = vpop.permute.xlu0 %2300
  %2302 = vrot.lane.b32.xlu0 %v519, 28
  %v2303 = vpop.permute.xlu0 %2302
  %2304 = vrot.lane.b32.xlu0 %v520, 28
  %v2305 = vpop.permute.xlu0 %2304
  %2306 = vrot.lane.b32.xlu0 %v521, 28
  %v2307 = vpop.permute.xlu0 %2306
  %2308 = vrot.lane.b32.xlu0 %v522, 28
  %v2309 = vpop.permute.xlu0 %2308
  %2310 = vrot.lane.b32.xlu0 %v523, 28
  %v2311 = vpop.permute.xlu0 %2310
  %2312 = vrot.lane.b32.xlu0 %v524, 28
  %v2313 = vpop.permute.xlu0 %2312
  %2314 = vrot.lane.b32.xlu0 %v525, 28
  %v2315 = vpop.permute.xlu0 %2314
  %2316 = vrot.lane.b32.xlu0 %v526, 28
  %v2317 = vpop.permute.xlu0 %2316
  %2318 = vrot.lane.b32.xlu0 %v527, 28
  %v2319 = vpop.permute.xlu0 %2318
  %2448 = vrot.lane.b32.xlu0 %v528, 32
  %v2449 = vpop.permute.xlu0 %2448
  %2450 = vrot.lane.b32.xlu0 %v529, 32
  %v2451 = vpop.permute.xlu0 %2450
  %2452 = vrot.lane.b32.xlu0 %v530, 32
  %v2453 = vpop.permute.xlu0 %2452
  %2454 = vrot.lane.b32.xlu0 %v531, 32
  %v2455 = vpop.permute.xlu0 %2454
  %2456 = vrot.lane.b32.xlu0 %v532, 32
  %v2457 = vpop.permute.xlu0 %2456
  %2458 = vrot.lane.b32.xlu0 %v533, 32
  %v2459 = vpop.permute.xlu0 %2458
  %2460 = vrot.lane.b32.xlu0 %v534, 32
  %v2461 = vpop.permute.xlu0 %2460
  %2462 = vrot.lane.b32.xlu0 %v535, 32
  %v2463 = vpop.permute.xlu0 %2462
  %2464 = vrot.lane.b32.xlu0 %v536, 32
  %v2465 = vpop.permute.xlu0 %2464
  %2466 = vrot.lane.b32.xlu0 %v537, 32
  %v2467 = vpop.permute.xlu0 %2466
  %2468 = vrot.lane.b32.xlu0 %v538, 32
  %v2469 = vpop.permute.xlu0 %2468
  %2470 = vrot.lane.b32.xlu0 %v539, 32
  %v2471 = vpop.permute.xlu0 %2470
  %2472 = vrot.lane.b32.xlu0 %v540, 32
  %v2473 = vpop.permute.xlu0 %2472
  %2474 = vrot.lane.b32.xlu0 %v541, 32
  %v2475 = vpop.permute.xlu0 %2474
  %2476 = vrot.lane.b32.xlu0 %v542, 32
  %v2477 = vpop.permute.xlu0 %2476
  %2478 = vrot.lane.b32.xlu0 %v543, 32
  %v2479 = vpop.permute.xlu0 %2478
  %2480 = vrot.lane.b32.xlu0 %v544, 32
  %v2481 = vpop.permute.xlu0 %2480
  %2482 = vrot.lane.b32.xlu0 %v545, 32
  %v2483 = vpop.permute.xlu0 %2482
  %2484 = vrot.lane.b32.xlu0 %v546, 32
  %v2485 = vpop.permute.xlu0 %2484
  %2486 = vrot.lane.b32.xlu0 %v547, 32
  %v2487 = vpop.permute.xlu0 %2486
  %2488 = vrot.lane.b32.xlu0 %v548, 32
  %v2489 = vpop.permute.xlu0 %2488
  %2490 = vrot.lane.b32.xlu0 %v549, 32
  %v2491 = vpop.permute.xlu0 %2490
  %2492 = vrot.lane.b32.xlu0 %v550, 32
  %v2493 = vpop.permute.xlu0 %2492
  %2494 = vrot.lane.b32.xlu0 %v551, 32
  %v2495 = vpop.permute.xlu0 %2494
  %2496 = vrot.lane.b32.xlu0 %v552, 32
  %v2497 = vpop.permute.xlu0 %2496
  %2498 = vrot.lane.b32.xlu0 %v553, 32
  %v2499 = vpop.permute.xlu0 %2498
  %2500 = vrot.lane.b32.xlu0 %v554, 32
  %v2501 = vpop.permute.xlu0 %2500
  %2502 = vrot.lane.b32.xlu0 %v555, 32
  %v2503 = vpop.permute.xlu0 %2502
  %2504 = vrot.lane.b32.xlu0 %v556, 32
  %v2505 = vpop.permute.xlu0 %2504
  %2506 = vrot.lane.b32.xlu0 %v557, 32
  %v2507 = vpop.permute.xlu0 %2506
  %2508 = vrot.lane.b32.xlu0 %v558, 32
  %v2509 = vpop.permute.xlu0 %2508
  %2510 = vrot.lane.b32.xlu0 %v559, 32
  %v2511 = vpop.permute.xlu0 %2510
  %2512 = vrot.lane.b32.xlu0 %v560, 32
  %v2513 = vpop.permute.xlu0 %2512
  %2514 = vrot.lane.b32.xlu0 %v561, 32
  %v2515 = vpop.permute.xlu0 %2514
  %2516 = vrot.lane.b32.xlu0 %v562, 32
  %v2517 = vpop.permute.xlu0 %2516
  %2518 = vrot.lane.b32.xlu0 %v563, 32
  %v2519 = vpop.permute.xlu0 %2518
  %2520 = vrot.lane.b32.xlu0 %v564, 32
  %v2521 = vpop.permute.xlu0 %2520
  %2522 = vrot.lane.b32.xlu0 %v565, 32
  %v2523 = vpop.permute.xlu0 %2522
  %2524 = vrot.lane.b32.xlu0 %v566, 32
  %v2525 = vpop.permute.xlu0 %2524
  %2526 = vrot.lane.b32.xlu0 %v567, 32
  %v2527 = vpop.permute.xlu0 %2526
  %2528 = vrot.lane.b32.xlu0 %v568, 32
  %v2529 = vpop.permute.xlu0 %2528
  %2530 = vrot.lane.b32.xlu0 %v569, 32
  %v2531 = vpop.permute.xlu0 %2530
  %2532 = vrot.lane.b32.xlu0 %v570, 32
  %v2533 = vpop.permute.xlu0 %2532
  %2534 = vrot.lane.b32.xlu0 %v571, 32
  %v2535 = vpop.permute.xlu0 %2534
  %2536 = vrot.lane.b32.xlu0 %v572, 32
  %v2537 = vpop.permute.xlu0 %2536
  %2538 = vrot.lane.b32.xlu0 %v573, 32
  %v2539 = vpop.permute.xlu0 %2538
  %2540 = vrot.lane.b32.xlu0 %v574, 32
  %v2541 = vpop.permute.xlu0 %2540
  %2542 = vrot.lane.b32.xlu0 %v575, 32
  %v2543 = vpop.permute.xlu0 %2542
  %2544 = vrot.lane.b32.xlu0 %v576, 32
  %v2545 = vpop.permute.xlu0 %2544
  %2546 = vrot.lane.b32.xlu0 %v577, 32
  %v2547 = vpop.permute.xlu0 %2546
  %2548 = vrot.lane.b32.xlu0 %v578, 32
  %v2549 = vpop.permute.xlu0 %2548
  %2550 = vrot.lane.b32.xlu0 %v579, 32
  %v2551 = vpop.permute.xlu0 %2550
  %2552 = vrot.lane.b32.xlu0 %v580, 32
  %v2553 = vpop.permute.xlu0 %2552
  %2554 = vrot.lane.b32.xlu0 %v581, 32
  %v2555 = vpop.permute.xlu0 %2554
  %2556 = vrot.lane.b32.xlu0 %v582, 32
  %v2557 = vpop.permute.xlu0 %2556
  %2558 = vrot.lane.b32.xlu0 %v583, 32
  %v2559 = vpop.permute.xlu0 %2558
  %2560 = vrot.lane.b32.xlu0 %v584, 32
  %v2561 = vpop.permute.xlu0 %2560
  %2562 = vrot.lane.b32.xlu0 %v585, 32
  %v2563 = vpop.permute.xlu0 %2562
  %2564 = vrot.lane.b32.xlu0 %v586, 32
  %v2565 = vpop.permute.xlu0 %2564
  %2566 = vrot.lane.b32.xlu0 %v587, 32
  %v2567 = vpop.permute.xlu0 %2566
  %2568 = vrot.lane.b32.xlu0 %v588, 32
  %v2569 = vpop.permute.xlu0 %2568
  %2570 = vrot.lane.b32.xlu0 %v589, 32
  %v2571 = vpop.permute.xlu0 %2570
  %2572 = vrot.lane.b32.xlu0 %v590, 32
  %v2573 = vpop.permute.xlu0 %2572
  %2574 = vrot.lane.b32.xlu0 %v591, 32
  %v2575 = vpop.permute.xlu0 %2574
  %vm2640 = vcmask 31744
  %v2641 = vsel %vm2640, %v14, %v657
  %v2642 = vsel %vm2640, %v15, %v659
  %v2643 = vsel %vm2640, %v16, %v661
  %v2644 = vsel %vm2640, %v17, %v663
  %v2645 = vsel %vm2640, %v18, %v665
  %v2646 = vsel %vm2640, %v19, %v667
  %v2647 = vsel %vm2640, %v20, %v669
  %v2648 = vsel %vm2640, %v21, %v671
  %v2649 = vsel %vm2640, %v22, %v673
  %v2650 = vsel %vm2640, %v23, %v675
  %v2651 = vsel %vm2640, %v24, %v677
  %v2652 = vsel %vm2640, %v25, %v679
  %v2653 = vsel %vm2640, %v26, %v681
  %v2654 = vsel %vm2640, %v27, %v683
  %v2655 = vsel %vm2640, %v28, %v685
  %v2656 = vsel %vm2640, %v29, %v687
  %v2657 = vsel %vm2640, %v30, %v689
  %v2658 = vsel %vm2640, %v31, %v691
  %v2659 = vsel %vm2640, %v32, %v693
  %v2660 = vsel %vm2640, %v33, %v695
  %v2661 = vsel %vm2640, %v34, %v697
  %v2662 = vsel %vm2640, %v35, %v699
  %v2663 = vsel %vm2640, %v36, %v701
  %v2664 = vsel %vm2640, %v37, %v703
  %v2665 = vsel %vm2640, %v38, %v705
  %v2666 = vsel %vm2640, %v39, %v707
  %v2667 = vsel %vm2640, %v40, %v709
  %v2668 = vsel %vm2640, %v41, %v711
  %v2669 = vsel %vm2640, %v42, %v713
  %v2670 = vsel %vm2640, %v43, %v715
  %v2671 = vsel %vm2640, %v44, %v717
  %v2672 = vsel %vm2640, %v45, %v719
  %v2673 = vsel %vm2640, %v46, %v721
  %v2674 = vsel %vm2640, %v47, %v723
  %v2675 = vsel %vm2640, %v48, %v725
  %v2676 = vsel %vm2640, %v49, %v727
  %v2677 = vsel %vm2640, %v50, %v729
  %v2678 = vsel %vm2640, %v51, %v731
  %v2679 = vsel %vm2640, %v52, %v733
  %v2680 = vsel %vm2640, %v53, %v735
  %v2681 = vsel %vm2640, %v54, %v737
  %v2682 = vsel %vm2640, %v55, %v739
  %v2683 = vsel %vm2640, %v56, %v741
  %v2684 = vsel %vm2640, %v57, %v743
  %v2685 = vsel %vm2640, %v58, %v745
  %v2686 = vsel %vm2640, %v59, %v747
  %v2687 = vsel %vm2640, %v60, %v749
  %v2688 = vsel %vm2640, %v61, %v751
  %v2689 = vsel %vm2640, %v62, %v753
  %v2690 = vsel %vm2640, %v63, %v755
  %v2691 = vsel %vm2640, %v64, %v757
  %v2692 = vsel %vm2640, %v65, %v759
  %v2693 = vsel %vm2640, %v66, %v761
  %v2694 = vsel %vm2640, %v67, %v763
  %v2695 = vsel %vm2640, %v68, %v765
  %v2696 = vsel %vm2640, %v69, %v767
  %v2697 = vsel %vm2640, %v70, %v769
  %v2698 = vsel %vm2640, %v71, %v771
  %v2699 = vsel %vm2640, %v72, %v773
  %v2700 = vsel %vm2640, %v73, %v775
  %v2701 = vsel %vm2640, %v74, %v777
  %v2702 = vsel %vm2640, %v75, %v779
  %v2703 = vsel %vm2640, %v76, %v781
  %v2704 = vsel %vm2640, %v77, %v783
  %vm2705 = vcmask 64512
  %v2706 = vsel %vm2705, %v2641, %v913
  %v2707 = vsel %vm2705, %v2642, %v915
  %v2708 = vsel %vm2705, %v2643, %v917
  %v2709 = vsel %vm2705, %v2644, %v919
  %v2710 = vsel %vm2705, %v2645, %v921
  %v2711 = vsel %vm2705, %v2646, %v923
  %v2712 = vsel %vm2705, %v2647, %v925
  %v2713 = vsel %vm2705, %v2648, %v927
  %v2714 = vsel %vm2705, %v2649, %v929
  %v2715 = vsel %vm2705, %v2650, %v931
  %v2716 = vsel %vm2705, %v2651, %v933
  %v2717 = vsel %vm2705, %v2652, %v935
  %v2718 = vsel %vm2705, %v2653, %v937
  %v2719 = vsel %vm2705, %v2654, %v939
  %v2720 = vsel %vm2705, %v2655, %v941
  %v2721 = vsel %vm2705, %v2656, %v943
  %v2722 = vsel %vm2705, %v2657, %v945
  %v2723 = vsel %vm2705, %v2658, %v947
  %v2724 = vsel %vm2705, %v2659, %v949
  %v2725 = vsel %vm2705, %v2660, %v951
  %v2726 = vsel %vm2705, %v2661, %v953
  %v2727 = vsel %vm2705, %v2662, %v955
  %v2728 = vsel %vm2705, %v2663, %v957
  %v2729 = vsel %vm2705, %v2664, %v959
  %v2730 = vsel %vm2705, %v2665, %v961
  %v2731 = vsel %vm2705, %v2666, %v963
  %v2732 = vsel %vm2705, %v2667, %v965
  %v2733 = vsel %vm2705, %v2668, %v967
  %v2734 = vsel %vm2705, %v2669, %v969
  %v2735 = vsel %vm2705, %v2670, %v971
  %v2736 = vsel %vm2705, %v2671, %v973
  %v2737 = vsel %vm2705, %v2672, %v975
  %v2738 = vsel %vm2705, %v2673, %v977
  %v2739 = vsel %vm2705, %v2674, %v979
  %v2740 = vsel %vm2705, %v2675, %v981
  %v2741 = vsel %vm2705, %v2676, %v983
  %v2742 = vsel %vm2705, %v2677, %v985
  %v2743 = vsel %vm2705, %v2678, %v987
  %v2744 = vsel %vm2705, %v2679, %v989
  %v2745 = vsel %vm2705, %v2680, %v991
  %v2746 = vsel %vm2705, %v2681, %v993
  %v2747 = vsel %vm2705, %v2682, %v995
  %v2748 = vsel %vm2705, %v2683, %v997
  %v2749 = vsel %vm2705, %v2684, %v999
  %v2750 = vsel %vm2705, %v2685, %v1001
  %v2751 = vsel %vm2705, %v2686, %v1003
  %v2752 = vsel %vm2705, %v2687, %v1005
  %v2753 = vsel %vm2705, %v2688, %v1007
  %v2754 = vsel %vm2705, %v2689, %v1009
  %v2755 = vsel %vm2705, %v2690, %v1011
  %v2756 = vsel %vm2705, %v2691, %v1013
  %v2757 = vsel %vm2705, %v2692, %v1015
  %v2758 = vsel %vm2705, %v2693, %v1017
  %v2759 = vsel %vm2705, %v2694, %v1019
  %v2760 = vsel %vm2705, %v2695, %v1021
  %v2761 = vsel %vm2705, %v2696, %v1023
  %v2762 = vsel %vm2705, %v2697, %v1025
  %v2763 = vsel %vm2705, %v2698, %v1027
  %v2764 = vsel %vm2705, %v2699, %v1029
  %v2765 = vsel %vm2705, %v2700, %v1031
  %v2766 = vsel %vm2705, %v2701, %v1033
  %v2767 = vsel %vm2705, %v2702, %v1035
  %v2768 = vsel %vm2705, %v2703, %v1037
  %v2769 = vsel %vm2705, %v2704, %v1039
  %vm2770 = vcmask 97280
  %v2771 = vsel %vm2770, %v2706, %v1169
  %v2772 = vsel %vm2770, %v2707, %v1171
  %v2773 = vsel %vm2770, %v2708, %v1173
  %v2774 = vsel %vm2770, %v2709, %v1175
  %v2775 = vsel %vm2770, %v2710, %v1177
  %v2776 = vsel %vm2770, %v2711, %v1179
  %v2777 = vsel %vm2770, %v2712, %v1181
  %v2778 = vsel %vm2770, %v2713, %v1183
  %v2779 = vsel %vm2770, %v2714, %v1185
  %v2780 = vsel %vm2770, %v2715, %v1187
  %v2781 = vsel %vm2770, %v2716, %v1189
  %v2782 = vsel %vm2770, %v2717, %v1191
  %v2783 = vsel %vm2770, %v2718, %v1193
  %v2784 = vsel %vm2770, %v2719, %v1195
  %v2785 = vsel %vm2770, %v2720, %v1197
  %v2786 = vsel %vm2770, %v2721, %v1199
  %v2787 = vsel %vm2770, %v2722, %v1201
  %v2788 = vsel %vm2770, %v2723, %v1203
  %v2789 = vsel %vm2770, %v2724, %v1205
  %v2790 = vsel %vm2770, %v2725, %v1207
  %v2791 = vsel %vm2770, %v2726, %v1209
  %v2792 = vsel %vm2770, %v2727, %v1211
  %v2793 = vsel %vm2770, %v2728, %v1213
  %v2794 = vsel %vm2770, %v2729, %v1215
  %v2795 = vsel %vm2770, %v2730, %v1217
  %v2796 = vsel %vm2770, %v2731, %v1219
  %v2797 = vsel %vm2770, %v2732, %v1221
  %v2798 = vsel %vm2770, %v2733, %v1223
  %v2799 = vsel %vm2770, %v2734, %v1225
  %v2800 = vsel %vm2770, %v2735, %v1227
  %v2801 = vsel %vm2770, %v2736, %v1229
  %v2802 = vsel %vm2770, %v2737, %v1231
  %v2803 = vsel %vm2770, %v2738, %v1233
  %v2804 = vsel %vm2770, %v2739, %v1235
  %v2805 = vsel %vm2770, %v2740, %v1237
  %v2806 = vsel %vm2770, %v2741, %v1239
  %v2807 = vsel %vm2770, %v2742, %v1241
  %v2808 = vsel %vm2770, %v2743, %v1243
  %v2809 = vsel %vm2770, %v2744, %v1245
  %v2810 = vsel %vm2770, %v2745, %v1247
  %v2811 = vsel %vm2770, %v2746, %v1249
  %v2812 = vsel %vm2770, %v2747, %v1251
  %v2813 = vsel %vm2770, %v2748, %v1253
  %v2814 = vsel %vm2770, %v2749, %v1255
  %v2815 = vsel %vm2770, %v2750, %v1257
  %v2816 = vsel %vm2770, %v2751, %v1259
  %v2817 = vsel %vm2770, %v2752, %v1261
  %v2818 = vsel %vm2770, %v2753, %v1263
  %v2819 = vsel %vm2770, %v2754, %v1265
  %v2820 = vsel %vm2770, %v2755, %v1267
  %v2821 = vsel %vm2770, %v2756, %v1269
  %v2822 = vsel %vm2770, %v2757, %v1271
  %v2823 = vsel %vm2770, %v2758, %v1273
  %v2824 = vsel %vm2770, %v2759, %v1275
  %v2825 = vsel %vm2770, %v2760, %v1277
  %v2826 = vsel %vm2770, %v2761, %v1279
  %v2827 = vsel %vm2770, %v2762, %v1281
  %v2828 = vsel %vm2770, %v2763, %v1283
  %v2829 = vsel %vm2770, %v2764, %v1285
  %v2830 = vsel %vm2770, %v2765, %v1287
  %v2831 = vsel %vm2770, %v2766, %v1289
  %v2832 = vsel %vm2770, %v2767, %v1291
  %v2833 = vsel %vm2770, %v2768, %v1293
  %v2834 = vsel %vm2770, %v2769, %v1295
  %vm2835 = vcmask 130048
  %v2836 = vsel %vm2835, %v2771, %v1425
  %v2837 = vsel %vm2835, %v2772, %v1427
  %v2838 = vsel %vm2835, %v2773, %v1429
  %v2839 = vsel %vm2835, %v2774, %v1431
  %v2840 = vsel %vm2835, %v2775, %v1433
  %v2841 = vsel %vm2835, %v2776, %v1435
  %v2842 = vsel %vm2835, %v2777, %v1437
  %v2843 = vsel %vm2835, %v2778, %v1439
  %v2844 = vsel %vm2835, %v2779, %v1441
  %v2845 = vsel %vm2835, %v2780, %v1443
  %v2846 = vsel %vm2835, %v2781, %v1445
  %v2847 = vsel %vm2835, %v2782, %v1447
  %v2848 = vsel %vm2835, %v2783, %v1449
  %v2849 = vsel %vm2835, %v2784, %v1451
  %v2850 = vsel %vm2835, %v2785, %v1453
  %v2851 = vsel %vm2835, %v2786, %v1455
  %v2852 = vsel %vm2835, %v2787, %v1457
  %v2853 = vsel %vm2835, %v2788, %v1459
  %v2854 = vsel %vm2835, %v2789, %v1461
  %v2855 = vsel %vm2835, %v2790, %v1463
  %v2856 = vsel %vm2835, %v2791, %v1465
  %v2857 = vsel %vm2835, %v2792, %v1467
  %v2858 = vsel %vm2835, %v2793, %v1469
  %v2859 = vsel %vm2835, %v2794, %v1471
  %v2860 = vsel %vm2835, %v2795, %v1473
  %v2861 = vsel %vm2835, %v2796, %v1475
  %v2862 = vsel %vm2835, %v2797, %v1477
  %v2863 = vsel %vm2835, %v2798, %v1479
  %v2864 = vsel %vm2835, %v2799, %v1481
  %v2865 = vsel %vm2835, %v2800, %v1483
  %v2866 = vsel %vm2835, %v2801, %v1485
  %v2867 = vsel %vm2835, %v2802, %v1487
  %v2868 = vsel %vm2835, %v2803, %v1489
  %v2869 = vsel %vm2835, %v2804, %v1491
  %v2870 = vsel %vm2835, %v2805, %v1493
  %v2871 = vsel %vm2835, %v2806, %v1495
  %v2872 = vsel %vm2835, %v2807, %v1497
  %v2873 = vsel %vm2835, %v2808, %v1499
  %v2874 = vsel %vm2835, %v2809, %v1501
  %v2875 = vsel %vm2835, %v2810, %v1503
  %v2876 = vsel %vm2835, %v2811, %v1505
  %v2877 = vsel %vm2835, %v2812, %v1507
  %v2878 = vsel %vm2835, %v2813, %v1509
  %v2879 = vsel %vm2835, %v2814, %v1511
  %v2880 = vsel %vm2835, %v2815, %v1513
  %v2881 = vsel %vm2835, %v2816, %v1515
  %v2882 = vsel %vm2835, %v2817, %v1517
  %v2883 = vsel %vm2835, %v2818, %v1519
  %v2884 = vsel %vm2835, %v2819, %v1521
  %v2885 = vsel %vm2835, %v2820, %v1523
  %v2886 = vsel %vm2835, %v2821, %v1525
  %v2887 = vsel %vm2835, %v2822, %v1527
  %v2888 = vsel %vm2835, %v2823, %v1529
  %v2889 = vsel %vm2835, %v2824, %v1531
  %v2890 = vsel %vm2835, %v2825, %v1533
  %v2891 = vsel %vm2835, %v2826, %v1535
  %v2892 = vsel %vm2835, %v2827, %v1537
  %v2893 = vsel %vm2835, %v2828, %v1539
  %v2894 = vsel %vm2835, %v2829, %v1541
  %v2895 = vsel %vm2835, %v2830, %v1543
  %v2896 = vsel %vm2835, %v2831, %v1545
  %v2897 = vsel %vm2835, %v2832, %v1547
  %v2898 = vsel %vm2835, %v2833, %v1549
  %v2899 = vsel %vm2835, %v2834, %v1551
  %vm2900 = vcmask 162816
  %v2901 = vsel %vm2900, %v2836, %v1681
  %v2902 = vsel %vm2900, %v2837, %v1683
  %v2903 = vsel %vm2900, %v2838, %v1685
  %v2904 = vsel %vm2900, %v2839, %v1687
  %v2905 = vsel %vm2900, %v2840, %v1689
  %v2906 = vsel %vm2900, %v2841, %v1691
  %v2907 = vsel %vm2900, %v2842, %v1693
  %v2908 = vsel %vm2900, %v2843, %v1695
  %v2909 = vsel %vm2900, %v2844, %v1697
  %v2910 = vsel %vm2900, %v2845, %v1699
  %v2911 = vsel %vm2900, %v2846, %v1701
  %v2912 = vsel %vm2900, %v2847, %v1703
  %v2913 = vsel %vm2900, %v2848, %v1705
  %v2914 = vsel %vm2900, %v2849, %v1707
  %v2915 = vsel %vm2900, %v2850, %v1709
  %v2916 = vsel %vm2900, %v2851, %v1711
  %v2917 = vsel %vm2900, %v2852, %v1713
  %v2918 = vsel %vm2900, %v2853, %v1715
  %v2919 = vsel %vm2900, %v2854, %v1717
  %v2920 = vsel %vm2900, %v2855, %v1719
  %v2921 = vsel %vm2900, %v2856, %v1721
  %v2922 = vsel %vm2900, %v2857, %v1723
  %v2923 = vsel %vm2900, %v2858, %v1725
  %v2924 = vsel %vm2900, %v2859, %v1727
  %v2925 = vsel %vm2900, %v2860, %v1729
  %v2926 = vsel %vm2900, %v2861, %v1731
  %v2927 = vsel %vm2900, %v2862, %v1733
  %v2928 = vsel %vm2900, %v2863, %v1735
  %v2929 = vsel %vm2900, %v2864, %v1737
  %v2930 = vsel %vm2900, %v2865, %v1739
  %v2931 = vsel %vm2900, %v2866, %v1741
  %v2932 = vsel %vm2900, %v2867, %v1743
  %v2933 = vsel %vm2900, %v2868, %v1745
  %v2934 = vsel %vm2900, %v2869, %v1747
  %v2935 = vsel %vm2900, %v2870, %v1749
  %v2936 = vsel %vm2900, %v2871, %v1751
  %v2937 = vsel %vm2900, %v2872, %v1753
  %v2938 = vsel %vm2900, %v2873, %v1755
  %v2939 = vsel %vm2900, %v2874, %v1757
  %v2940 = vsel %vm2900, %v2875, %v1759
  %v2941 = vsel %vm2900, %v2876, %v1761
  %v2942 = vsel %vm2900, %v2877, %v1763
  %v2943 = vsel %vm2900, %v2878, %v1765
  %v2944 = vsel %vm2900, %v2879, %v1767
  %v2945 = vsel %vm2900, %v2880, %v1769
  %v2946 = vsel %vm2900, %v2881, %v1771
  %v2947 = vsel %vm2900, %v2882, %v1773
  %v2948 = vsel %vm2900, %v2883, %v1775
  %v2949 = vsel %vm2900, %v2884, %v1777
  %v2950 = vsel %vm2900, %v2885, %v1779
  %v2951 = vsel %vm2900, %v2886, %v1781
  %v2952 = vsel %vm2900, %v2887, %v1783
  %v2953 = vsel %vm2900, %v2888, %v1785
  %v2954 = vsel %vm2900, %v2889, %v1787
  %v2955 = vsel %vm2900, %v2890, %v1789
  %v2956 = vsel %vm2900, %v2891, %v1791
  %v2957 = vsel %vm2900, %v2892, %v1793
  %v2958 = vsel %vm2900, %v2893, %v1795
  %v2959 = vsel %vm2900, %v2894, %v1797
  %v2960 = vsel %vm2900, %v2895, %v1799
  %v2961 = vsel %vm2900, %v2896, %v1801
  %v2962 = vsel %vm2900, %v2897, %v1803
  %v2963 = vsel %vm2900, %v2898, %v1805
  %v2964 = vsel %vm2900, %v2899, %v1807
  %vm2965 = vcmask 195584
  %v2966 = vsel %vm2965, %v2901, %v1937
  %v2967 = vsel %vm2965, %v2902, %v1939
  %v2968 = vsel %vm2965, %v2903, %v1941
  %v2969 = vsel %vm2965, %v2904, %v1943
  %v2970 = vsel %vm2965, %v2905, %v1945
  %v2971 = vsel %vm2965, %v2906, %v1947
  %v2972 = vsel %vm2965, %v2907, %v1949
  %v2973 = vsel %vm2965, %v2908, %v1951
  %v2974 = vsel %vm2965, %v2909, %v1953
  %v2975 = vsel %vm2965, %v2910, %v1955
  %v2976 = vsel %vm2965, %v2911, %v1957
  %v2977 = vsel %vm2965, %v2912, %v1959
  %v2978 = vsel %vm2965, %v2913, %v1961
  %v2979 = vsel %vm2965, %v2914, %v1963
  %v2980 = vsel %vm2965, %v2915, %v1965
  %v2981 = vsel %vm2965, %v2916, %v1967
  %v2982 = vsel %vm2965, %v2917, %v1969
  %v2983 = vsel %vm2965, %v2918, %v1971
  %v2984 = vsel %vm2965, %v2919, %v1973
  %v2985 = vsel %vm2965, %v2920, %v1975
  %v2986 = vsel %vm2965, %v2921, %v1977
  %v2987 = vsel %vm2965, %v2922, %v1979
  %v2988 = vsel %vm2965, %v2923, %v1981
  %v2989 = vsel %vm2965, %v2924, %v1983
  %v2990 = vsel %vm2965, %v2925, %v1985
  %v2991 = vsel %vm2965, %v2926, %v1987
  %v2992 = vsel %vm2965, %v2927, %v1989
  %v2993 = vsel %vm2965, %v2928, %v1991
  %v2994 = vsel %vm2965, %v2929, %v1993
  %v2995 = vsel %vm2965, %v2930, %v1995
  %v2996 = vsel %vm2965, %v2931, %v1997
  %v2997 = vsel %vm2965, %v2932, %v1999
  %v2998 = vsel %vm2965, %v2933, %v2001
  %v2999 = vsel %vm2965, %v2934, %v2003
  %v3000 = vsel %vm2965, %v2935, %v2005
  %v3001 = vsel %vm2965, %v2936, %v2007
  %v3002 = vsel %vm2965, %v2937, %v2009
  %v3003 = vsel %vm2965, %v2938, %v2011
  %v3004 = vsel %vm2965, %v2939, %v2013
  %v3005 = vsel %vm2965, %v2940, %v2015
  %v3006 = vsel %vm2965, %v2941, %v2017
  %v3007 = vsel %vm2965, %v2942, %v2019
  %v3008 = vsel %vm2965, %v2943, %v2021
  %v3009 = vsel %vm2965, %v2944, %v2023
  %v3010 = vsel %vm2965, %v2945, %v2025
  %v3011 = vsel %vm2965, %v2946, %v2027
  %v3012 = vsel %vm2965, %v2947, %v2029
  %v3013 = vsel %vm2965, %v2948, %v2031
  %v3014 = vsel %vm2965, %v2949, %v2033
  %v3015 = vsel %vm2965, %v2950, %v2035
  %v3016 = vsel %vm2965, %v2951, %v2037
  %v3017 = vsel %vm2965, %v2952, %v2039
  %v3018 = vsel %vm2965, %v2953, %v2041
  %v3019 = vsel %vm2965, %v2954, %v2043
  %v3020 = vsel %vm2965, %v2955, %v2045
  %v3021 = vsel %vm2965, %v2956, %v2047
  %v3022 = vsel %vm2965, %v2957, %v2049
  %v3023 = vsel %vm2965, %v2958, %v2051
  %v3024 = vsel %vm2965, %v2959, %v2053
  %v3025 = vsel %vm2965, %v2960, %v2055
  %v3026 = vsel %vm2965, %v2961, %v2057
  %v3027 = vsel %vm2965, %v2962, %v2059
  %v3028 = vsel %vm2965, %v2963, %v2061
  %v3029 = vsel %vm2965, %v2964, %v2063
  %vm3030 = vcmask 228352
  %v3031 = vsel %vm3030, %v2966, %v2193
  %v3032 = vsel %vm3030, %v2967, %v2195
  %v3033 = vsel %vm3030, %v2968, %v2197
  %v3034 = vsel %vm3030, %v2969, %v2199
  %v3035 = vsel %vm3030, %v2970, %v2201
  %v3036 = vsel %vm3030, %v2971, %v2203
  %v3037 = vsel %vm3030, %v2972, %v2205
  %v3038 = vsel %vm3030, %v2973, %v2207
  %v3039 = vsel %vm3030, %v2974, %v2209
  %v3040 = vsel %vm3030, %v2975, %v2211
  %v3041 = vsel %vm3030, %v2976, %v2213
  %v3042 = vsel %vm3030, %v2977, %v2215
  %v3043 = vsel %vm3030, %v2978, %v2217
  %v3044 = vsel %vm3030, %v2979, %v2219
  %v3045 = vsel %vm3030, %v2980, %v2221
  %v3046 = vsel %vm3030, %v2981, %v2223
  %v3047 = vsel %vm3030, %v2982, %v2225
  %v3048 = vsel %vm3030, %v2983, %v2227
  %v3049 = vsel %vm3030, %v2984, %v2229
  %v3050 = vsel %vm3030, %v2985, %v2231
  %v3051 = vsel %vm3030, %v2986, %v2233
  %v3052 = vsel %vm3030, %v2987, %v2235
  %v3053 = vsel %vm3030, %v2988, %v2237
  %v3054 = vsel %vm3030, %v2989, %v2239
  %v3055 = vsel %vm3030, %v2990, %v2241
  %v3056 = vsel %vm3030, %v2991, %v2243
  %v3057 = vsel %vm3030, %v2992, %v2245
  %v3058 = vsel %vm3030, %v2993, %v2247
  %v3059 = vsel %vm3030, %v2994, %v2249
  %v3060 = vsel %vm3030, %v2995, %v2251
  %v3061 = vsel %vm3030, %v2996, %v2253
  %v3062 = vsel %vm3030, %v2997, %v2255
  %v3063 = vsel %vm3030, %v2998, %v2257
  %v3064 = vsel %vm3030, %v2999, %v2259
  %v3065 = vsel %vm3030, %v3000, %v2261
  %v3066 = vsel %vm3030, %v3001, %v2263
  %v3067 = vsel %vm3030, %v3002, %v2265
  %v3068 = vsel %vm3030, %v3003, %v2267
  %v3069 = vsel %vm3030, %v3004, %v2269
  %v3070 = vsel %vm3030, %v3005, %v2271
  %v3071 = vsel %vm3030, %v3006, %v2273
  %v3072 = vsel %vm3030, %v3007, %v2275
  %v3073 = vsel %vm3030, %v3008, %v2277
  %v3074 = vsel %vm3030, %v3009, %v2279
  %v3075 = vsel %vm3030, %v3010, %v2281
  %v3076 = vsel %vm3030, %v3011, %v2283
  %v3077 = vsel %vm3030, %v3012, %v2285
  %v3078 = vsel %vm3030, %v3013, %v2287
  %v3079 = vsel %vm3030, %v3014, %v2289
  %v3080 = vsel %vm3030, %v3015, %v2291
  %v3081 = vsel %vm3030, %v3016, %v2293
  %v3082 = vsel %vm3030, %v3017, %v2295
  %v3083 = vsel %vm3030, %v3018, %v2297
  %v3084 = vsel %vm3030, %v3019, %v2299
  %v3085 = vsel %vm3030, %v3020, %v2301
  %v3086 = vsel %vm3030, %v3021, %v2303
  %v3087 = vsel %vm3030, %v3022, %v2305
  %v3088 = vsel %vm3030, %v3023, %v2307
  %v3089 = vsel %vm3030, %v3024, %v2309
  %v3090 = vsel %vm3030, %v3025, %v2311
  %v3091 = vsel %vm3030, %v3026, %v2313
  %v3092 = vsel %vm3030, %v3027, %v2315
  %v3093 = vsel %vm3030, %v3028, %v2317
  %v3094 = vsel %vm3030, %v3029, %v2319
  %vm3095 = vcmask 261120
  %v3096 = vsel %vm3095, %v3031, %v2449
  %v3097 = vsel %vm3095, %v3032, %v2451
  %v3098 = vsel %vm3095, %v3033, %v2453
  %v3099 = vsel %vm3095, %v3034, %v2455
  %v3100 = vsel %vm3095, %v3035, %v2457
  %v3101 = vsel %vm3095, %v3036, %v2459
  %v3102 = vsel %vm3095, %v3037, %v2461
  %v3103 = vsel %vm3095, %v3038, %v2463
  %v3104 = vsel %vm3095, %v3039, %v2465
  %v3105 = vsel %vm3095, %v3040, %v2467
  %v3106 = vsel %vm3095, %v3041, %v2469
  %v3107 = vsel %vm3095, %v3042, %v2471
  %v3108 = vsel %vm3095, %v3043, %v2473
  %v3109 = vsel %vm3095, %v3044, %v2475
  %v3110 = vsel %vm3095, %v3045, %v2477
  %v3111 = vsel %vm3095, %v3046, %v2479
  %v3112 = vsel %vm3095, %v3047, %v2481
  %v3113 = vsel %vm3095, %v3048, %v2483
  %v3114 = vsel %vm3095, %v3049, %v2485
  %v3115 = vsel %vm3095, %v3050, %v2487
  %v3116 = vsel %vm3095, %v3051, %v2489
  %v3117 = vsel %vm3095, %v3052, %v2491
  %v3118 = vsel %vm3095, %v3053, %v2493
  %v3119 = vsel %vm3095, %v3054, %v2495
  %v3120 = vsel %vm3095, %v3055, %v2497
  %v3121 = vsel %vm3095, %v3056, %v2499
  %v3122 = vsel %vm3095, %v3057, %v2501
  %v3123 = vsel %vm3095, %v3058, %v2503
  %v3124 = vsel %vm3095, %v3059, %v2505
  %v3125 = vsel %vm3095, %v3060, %v2507
  %v3126 = vsel %vm3095, %v3061, %v2509
  %v3127 = vsel %vm3095, %v3062, %v2511
  %v3128 = vsel %vm3095, %v3063, %v2513
  %v3129 = vsel %vm3095, %v3064, %v2515
  %v3130 = vsel %vm3095, %v3065, %v2517
  %v3131 = vsel %vm3095, %v3066, %v2519
  %v3132 = vsel %vm3095, %v3067, %v2521
  %v3133 = vsel %vm3095, %v3068, %v2523
  %v3134 = vsel %vm3095, %v3069, %v2525
  %v3135 = vsel %vm3095, %v3070, %v2527
  %v3136 = vsel %vm3095, %v3071, %v2529
  %v3137 = vsel %vm3095, %v3072, %v2531
  %v3138 = vsel %vm3095, %v3073, %v2533
  %v3139 = vsel %vm3095, %v3074, %v2535
  %v3140 = vsel %vm3095, %v3075, %v2537
  %v3141 = vsel %vm3095, %v3076, %v2539
  %v3142 = vsel %vm3095, %v3077, %v2541
  %v3143 = vsel %vm3095, %v3078, %v2543
  %v3144 = vsel %vm3095, %v3079, %v2545
  %v3145 = vsel %vm3095, %v3080, %v2547
  %v3146 = vsel %vm3095, %v3081, %v2549
  %v3147 = vsel %vm3095, %v3082, %v2551
  %v3148 = vsel %vm3095, %v3083, %v2553
  %v3149 = vsel %vm3095, %v3084, %v2555
  %v3150 = vsel %vm3095, %v3085, %v2557
  %v3151 = vsel %vm3095, %v3086, %v2559
  %v3152 = vsel %vm3095, %v3087, %v2561
  %v3153 = vsel %vm3095, %v3088, %v2563
  %v3154 = vsel %vm3095, %v3089, %v2565
  %v3155 = vsel %vm3095, %v3090, %v2567
  %v3156 = vsel %vm3095, %v3091, %v2569
  %v3157 = vsel %vm3095, %v3092, %v2571
  %v3158 = vsel %vm3095, %v3093, %v2573
  %v3159 = vsel %vm3095, %v3094, %v2575
  %v3160 = vld [vmem:[%s1] sm:$0xff]
  %v3161 = vld [vmem:[%s1 + $0x8] sm:$0xff]
  %v3162 = vld [vmem:[%s1 + $0x10] sm:$0xff]
  %v3163 = vld [vmem:[%s1 + $0x18] sm:$0xff]
  %v3164 = vld [vmem:[%s1 + $0x20] sm:$0xf]
  %v3165 = vld [vmem:[%s2] sm:$0x1]
  %v3167 = vlaneseq
  %v3168 = vshrl.u32 %v3167, 7
  %v3169 = vsub.s32 0, %v3168
  %v3170 = vrot.slane %v3165, %v3169
  %vm3172 = vcmask 293888
  %v3174 = vsel %vm3172, %v3096, 0
  %v3177 = vsel %vm3172, %v3097, 0
  %v3180 = vsel %vm3172, %v3098, 0
  %v3183 = vsel %vm3172, %v3099, 0
  %v3186 = vsel %vm3172, %v3100, 0
  %v3189 = vsel %vm3172, %v3101, 0
  %v3192 = vsel %vm3172, %v3102, 0
  %v3195 = vsel %vm3172, %v3103, 0
  %v3198 = vsel %vm3172, %v3104, 0
  %v3201 = vsel %vm3172, %v3105, 0
  %v3204 = vsel %vm3172, %v3106, 0
  %v3207 = vsel %vm3172, %v3107, 0
  %v3210 = vsel %vm3172, %v3108, 0
  %v3213 = vsel %vm3172, %v3109, 0
  %v3216 = vsel %vm3172, %v3110, 0
  %v3219 = vsel %vm3172, %v3111, 0
  %v3222 = vsel %vm3172, %v3112, 0
  %v3225 = vsel %vm3172, %v3113, 0
  %v3228 = vsel %vm3172, %v3114, 0
  %v3231 = vsel %vm3172, %v3115, 0
  %v3234 = vsel %vm3172, %v3116, 0
  %v3237 = vsel %vm3172, %v3117, 0
  %v3240 = vsel %vm3172, %v3118, 0
  %v3243 = vsel %vm3172, %v3119, 0
  %v3246 = vsel %vm3172, %v3120, 0
  %v3249 = vsel %vm3172, %v3121, 0
  %v3252 = vsel %vm3172, %v3122, 0
  %v3255 = vsel %vm3172, %v3123, 0
  %v3258 = vsel %vm3172, %v3124, 0
  %v3261 = vsel %vm3172, %v3125, 0
  %v3264 = vsel %vm3172, %v3126, 0
  %v3267 = vsel %vm3172, %v3127, 0
  %v3270 = vsel %vm3172, %v3128, 0
  %v3273 = vsel %vm3172, %v3129, 0
  %v3276 = vsel %vm3172, %v3130, 0
  %v3279 = vsel %vm3172, %v3131, 0
  %v3282 = vsel %vm3172, %v3132, 0
  %v3285 = vsel %vm3172, %v3133, 0
  %v3288 = vsel %vm3172, %v3134, 0
  %v3291 = vsel %vm3172, %v3135, 0
  %v3294 = vsel %vm3172, %v3136, 0
  %v3297 = vsel %vm3172, %v3137, 0
  %v3300 = vsel %vm3172, %v3138, 0
  %v3303 = vsel %vm3172, %v3139, 0
  %v3306 = vsel %vm3172, %v3140, 0
  %v3309 = vsel %vm3172, %v3141, 0
  %v3312 = vsel %vm3172, %v3142, 0
  %v3315 = vsel %vm3172, %v3143, 0
  %v3318 = vsel %vm3172, %v3144, 0
  %v3321 = vsel %vm3172, %v3145, 0
  %v3324 = vsel %vm3172, %v3146, 0
  %v3327 = vsel %vm3172, %v3147, 0
  %v3330 = vsel %vm3172, %v3148, 0
  %v3333 = vsel %vm3172, %v3149, 0
  %v3336 = vsel %vm3172, %v3150, 0
  %v3339 = vsel %vm3172, %v3151, 0
  %v3342 = vsel %vm3172, %v3152, 0
  %v3345 = vsel %vm3172, %v3153, 0
  %v3348 = vsel %vm3172, %v3154, 0
  %v3351 = vsel %vm3172, %v3155, 0
  %v3354 = vsel %vm3172, %v3156, 0
  %v3357 = vsel %vm3172, %v3157, 0
  %v3360 = vsel %vm3172, %v3158, 0
  %v3363 = vsel %vm3172, %v3159, 0
  %vm3365 = vcmask 1043456
  %v3367 = vsel %vm3365, %v3164, 0
  %3369 = vmatprep.subr.mxu0 0.0
  %3370 = vmatpush1.msra.mxu0 %v3160
  %3371 = vmatprep.subr.mxu0 0.0
  %3372 = vmatpush1.msra.mxu0 %v3161
  %3373 = vmatprep.subr.mxu0 0.0
  %3374 = vmatpush1.msra.mxu0 %v3162
  %3375 = vmatprep.subr.mxu0 0.0
  %3376 = vmatpush1.msra.mxu0 %v3163
  %3377 = vmatprep.subr.mxu0 0.0
  %3378 = vmatpush1.msra.mxu0 %v3367
  %3379 = vmatprep.subr.mxu0 0.0
  %3380 = vmatpush1.msra.mxu0 0.0
  %3381 = vmatprep.subr.mxu0 0.0
  %3382 = vmatpush1.msra.mxu0 0.0
  %3383 = vmatprep.subr.mxu0 0.0
  %3384 = vmatpush1.msra.mxu0 0.0
  %3385 = vmatprep.subr.mxu0 0.0
  %3386 = vmatpush1.msra.mxu0 0.0
  %3387 = vmatprep.subr.mxu0 0.0
  %3388 = vmatpush1.msra.mxu0 0.0
  %3389 = vmatprep.subr.mxu0 0.0
  %3390 = vmatpush1.msra.mxu0 0.0
  %3391 = vmatprep.subr.mxu0 0.0
  %3392 = vmatpush1.msra.mxu0 0.0
  %3393 = vmatprep.subr.mxu0 0.0
  %3394 = vmatpush1.msra.mxu0 0.0
  %3395 = vmatprep.subr.mxu0 0.0
  %3396 = vmatpush1.msra.mxu0 0.0
  %3397 = vmatprep.subr.mxu0 0.0
  %3398 = vmatpush1.msra.mxu0 0.0
  %3399 = vmatprep.subr.mxu0 0.0
  %3400 = vmatpush1.msra.mxu0 0.0
  %3401 = vmatprep.subr.mxu0 0.0
  %3402 = vmatpush1.msra.mxu0 0.0
  %3403 = vmatprep.subr.mxu0 0.0
  %3404 = vmatpush1.msra.mxu0 0.0
  %3405 = vmatprep.subr.mxu0 0.0
  %3406 = vmatpush1.msra.mxu0 0.0
  %3407 = vmatprep.subr.mxu0 0.0
  %3408 = vmatpush1.msra.mxu0 0.0
  %3409 = vmatprep.subr.mxu0 0.0
  %3410 = vmatpush1.msra.mxu0 0.0
  %3411 = vmatprep.subr.mxu0 0.0
  %3412 = vmatpush1.msra.mxu0 0.0
  %3413 = vmatprep.subr.mxu0 0.0
  %3414 = vmatpush1.msra.mxu0 0.0
  %3415 = vmatprep.subr.mxu0 0.0
  %3416 = vmatpush1.msra.mxu0 0.0
  %3417 = vmatprep.subr.mxu0 0.0
  %3418 = vmatpush1.msra.mxu0 0.0
  %3419 = vmatprep.subr.mxu0 0.0
  %3420 = vmatpush1.msra.mxu0 0.0
  %3421 = vmatprep.subr.mxu0 0.0
  %3422 = vmatpush1.msra.mxu0 0.0
  %3423 = vmatprep.subr.mxu0 0.0
  %3424 = vmatpush1.msra.mxu0 0.0
  %3425 = vmatprep.subr.mxu0 0.0
  %3426 = vmatpush1.msra.mxu0 0.0
  %3427 = vmatprep.subr.mxu0 0.0
  %3428 = vmatpush1.msra.mxu0 0.0
  %3429 = vmatprep.subr.mxu0 0.0
  %3430 = vmatpush1.msra.mxu0 0.0
  %3431 = vmatprep.subr.mxu0 0.0
  %3432 = vmatpush1.msra.mxu0 0.0
  %3433 = vmatprep.mubr.f32.mxu0 0.0
  %3434 = vmatmul.mubr.f32.gmra.mrb[0].mxu0 %v3174
  %v3435 = vpop.f32.mrb[0].mxu0
  %v3436 = vadd.f32 %v3170, %v3435
  %v3437 = vpop.f32.mrb[0].mxu0
  %3438 = vmatprep.mubr.f32.mxu0 0.0
  %3439 = vmatmul.mubr.f32.gmra.mrb[0].mxu0 %v3177
  %v3440 = vpop.f32.mrb[0].mxu0
  %v3441 = vadd.f32 %v3170, %v3440
  %v3442 = vpop.f32.mrb[0].mxu0
  %3443 = vmatprep.mubr.f32.mxu0 0.0
  %3444 = vmatmul.mubr.f32.gmra.mrb[0].mxu0 %v3180
  %v3445 = vpop.f32.mrb[0].mxu0
  %v3446 = vadd.f32 %v3170, %v3445
  %v3447 = vpop.f32.mrb[0].mxu0
  %3448 = vmatprep.mubr.f32.mxu0 0.0
  %3449 = vmatmul.mubr.f32.gmra.mrb[0].mxu0 %v3183
  %v3450 = vpop.f32.mrb[0].mxu0
  %v3451 = vadd.f32 %v3170, %v3450
  %v3452 = vpop.f32.mrb[0].mxu0
  %3453 = vmatprep.mubr.f32.mxu0 0.0
  %3454 = vmatmul.mubr.f32.gmra.mrb[0].mxu0 %v3186
  %v3455 = vpop.f32.mrb[0].mxu0
  %v3456 = vadd.f32 %v3170, %v3455
  %v3457 = vpop.f32.mrb[0].mxu0
  %3458 = vmatprep.mubr.f32.mxu0 0.0
  %3459 = vmatmul.mubr.f32.gmra.mrb[0].mxu0 %v3189
  %v3460 = vpop.f32.mrb[0].mxu0
  %v3461 = vadd.f32 %v3170, %v3460
  %v3462 = vpop.f32.mrb[0].mxu0
  %3463 = vmatprep.mubr.f32.mxu0 0.0
  %3464 = vmatmul.mubr.f32.gmra.mrb[0].mxu0 %v3192
  %v3465 = vpop.f32.mrb[0].mxu0
  %v3466 = vadd.f32 %v3170, %v3465
  %v3467 = vpop.f32.mrb[0].mxu0
  %3468 = vmatprep.mubr.f32.mxu0 0.0
  %3469 = vmatmul.mubr.f32.gmra.mrb[0].mxu0 %v3195
  %v3470 = vpop.f32.mrb[0].mxu0
  %v3471 = vadd.f32 %v3170, %v3470
  %v3472 = vpop.f32.mrb[0].mxu0
  %3473 = vmatprep.mubr.f32.mxu0 0.0
  %3474 = vmatmul.mubr.f32.gmra.mrb[0].mxu0 %v3198
  %v3475 = vpop.f32.mrb[0].mxu0
  %v3476 = vadd.f32 %v3170, %v3475
  %v3477 = vpop.f32.mrb[0].mxu0
  %3478 = vmatprep.mubr.f32.mxu0 0.0
  %3479 = vmatmul.mubr.f32.gmra.mrb[0].mxu0 %v3201
  %v3480 = vpop.f32.mrb[0].mxu0
  %v3481 = vadd.f32 %v3170, %v3480
  %v3482 = vpop.f32.mrb[0].mxu0
  %3483 = vmatprep.mubr.f32.mxu0 0.0
  %3484 = vmatmul.mubr.f32.gmra.mrb[0].mxu0 %v3204
  %v3485 = vpop.f32.mrb[0].mxu0
  %v3486 = vadd.f32 %v3170, %v3485
  %v3487 = vpop.f32.mrb[0].mxu0
  %3488 = vmatprep.mubr.f32.mxu0 0.0
  %3489 = vmatmul.mubr.f32.gmra.mrb[0].mxu0 %v3207
  %v3490 = vpop.f32.mrb[0].mxu0
  %v3491 = vadd.f32 %v3170, %v3490
  %v3492 = vpop.f32.mrb[0].mxu0
  %3493 = vmatprep.mubr.f32.mxu0 0.0
  %3494 = vmatmul.mubr.f32.gmra.mrb[0].mxu0 %v3210
  %v3495 = vpop.f32.mrb[0].mxu0
  %v3496 = vadd.f32 %v3170, %v3495
  %v3497 = vpop.f32.mrb[0].mxu0
  %3498 = vmatprep.mubr.f32.mxu0 0.0
  %3499 = vmatmul.mubr.f32.gmra.mrb[0].mxu0 %v3213
  %v3500 = vpop.f32.mrb[0].mxu0
  %v3501 = vadd.f32 %v3170, %v3500
  %v3502 = vpop.f32.mrb[0].mxu0
  %3503 = vmatprep.mubr.f32.mxu0 0.0
  %3504 = vmatmul.mubr.f32.gmra.mrb[0].mxu0 %v3216
  %v3505 = vpop.f32.mrb[0].mxu0
  %v3506 = vadd.f32 %v3170, %v3505
  %v3507 = vpop.f32.mrb[0].mxu0
  %3508 = vmatprep.mubr.f32.mxu0 0.0
  %3509 = vmatmul.mubr.f32.gmra.mrb[0].mxu0 %v3219
  %v3510 = vpop.f32.mrb[0].mxu0
  %v3511 = vadd.f32 %v3170, %v3510
  %v3512 = vpop.f32.mrb[0].mxu0
  %3513 = vmatprep.mubr.f32.mxu0 0.0
  %3514 = vmatmul.mubr.f32.gmra.mrb[0].mxu0 %v3222
  %v3515 = vpop.f32.mrb[0].mxu0
  %v3516 = vadd.f32 %v3170, %v3515
  %v3517 = vpop.f32.mrb[0].mxu0
  %3518 = vmatprep.mubr.f32.mxu0 0.0
  %3519 = vmatmul.mubr.f32.gmra.mrb[0].mxu0 %v3225
  %v3520 = vpop.f32.mrb[0].mxu0
  %v3521 = vadd.f32 %v3170, %v3520
  %v3522 = vpop.f32.mrb[0].mxu0
  %3523 = vmatprep.mubr.f32.mxu0 0.0
  %3524 = vmatmul.mubr.f32.gmra.mrb[0].mxu0 %v3228
  %v3525 = vpop.f32.mrb[0].mxu0
  %v3526 = vadd.f32 %v3170, %v3525
  %v3527 = vpop.f32.mrb[0].mxu0
  %3528 = vmatprep.mubr.f32.mxu0 0.0
  %3529 = vmatmul.mubr.f32.gmra.mrb[0].mxu0 %v3231
  %v3530 = vpop.f32.mrb[0].mxu0
  %v3531 = vadd.f32 %v3170, %v3530
  %v3532 = vpop.f32.mrb[0].mxu0
  %3533 = vmatprep.mubr.f32.mxu0 0.0
  %3534 = vmatmul.mubr.f32.gmra.mrb[0].mxu0 %v3234
  %v3535 = vpop.f32.mrb[0].mxu0
  %v3536 = vadd.f32 %v3170, %v3535
  %v3537 = vpop.f32.mrb[0].mxu0
  %3538 = vmatprep.mubr.f32.mxu0 0.0
  %3539 = vmatmul.mubr.f32.gmra.mrb[0].mxu0 %v3237
  %v3540 = vpop.f32.mrb[0].mxu0
  %v3541 = vadd.f32 %v3170, %v3540
  %v3542 = vpop.f32.mrb[0].mxu0
  %3543 = vmatprep.mubr.f32.mxu0 0.0
  %3544 = vmatmul.mubr.f32.gmra.mrb[0].mxu0 %v3240
  %v3545 = vpop.f32.mrb[0].mxu0
  %v3546 = vadd.f32 %v3170, %v3545
  %v3547 = vpop.f32.mrb[0].mxu0
  %3548 = vmatprep.mubr.f32.mxu0 0.0
  %3549 = vmatmul.mubr.f32.gmra.mrb[0].mxu0 %v3243
  %v3550 = vpop.f32.mrb[0].mxu0
  %v3551 = vadd.f32 %v3170, %v3550
  %v3552 = vpop.f32.mrb[0].mxu0
  %3553 = vmatprep.mubr.f32.mxu0 0.0
  %3554 = vmatmul.mubr.f32.gmra.mrb[0].mxu0 %v3246
  %v3555 = vpop.f32.mrb[0].mxu0
  %v3556 = vadd.f32 %v3170, %v3555
  %v3557 = vpop.f32.mrb[0].mxu0
  %3558 = vmatprep.mubr.f32.mxu0 0.0
  %3559 = vmatmul.mubr.f32.gmra.mrb[0].mxu0 %v3249
  %v3560 = vpop.f32.mrb[0].mxu0
  %v3561 = vadd.f32 %v3170, %v3560
  %v3562 = vpop.f32.mrb[0].mxu0
  %3563 = vmatprep.mubr.f32.mxu0 0.0
  %3564 = vmatmul.mubr.f32.gmra.mrb[0].mxu0 %v3252
  %v3565 = vpop.f32.mrb[0].mxu0
  %v3566 = vadd.f32 %v3170, %v3565
  %v3567 = vpop.f32.mrb[0].mxu0
  %3568 = vmatprep.mubr.f32.mxu0 0.0
  %3569 = vmatmul.mubr.f32.gmra.mrb[0].mxu0 %v3255
  %v3570 = vpop.f32.mrb[0].mxu0
  %v3571 = vadd.f32 %v3170, %v3570
  %v3572 = vpop.f32.mrb[0].mxu0
  %3573 = vmatprep.mubr.f32.mxu0 0.0
  %3574 = vmatmul.mubr.f32.gmra.mrb[0].mxu0 %v3258
  %v3575 = vpop.f32.mrb[0].mxu0
  %v3576 = vadd.f32 %v3170, %v3575
  %v3577 = vpop.f32.mrb[0].mxu0
  %3578 = vmatprep.mubr.f32.mxu0 0.0
  %3579 = vmatmul.mubr.f32.gmra.mrb[0].mxu0 %v3261
  %v3580 = vpop.f32.mrb[0].mxu0
  %v3581 = vadd.f32 %v3170, %v3580
  %v3582 = vpop.f32.mrb[0].mxu0
  %3583 = vmatprep.mubr.f32.mxu0 0.0
  %3584 = vmatmul.mubr.f32.gmra.mrb[0].mxu0 %v3264
  %v3585 = vpop.f32.mrb[0].mxu0
  %v3586 = vadd.f32 %v3170, %v3585
  %v3587 = vpop.f32.mrb[0].mxu0
  %3588 = vmatprep.mubr.f32.mxu0 0.0
  %3589 = vmatmul.mubr.f32.gmra.mrb[0].mxu0 %v3267
  %v3590 = vpop.f32.mrb[0].mxu0
  %v3591 = vadd.f32 %v3170, %v3590
  %v3592 = vpop.f32.mrb[0].mxu0
  %3593 = vmatprep.mubr.f32.mxu0 0.0
  %3594 = vmatmul.mubr.f32.gmra.mrb[0].mxu0 %v3270
  %v3595 = vpop.f32.mrb[0].mxu0
  %v3596 = vadd.f32 %v3170, %v3595
  %v3597 = vpop.f32.mrb[0].mxu0
  %3598 = vmatprep.mubr.f32.mxu0 0.0
  %3599 = vmatmul.mubr.f32.gmra.mrb[0].mxu0 %v3273
  %v3600 = vpop.f32.mrb[0].mxu0
  %v3601 = vadd.f32 %v3170, %v3600
  %v3602 = vpop.f32.mrb[0].mxu0
  %3603 = vmatprep.mubr.f32.mxu0 0.0
  %3604 = vmatmul.mubr.f32.gmra.mrb[0].mxu0 %v3276
  %v3605 = vpop.f32.mrb[0].mxu0
  %v3606 = vadd.f32 %v3170, %v3605
  %v3607 = vpop.f32.mrb[0].mxu0
  %3608 = vmatprep.mubr.f32.mxu0 0.0
  %3609 = vmatmul.mubr.f32.gmra.mrb[0].mxu0 %v3279
  %v3610 = vpop.f32.mrb[0].mxu0
  %v3611 = vadd.f32 %v3170, %v3610
  %v3612 = vpop.f32.mrb[0].mxu0
  %3613 = vmatprep.mubr.f32.mxu0 0.0
  %3614 = vmatmul.mubr.f32.gmra.mrb[0].mxu0 %v3282
  %v3615 = vpop.f32.mrb[0].mxu0
  %v3616 = vadd.f32 %v3170, %v3615
  %v3617 = vpop.f32.mrb[0].mxu0
  %3618 = vmatprep.mubr.f32.mxu0 0.0
  %3619 = vmatmul.mubr.f32.gmra.mrb[0].mxu0 %v3285
  %v3620 = vpop.f32.mrb[0].mxu0
  %v3621 = vadd.f32 %v3170, %v3620
  %v3622 = vpop.f32.mrb[0].mxu0
  %3623 = vmatprep.mubr.f32.mxu0 0.0
  %3624 = vmatmul.mubr.f32.gmra.mrb[0].mxu0 %v3288
  %v3625 = vpop.f32.mrb[0].mxu0
  %v3626 = vadd.f32 %v3170, %v3625
  %v3627 = vpop.f32.mrb[0].mxu0
  %3628 = vmatprep.mubr.f32.mxu0 0.0
  %3629 = vmatmul.mubr.f32.gmra.mrb[0].mxu0 %v3291
  %v3630 = vpop.f32.mrb[0].mxu0
  %v3631 = vadd.f32 %v3170, %v3630
  %v3632 = vpop.f32.mrb[0].mxu0
  %3633 = vmatprep.mubr.f32.mxu0 0.0
  %3634 = vmatmul.mubr.f32.gmra.mrb[0].mxu0 %v3294
  %v3635 = vpop.f32.mrb[0].mxu0
  %v3636 = vadd.f32 %v3170, %v3635
  %v3637 = vpop.f32.mrb[0].mxu0
  %3638 = vmatprep.mubr.f32.mxu0 0.0
  %3639 = vmatmul.mubr.f32.gmra.mrb[0].mxu0 %v3297
  %v3640 = vpop.f32.mrb[0].mxu0
  %v3641 = vadd.f32 %v3170, %v3640
  %v3642 = vpop.f32.mrb[0].mxu0
  %3643 = vmatprep.mubr.f32.mxu0 0.0
  %3644 = vmatmul.mubr.f32.gmra.mrb[0].mxu0 %v3300
  %v3645 = vpop.f32.mrb[0].mxu0
  %v3646 = vadd.f32 %v3170, %v3645
  %v3647 = vpop.f32.mrb[0].mxu0
  %3648 = vmatprep.mubr.f32.mxu0 0.0
  %3649 = vmatmul.mubr.f32.gmra.mrb[0].mxu0 %v3303
  %v3650 = vpop.f32.mrb[0].mxu0
  %v3651 = vadd.f32 %v3170, %v3650
  %v3652 = vpop.f32.mrb[0].mxu0
  %3653 = vmatprep.mubr.f32.mxu0 0.0
  %3654 = vmatmul.mubr.f32.gmra.mrb[0].mxu0 %v3306
  %v3655 = vpop.f32.mrb[0].mxu0
  %v3656 = vadd.f32 %v3170, %v3655
  %v3657 = vpop.f32.mrb[0].mxu0
  %3658 = vmatprep.mubr.f32.mxu0 0.0
  %3659 = vmatmul.mubr.f32.gmra.mrb[0].mxu0 %v3309
  %v3660 = vpop.f32.mrb[0].mxu0
  %v3661 = vadd.f32 %v3170, %v3660
  %v3662 = vpop.f32.mrb[0].mxu0
  %3663 = vmatprep.mubr.f32.mxu0 0.0
  %3664 = vmatmul.mubr.f32.gmra.mrb[0].mxu0 %v3312
  %v3665 = vpop.f32.mrb[0].mxu0
  %v3666 = vadd.f32 %v3170, %v3665
  %v3667 = vpop.f32.mrb[0].mxu0
  %3668 = vmatprep.mubr.f32.mxu0 0.0
  %3669 = vmatmul.mubr.f32.gmra.mrb[0].mxu0 %v3315
  %v3670 = vpop.f32.mrb[0].mxu0
  %v3671 = vadd.f32 %v3170, %v3670
  %v3672 = vpop.f32.mrb[0].mxu0
  %3673 = vmatprep.mubr.f32.mxu0 0.0
  %3674 = vmatmul.mubr.f32.gmra.mrb[0].mxu0 %v3318
  %v3675 = vpop.f32.mrb[0].mxu0
  %v3676 = vadd.f32 %v3170, %v3675
  %v3677 = vpop.f32.mrb[0].mxu0
  %3678 = vmatprep.mubr.f32.mxu0 0.0
  %3679 = vmatmul.mubr.f32.gmra.mrb[0].mxu0 %v3321
  %v3680 = vpop.f32.mrb[0].mxu0
  %v3681 = vadd.f32 %v3170, %v3680
  %v3682 = vpop.f32.mrb[0].mxu0
  %3683 = vmatprep.mubr.f32.mxu0 0.0
  %3684 = vmatmul.mubr.f32.gmra.mrb[0].mxu0 %v3324
  %v3685 = vpop.f32.mrb[0].mxu0
  %v3686 = vadd.f32 %v3170, %v3685
  %v3687 = vpop.f32.mrb[0].mxu0
  %3688 = vmatprep.mubr.f32.mxu0 0.0
  %3689 = vmatmul.mubr.f32.gmra.mrb[0].mxu0 %v3327
  %v3690 = vpop.f32.mrb[0].mxu0
  %v3691 = vadd.f32 %v3170, %v3690
  %v3692 = vpop.f32.mrb[0].mxu0
  %3693 = vmatprep.mubr.f32.mxu0 0.0
  %3694 = vmatmul.mubr.f32.gmra.mrb[0].mxu0 %v3330
  %v3695 = vpop.f32.mrb[0].mxu0
  %v3696 = vadd.f32 %v3170, %v3695
  %v3697 = vpop.f32.mrb[0].mxu0
  %3698 = vmatprep.mubr.f32.mxu0 0.0
  %3699 = vmatmul.mubr.f32.gmra.mrb[0].mxu0 %v3333
  %v3700 = vpop.f32.mrb[0].mxu0
  %v3701 = vadd.f32 %v3170, %v3700
  %v3702 = vpop.f32.mrb[0].mxu0
  %3703 = vmatprep.mubr.f32.mxu0 0.0
  %3704 = vmatmul.mubr.f32.gmra.mrb[0].mxu0 %v3336
  %v3705 = vpop.f32.mrb[0].mxu0
  %v3706 = vadd.f32 %v3170, %v3705
  %v3707 = vpop.f32.mrb[0].mxu0
  %3708 = vmatprep.mubr.f32.mxu0 0.0
  %3709 = vmatmul.mubr.f32.gmra.mrb[0].mxu0 %v3339
  %v3710 = vpop.f32.mrb[0].mxu0
  %v3711 = vadd.f32 %v3170, %v3710
  %v3712 = vpop.f32.mrb[0].mxu0
  %3713 = vmatprep.mubr.f32.mxu0 0.0
  %3714 = vmatmul.mubr.f32.gmra.mrb[0].mxu0 %v3342
  %v3715 = vpop.f32.mrb[0].mxu0
  %v3716 = vadd.f32 %v3170, %v3715
  %v3717 = vpop.f32.mrb[0].mxu0
  %3718 = vmatprep.mubr.f32.mxu0 0.0
  %3719 = vmatmul.mubr.f32.gmra.mrb[0].mxu0 %v3345
  %v3720 = vpop.f32.mrb[0].mxu0
  %v3721 = vadd.f32 %v3170, %v3720
  %v3722 = vpop.f32.mrb[0].mxu0
  %3723 = vmatprep.mubr.f32.mxu0 0.0
  %3724 = vmatmul.mubr.f32.gmra.mrb[0].mxu0 %v3348
  %v3725 = vpop.f32.mrb[0].mxu0
  %v3726 = vadd.f32 %v3170, %v3725
  %v3727 = vpop.f32.mrb[0].mxu0
  %3728 = vmatprep.mubr.f32.mxu0 0.0
  %3729 = vmatmul.mubr.f32.gmra.mrb[0].mxu0 %v3351
  %v3730 = vpop.f32.mrb[0].mxu0
  %v3731 = vadd.f32 %v3170, %v3730
  %v3732 = vpop.f32.mrb[0].mxu0
  %3733 = vmatprep.mubr.f32.mxu0 0.0
  %3734 = vmatmul.mubr.f32.gmra.mrb[0].mxu0 %v3354
  %v3735 = vpop.f32.mrb[0].mxu0
  %v3736 = vadd.f32 %v3170, %v3735
  %v3737 = vpop.f32.mrb[0].mxu0
  %3738 = vmatprep.mubr.f32.mxu0 0.0
  %3739 = vmatmul.mubr.f32.gmra.mrb[0].mxu0 %v3357
  %v3740 = vpop.f32.mrb[0].mxu0
  %v3741 = vadd.f32 %v3170, %v3740
  %v3742 = vpop.f32.mrb[0].mxu0
  %3743 = vmatprep.mubr.f32.mxu0 0.0
  %3744 = vmatmul.mubr.f32.gmra.mrb[0].mxu0 %v3360
  %v3745 = vpop.f32.mrb[0].mxu0
  %v3746 = vadd.f32 %v3170, %v3745
  %v3747 = vpop.f32.mrb[0].mxu0
  %3748 = vmatprep.mubr.f32.mxu0 0.0
  %3749 = vmatmul.mubr.f32.gmra.mrb[0].mxu0 %v3363
  %v3750 = vpop.f32.mrb[0].mxu0
  %v3751 = vadd.f32 %v3170, %v3750
  %v3752 = vpop.f32.mrb[0].mxu0
  %3753 = vdwg.mxu0
  %v3754 = vmax.f32 %v3436, 0.0
  %v3755 = vmax.f32 %v3441, 0.0
  %v3756 = vmax.f32 %v3446, 0.0
  %v3757 = vmax.f32 %v3451, 0.0
  %v3758 = vmax.f32 %v3456, 0.0
  %v3759 = vmax.f32 %v3461, 0.0
  %v3760 = vmax.f32 %v3466, 0.0
  %v3761 = vmax.f32 %v3471, 0.0
  %v3762 = vmax.f32 %v3476, 0.0
  %v3763 = vmax.f32 %v3481, 0.0
  %v3764 = vmax.f32 %v3486, 0.0
  %v3765 = vmax.f32 %v3491, 0.0
  %v3766 = vmax.f32 %v3496, 0.0
  %v3767 = vmax.f32 %v3501, 0.0
  %v3768 = vmax.f32 %v3506, 0.0
  %v3769 = vmax.f32 %v3511, 0.0
  %v3770 = vmax.f32 %v3516, 0.0
  %v3771 = vmax.f32 %v3521, 0.0
  %v3772 = vmax.f32 %v3526, 0.0
  %v3773 = vmax.f32 %v3531, 0.0
  %v3774 = vmax.f32 %v3536, 0.0
  %v3775 = vmax.f32 %v3541, 0.0
  %v3776 = vmax.f32 %v3546, 0.0
  %v3777 = vmax.f32 %v3551, 0.0
  %v3778 = vmax.f32 %v3556, 0.0
  %v3779 = vmax.f32 %v3561, 0.0
  %v3780 = vmax.f32 %v3566, 0.0
  %v3781 = vmax.f32 %v3571, 0.0
  %v3782 = vmax.f32 %v3576, 0.0
  %v3783 = vmax.f32 %v3581, 0.0
  %v3784 = vmax.f32 %v3586, 0.0
  %v3785 = vmax.f32 %v3591, 0.0
  %v3786 = vmax.f32 %v3596, 0.0
  %v3787 = vmax.f32 %v3601, 0.0
  %v3788 = vmax.f32 %v3606, 0.0
  %v3789 = vmax.f32 %v3611, 0.0
  %v3790 = vmax.f32 %v3616, 0.0
  %v3791 = vmax.f32 %v3621, 0.0
  %v3792 = vmax.f32 %v3626, 0.0
  %v3793 = vmax.f32 %v3631, 0.0
  %v3794 = vmax.f32 %v3636, 0.0
  %v3795 = vmax.f32 %v3641, 0.0
  %v3796 = vmax.f32 %v3646, 0.0
  %v3797 = vmax.f32 %v3651, 0.0
  %v3798 = vmax.f32 %v3656, 0.0
  %v3799 = vmax.f32 %v3661, 0.0
  %v3800 = vmax.f32 %v3666, 0.0
  %v3801 = vmax.f32 %v3671, 0.0
  %v3802 = vmax.f32 %v3676, 0.0
  %v3803 = vmax.f32 %v3681, 0.0
  %v3804 = vmax.f32 %v3686, 0.0
  %v3805 = vmax.f32 %v3691, 0.0
  %v3806 = vmax.f32 %v3696, 0.0
  %v3807 = vmax.f32 %v3701, 0.0
  %v3808 = vmax.f32 %v3706, 0.0
  %v3809 = vmax.f32 %v3711, 0.0
  %v3810 = vmax.f32 %v3716, 0.0
  %v3811 = vmax.f32 %v3721, 0.0
  %v3812 = vmax.f32 %v3726, 0.0
  %v3813 = vmax.f32 %v3731, 0.0
  %v3814 = vmax.f32 %v3736, 0.0
  %v3815 = vmax.f32 %v3741, 0.0
  %v3816 = vmax.f32 %v3746, 0.0
  %v3817 = vmax.f32 %v3751, 0.0
  %v3882 = vcombine.high %v3754, %v3754
  %v3884 = vunpack.c.l.s4 1983009808
  %v3885 = vunpack.c.0.s8 %v3884
  %v3886 = vlaneseq
  %v3887 = vshrl.u32 %v3886, 7
  %v3888 = vsub.s32 %v3885, %v3887
  %v3889 = vrot.slane %v3754, %v3888
  %v3891 = vunpack.c.l.s4 1983009808
  %v3892 = vunpack.c.0.s8 %v3891
  %v3893 = vlaneseq
  %v3894 = vshrl.u32 %v3893, 7
  %v3895 = vsub.s32 %v3892, %v3894
  %v3896 = vrot.slane %v3882, %v3895
  %v3897 = vcombine.high %v3889, %v3889
  %v3898 = vcombine.high %v3896, %v3896
  %v3899 = vcombine.high %v3755, %v3755
  %v3901 = vunpack.c.l.s4 1983009808
  %v3902 = vunpack.c.0.s8 %v3901
  %v3903 = vlaneseq
  %v3904 = vshrl.u32 %v3903, 7
  %v3905 = vsub.s32 %v3902, %v3904
  %v3906 = vrot.slane %v3755, %v3905
  %v3908 = vunpack.c.l.s4 1983009808
  %v3909 = vunpack.c.0.s8 %v3908
  %v3910 = vlaneseq
  %v3911 = vshrl.u32 %v3910, 7
  %v3912 = vsub.s32 %v3909, %v3911
  %v3913 = vrot.slane %v3899, %v3912
  %v3914 = vcombine.high %v3906, %v3906
  %v3915 = vcombine.high %v3913, %v3913
  %v3916 = vcombine.high %v3756, %v3756
  %v3918 = vunpack.c.l.s4 1983009808
  %v3919 = vunpack.c.0.s8 %v3918
  %v3920 = vlaneseq
  %v3921 = vshrl.u32 %v3920, 7
  %v3922 = vsub.s32 %v3919, %v3921
  %v3923 = vrot.slane %v3756, %v3922
  %v3925 = vunpack.c.l.s4 1983009808
  %v3926 = vunpack.c.0.s8 %v3925
  %v3927 = vlaneseq
  %v3928 = vshrl.u32 %v3927, 7
  %v3929 = vsub.s32 %v3926, %v3928
  %v3930 = vrot.slane %v3916, %v3929
  %v3931 = vcombine.high %v3923, %v3923
  %v3932 = vcombine.high %v3930, %v3930
  %v3933 = vcombine.high %v3757, %v3757
  %v3935 = vunpack.c.l.s4 1983009808
  %v3936 = vunpack.c.0.s8 %v3935
  %v3937 = vlaneseq
  %v3938 = vshrl.u32 %v3937, 7
  %v3939 = vsub.s32 %v3936, %v3938
  %v3940 = vrot.slane %v3757, %v3939
  %v3942 = vunpack.c.l.s4 1983009808
  %v3943 = vunpack.c.0.s8 %v3942
  %v3944 = vlaneseq
  %v3945 = vshrl.u32 %v3944, 7
  %v3946 = vsub.s32 %v3943, %v3945
  %v3947 = vrot.slane %v3933, %v3946
  %v3948 = vcombine.high %v3940, %v3940
  %v3949 = vcombine.high %v3947, %v3947
  %v3950 = vcombine.high %v3758, %v3758
  %v3952 = vunpack.c.l.s4 1983009808
  %v3953 = vunpack.c.0.s8 %v3952
  %v3954 = vlaneseq
  %v3955 = vshrl.u32 %v3954, 7
  %v3956 = vsub.s32 %v3953, %v3955
  %v3957 = vrot.slane %v3758, %v3956
  %v3959 = vunpack.c.l.s4 1983009808
  %v3960 = vunpack.c.0.s8 %v3959
  %v3961 = vlaneseq
  %v3962 = vshrl.u32 %v3961, 7
  %v3963 = vsub.s32 %v3960, %v3962
  %v3964 = vrot.slane %v3950, %v3963
  %v3965 = vcombine.high %v3957, %v3957
  %v3966 = vcombine.high %v3964, %v3964
  %v3967 = vcombine.high %v3759, %v3759
  %v3969 = vunpack.c.l.s4 1983009808
  %v3970 = vunpack.c.0.s8 %v3969
  %v3971 = vlaneseq
  %v3972 = vshrl.u32 %v3971, 7
  %v3973 = vsub.s32 %v3970, %v3972
  %v3974 = vrot.slane %v3759, %v3973
  %v3976 = vunpack.c.l.s4 1983009808
  %v3977 = vunpack.c.0.s8 %v3976
  %v3978 = vlaneseq
  %v3979 = vshrl.u32 %v3978, 7
  %v3980 = vsub.s32 %v3977, %v3979
  %v3981 = vrot.slane %v3967, %v3980
  %v3982 = vcombine.high %v3974, %v3974
  %v3983 = vcombine.high %v3981, %v3981
  %v3984 = vcombine.high %v3760, %v3760
  %v3986 = vunpack.c.l.s4 1983009808
  %v3987 = vunpack.c.0.s8 %v3986
  %v3988 = vlaneseq
  %v3989 = vshrl.u32 %v3988, 7
  %v3990 = vsub.s32 %v3987, %v3989
  %v3991 = vrot.slane %v3760, %v3990
  %v3993 = vunpack.c.l.s4 1983009808
  %v3994 = vunpack.c.0.s8 %v3993
  %v3995 = vlaneseq
  %v3996 = vshrl.u32 %v3995, 7
  %v3997 = vsub.s32 %v3994, %v3996
  %v3998 = vrot.slane %v3984, %v3997
  %v3999 = vcombine.high %v3991, %v3991
  %v4000 = vcombine.high %v3998, %v3998
  %v4001 = vcombine.high %v3761, %v3761
  %v4003 = vunpack.c.l.s4 1983009808
  %v4004 = vunpack.c.0.s8 %v4003
  %v4005 = vlaneseq
  %v4006 = vshrl.u32 %v4005, 7
  %v4007 = vsub.s32 %v4004, %v4006
  %v4008 = vrot.slane %v3761, %v4007
  %v4010 = vunpack.c.l.s4 1983009808
  %v4011 = vunpack.c.0.s8 %v4010
  %v4012 = vlaneseq
  %v4013 = vshrl.u32 %v4012, 7
  %v4014 = vsub.s32 %v4011, %v4013
  %v4015 = vrot.slane %v4001, %v4014
  %v4016 = vcombine.high %v4008, %v4008
  %v4017 = vcombine.high %v4015, %v4015
  %v4018 = vcombine.high %v3762, %v3762
  %v4020 = vunpack.c.l.s4 1983009808
  %v4021 = vunpack.c.0.s8 %v4020
  %v4022 = vlaneseq
  %v4023 = vshrl.u32 %v4022, 7
  %v4024 = vsub.s32 %v4021, %v4023
  %v4025 = vrot.slane %v3762, %v4024
  %v4027 = vunpack.c.l.s4 1983009808
  %v4028 = vunpack.c.0.s8 %v4027
  %v4029 = vlaneseq
  %v4030 = vshrl.u32 %v4029, 7
  %v4031 = vsub.s32 %v4028, %v4030
  %v4032 = vrot.slane %v4018, %v4031
  %v4033 = vcombine.high %v4025, %v4025
  %v4034 = vcombine.high %v4032, %v4032
  %v4035 = vcombine.high %v3763, %v3763
  %v4037 = vunpack.c.l.s4 1983009808
  %v4038 = vunpack.c.0.s8 %v4037
  %v4039 = vlaneseq
  %v4040 = vshrl.u32 %v4039, 7
  %v4041 = vsub.s32 %v4038, %v4040
  %v4042 = vrot.slane %v3763, %v4041
  %v4044 = vunpack.c.l.s4 1983009808
  %v4045 = vunpack.c.0.s8 %v4044
  %v4046 = vlaneseq
  %v4047 = vshrl.u32 %v4046, 7
  %v4048 = vsub.s32 %v4045, %v4047
  %v4049 = vrot.slane %v4035, %v4048
  %v4050 = vcombine.high %v4042, %v4042
  %v4051 = vcombine.high %v4049, %v4049
  %v4052 = vcombine.high %v3764, %v3764
  %v4054 = vunpack.c.l.s4 1983009808
  %v4055 = vunpack.c.0.s8 %v4054
  %v4056 = vlaneseq
  %v4057 = vshrl.u32 %v4056, 7
  %v4058 = vsub.s32 %v4055, %v4057
  %v4059 = vrot.slane %v3764, %v4058
  %v4061 = vunpack.c.l.s4 1983009808
  %v4062 = vunpack.c.0.s8 %v4061
  %v4063 = vlaneseq
  %v4064 = vshrl.u32 %v4063, 7
  %v4065 = vsub.s32 %v4062, %v4064
  %v4066 = vrot.slane %v4052, %v4065
  %v4067 = vcombine.high %v4059, %v4059
  %v4068 = vcombine.high %v4066, %v4066
  %v4069 = vcombine.high %v3765, %v3765
  %v4071 = vunpack.c.l.s4 1983009808
  %v4072 = vunpack.c.0.s8 %v4071
  %v4073 = vlaneseq
  %v4074 = vshrl.u32 %v4073, 7
  %v4075 = vsub.s32 %v4072, %v4074
  %v4076 = vrot.slane %v3765, %v4075
  %v4078 = vunpack.c.l.s4 1983009808
  %v4079 = vunpack.c.0.s8 %v4078
  %v4080 = vlaneseq
  %v4081 = vshrl.u32 %v4080, 7
  %v4082 = vsub.s32 %v4079, %v4081
  %v4083 = vrot.slane %v4069, %v4082
  %v4084 = vcombine.high %v4076, %v4076
  %v4085 = vcombine.high %v4083, %v4083
  %v4086 = vcombine.high %v3766, %v3766
  %v4088 = vunpack.c.l.s4 1983009808
  %v4089 = vunpack.c.0.s8 %v4088
  %v4090 = vlaneseq
  %v4091 = vshrl.u32 %v4090, 7
  %v4092 = vsub.s32 %v4089, %v4091
  %v4093 = vrot.slane %v3766, %v4092
  %v4095 = vunpack.c.l.s4 1983009808
  %v4096 = vunpack.c.0.s8 %v4095
  %v4097 = vlaneseq
  %v4098 = vshrl.u32 %v4097, 7
  %v4099 = vsub.s32 %v4096, %v4098
  %v4100 = vrot.slane %v4086, %v4099
  %v4101 = vcombine.high %v4093, %v4093
  %v4102 = vcombine.high %v4100, %v4100
  %v4103 = vcombine.high %v3767, %v3767
  %v4105 = vunpack.c.l.s4 1983009808
  %v4106 = vunpack.c.0.s8 %v4105
  %v4107 = vlaneseq
  %v4108 = vshrl.u32 %v4107, 7
  %v4109 = vsub.s32 %v4106, %v4108
  %v4110 = vrot.slane %v3767, %v4109
  %v4112 = vunpack.c.l.s4 1983009808
  %v4113 = vunpack.c.0.s8 %v4112
  %v4114 = vlaneseq
  %v4115 = vshrl.u32 %v4114, 7
  %v4116 = vsub.s32 %v4113, %v4115
  %v4117 = vrot.slane %v4103, %v4116
  %v4118 = vcombine.high %v4110, %v4110
  %v4119 = vcombine.high %v4117, %v4117
  %v4120 = vcombine.high %v3768, %v3768
  %v4122 = vunpack.c.l.s4 1983009808
  %v4123 = vunpack.c.0.s8 %v4122
  %v4124 = vlaneseq
  %v4125 = vshrl.u32 %v4124, 7
  %v4126 = vsub.s32 %v4123, %v4125
  %v4127 = vrot.slane %v3768, %v4126
  %v4129 = vunpack.c.l.s4 1983009808
  %v4130 = vunpack.c.0.s8 %v4129
  %v4131 = vlaneseq
  %v4132 = vshrl.u32 %v4131, 7
  %v4133 = vsub.s32 %v4130, %v4132
  %v4134 = vrot.slane %v4120, %v4133
  %v4135 = vcombine.high %v4127, %v4127
  %v4136 = vcombine.high %v4134, %v4134
  %v4137 = vcombine.high %v3769, %v3769
  %v4139 = vunpack.c.l.s4 1983009808
  %v4140 = vunpack.c.0.s8 %v4139
  %v4141 = vlaneseq
  %v4142 = vshrl.u32 %v4141, 7
  %v4143 = vsub.s32 %v4140, %v4142
  %v4144 = vrot.slane %v3769, %v4143
  %v4146 = vunpack.c.l.s4 1983009808
  %v4147 = vunpack.c.0.s8 %v4146
  %v4148 = vlaneseq
  %v4149 = vshrl.u32 %v4148, 7
  %v4150 = vsub.s32 %v4147, %v4149
  %v4151 = vrot.slane %v4137, %v4150
  %v4152 = vcombine.high %v4144, %v4144
  %v4153 = vcombine.high %v4151, %v4151
  %v4154 = vcombine.high %v3770, %v3770
  %v4156 = vunpack.c.l.s4 1983009808
  %v4157 = vunpack.c.0.s8 %v4156
  %v4158 = vlaneseq
  %v4159 = vshrl.u32 %v4158, 7
  %v4160 = vsub.s32 %v4157, %v4159
  %v4161 = vrot.slane %v3770, %v4160
  %v4163 = vunpack.c.l.s4 1983009808
  %v4164 = vunpack.c.0.s8 %v4163
  %v4165 = vlaneseq
  %v4166 = vshrl.u32 %v4165, 7
  %v4167 = vsub.s32 %v4164, %v4166
  %v4168 = vrot.slane %v4154, %v4167
  %v4169 = vcombine.high %v4161, %v4161
  %v4170 = vcombine.high %v4168, %v4168
  %v4171 = vcombine.high %v3771, %v3771
  %v4173 = vunpack.c.l.s4 1983009808
  %v4174 = vunpack.c.0.s8 %v4173
  %v4175 = vlaneseq
  %v4176 = vshrl.u32 %v4175, 7
  %v4177 = vsub.s32 %v4174, %v4176
  %v4178 = vrot.slane %v3771, %v4177
  %v4180 = vunpack.c.l.s4 1983009808
  %v4181 = vunpack.c.0.s8 %v4180
  %v4182 = vlaneseq
  %v4183 = vshrl.u32 %v4182, 7
  %v4184 = vsub.s32 %v4181, %v4183
  %v4185 = vrot.slane %v4171, %v4184
  %v4186 = vcombine.high %v4178, %v4178
  %v4187 = vcombine.high %v4185, %v4185
  %v4188 = vcombine.high %v3772, %v3772
  %v4190 = vunpack.c.l.s4 1983009808
  %v4191 = vunpack.c.0.s8 %v4190
  %v4192 = vlaneseq
  %v4193 = vshrl.u32 %v4192, 7
  %v4194 = vsub.s32 %v4191, %v4193
  %v4195 = vrot.slane %v3772, %v4194
  %v4197 = vunpack.c.l.s4 1983009808
  %v4198 = vunpack.c.0.s8 %v4197
  %v4199 = vlaneseq
  %v4200 = vshrl.u32 %v4199, 7
  %v4201 = vsub.s32 %v4198, %v4200
  %v4202 = vrot.slane %v4188, %v4201
  %v4203 = vcombine.high %v4195, %v4195
  %v4204 = vcombine.high %v4202, %v4202
  %v4205 = vcombine.high %v3773, %v3773
  %v4207 = vunpack.c.l.s4 1983009808
  %v4208 = vunpack.c.0.s8 %v4207
  %v4209 = vlaneseq
  %v4210 = vshrl.u32 %v4209, 7
  %v4211 = vsub.s32 %v4208, %v4210
  %v4212 = vrot.slane %v3773, %v4211
  %v4214 = vunpack.c.l.s4 1983009808
  %v4215 = vunpack.c.0.s8 %v4214
  %v4216 = vlaneseq
  %v4217 = vshrl.u32 %v4216, 7
  %v4218 = vsub.s32 %v4215, %v4217
  %v4219 = vrot.slane %v4205, %v4218
  %v4220 = vcombine.high %v4212, %v4212
  %v4221 = vcombine.high %v4219, %v4219
  %v4222 = vcombine.high %v3774, %v3774
  %v4224 = vunpack.c.l.s4 1983009808
  %v4225 = vunpack.c.0.s8 %v4224
  %v4226 = vlaneseq
  %v4227 = vshrl.u32 %v4226, 7
  %v4228 = vsub.s32 %v4225, %v4227
  %v4229 = vrot.slane %v3774, %v4228
  %v4231 = vunpack.c.l.s4 1983009808
  %v4232 = vunpack.c.0.s8 %v4231
  %v4233 = vlaneseq
  %v4234 = vshrl.u32 %v4233, 7
  %v4235 = vsub.s32 %v4232, %v4234
  %v4236 = vrot.slane %v4222, %v4235
  %v4237 = vcombine.high %v4229, %v4229
  %v4238 = vcombine.high %v4236, %v4236
  %v4239 = vcombine.high %v3775, %v3775
  %v4241 = vunpack.c.l.s4 1983009808
  %v4242 = vunpack.c.0.s8 %v4241
  %v4243 = vlaneseq
  %v4244 = vshrl.u32 %v4243, 7
  %v4245 = vsub.s32 %v4242, %v4244
  %v4246 = vrot.slane %v3775, %v4245
  %v4248 = vunpack.c.l.s4 1983009808
  %v4249 = vunpack.c.0.s8 %v4248
  %v4250 = vlaneseq
  %v4251 = vshrl.u32 %v4250, 7
  %v4252 = vsub.s32 %v4249, %v4251
  %v4253 = vrot.slane %v4239, %v4252
  %v4254 = vcombine.high %v4246, %v4246
  %v4255 = vcombine.high %v4253, %v4253
  %v4256 = vcombine.high %v3776, %v3776
  %v4258 = vunpack.c.l.s4 1983009808
  %v4259 = vunpack.c.0.s8 %v4258
  %v4260 = vlaneseq
  %v4261 = vshrl.u32 %v4260, 7
  %v4262 = vsub.s32 %v4259, %v4261
  %v4263 = vrot.slane %v3776, %v4262
  %v4265 = vunpack.c.l.s4 1983009808
  %v4266 = vunpack.c.0.s8 %v4265
  %v4267 = vlaneseq
  %v4268 = vshrl.u32 %v4267, 7
  %v4269 = vsub.s32 %v4266, %v4268
  %v4270 = vrot.slane %v4256, %v4269
  %v4271 = vcombine.high %v4263, %v4263
  %v4272 = vcombine.high %v4270, %v4270
  %v4273 = vcombine.high %v3777, %v3777
  %v4275 = vunpack.c.l.s4 1983009808
  %v4276 = vunpack.c.0.s8 %v4275
  %v4277 = vlaneseq
  %v4278 = vshrl.u32 %v4277, 7
  %v4279 = vsub.s32 %v4276, %v4278
  %v4280 = vrot.slane %v3777, %v4279
  %v4282 = vunpack.c.l.s4 1983009808
  %v4283 = vunpack.c.0.s8 %v4282
  %v4284 = vlaneseq
  %v4285 = vshrl.u32 %v4284, 7
  %v4286 = vsub.s32 %v4283, %v4285
  %v4287 = vrot.slane %v4273, %v4286
  %v4288 = vcombine.high %v4280, %v4280
  %v4289 = vcombine.high %v4287, %v4287
  %v4290 = vcombine.high %v3778, %v3778
  %v4292 = vunpack.c.l.s4 1983009808
  %v4293 = vunpack.c.0.s8 %v4292
  %v4294 = vlaneseq
  %v4295 = vshrl.u32 %v4294, 7
  %v4296 = vsub.s32 %v4293, %v4295
  %v4297 = vrot.slane %v3778, %v4296
  %v4299 = vunpack.c.l.s4 1983009808
  %v4300 = vunpack.c.0.s8 %v4299
  %v4301 = vlaneseq
  %v4302 = vshrl.u32 %v4301, 7
  %v4303 = vsub.s32 %v4300, %v4302
  %v4304 = vrot.slane %v4290, %v4303
  %v4305 = vcombine.high %v4297, %v4297
  %v4306 = vcombine.high %v4304, %v4304
  %v4307 = vcombine.high %v3779, %v3779
  %v4309 = vunpack.c.l.s4 1983009808
  %v4310 = vunpack.c.0.s8 %v4309
  %v4311 = vlaneseq
  %v4312 = vshrl.u32 %v4311, 7
  %v4313 = vsub.s32 %v4310, %v4312
  %v4314 = vrot.slane %v3779, %v4313
  %v4316 = vunpack.c.l.s4 1983009808
  %v4317 = vunpack.c.0.s8 %v4316
  %v4318 = vlaneseq
  %v4319 = vshrl.u32 %v4318, 7
  %v4320 = vsub.s32 %v4317, %v4319
  %v4321 = vrot.slane %v4307, %v4320
  %v4322 = vcombine.high %v4314, %v4314
  %v4323 = vcombine.high %v4321, %v4321
  %v4324 = vcombine.high %v3780, %v3780
  %v4326 = vunpack.c.l.s4 1983009808
  %v4327 = vunpack.c.0.s8 %v4326
  %v4328 = vlaneseq
  %v4329 = vshrl.u32 %v4328, 7
  %v4330 = vsub.s32 %v4327, %v4329
  %v4331 = vrot.slane %v3780, %v4330
  %v4333 = vunpack.c.l.s4 1983009808
  %v4334 = vunpack.c.0.s8 %v4333
  %v4335 = vlaneseq
  %v4336 = vshrl.u32 %v4335, 7
  %v4337 = vsub.s32 %v4334, %v4336
  %v4338 = vrot.slane %v4324, %v4337
  %v4339 = vcombine.high %v4331, %v4331
  %v4340 = vcombine.high %v4338, %v4338
  %v4341 = vcombine.high %v3781, %v3781
  %v4343 = vunpack.c.l.s4 1983009808
  %v4344 = vunpack.c.0.s8 %v4343
  %v4345 = vlaneseq
  %v4346 = vshrl.u32 %v4345, 7
  %v4347 = vsub.s32 %v4344, %v4346
  %v4348 = vrot.slane %v3781, %v4347
  %v4350 = vunpack.c.l.s4 1983009808
  %v4351 = vunpack.c.0.s8 %v4350
  %v4352 = vlaneseq
  %v4353 = vshrl.u32 %v4352, 7
  %v4354 = vsub.s32 %v4351, %v4353
  %v4355 = vrot.slane %v4341, %v4354
  %v4356 = vcombine.high %v4348, %v4348
  %v4357 = vcombine.high %v4355, %v4355
  %v4358 = vcombine.high %v3782, %v3782
  %v4360 = vunpack.c.l.s4 1983009808
  %v4361 = vunpack.c.0.s8 %v4360
  %v4362 = vlaneseq
  %v4363 = vshrl.u32 %v4362, 7
  %v4364 = vsub.s32 %v4361, %v4363
  %v4365 = vrot.slane %v3782, %v4364
  %v4367 = vunpack.c.l.s4 1983009808
  %v4368 = vunpack.c.0.s8 %v4367
  %v4369 = vlaneseq
  %v4370 = vshrl.u32 %v4369, 7
  %v4371 = vsub.s32 %v4368, %v4370
  %v4372 = vrot.slane %v4358, %v4371
  %v4373 = vcombine.high %v4365, %v4365
  %v4374 = vcombine.high %v4372, %v4372
  %v4375 = vcombine.high %v3783, %v3783
  %v4377 = vunpack.c.l.s4 1983009808
  %v4378 = vunpack.c.0.s8 %v4377
  %v4379 = vlaneseq
  %v4380 = vshrl.u32 %v4379, 7
  %v4381 = vsub.s32 %v4378, %v4380
  %v4382 = vrot.slane %v3783, %v4381
  %v4384 = vunpack.c.l.s4 1983009808
  %v4385 = vunpack.c.0.s8 %v4384
  %v4386 = vlaneseq
  %v4387 = vshrl.u32 %v4386, 7
  %v4388 = vsub.s32 %v4385, %v4387
  %v4389 = vrot.slane %v4375, %v4388
  %v4390 = vcombine.high %v4382, %v4382
  %v4391 = vcombine.high %v4389, %v4389
  %v4392 = vcombine.high %v3784, %v3784
  %v4394 = vunpack.c.l.s4 1983009808
  %v4395 = vunpack.c.0.s8 %v4394
  %v4396 = vlaneseq
  %v4397 = vshrl.u32 %v4396, 7
  %v4398 = vsub.s32 %v4395, %v4397
  %v4399 = vrot.slane %v3784, %v4398
  %v4401 = vunpack.c.l.s4 1983009808
  %v4402 = vunpack.c.0.s8 %v4401
  %v4403 = vlaneseq
  %v4404 = vshrl.u32 %v4403, 7
  %v4405 = vsub.s32 %v4402, %v4404
  %v4406 = vrot.slane %v4392, %v4405
  %v4407 = vcombine.high %v4399, %v4399
  %v4408 = vcombine.high %v4406, %v4406
  %v4409 = vcombine.high %v3785, %v3785
  %v4411 = vunpack.c.l.s4 1983009808
  %v4412 = vunpack.c.0.s8 %v4411
  %v4413 = vlaneseq
  %v4414 = vshrl.u32 %v4413, 7
  %v4415 = vsub.s32 %v4412, %v4414
  %v4416 = vrot.slane %v3785, %v4415
  %v4418 = vunpack.c.l.s4 1983009808
  %v4419 = vunpack.c.0.s8 %v4418
  %v4420 = vlaneseq
  %v4421 = vshrl.u32 %v4420, 7
  %v4422 = vsub.s32 %v4419, %v4421
  %v4423 = vrot.slane %v4409, %v4422
  %v4424 = vcombine.high %v4416, %v4416
  %v4425 = vcombine.high %v4423, %v4423
  %v4426 = vcombine.high %v3786, %v3786
  %v4428 = vunpack.c.l.s4 1983009808
  %v4429 = vunpack.c.0.s8 %v4428
  %v4430 = vlaneseq
  %v4431 = vshrl.u32 %v4430, 7
  %v4432 = vsub.s32 %v4429, %v4431
  %v4433 = vrot.slane %v3786, %v4432
  %v4435 = vunpack.c.l.s4 1983009808
  %v4436 = vunpack.c.0.s8 %v4435
  %v4437 = vlaneseq
  %v4438 = vshrl.u32 %v4437, 7
  %v4439 = vsub.s32 %v4436, %v4438
  %v4440 = vrot.slane %v4426, %v4439
  %v4441 = vcombine.high %v4433, %v4433
  %v4442 = vcombine.high %v4440, %v4440
  %v4443 = vcombine.high %v3787, %v3787
  %v4445 = vunpack.c.l.s4 1983009808
  %v4446 = vunpack.c.0.s8 %v4445
  %v4447 = vlaneseq
  %v4448 = vshrl.u32 %v4447, 7
  %v4449 = vsub.s32 %v4446, %v4448
  %v4450 = vrot.slane %v3787, %v4449
  %v4452 = vunpack.c.l.s4 1983009808
  %v4453 = vunpack.c.0.s8 %v4452
  %v4454 = vlaneseq
  %v4455 = vshrl.u32 %v4454, 7
  %v4456 = vsub.s32 %v4453, %v4455
  %v4457 = vrot.slane %v4443, %v4456
  %v4458 = vcombine.high %v4450, %v4450
  %v4459 = vcombine.high %v4457, %v4457
  %v4460 = vcombine.high %v3788, %v3788
  %v4462 = vunpack.c.l.s4 1983009808
  %v4463 = vunpack.c.0.s8 %v4462
  %v4464 = vlaneseq
  %v4465 = vshrl.u32 %v4464, 7
  %v4466 = vsub.s32 %v4463, %v4465
  %v4467 = vrot.slane %v3788, %v4466
  %v4469 = vunpack.c.l.s4 1983009808
  %v4470 = vunpack.c.0.s8 %v4469
  %v4471 = vlaneseq
  %v4472 = vshrl.u32 %v4471, 7
  %v4473 = vsub.s32 %v4470, %v4472
  %v4474 = vrot.slane %v4460, %v4473
  %v4475 = vcombine.high %v4467, %v4467
  %v4476 = vcombine.high %v4474, %v4474
  %v4477 = vcombine.high %v3789, %v3789
  %v4479 = vunpack.c.l.s4 1983009808
  %v4480 = vunpack.c.0.s8 %v4479
  %v4481 = vlaneseq
  %v4482 = vshrl.u32 %v4481, 7
  %v4483 = vsub.s32 %v4480, %v4482
  %v4484 = vrot.slane %v3789, %v4483
  %v4486 = vunpack.c.l.s4 1983009808
  %v4487 = vunpack.c.0.s8 %v4486
  %v4488 = vlaneseq
  %v4489 = vshrl.u32 %v4488, 7
  %v4490 = vsub.s32 %v4487, %v4489
  %v4491 = vrot.slane %v4477, %v4490
  %v4492 = vcombine.high %v4484, %v4484
  %v4493 = vcombine.high %v4491, %v4491
  %v4494 = vcombine.high %v3790, %v3790
  %v4496 = vunpack.c.l.s4 1983009808
  %v4497 = vunpack.c.0.s8 %v4496
  %v4498 = vlaneseq
  %v4499 = vshrl.u32 %v4498, 7
  %v4500 = vsub.s32 %v4497, %v4499
  %v4501 = vrot.slane %v3790, %v4500
  %v4503 = vunpack.c.l.s4 1983009808
  %v4504 = vunpack.c.0.s8 %v4503
  %v4505 = vlaneseq
  %v4506 = vshrl.u32 %v4505, 7
  %v4507 = vsub.s32 %v4504, %v4506
  %v4508 = vrot.slane %v4494, %v4507
  %v4509 = vcombine.high %v4501, %v4501
  %v4510 = vcombine.high %v4508, %v4508
  %v4511 = vcombine.high %v3791, %v3791
  %v4513 = vunpack.c.l.s4 1983009808
  %v4514 = vunpack.c.0.s8 %v4513
  %v4515 = vlaneseq
  %v4516 = vshrl.u32 %v4515, 7
  %v4517 = vsub.s32 %v4514, %v4516
  %v4518 = vrot.slane %v3791, %v4517
  %v4520 = vunpack.c.l.s4 1983009808
  %v4521 = vunpack.c.0.s8 %v4520
  %v4522 = vlaneseq
  %v4523 = vshrl.u32 %v4522, 7
  %v4524 = vsub.s32 %v4521, %v4523
  %v4525 = vrot.slane %v4511, %v4524
  %v4526 = vcombine.high %v4518, %v4518
  %v4527 = vcombine.high %v4525, %v4525
  %v4528 = vcombine.high %v3792, %v3792
  %v4530 = vunpack.c.l.s4 1983009808
  %v4531 = vunpack.c.0.s8 %v4530
  %v4532 = vlaneseq
  %v4533 = vshrl.u32 %v4532, 7
  %v4534 = vsub.s32 %v4531, %v4533
  %v4535 = vrot.slane %v3792, %v4534
  %v4537 = vunpack.c.l.s4 1983009808
  %v4538 = vunpack.c.0.s8 %v4537
  %v4539 = vlaneseq
  %v4540 = vshrl.u32 %v4539, 7
  %v4541 = vsub.s32 %v4538, %v4540
  %v4542 = vrot.slane %v4528, %v4541
  %v4543 = vcombine.high %v4535, %v4535
  %v4544 = vcombine.high %v4542, %v4542
  %v4545 = vcombine.high %v3793, %v3793
  %v4547 = vunpack.c.l.s4 1983009808
  %v4548 = vunpack.c.0.s8 %v4547
  %v4549 = vlaneseq
  %v4550 = vshrl.u32 %v4549, 7
  %v4551 = vsub.s32 %v4548, %v4550
  %v4552 = vrot.slane %v3793, %v4551
  %v4554 = vunpack.c.l.s4 1983009808
  %v4555 = vunpack.c.0.s8 %v4554
  %v4556 = vlaneseq
  %v4557 = vshrl.u32 %v4556, 7
  %v4558 = vsub.s32 %v4555, %v4557
  %v4559 = vrot.slane %v4545, %v4558
  %v4560 = vcombine.high %v4552, %v4552
  %v4561 = vcombine.high %v4559, %v4559
  %v4562 = vcombine.high %v3794, %v3794
  %v4564 = vunpack.c.l.s4 1983009808
  %v4565 = vunpack.c.0.s8 %v4564
  %v4566 = vlaneseq
  %v4567 = vshrl.u32 %v4566, 7
  %v4568 = vsub.s32 %v4565, %v4567
  %v4569 = vrot.slane %v3794, %v4568
  %v4571 = vunpack.c.l.s4 1983009808
  %v4572 = vunpack.c.0.s8 %v4571
  %v4573 = vlaneseq
  %v4574 = vshrl.u32 %v4573, 7
  %v4575 = vsub.s32 %v4572, %v4574
  %v4576 = vrot.slane %v4562, %v4575
  %v4577 = vcombine.high %v4569, %v4569
  %v4578 = vcombine.high %v4576, %v4576
  %v4579 = vcombine.high %v3795, %v3795
  %v4581 = vunpack.c.l.s4 1983009808
  %v4582 = vunpack.c.0.s8 %v4581
  %v4583 = vlaneseq
  %v4584 = vshrl.u32 %v4583, 7
  %v4585 = vsub.s32 %v4582, %v4584
  %v4586 = vrot.slane %v3795, %v4585
  %v4588 = vunpack.c.l.s4 1983009808
  %v4589 = vunpack.c.0.s8 %v4588
  %v4590 = vlaneseq
  %v4591 = vshrl.u32 %v4590, 7
  %v4592 = vsub.s32 %v4589, %v4591
  %v4593 = vrot.slane %v4579, %v4592
  %v4594 = vcombine.high %v4586, %v4586
  %v4595 = vcombine.high %v4593, %v4593
  %v4596 = vcombine.high %v3796, %v3796
  %v4598 = vunpack.c.l.s4 1983009808
  %v4599 = vunpack.c.0.s8 %v4598
  %v4600 = vlaneseq
  %v4601 = vshrl.u32 %v4600, 7
  %v4602 = vsub.s32 %v4599, %v4601
  %v4603 = vrot.slane %v3796, %v4602
  %v4605 = vunpack.c.l.s4 1983009808
  %v4606 = vunpack.c.0.s8 %v4605
  %v4607 = vlaneseq
  %v4608 = vshrl.u32 %v4607, 7
  %v4609 = vsub.s32 %v4606, %v4608
  %v4610 = vrot.slane %v4596, %v4609
  %v4611 = vcombine.high %v4603, %v4603
  %v4612 = vcombine.high %v4610, %v4610
  %v4613 = vcombine.high %v3797, %v3797
  %v4615 = vunpack.c.l.s4 1983009808
  %v4616 = vunpack.c.0.s8 %v4615
  %v4617 = vlaneseq
  %v4618 = vshrl.u32 %v4617, 7
  %v4619 = vsub.s32 %v4616, %v4618
  %v4620 = vrot.slane %v3797, %v4619
  %v4622 = vunpack.c.l.s4 1983009808
  %v4623 = vunpack.c.0.s8 %v4622
  %v4624 = vlaneseq
  %v4625 = vshrl.u32 %v4624, 7
  %v4626 = vsub.s32 %v4623, %v4625
  %v4627 = vrot.slane %v4613, %v4626
  %v4628 = vcombine.high %v4620, %v4620
  %v4629 = vcombine.high %v4627, %v4627
  %v4630 = vcombine.high %v3798, %v3798
  %v4632 = vunpack.c.l.s4 1983009808
  %v4633 = vunpack.c.0.s8 %v4632
  %v4634 = vlaneseq
  %v4635 = vshrl.u32 %v4634, 7
  %v4636 = vsub.s32 %v4633, %v4635
  %v4637 = vrot.slane %v3798, %v4636
  %v4639 = vunpack.c.l.s4 1983009808
  %v4640 = vunpack.c.0.s8 %v4639
  %v4641 = vlaneseq
  %v4642 = vshrl.u32 %v4641, 7
  %v4643 = vsub.s32 %v4640, %v4642
  %v4644 = vrot.slane %v4630, %v4643
  %v4645 = vcombine.high %v4637, %v4637
  %v4646 = vcombine.high %v4644, %v4644
  %v4647 = vcombine.high %v3799, %v3799
  %v4649 = vunpack.c.l.s4 1983009808
  %v4650 = vunpack.c.0.s8 %v4649
  %v4651 = vlaneseq
  %v4652 = vshrl.u32 %v4651, 7
  %v4653 = vsub.s32 %v4650, %v4652
  %v4654 = vrot.slane %v3799, %v4653
  %v4656 = vunpack.c.l.s4 1983009808
  %v4657 = vunpack.c.0.s8 %v4656
  %v4658 = vlaneseq
  %v4659 = vshrl.u32 %v4658, 7
  %v4660 = vsub.s32 %v4657, %v4659
  %v4661 = vrot.slane %v4647, %v4660
  %v4662 = vcombine.high %v4654, %v4654
  %v4663 = vcombine.high %v4661, %v4661
  %v4664 = vcombine.high %v3800, %v3800
  %v4666 = vunpack.c.l.s4 1983009808
  %v4667 = vunpack.c.0.s8 %v4666
  %v4668 = vlaneseq
  %v4669 = vshrl.u32 %v4668, 7
  %v4670 = vsub.s32 %v4667, %v4669
  %v4671 = vrot.slane %v3800, %v4670
  %v4673 = vunpack.c.l.s4 1983009808
  %v4674 = vunpack.c.0.s8 %v4673
  %v4675 = vlaneseq
  %v4676 = vshrl.u32 %v4675, 7
  %v4677 = vsub.s32 %v4674, %v4676
  %v4678 = vrot.slane %v4664, %v4677
  %v4679 = vcombine.high %v4671, %v4671
  %v4680 = vcombine.high %v4678, %v4678
  %v4681 = vcombine.high %v3801, %v3801
  %v4683 = vunpack.c.l.s4 1983009808
  %v4684 = vunpack.c.0.s8 %v4683
  %v4685 = vlaneseq
  %v4686 = vshrl.u32 %v4685, 7
  %v4687 = vsub.s32 %v4684, %v4686
  %v4688 = vrot.slane %v3801, %v4687
  %v4690 = vunpack.c.l.s4 1983009808
  %v4691 = vunpack.c.0.s8 %v4690
  %v4692 = vlaneseq
  %v4693 = vshrl.u32 %v4692, 7
  %v4694 = vsub.s32 %v4691, %v4693
  %v4695 = vrot.slane %v4681, %v4694
  %v4696 = vcombine.high %v4688, %v4688
  %v4697 = vcombine.high %v4695, %v4695
  %v4698 = vcombine.high %v3802, %v3802
  %v4700 = vunpack.c.l.s4 1983009808
  %v4701 = vunpack.c.0.s8 %v4700
  %v4702 = vlaneseq
  %v4703 = vshrl.u32 %v4702, 7
  %v4704 = vsub.s32 %v4701, %v4703
  %v4705 = vrot.slane %v3802, %v4704
  %v4707 = vunpack.c.l.s4 1983009808
  %v4708 = vunpack.c.0.s8 %v4707
  %v4709 = vlaneseq
  %v4710 = vshrl.u32 %v4709, 7
  %v4711 = vsub.s32 %v4708, %v4710
  %v4712 = vrot.slane %v4698, %v4711
  %v4713 = vcombine.high %v4705, %v4705
  %v4714 = vcombine.high %v4712, %v4712
  %v4715 = vcombine.high %v3803, %v3803
  %v4717 = vunpack.c.l.s4 1983009808
  %v4718 = vunpack.c.0.s8 %v4717
  %v4719 = vlaneseq
  %v4720 = vshrl.u32 %v4719, 7
  %v4721 = vsub.s32 %v4718, %v4720
  %v4722 = vrot.slane %v3803, %v4721
  %v4724 = vunpack.c.l.s4 1983009808
  %v4725 = vunpack.c.0.s8 %v4724
  %v4726 = vlaneseq
  %v4727 = vshrl.u32 %v4726, 7
  %v4728 = vsub.s32 %v4725, %v4727
  %v4729 = vrot.slane %v4715, %v4728
  %v4730 = vcombine.high %v4722, %v4722
  %v4731 = vcombine.high %v4729, %v4729
  %v4732 = vcombine.high %v3804, %v3804
  %v4734 = vunpack.c.l.s4 1983009808
  %v4735 = vunpack.c.0.s8 %v4734
  %v4736 = vlaneseq
  %v4737 = vshrl.u32 %v4736, 7
  %v4738 = vsub.s32 %v4735, %v4737
  %v4739 = vrot.slane %v3804, %v4738
  %v4741 = vunpack.c.l.s4 1983009808
  %v4742 = vunpack.c.0.s8 %v4741
  %v4743 = vlaneseq
  %v4744 = vshrl.u32 %v4743, 7
  %v4745 = vsub.s32 %v4742, %v4744
  %v4746 = vrot.slane %v4732, %v4745
  %v4747 = vcombine.high %v4739, %v4739
  %v4748 = vcombine.high %v4746, %v4746
  %v4749 = vcombine.high %v3805, %v3805
  %v4751 = vunpack.c.l.s4 1983009808
  %v4752 = vunpack.c.0.s8 %v4751
  %v4753 = vlaneseq
  %v4754 = vshrl.u32 %v4753, 7
  %v4755 = vsub.s32 %v4752, %v4754
  %v4756 = vrot.slane %v3805, %v4755
  %v4758 = vunpack.c.l.s4 1983009808
  %v4759 = vunpack.c.0.s8 %v4758
  %v4760 = vlaneseq
  %v4761 = vshrl.u32 %v4760, 7
  %v4762 = vsub.s32 %v4759, %v4761
  %v4763 = vrot.slane %v4749, %v4762
  %v4764 = vcombine.high %v4756, %v4756
  %v4765 = vcombine.high %v4763, %v4763
  %v4766 = vcombine.high %v3806, %v3806
  %v4768 = vunpack.c.l.s4 1983009808
  %v4769 = vunpack.c.0.s8 %v4768
  %v4770 = vlaneseq
  %v4771 = vshrl.u32 %v4770, 7
  %v4772 = vsub.s32 %v4769, %v4771
  %v4773 = vrot.slane %v3806, %v4772
  %v4775 = vunpack.c.l.s4 1983009808
  %v4776 = vunpack.c.0.s8 %v4775
  %v4777 = vlaneseq
  %v4778 = vshrl.u32 %v4777, 7
  %v4779 = vsub.s32 %v4776, %v4778
  %v4780 = vrot.slane %v4766, %v4779
  %v4781 = vcombine.high %v4773, %v4773
  %v4782 = vcombine.high %v4780, %v4780
  %v4783 = vcombine.high %v3807, %v3807
  %v4785 = vunpack.c.l.s4 1983009808
  %v4786 = vunpack.c.0.s8 %v4785
  %v4787 = vlaneseq
  %v4788 = vshrl.u32 %v4787, 7
  %v4789 = vsub.s32 %v4786, %v4788
  %v4790 = vrot.slane %v3807, %v4789
  %v4792 = vunpack.c.l.s4 1983009808
  %v4793 = vunpack.c.0.s8 %v4792
  %v4794 = vlaneseq
  %v4795 = vshrl.u32 %v4794, 7
  %v4796 = vsub.s32 %v4793, %v4795
  %v4797 = vrot.slane %v4783, %v4796
  %v4798 = vcombine.high %v4790, %v4790
  %v4799 = vcombine.high %v4797, %v4797
  %v4800 = vcombine.high %v3808, %v3808
  %v4802 = vunpack.c.l.s4 1983009808
  %v4803 = vunpack.c.0.s8 %v4802
  %v4804 = vlaneseq
  %v4805 = vshrl.u32 %v4804, 7
  %v4806 = vsub.s32 %v4803, %v4805
  %v4807 = vrot.slane %v3808, %v4806
  %v4809 = vunpack.c.l.s4 1983009808
  %v4810 = vunpack.c.0.s8 %v4809
  %v4811 = vlaneseq
  %v4812 = vshrl.u32 %v4811, 7
  %v4813 = vsub.s32 %v4810, %v4812
  %v4814 = vrot.slane %v4800, %v4813
  %v4815 = vcombine.high %v4807, %v4807
  %v4816 = vcombine.high %v4814, %v4814
  %v4817 = vcombine.high %v3809, %v3809
  %v4819 = vunpack.c.l.s4 1983009808
  %v4820 = vunpack.c.0.s8 %v4819
  %v4821 = vlaneseq
  %v4822 = vshrl.u32 %v4821, 7
  %v4823 = vsub.s32 %v4820, %v4822
  %v4824 = vrot.slane %v3809, %v4823
  %v4826 = vunpack.c.l.s4 1983009808
  %v4827 = vunpack.c.0.s8 %v4826
  %v4828 = vlaneseq
  %v4829 = vshrl.u32 %v4828, 7
  %v4830 = vsub.s32 %v4827, %v4829
  %v4831 = vrot.slane %v4817, %v4830
  %v4832 = vcombine.high %v4824, %v4824
  %v4833 = vcombine.high %v4831, %v4831
  %v4834 = vcombine.high %v3810, %v3810
  %v4836 = vunpack.c.l.s4 1983009808
  %v4837 = vunpack.c.0.s8 %v4836
  %v4838 = vlaneseq
  %v4839 = vshrl.u32 %v4838, 7
  %v4840 = vsub.s32 %v4837, %v4839
  %v4841 = vrot.slane %v3810, %v4840
  %v4843 = vunpack.c.l.s4 1983009808
  %v4844 = vunpack.c.0.s8 %v4843
  %v4845 = vlaneseq
  %v4846 = vshrl.u32 %v4845, 7
  %v4847 = vsub.s32 %v4844, %v4846
  %v4848 = vrot.slane %v4834, %v4847
  %v4849 = vcombine.high %v4841, %v4841
  %v4850 = vcombine.high %v4848, %v4848
  %v4851 = vcombine.high %v3811, %v3811
  %v4853 = vunpack.c.l.s4 1983009808
  %v4854 = vunpack.c.0.s8 %v4853
  %v4855 = vlaneseq
  %v4856 = vshrl.u32 %v4855, 7
  %v4857 = vsub.s32 %v4854, %v4856
  %v4858 = vrot.slane %v3811, %v4857
  %v4860 = vunpack.c.l.s4 1983009808
  %v4861 = vunpack.c.0.s8 %v4860
  %v4862 = vlaneseq
  %v4863 = vshrl.u32 %v4862, 7
  %v4864 = vsub.s32 %v4861, %v4863
  %v4865 = vrot.slane %v4851, %v4864
  %v4866 = vcombine.high %v4858, %v4858
  %v4867 = vcombine.high %v4865, %v4865
  %v4868 = vcombine.high %v3812, %v3812
  %v4870 = vunpack.c.l.s4 1983009808
  %v4871 = vunpack.c.0.s8 %v4870
  %v4872 = vlaneseq
  %v4873 = vshrl.u32 %v4872, 7
  %v4874 = vsub.s32 %v4871, %v4873
  %v4875 = vrot.slane %v3812, %v4874
  %v4877 = vunpack.c.l.s4 1983009808
  %v4878 = vunpack.c.0.s8 %v4877
  %v4879 = vlaneseq
  %v4880 = vshrl.u32 %v4879, 7
  %v4881 = vsub.s32 %v4878, %v4880
  %v4882 = vrot.slane %v4868, %v4881
  %v4883 = vcombine.high %v4875, %v4875
  %v4884 = vcombine.high %v4882, %v4882
  %v4885 = vcombine.high %v3813, %v3813
  %v4887 = vunpack.c.l.s4 1983009808
  %v4888 = vunpack.c.0.s8 %v4887
  %v4889 = vlaneseq
  %v4890 = vshrl.u32 %v4889, 7
  %v4891 = vsub.s32 %v4888, %v4890
  %v4892 = vrot.slane %v3813, %v4891
  %v4894 = vunpack.c.l.s4 1983009808
  %v4895 = vunpack.c.0.s8 %v4894
  %v4896 = vlaneseq
  %v4897 = vshrl.u32 %v4896, 7
  %v4898 = vsub.s32 %v4895, %v4897
  %v4899 = vrot.slane %v4885, %v4898
  %v4900 = vcombine.high %v4892, %v4892
  %v4901 = vcombine.high %v4899, %v4899
  %v4902 = vcombine.high %v3814, %v3814
  %v4904 = vunpack.c.l.s4 1983009808
  %v4905 = vunpack.c.0.s8 %v4904
  %v4906 = vlaneseq
  %v4907 = vshrl.u32 %v4906, 7
  %v4908 = vsub.s32 %v4905, %v4907
  %v4909 = vrot.slane %v3814, %v4908
  %v4911 = vunpack.c.l.s4 1983009808
  %v4912 = vunpack.c.0.s8 %v4911
  %v4913 = vlaneseq
  %v4914 = vshrl.u32 %v4913, 7
  %v4915 = vsub.s32 %v4912, %v4914
  %v4916 = vrot.slane %v4902, %v4915
  %v4917 = vcombine.high %v4909, %v4909
  %v4918 = vcombine.high %v4916, %v4916
  %v4919 = vcombine.high %v3815, %v3815
  %v4921 = vunpack.c.l.s4 1983009808
  %v4922 = vunpack.c.0.s8 %v4921
  %v4923 = vlaneseq
  %v4924 = vshrl.u32 %v4923, 7
  %v4925 = vsub.s32 %v4922, %v4924
  %v4926 = vrot.slane %v3815, %v4925
  %v4928 = vunpack.c.l.s4 1983009808
  %v4929 = vunpack.c.0.s8 %v4928
  %v4930 = vlaneseq
  %v4931 = vshrl.u32 %v4930, 7
  %v4932 = vsub.s32 %v4929, %v4931
  %v4933 = vrot.slane %v4919, %v4932
  %v4934 = vcombine.high %v4926, %v4926
  %v4935 = vcombine.high %v4933, %v4933
  %v4936 = vcombine.high %v3816, %v3816
  %v4938 = vunpack.c.l.s4 1983009808
  %v4939 = vunpack.c.0.s8 %v4938
  %v4940 = vlaneseq
  %v4941 = vshrl.u32 %v4940, 7
  %v4942 = vsub.s32 %v4939, %v4941
  %v4943 = vrot.slane %v3816, %v4942
  %v4945 = vunpack.c.l.s4 1983009808
  %v4946 = vunpack.c.0.s8 %v4945
  %v4947 = vlaneseq
  %v4948 = vshrl.u32 %v4947, 7
  %v4949 = vsub.s32 %v4946, %v4948
  %v4950 = vrot.slane %v4936, %v4949
  %v4951 = vcombine.high %v4943, %v4943
  %v4952 = vcombine.high %v4950, %v4950
  %v4953 = vcombine.high %v3817, %v3817
  %v4955 = vunpack.c.l.s4 1983009808
  %v4956 = vunpack.c.0.s8 %v4955
  %v4957 = vlaneseq
  %v4958 = vshrl.u32 %v4957, 7
  %v4959 = vsub.s32 %v4956, %v4958
  %v4960 = vrot.slane %v3817, %v4959
  %v4962 = vunpack.c.l.s4 1983009808
  %v4963 = vunpack.c.0.s8 %v4962
  %v4964 = vlaneseq
  %v4965 = vshrl.u32 %v4964, 7
  %v4966 = vsub.s32 %v4963, %v4965
  %v4967 = vrot.slane %v4953, %v4966
  %v4968 = vcombine.high %v4960, %v4960
  %v4969 = vcombine.high %v4967, %v4967
  %v5226 = vrot.slane %v3889, 7
  %v5227 = vrot.slane %v5226, 2
  %v5228 = vrot.slane %v3897, 7
  %v5229 = vrot.slane %v5228, 2
  %v5230 = vrot.slane %v3896, 7
  %v5231 = vrot.slane %v5230, 2
  %v5232 = vrot.slane %v3898, 7
  %v5233 = vrot.slane %v5232, 2
  %v5234 = vrot.slane %v3906, 7
  %v5235 = vrot.slane %v5234, 2
  %v5236 = vrot.slane %v3914, 7
  %v5237 = vrot.slane %v5236, 2
  %v5238 = vrot.slane %v3913, 7
  %v5239 = vrot.slane %v5238, 2
  %v5240 = vrot.slane %v3915, 7
  %v5241 = vrot.slane %v5240, 2
  %v5242 = vrot.slane %v3923, 7
  %v5243 = vrot.slane %v5242, 2
  %v5244 = vrot.slane %v3931, 7
  %v5245 = vrot.slane %v5244, 2
  %v5246 = vrot.slane %v3930, 7
  %v5247 = vrot.slane %v5246, 2
  %v5248 = vrot.slane %v3932, 7
  %v5249 = vrot.slane %v5248, 2
  %v5250 = vrot.slane %v3940, 7
  %v5251 = vrot.slane %v5250, 2
  %v5252 = vrot.slane %v3948, 7
  %v5253 = vrot.slane %v5252, 2
  %v5254 = vrot.slane %v3947, 7
  %v5255 = vrot.slane %v5254, 2
  %v5256 = vrot.slane %v3949, 7
  %v5257 = vrot.slane %v5256, 2
  %v5258 = vrot.slane %v3957, 7
  %v5259 = vrot.slane %v5258, 2
  %v5260 = vrot.slane %v3965, 7
  %v5261 = vrot.slane %v5260, 2
  %v5262 = vrot.slane %v3964, 7
  %v5263 = vrot.slane %v5262, 2
  %v5264 = vrot.slane %v3966, 7
  %v5265 = vrot.slane %v5264, 2
  %v5266 = vrot.slane %v3974, 7
  %v5267 = vrot.slane %v5266, 2
  %v5268 = vrot.slane %v3982, 7
  %v5269 = vrot.slane %v5268, 2
  %v5270 = vrot.slane %v3981, 7
  %v5271 = vrot.slane %v5270, 2
  %v5272 = vrot.slane %v3983, 7
  %v5273 = vrot.slane %v5272, 2
  %v5274 = vrot.slane %v3991, 7
  %v5275 = vrot.slane %v5274, 2
  %v5276 = vrot.slane %v3999, 7
  %v5277 = vrot.slane %v5276, 2
  %v5278 = vrot.slane %v3998, 7
  %v5279 = vrot.slane %v5278, 2
  %v5280 = vrot.slane %v4000, 7
  %v5281 = vrot.slane %v5280, 2
  %v5282 = vrot.slane %v4008, 7
  %v5283 = vrot.slane %v5282, 2
  %v5284 = vrot.slane %v4016, 7
  %v5285 = vrot.slane %v5284, 2
  %v5286 = vrot.slane %v4015, 7
  %v5287 = vrot.slane %v5286, 2
  %v5288 = vrot.slane %v4017, 7
  %v5289 = vrot.slane %v5288, 2
  %v5290 = vrot.slane %v4025, 7
  %v5291 = vrot.slane %v5290, 2
  %v5292 = vrot.slane %v4033, 7
  %v5293 = vrot.slane %v5292, 2
  %v5294 = vrot.slane %v4032, 7
  %v5295 = vrot.slane %v5294, 2
  %v5296 = vrot.slane %v4034, 7
  %v5297 = vrot.slane %v5296, 2
  %v5298 = vrot.slane %v4042, 7
  %v5299 = vrot.slane %v5298, 2
  %v5300 = vrot.slane %v4050, 7
  %v5301 = vrot.slane %v5300, 2
  %v5302 = vrot.slane %v4049, 7
  %v5303 = vrot.slane %v5302, 2
  %v5304 = vrot.slane %v4051, 7
  %v5305 = vrot.slane %v5304, 2
  %v5306 = vrot.slane %v4059, 7
  %v5307 = vrot.slane %v5306, 2
  %v5308 = vrot.slane %v4067, 7
  %v5309 = vrot.slane %v5308, 2
  %v5310 = vrot.slane %v4066, 7
  %v5311 = vrot.slane %v5310, 2
  %v5312 = vrot.slane %v4068, 7
  %v5313 = vrot.slane %v5312, 2
  %v5314 = vrot.slane %v4076, 7
  %v5315 = vrot.slane %v5314, 2
  %v5316 = vrot.slane %v4084, 7
  %v5317 = vrot.slane %v5316, 2
  %v5318 = vrot.slane %v4083, 7
  %v5319 = vrot.slane %v5318, 2
  %v5320 = vrot.slane %v4085, 7
  %v5321 = vrot.slane %v5320, 2
  %v5322 = vrot.slane %v4093, 7
  %v5323 = vrot.slane %v5322, 2
  %v5324 = vrot.slane %v4101, 7
  %v5325 = vrot.slane %v5324, 2
  %v5326 = vrot.slane %v4100, 7
  %v5327 = vrot.slane %v5326, 2
  %v5328 = vrot.slane %v4102, 7
  %v5329 = vrot.slane %v5328, 2
  %v5330 = vrot.slane %v4110, 7
  %v5331 = vrot.slane %v5330, 2
  %v5332 = vrot.slane %v4118, 7
  %v5333 = vrot.slane %v5332, 2
  %v5334 = vrot.slane %v4117, 7
  %v5335 = vrot.slane %v5334, 2
  %v5336 = vrot.slane %v4119, 7
  %v5337 = vrot.slane %v5336, 2
  %v5338 = vrot.slane %v4127, 7
  %v5339 = vrot.slane %v5338, 2
  %v5340 = vrot.slane %v4135, 7
  %v5341 = vrot.slane %v5340, 2
  %v5342 = vrot.slane %v4134, 7
  %v5343 = vrot.slane %v5342, 2
  %v5344 = vrot.slane %v4136, 7
  %v5345 = vrot.slane %v5344, 2
  %v5346 = vrot.slane %v4144, 7
  %v5347 = vrot.slane %v5346, 2
  %v5348 = vrot.slane %v4152, 7
  %v5349 = vrot.slane %v5348, 2
  %v5350 = vrot.slane %v4151, 7
  %v5351 = vrot.slane %v5350, 2
  %v5352 = vrot.slane %v4153, 7
  %v5353 = vrot.slane %v5352, 2
  %v5354 = vrot.slane %v4161, 7
  %v5355 = vrot.slane %v5354, 2
  %v5356 = vrot.slane %v4169, 7
  %v5357 = vrot.slane %v5356, 2
  %v5358 = vrot.slane %v4168, 7
  %v5359 = vrot.slane %v5358, 2
  %v5360 = vrot.slane %v4170, 7
  %v5361 = vrot.slane %v5360, 2
  %v5362 = vrot.slane %v4178, 7
  %v5363 = vrot.slane %v5362, 2
  %v5364 = vrot.slane %v4186, 7
  %v5365 = vrot.slane %v5364, 2
  %v5366 = vrot.slane %v4185, 7
  %v5367 = vrot.slane %v5366, 2
  %v5368 = vrot.slane %v4187, 7
  %v5369 = vrot.slane %v5368, 2
  %v5370 = vrot.slane %v4195, 7
  %v5371 = vrot.slane %v5370, 2
  %v5372 = vrot.slane %v4203, 7
  %v5373 = vrot.slane %v5372, 2
  %v5374 = vrot.slane %v4202, 7
  %v5375 = vrot.slane %v5374, 2
  %v5376 = vrot.slane %v4204, 7
  %v5377 = vrot.slane %v5376, 2
  %v5378 = vrot.slane %v4212, 7
  %v5379 = vrot.slane %v5378, 2
  %v5380 = vrot.slane %v4220, 7
  %v5381 = vrot.slane %v5380, 2
  %v5382 = vrot.slane %v4219, 7
  %v5383 = vrot.slane %v5382, 2
  %v5384 = vrot.slane %v4221, 7
  %v5385 = vrot.slane %v5384, 2
  %v5386 = vrot.slane %v4229, 7
  %v5387 = vrot.slane %v5386, 2
  %v5388 = vrot.slane %v4237, 7
  %v5389 = vrot.slane %v5388, 2
  %v5390 = vrot.slane %v4236, 7
  %v5391 = vrot.slane %v5390, 2
  %v5392 = vrot.slane %v4238, 7
  %v5393 = vrot.slane %v5392, 2
  %v5394 = vrot.slane %v4246, 7
  %v5395 = vrot.slane %v5394, 2
  %v5396 = vrot.slane %v4254, 7
  %v5397 = vrot.slane %v5396, 2
  %v5398 = vrot.slane %v4253, 7
  %v5399 = vrot.slane %v5398, 2
  %v5400 = vrot.slane %v4255, 7
  %v5401 = vrot.slane %v5400, 2
  %v5402 = vrot.slane %v4263, 7
  %v5403 = vrot.slane %v5402, 2
  %v5404 = vrot.slane %v4271, 7
  %v5405 = vrot.slane %v5404, 2
  %v5406 = vrot.slane %v4270, 7
  %v5407 = vrot.slane %v5406, 2
  %v5408 = vrot.slane %v4272, 7
  %v5409 = vrot.slane %v5408, 2
  %v5410 = vrot.slane %v4280, 7
  %v5411 = vrot.slane %v5410, 2
  %v5412 = vrot.slane %v4288, 7
  %v5413 = vrot.slane %v5412, 2
  %v5414 = vrot.slane %v4287, 7
  %v5415 = vrot.slane %v5414, 2
  %v5416 = vrot.slane %v4289, 7
  %v5417 = vrot.slane %v5416, 2
  %v5418 = vrot.slane %v4297, 7
  %v5419 = vrot.slane %v5418, 2
  %v5420 = vrot.slane %v4305, 7
  %v5421 = vrot.slane %v5420, 2
  %v5422 = vrot.slane %v4304, 7
  %v5423 = vrot.slane %v5422, 2
  %v5424 = vrot.slane %v4306, 7
  %v5425 = vrot.slane %v5424, 2
  %v5426 = vrot.slane %v4314, 7
  %v5427 = vrot.slane %v5426, 2
  %v5428 = vrot.slane %v4322, 7
  %v5429 = vrot.slane %v5428, 2
  %v5430 = vrot.slane %v4321, 7
  %v5431 = vrot.slane %v5430, 2
  %v5432 = vrot.slane %v4323, 7
  %v5433 = vrot.slane %v5432, 2
  %v5434 = vrot.slane %v4331, 7
  %v5435 = vrot.slane %v5434, 2
  %v5436 = vrot.slane %v4339, 7
  %v5437 = vrot.slane %v5436, 2
  %v5438 = vrot.slane %v4338, 7
  %v5439 = vrot.slane %v5438, 2
  %v5440 = vrot.slane %v4340, 7
  %v5441 = vrot.slane %v5440, 2
  %v5442 = vrot.slane %v4348, 7
  %v5443 = vrot.slane %v5442, 2
  %v5444 = vrot.slane %v4356, 7
  %v5445 = vrot.slane %v5444, 2
  %v5446 = vrot.slane %v4355, 7
  %v5447 = vrot.slane %v5446, 2
  %v5448 = vrot.slane %v4357, 7
  %v5449 = vrot.slane %v5448, 2
  %v5450 = vrot.slane %v4365, 7
  %v5451 = vrot.slane %v5450, 2
  %v5452 = vrot.slane %v4373, 7
  %v5453 = vrot.slane %v5452, 2
  %v5454 = vrot.slane %v4372, 7
  %v5455 = vrot.slane %v5454, 2
  %v5456 = vrot.slane %v4374, 7
  %v5457 = vrot.slane %v5456, 2
  %v5458 = vrot.slane %v4382, 7
  %v5459 = vrot.slane %v5458, 2
  %v5460 = vrot.slane %v4390, 7
  %v5461 = vrot.slane %v5460, 2
  %v5462 = vrot.slane %v4389, 7
  %v5463 = vrot.slane %v5462, 2
  %v5464 = vrot.slane %v4391, 7
  %v5465 = vrot.slane %v5464, 2
  %v5466 = vrot.slane %v4399, 7
  %v5467 = vrot.slane %v5466, 2
  %v5468 = vrot.slane %v4407, 7
  %v5469 = vrot.slane %v5468, 2
  %v5470 = vrot.slane %v4406, 7
  %v5471 = vrot.slane %v5470, 2
  %v5472 = vrot.slane %v4408, 7
  %v5473 = vrot.slane %v5472, 2
  %v5474 = vrot.slane %v4416, 7
  %v5475 = vrot.slane %v5474, 2
  %v5476 = vrot.slane %v4424, 7
  %v5477 = vrot.slane %v5476, 2
  %v5478 = vrot.slane %v4423, 7
  %v5479 = vrot.slane %v5478, 2
  %v5480 = vrot.slane %v4425, 7
  %v5481 = vrot.slane %v5480, 2
  %v5482 = vrot.slane %v4433, 7
  %v5483 = vrot.slane %v5482, 2
  %v5484 = vrot.slane %v4441, 7
  %v5485 = vrot.slane %v5484, 2
  %v5486 = vrot.slane %v4440, 7
  %v5487 = vrot.slane %v5486, 2
  %v5488 = vrot.slane %v4442, 7
  %v5489 = vrot.slane %v5488, 2
  %v5490 = vrot.slane %v4450, 7
  %v5491 = vrot.slane %v5490, 2
  %v5492 = vrot.slane %v4458, 7
  %v5493 = vrot.slane %v5492, 2
  %v5494 = vrot.slane %v4457, 7
  %v5495 = vrot.slane %v5494, 2
  %v5496 = vrot.slane %v4459, 7
  %v5497 = vrot.slane %v5496, 2
  %v5498 = vrot.slane %v4467, 7
  %v5499 = vrot.slane %v5498, 2
  %v5500 = vrot.slane %v4475, 7
  %v5501 = vrot.slane %v5500, 2
  %v5502 = vrot.slane %v4474, 7
  %v5503 = vrot.slane %v5502, 2
  %v5504 = vrot.slane %v4476, 7
  %v5505 = vrot.slane %v5504, 2
  %v5506 = vrot.slane %v4484, 7
  %v5507 = vrot.slane %v5506, 2
  %v5508 = vrot.slane %v4492, 7
  %v5509 = vrot.slane %v5508, 2
  %v5510 = vrot.slane %v4491, 7
  %v5511 = vrot.slane %v5510, 2
  %v5512 = vrot.slane %v4493, 7
  %v5513 = vrot.slane %v5512, 2
  %v5514 = vrot.slane %v4501, 7
  %v5515 = vrot.slane %v5514, 2
  %v5516 = vrot.slane %v4509, 7
  %v5517 = vrot.slane %v5516, 2
  %v5518 = vrot.slane %v4508, 7
  %v5519 = vrot.slane %v5518, 2
  %v5520 = vrot.slane %v4510, 7
  %v5521 = vrot.slane %v5520, 2
  %v5522 = vrot.slane %v4518, 7
  %v5523 = vrot.slane %v5522, 2
  %v5524 = vrot.slane %v4526, 7
  %v5525 = vrot.slane %v5524, 2
  %v5526 = vrot.slane %v4525, 7
  %v5527 = vrot.slane %v5526, 2
  %v5528 = vrot.slane %v4527, 7
  %v5529 = vrot.slane %v5528, 2
  %v5530 = vrot.slane %v4535, 7
  %v5531 = vrot.slane %v5530, 2
  %v5532 = vrot.slane %v4543, 7
  %v5533 = vrot.slane %v5532, 2
  %v5534 = vrot.slane %v4542, 7
  %v5535 = vrot.slane %v5534, 2
  %v5536 = vrot.slane %v4544, 7
  %v5537 = vrot.slane %v5536, 2
  %v5538 = vrot.slane %v4552, 7
  %v5539 = vrot.slane %v5538, 2
  %v5540 = vrot.slane %v4560, 7
  %v5541 = vrot.slane %v5540, 2
  %v5542 = vrot.slane %v4559, 7
  %v5543 = vrot.slane %v5542, 2
  %v5544 = vrot.slane %v4561, 7
  %v5545 = vrot.slane %v5544, 2
  %v5546 = vrot.slane %v4569, 7
  %v5547 = vrot.slane %v5546, 2
  %v5548 = vrot.slane %v4577, 7
  %v5549 = vrot.slane %v5548, 2
  %v5550 = vrot.slane %v4576, 7
  %v5551 = vrot.slane %v5550, 2
  %v5552 = vrot.slane %v4578, 7
  %v5553 = vrot.slane %v5552, 2
  %v5554 = vrot.slane %v4586, 7
  %v5555 = vrot.slane %v5554, 2
  %v5556 = vrot.slane %v4594, 7
  %v5557 = vrot.slane %v5556, 2
  %v5558 = vrot.slane %v4593, 7
  %v5559 = vrot.slane %v5558, 2
  %v5560 = vrot.slane %v4595, 7
  %v5561 = vrot.slane %v5560, 2
  %v5562 = vrot.slane %v4603, 7
  %v5563 = vrot.slane %v5562, 2
  %v5564 = vrot.slane %v4611, 7
  %v5565 = vrot.slane %v5564, 2
  %v5566 = vrot.slane %v4610, 7
  %v5567 = vrot.slane %v5566, 2
  %v5568 = vrot.slane %v4612, 7
  %v5569 = vrot.slane %v5568, 2
  %v5570 = vrot.slane %v4620, 7
  %v5571 = vrot.slane %v5570, 2
  %v5572 = vrot.slane %v4628, 7
  %v5573 = vrot.slane %v5572, 2
  %v5574 = vrot.slane %v4627, 7
  %v5575 = vrot.slane %v5574, 2
  %v5576 = vrot.slane %v4629, 7
  %v5577 = vrot.slane %v5576, 2
  %v5578 = vrot.slane %v4637, 7
  %v5579 = vrot.slane %v5578, 2
  %v5580 = vrot.slane %v4645, 7
  %v5581 = vrot.slane %v5580, 2
  %v5582 = vrot.slane %v4644, 7
  %v5583 = vrot.slane %v5582, 2
  %v5584 = vrot.slane %v4646, 7
  %v5585 = vrot.slane %v5584, 2
  %v5586 = vrot.slane %v4654, 7
  %v5587 = vrot.slane %v5586, 2
  %v5588 = vrot.slane %v4662, 7
  %v5589 = vrot.slane %v5588, 2
  %v5590 = vrot.slane %v4661, 7
  %v5591 = vrot.slane %v5590, 2
  %v5592 = vrot.slane %v4663, 7
  %v5593 = vrot.slane %v5592, 2
  %v5594 = vrot.slane %v4671, 7
  %v5595 = vrot.slane %v5594, 2
  %v5596 = vrot.slane %v4679, 7
  %v5597 = vrot.slane %v5596, 2
  %v5598 = vrot.slane %v4678, 7
  %v5599 = vrot.slane %v5598, 2
  %v5600 = vrot.slane %v4680, 7
  %v5601 = vrot.slane %v5600, 2
  %v5602 = vrot.slane %v4688, 7
  %v5603 = vrot.slane %v5602, 2
  %v5604 = vrot.slane %v4696, 7
  %v5605 = vrot.slane %v5604, 2
  %v5606 = vrot.slane %v4695, 7
  %v5607 = vrot.slane %v5606, 2
  %v5608 = vrot.slane %v4697, 7
  %v5609 = vrot.slane %v5608, 2
  %v5610 = vrot.slane %v4705, 7
  %v5611 = vrot.slane %v5610, 2
  %v5612 = vrot.slane %v4713, 7
  %v5613 = vrot.slane %v5612, 2
  %v5614 = vrot.slane %v4712, 7
  %v5615 = vrot.slane %v5614, 2
  %v5616 = vrot.slane %v4714, 7
  %v5617 = vrot.slane %v5616, 2
  %v5618 = vrot.slane %v4722, 7
  %v5619 = vrot.slane %v5618, 2
  %v5620 = vrot.slane %v4730, 7
  %v5621 = vrot.slane %v5620, 2
  %v5622 = vrot.slane %v4729, 7
  %v5623 = vrot.slane %v5622, 2
  %v5624 = vrot.slane %v4731, 7
  %v5625 = vrot.slane %v5624, 2
  %v5626 = vrot.slane %v4739, 7
  %v5627 = vrot.slane %v5626, 2
  %v5628 = vrot.slane %v4747, 7
  %v5629 = vrot.slane %v5628, 2
  %v5630 = vrot.slane %v4746, 7
  %v5631 = vrot.slane %v5630, 2
  %v5632 = vrot.slane %v4748, 7
  %v5633 = vrot.slane %v5632, 2
  %v5634 = vrot.slane %v4756, 7
  %v5635 = vrot.slane %v5634, 2
  %v5636 = vrot.slane %v4764, 7
  %v5637 = vrot.slane %v5636, 2
  %v5638 = vrot.slane %v4763, 7
  %v5639 = vrot.slane %v5638, 2
  %v5640 = vrot.slane %v4765, 7
  %v5641 = vrot.slane %v5640, 2
  %v5642 = vrot.slane %v4773, 7
  %v5643 = vrot.slane %v5642, 2
  %v5644 = vrot.slane %v4781, 7
  %v5645 = vrot.slane %v5644, 2
  %v5646 = vrot.slane %v4780, 7
  %v5647 = vrot.slane %v5646, 2
  %v5648 = vrot.slane %v4782, 7
  %v5649 = vrot.slane %v5648, 2
  %v5650 = vrot.slane %v4790, 7
  %v5651 = vrot.slane %v5650, 2
  %v5652 = vrot.slane %v4798, 7
  %v5653 = vrot.slane %v5652, 2
  %v5654 = vrot.slane %v4797, 7
  %v5655 = vrot.slane %v5654, 2
  %v5656 = vrot.slane %v4799, 7
  %v5657 = vrot.slane %v5656, 2
  %v5658 = vrot.slane %v4807, 7
  %v5659 = vrot.slane %v5658, 2
  %v5660 = vrot.slane %v4815, 7
  %v5661 = vrot.slane %v5660, 2
  %v5662 = vrot.slane %v4814, 7
  %v5663 = vrot.slane %v5662, 2
  %v5664 = vrot.slane %v4816, 7
  %v5665 = vrot.slane %v5664, 2
  %v5666 = vrot.slane %v4824, 7
  %v5667 = vrot.slane %v5666, 2
  %v5668 = vrot.slane %v4832, 7
  %v5669 = vrot.slane %v5668, 2
  %v5670 = vrot.slane %v4831, 7
  %v5671 = vrot.slane %v5670, 2
  %v5672 = vrot.slane %v4833, 7
  %v5673 = vrot.slane %v5672, 2
  %v5674 = vrot.slane %v4841, 7
  %v5675 = vrot.slane %v5674, 2
  %v5676 = vrot.slane %v4849, 7
  %v5677 = vrot.slane %v5676, 2
  %v5678 = vrot.slane %v4848, 7
  %v5679 = vrot.slane %v5678, 2
  %v5680 = vrot.slane %v4850, 7
  %v5681 = vrot.slane %v5680, 2
  %v5682 = vrot.slane %v4858, 7
  %v5683 = vrot.slane %v5682, 2
  %v5684 = vrot.slane %v4866, 7
  %v5685 = vrot.slane %v5684, 2
  %v5686 = vrot.slane %v4865, 7
  %v5687 = vrot.slane %v5686, 2
  %v5688 = vrot.slane %v4867, 7
  %v5689 = vrot.slane %v5688, 2
  %v5690 = vrot.slane %v4875, 7
  %v5691 = vrot.slane %v5690, 2
  %v5692 = vrot.slane %v4883, 7
  %v5693 = vrot.slane %v5692, 2
  %v5694 = vrot.slane %v4882, 7
  %v5695 = vrot.slane %v5694, 2
  %v5696 = vrot.slane %v4884, 7
  %v5697 = vrot.slane %v5696, 2
  %v5698 = vrot.slane %v4892, 7
  %v5699 = vrot.slane %v5698, 2
  %v5700 = vrot.slane %v4900, 7
  %v5701 = vrot.slane %v5700, 2
  %v5702 = vrot.slane %v4899, 7
  %v5703 = vrot.slane %v5702, 2
  %v5704 = vrot.slane %v4901, 7
  %v5705 = vrot.slane %v5704, 2
  %v5706 = vrot.slane %v4909, 7
  %v5707 = vrot.slane %v5706, 2
  %v5708 = vrot.slane %v4917, 7
  %v5709 = vrot.slane %v5708, 2
  %v5710 = vrot.slane %v4916, 7
  %v5711 = vrot.slane %v5710, 2
  %v5712 = vrot.slane %v4918, 7
  %v5713 = vrot.slane %v5712, 2
  %v5714 = vrot.slane %v4926, 7
  %v5715 = vrot.slane %v5714, 2
  %v5716 = vrot.slane %v4934, 7
  %v5717 = vrot.slane %v5716, 2
  %v5718 = vrot.slane %v4933, 7
  %v5719 = vrot.slane %v5718, 2
  %v5720 = vrot.slane %v4935, 7
  %v5721 = vrot.slane %v5720, 2
  %v5722 = vrot.slane %v4943, 7
  %v5723 = vrot.slane %v5722, 2
  %v5724 = vrot.slane %v4951, 7
  %v5725 = vrot.slane %v5724, 2
  %v5726 = vrot.slane %v4950, 7
  %v5727 = vrot.slane %v5726, 2
  %v5728 = vrot.slane %v4952, 7
  %v5729 = vrot.slane %v5728, 2
  %v5730 = vrot.slane %v4960, 7
  %v5731 = vrot.slane %v5730, 2
  %v5732 = vrot.slane %v4968, 7
  %v5733 = vrot.slane %v5732, 2
  %v5734 = vrot.slane %v4967, 7
  %v5735 = vrot.slane %v5734, 2
  %v5736 = vrot.slane %v4969, 7
  %v5737 = vrot.slane %v5736, 2
  %v5994 = vadd.f32 %v3889, %v5227
  %v5995 = vadd.f32 %v3897, %v5229
  %v5996 = vadd.f32 %v3896, %v5231
  %v5997 = vadd.f32 %v3898, %v5233
  %v5998 = vadd.f32 %v3906, %v5235
  %v5999 = vadd.f32 %v3914, %v5237
  %v6000 = vadd.f32 %v3913, %v5239
  %v6001 = vadd.f32 %v3915, %v5241
  %v6002 = vadd.f32 %v3923, %v5243
  %v6003 = vadd.f32 %v3931, %v5245
  %v6004 = vadd.f32 %v3930, %v5247
  %v6005 = vadd.f32 %v3932, %v5249
  %v6006 = vadd.f32 %v3940, %v5251
  %v6007 = vadd.f32 %v3948, %v5253
  %v6008 = vadd.f32 %v3947, %v5255
  %v6009 = vadd.f32 %v3949, %v5257
  %v6010 = vadd.f32 %v3957, %v5259
  %v6011 = vadd.f32 %v3965, %v5261
  %v6012 = vadd.f32 %v3964, %v5263
  %v6013 = vadd.f32 %v3966, %v5265
  %v6014 = vadd.f32 %v3974, %v5267
  %v6015 = vadd.f32 %v3982, %v5269
  %v6016 = vadd.f32 %v3981, %v5271
  %v6017 = vadd.f32 %v3983, %v5273
  %v6018 = vadd.f32 %v3991, %v5275
  %v6019 = vadd.f32 %v3999, %v5277
  %v6020 = vadd.f32 %v3998, %v5279
  %v6021 = vadd.f32 %v4000, %v5281
  %v6022 = vadd.f32 %v4008, %v5283
  %v6023 = vadd.f32 %v4016, %v5285
  %v6024 = vadd.f32 %v4015, %v5287
  %v6025 = vadd.f32 %v4017, %v5289
  %v6026 = vadd.f32 %v4025, %v5291
  %v6027 = vadd.f32 %v4033, %v5293
  %v6028 = vadd.f32 %v4032, %v5295
  %v6029 = vadd.f32 %v4034, %v5297
  %v6030 = vadd.f32 %v4042, %v5299
  %v6031 = vadd.f32 %v4050, %v5301
  %v6032 = vadd.f32 %v4049, %v5303
  %v6033 = vadd.f32 %v4051, %v5305
  %v6034 = vadd.f32 %v4059, %v5307
  %v6035 = vadd.f32 %v4067, %v5309
  %v6036 = vadd.f32 %v4066, %v5311
  %v6037 = vadd.f32 %v4068, %v5313
  %v6038 = vadd.f32 %v4076, %v5315
  %v6039 = vadd.f32 %v4084, %v5317
  %v6040 = vadd.f32 %v4083, %v5319
  %v6041 = vadd.f32 %v4085, %v5321
  %v6042 = vadd.f32 %v4093, %v5323
  %v6043 = vadd.f32 %v4101, %v5325
  %v6044 = vadd.f32 %v4100, %v5327
  %v6045 = vadd.f32 %v4102, %v5329
  %v6046 = vadd.f32 %v4110, %v5331
  %v6047 = vadd.f32 %v4118, %v5333
  %v6048 = vadd.f32 %v4117, %v5335
  %v6049 = vadd.f32 %v4119, %v5337
  %v6050 = vadd.f32 %v4127, %v5339
  %v6051 = vadd.f32 %v4135, %v5341
  %v6052 = vadd.f32 %v4134, %v5343
  %v6053 = vadd.f32 %v4136, %v5345
  %v6054 = vadd.f32 %v4144, %v5347
  %v6055 = vadd.f32 %v4152, %v5349
  %v6056 = vadd.f32 %v4151, %v5351
  %v6057 = vadd.f32 %v4153, %v5353
  %v6058 = vadd.f32 %v4161, %v5355
  %v6059 = vadd.f32 %v4169, %v5357
  %v6060 = vadd.f32 %v4168, %v5359
  %v6061 = vadd.f32 %v4170, %v5361
  %v6062 = vadd.f32 %v4178, %v5363
  %v6063 = vadd.f32 %v4186, %v5365
  %v6064 = vadd.f32 %v4185, %v5367
  %v6065 = vadd.f32 %v4187, %v5369
  %v6066 = vadd.f32 %v4195, %v5371
  %v6067 = vadd.f32 %v4203, %v5373
  %v6068 = vadd.f32 %v4202, %v5375
  %v6069 = vadd.f32 %v4204, %v5377
  %v6070 = vadd.f32 %v4212, %v5379
  %v6071 = vadd.f32 %v4220, %v5381
  %v6072 = vadd.f32 %v4219, %v5383
  %v6073 = vadd.f32 %v4221, %v5385
  %v6074 = vadd.f32 %v4229, %v5387
  %v6075 = vadd.f32 %v4237, %v5389
  %v6076 = vadd.f32 %v4236, %v5391
  %v6077 = vadd.f32 %v4238, %v5393
  %v6078 = vadd.f32 %v4246, %v5395
  %v6079 = vadd.f32 %v4254, %v5397
  %v6080 = vadd.f32 %v4253, %v5399
  %v6081 = vadd.f32 %v4255, %v5401
  %v6082 = vadd.f32 %v4263, %v5403
  %v6083 = vadd.f32 %v4271, %v5405
  %v6084 = vadd.f32 %v4270, %v5407
  %v6085 = vadd.f32 %v4272, %v5409
  %v6086 = vadd.f32 %v4280, %v5411
  %v6087 = vadd.f32 %v4288, %v5413
  %v6088 = vadd.f32 %v4287, %v5415
  %v6089 = vadd.f32 %v4289, %v5417
  %v6090 = vadd.f32 %v4297, %v5419
  %v6091 = vadd.f32 %v4305, %v5421
  %v6092 = vadd.f32 %v4304, %v5423
  %v6093 = vadd.f32 %v4306, %v5425
  %v6094 = vadd.f32 %v4314, %v5427
  %v6095 = vadd.f32 %v4322, %v5429
  %v6096 = vadd.f32 %v4321, %v5431
  %v6097 = vadd.f32 %v4323, %v5433
  %v6098 = vadd.f32 %v4331, %v5435
  %v6099 = vadd.f32 %v4339, %v5437
  %v6100 = vadd.f32 %v4338, %v5439
  %v6101 = vadd.f32 %v4340, %v5441
  %v6102 = vadd.f32 %v4348, %v5443
  %v6103 = vadd.f32 %v4356, %v5445
  %v6104 = vadd.f32 %v4355, %v5447
  %v6105 = vadd.f32 %v4357, %v5449
  %v6106 = vadd.f32 %v4365, %v5451
  %v6107 = vadd.f32 %v4373, %v5453
  %v6108 = vadd.f32 %v4372, %v5455
  %v6109 = vadd.f32 %v4374, %v5457
  %v6110 = vadd.f32 %v4382, %v5459
  %v6111 = vadd.f32 %v4390, %v5461
  %v6112 = vadd.f32 %v4389, %v5463
  %v6113 = vadd.f32 %v4391, %v5465
  %v6114 = vadd.f32 %v4399, %v5467
  %v6115 = vadd.f32 %v4407, %v5469
  %v6116 = vadd.f32 %v4406, %v5471
  %v6117 = vadd.f32 %v4408, %v5473
  %v6118 = vadd.f32 %v4416, %v5475
  %v6119 = vadd.f32 %v4424, %v5477
  %v6120 = vadd.f32 %v4423, %v5479
  %v6121 = vadd.f32 %v4425, %v5481
  %v6122 = vadd.f32 %v4433, %v5483
  %v6123 = vadd.f32 %v4441, %v5485
  %v6124 = vadd.f32 %v4440, %v5487
  %v6125 = vadd.f32 %v4442, %v5489
  %v6126 = vadd.f32 %v4450, %v5491
  %v6127 = vadd.f32 %v4458, %v5493
  %v6128 = vadd.f32 %v4457, %v5495
  %v6129 = vadd.f32 %v4459, %v5497
  %v6130 = vadd.f32 %v4467, %v5499
  %v6131 = vadd.f32 %v4475, %v5501
  %v6132 = vadd.f32 %v4474, %v5503
  %v6133 = vadd.f32 %v4476, %v5505
  %v6134 = vadd.f32 %v4484, %v5507
  %v6135 = vadd.f32 %v4492, %v5509
  %v6136 = vadd.f32 %v4491, %v5511
  %v6137 = vadd.f32 %v4493, %v5513
  %v6138 = vadd.f32 %v4501, %v5515
  %v6139 = vadd.f32 %v4509, %v5517
  %v6140 = vadd.f32 %v4508, %v5519
  %v6141 = vadd.f32 %v4510, %v5521
  %v6142 = vadd.f32 %v4518, %v5523
  %v6143 = vadd.f32 %v4526, %v5525
  %v6144 = vadd.f32 %v4525, %v5527
  %v6145 = vadd.f32 %v4527, %v5529
  %v6146 = vadd.f32 %v4535, %v5531
  %v6147 = vadd.f32 %v4543, %v5533
  %v6148 = vadd.f32 %v4542, %v5535
  %v6149 = vadd.f32 %v4544, %v5537
  %v6150 = vadd.f32 %v4552, %v5539
  %v6151 = vadd.f32 %v4560, %v5541
  %v6152 = vadd.f32 %v4559, %v5543
  %v6153 = vadd.f32 %v4561, %v5545
  %v6154 = vadd.f32 %v4569, %v5547
  %v6155 = vadd.f32 %v4577, %v5549
  %v6156 = vadd.f32 %v4576, %v5551
  %v6157 = vadd.f32 %v4578, %v5553
  %v6158 = vadd.f32 %v4586, %v5555
  %v6159 = vadd.f32 %v4594, %v5557
  %v6160 = vadd.f32 %v4593, %v5559
  %v6161 = vadd.f32 %v4595, %v5561
  %v6162 = vadd.f32 %v4603, %v5563
  %v6163 = vadd.f32 %v4611, %v5565
  %v6164 = vadd.f32 %v4610, %v5567
  %v6165 = vadd.f32 %v4612, %v5569
  %v6166 = vadd.f32 %v4620, %v5571
  %v6167 = vadd.f32 %v4628, %v5573
  %v6168 = vadd.f32 %v4627, %v5575
  %v6169 = vadd.f32 %v4629, %v5577
  %v6170 = vadd.f32 %v4637, %v5579
  %v6171 = vadd.f32 %v4645, %v5581
  %v6172 = vadd.f32 %v4644, %v5583
  %v6173 = vadd.f32 %v4646, %v5585
  %v6174 = vadd.f32 %v4654, %v5587
  %v6175 = vadd.f32 %v4662, %v5589
  %v6176 = vadd.f32 %v4661, %v5591
  %v6177 = vadd.f32 %v4663, %v5593
  %v6178 = vadd.f32 %v4671, %v5595
  %v6179 = vadd.f32 %v4679, %v5597
  %v6180 = vadd.f32 %v4678, %v5599
  %v6181 = vadd.f32 %v4680, %v5601
  %v6182 = vadd.f32 %v4688, %v5603
  %v6183 = vadd.f32 %v4696, %v5605
  %v6184 = vadd.f32 %v4695, %v5607
  %v6185 = vadd.f32 %v4697, %v5609
  %v6186 = vadd.f32 %v4705, %v5611
  %v6187 = vadd.f32 %v4713, %v5613
  %v6188 = vadd.f32 %v4712, %v5615
  %v6189 = vadd.f32 %v4714, %v5617
  %v6190 = vadd.f32 %v4722, %v5619
  %v6191 = vadd.f32 %v4730, %v5621
  %v6192 = vadd.f32 %v4729, %v5623
  %v6193 = vadd.f32 %v4731, %v5625
  %v6194 = vadd.f32 %v4739, %v5627
  %v6195 = vadd.f32 %v4747, %v5629
  %v6196 = vadd.f32 %v4746, %v5631
  %v6197 = vadd.f32 %v4748, %v5633
  %v6198 = vadd.f32 %v4756, %v5635
  %v6199 = vadd.f32 %v4764, %v5637
  %v6200 = vadd.f32 %v4763, %v5639
  %v6201 = vadd.f32 %v4765, %v5641
  %v6202 = vadd.f32 %v4773, %v5643
  %v6203 = vadd.f32 %v4781, %v5645
  %v6204 = vadd.f32 %v4780, %v5647
  %v6205 = vadd.f32 %v4782, %v5649
  %v6206 = vadd.f32 %v4790, %v5651
  %v6207 = vadd.f32 %v4798, %v5653
  %v6208 = vadd.f32 %v4797, %v5655
  %v6209 = vadd.f32 %v4799, %v5657
  %v6210 = vadd.f32 %v4807, %v5659
  %v6211 = vadd.f32 %v4815, %v5661
  %v6212 = vadd.f32 %v4814, %v5663
  %v6213 = vadd.f32 %v4816, %v5665
  %v6214 = vadd.f32 %v4824, %v5667
  %v6215 = vadd.f32 %v4832, %v5669
  %v6216 = vadd.f32 %v4831, %v5671
  %v6217 = vadd.f32 %v4833, %v5673
  %v6218 = vadd.f32 %v4841, %v5675
  %v6219 = vadd.f32 %v4849, %v5677
  %v6220 = vadd.f32 %v4848, %v5679
  %v6221 = vadd.f32 %v4850, %v5681
  %v6222 = vadd.f32 %v4858, %v5683
  %v6223 = vadd.f32 %v4866, %v5685
  %v6224 = vadd.f32 %v4865, %v5687
  %v6225 = vadd.f32 %v4867, %v5689
  %v6226 = vadd.f32 %v4875, %v5691
  %v6227 = vadd.f32 %v4883, %v5693
  %v6228 = vadd.f32 %v4882, %v5695
  %v6229 = vadd.f32 %v4884, %v5697
  %v6230 = vadd.f32 %v4892, %v5699
  %v6231 = vadd.f32 %v4900, %v5701
  %v6232 = vadd.f32 %v4899, %v5703
  %v6233 = vadd.f32 %v4901, %v5705
  %v6234 = vadd.f32 %v4909, %v5707
  %v6235 = vadd.f32 %v4917, %v5709
  %v6236 = vadd.f32 %v4916, %v5711
  %v6237 = vadd.f32 %v4918, %v5713
  %v6238 = vadd.f32 %v4926, %v5715
  %v6239 = vadd.f32 %v4934, %v5717
  %v6240 = vadd.f32 %v4933, %v5719
  %v6241 = vadd.f32 %v4935, %v5721
  %v6242 = vadd.f32 %v4943, %v5723
  %v6243 = vadd.f32 %v4951, %v5725
  %v6244 = vadd.f32 %v4950, %v5727
  %v6245 = vadd.f32 %v4952, %v5729
  %v6246 = vadd.f32 %v4960, %v5731
  %v6247 = vadd.f32 %v4968, %v5733
  %v6248 = vadd.f32 %v4967, %v5735
  %v6249 = vadd.f32 %v4969, %v5737
  %v6250 = vadd.f32 %v5994, %v6002
  %v6251 = vadd.f32 %v5995, %v6003
  %v6252 = vadd.f32 %v5996, %v6004
  %v6253 = vadd.f32 %v5997, %v6005
  %v6254 = vadd.f32 %v5998, %v6006
  %v6255 = vadd.f32 %v5999, %v6007
  %v6256 = vadd.f32 %v6000, %v6008
  %v6257 = vadd.f32 %v6001, %v6009
  %v6258 = vadd.f32 %v6010, %v6018
  %v6259 = vadd.f32 %v6011, %v6019
  %v6260 = vadd.f32 %v6012, %v6020
  %v6261 = vadd.f32 %v6013, %v6021
  %v6262 = vadd.f32 %v6014, %v6022
  %v6263 = vadd.f32 %v6015, %v6023
  %v6264 = vadd.f32 %v6016, %v6024
  %v6265 = vadd.f32 %v6017, %v6025
  %v6266 = vadd.f32 %v6026, %v6034
  %v6267 = vadd.f32 %v6027, %v6035
  %v6268 = vadd.f32 %v6028, %v6036
  %v6269 = vadd.f32 %v6029, %v6037
  %v6270 = vadd.f32 %v6030, %v6038
  %v6271 = vadd.f32 %v6031, %v6039
  %v6272 = vadd.f32 %v6032, %v6040
  %v6273 = vadd.f32 %v6033, %v6041
  %v6274 = vadd.f32 %v6042, %v6050
  %v6275 = vadd.f32 %v6043, %v6051
  %v6276 = vadd.f32 %v6044, %v6052
  %v6277 = vadd.f32 %v6045, %v6053
  %v6278 = vadd.f32 %v6046, %v6054
  %v6279 = vadd.f32 %v6047, %v6055
  %v6280 = vadd.f32 %v6048, %v6056
  %v6281 = vadd.f32 %v6049, %v6057
  %v6282 = vadd.f32 %v6058, %v6066
  %v6283 = vadd.f32 %v6059, %v6067
  %v6284 = vadd.f32 %v6060, %v6068
  %v6285 = vadd.f32 %v6061, %v6069
  %v6286 = vadd.f32 %v6062, %v6070
  %v6287 = vadd.f32 %v6063, %v6071
  %v6288 = vadd.f32 %v6064, %v6072
  %v6289 = vadd.f32 %v6065, %v6073
  %v6290 = vadd.f32 %v6074, %v6082
  %v6291 = vadd.f32 %v6075, %v6083
  %v6292 = vadd.f32 %v6076, %v6084
  %v6293 = vadd.f32 %v6077, %v6085
  %v6294 = vadd.f32 %v6078, %v6086
  %v6295 = vadd.f32 %v6079, %v6087
  %v6296 = vadd.f32 %v6080, %v6088
  %v6297 = vadd.f32 %v6081, %v6089
  %v6298 = vadd.f32 %v6090, %v6098
  %v6299 = vadd.f32 %v6091, %v6099
  %v6300 = vadd.f32 %v6092, %v6100
  %v6301 = vadd.f32 %v6093, %v6101
  %v6302 = vadd.f32 %v6094, %v6102
  %v6303 = vadd.f32 %v6095, %v6103
  %v6304 = vadd.f32 %v6096, %v6104
  %v6305 = vadd.f32 %v6097, %v6105
  %v6306 = vadd.f32 %v6106, %v6114
  %v6307 = vadd.f32 %v6107, %v6115
  %v6308 = vadd.f32 %v6108, %v6116
  %v6309 = vadd.f32 %v6109, %v6117
  %v6310 = vadd.f32 %v6110, %v6118
  %v6311 = vadd.f32 %v6111, %v6119
  %v6312 = vadd.f32 %v6112, %v6120
  %v6313 = vadd.f32 %v6113, %v6121
  %v6314 = vadd.f32 %v6122, %v6130
  %v6315 = vadd.f32 %v6123, %v6131
  %v6316 = vadd.f32 %v6124, %v6132
  %v6317 = vadd.f32 %v6125, %v6133
  %v6318 = vadd.f32 %v6126, %v6134
  %v6319 = vadd.f32 %v6127, %v6135
  %v6320 = vadd.f32 %v6128, %v6136
  %v6321 = vadd.f32 %v6129, %v6137
  %v6322 = vadd.f32 %v6138, %v6146
  %v6323 = vadd.f32 %v6139, %v6147
  %v6324 = vadd.f32 %v6140, %v6148
  %v6325 = vadd.f32 %v6141, %v6149
  %v6326 = vadd.f32 %v6142, %v6150
  %v6327 = vadd.f32 %v6143, %v6151
  %v6328 = vadd.f32 %v6144, %v6152
  %v6329 = vadd.f32 %v6145, %v6153
  %v6330 = vadd.f32 %v6154, %v6162
  %v6331 = vadd.f32 %v6155, %v6163
  %v6332 = vadd.f32 %v6156, %v6164
  %v6333 = vadd.f32 %v6157, %v6165
  %v6334 = vadd.f32 %v6158, %v6166
  %v6335 = vadd.f32 %v6159, %v6167
  %v6336 = vadd.f32 %v6160, %v6168
  %v6337 = vadd.f32 %v6161, %v6169
  %v6338 = vadd.f32 %v6170, %v6178
  %v6339 = vadd.f32 %v6171, %v6179
  %v6340 = vadd.f32 %v6172, %v6180
  %v6341 = vadd.f32 %v6173, %v6181
  %v6342 = vadd.f32 %v6174, %v6182
  %v6343 = vadd.f32 %v6175, %v6183
  %v6344 = vadd.f32 %v6176, %v6184
  %v6345 = vadd.f32 %v6177, %v6185
  %v6346 = vadd.f32 %v6186, %v6194
  %v6347 = vadd.f32 %v6187, %v6195
  %v6348 = vadd.f32 %v6188, %v6196
  %v6349 = vadd.f32 %v6189, %v6197
  %v6350 = vadd.f32 %v6190, %v6198
  %v6351 = vadd.f32 %v6191, %v6199
  %v6352 = vadd.f32 %v6192, %v6200
  %v6353 = vadd.f32 %v6193, %v6201
  %v6354 = vadd.f32 %v6202, %v6210
  %v6355 = vadd.f32 %v6203, %v6211
  %v6356 = vadd.f32 %v6204, %v6212
  %v6357 = vadd.f32 %v6205, %v6213
  %v6358 = vadd.f32 %v6206, %v6214
  %v6359 = vadd.f32 %v6207, %v6215
  %v6360 = vadd.f32 %v6208, %v6216
  %v6361 = vadd.f32 %v6209, %v6217
  %v6362 = vadd.f32 %v6218, %v6226
  %v6363 = vadd.f32 %v6219, %v6227
  %v6364 = vadd.f32 %v6220, %v6228
  %v6365 = vadd.f32 %v6221, %v6229
  %v6366 = vadd.f32 %v6222, %v6230
  %v6367 = vadd.f32 %v6223, %v6231
  %v6368 = vadd.f32 %v6224, %v6232
  %v6369 = vadd.f32 %v6225, %v6233
  %v6370 = vadd.f32 %v6234, %v6242
  %v6371 = vadd.f32 %v6235, %v6243
  %v6372 = vadd.f32 %v6236, %v6244
  %v6373 = vadd.f32 %v6237, %v6245
  %v6374 = vadd.f32 %v6238, %v6246
  %v6375 = vadd.f32 %v6239, %v6247
  %v6376 = vadd.f32 %v6240, %v6248
  %v6377 = vadd.f32 %v6241, %v6249
  %v6378 = vmul.f32 %v6250, 0.25
  %v6379 = vmul.f32 %v6251, 0.25
  %v6380 = vmul.f32 %v6252, 0.25
  %v6381 = vmul.f32 %v6253, 0.25
  %v6382 = vmul.f32 %v6254, 0.25
  %v6383 = vmul.f32 %v6255, 0.25
  %v6384 = vmul.f32 %v6256, 0.25
  %v6385 = vmul.f32 %v6257, 0.25
  %v6386 = vmul.f32 %v6258, 0.25
  %v6387 = vmul.f32 %v6259, 0.25
  %v6388 = vmul.f32 %v6260, 0.25
  %v6389 = vmul.f32 %v6261, 0.25
  %v6390 = vmul.f32 %v6262, 0.25
  %v6391 = vmul.f32 %v6263, 0.25
  %v6392 = vmul.f32 %v6264, 0.25
  %v6393 = vmul.f32 %v6265, 0.25
  %v6394 = vmul.f32 %v6266, 0.25
  %v6395 = vmul.f32 %v6267, 0.25
  %v6396 = vmul.f32 %v6268, 0.25
  %v6397 = vmul.f32 %v6269, 0.25
  %v6398 = vmul.f32 %v6270, 0.25
  %v6399 = vmul.f32 %v6271, 0.25
  %v6400 = vmul.f32 %v6272, 0.25
  %v6401 = vmul.f32 %v6273, 0.25
  %v6402 = vmul.f32 %v6274, 0.25
  %v6403 = vmul.f32 %v6275, 0.25
  %v6404 = vmul.f32 %v6276, 0.25
  %v6405 = vmul.f32 %v6277, 0.25
  %v6406 = vmul.f32 %v6278, 0.25
  %v6407 = vmul.f32 %v6279, 0.25
  %v6408 = vmul.f32 %v6280, 0.25
  %v6409 = vmul.f32 %v6281, 0.25
  %v6410 = vmul.f32 %v6282, 0.25
  %v6411 = vmul.f32 %v6283, 0.25
  %v6412 = vmul.f32 %v6284, 0.25
  %v6413 = vmul.f32 %v6285, 0.25
  %v6414 = vmul.f32 %v6286, 0.25
  %v6415 = vmul.f32 %v6287, 0.25
  %v6416 = vmul.f32 %v6288, 0.25
  %v6417 = vmul.f32 %v6289, 0.25
  %v6418 = vmul.f32 %v6290, 0.25
  %v6419 = vmul.f32 %v6291, 0.25
  %v6420 = vmul.f32 %v6292, 0.25
  %v6421 = vmul.f32 %v6293, 0.25
  %v6422 = vmul.f32 %v6294, 0.25
  %v6423 = vmul.f32 %v6295, 0.25
  %v6424 = vmul.f32 %v6296, 0.25
  %v6425 = vmul.f32 %v6297, 0.25
  %v6426 = vmul.f32 %v6298, 0.25
  %v6427 = vmul.f32 %v6299, 0.25
  %v6428 = vmul.f32 %v6300, 0.25
  %v6429 = vmul.f32 %v6301, 0.25
  %v6430 = vmul.f32 %v6302, 0.25
  %v6431 = vmul.f32 %v6303, 0.25
  %v6432 = vmul.f32 %v6304, 0.25
  %v6433 = vmul.f32 %v6305, 0.25
  %v6434 = vmul.f32 %v6306, 0.25
  %v6435 = vmul.f32 %v6307, 0.25
  %v6436 = vmul.f32 %v6308, 0.25
  %v6437 = vmul.f32 %v6309, 0.25
  %v6438 = vmul.f32 %v6310, 0.25
  %v6439 = vmul.f32 %v6311, 0.25
  %v6440 = vmul.f32 %v6312, 0.25
  %v6441 = vmul.f32 %v6313, 0.25
  %v6442 = vmul.f32 %v6314, 0.25
  %v6443 = vmul.f32 %v6315, 0.25
  %v6444 = vmul.f32 %v6316, 0.25
  %v6445 = vmul.f32 %v6317, 0.25
  %v6446 = vmul.f32 %v6318, 0.25
  %v6447 = vmul.f32 %v6319, 0.25
  %v6448 = vmul.f32 %v6320, 0.25
  %v6449 = vmul.f32 %v6321, 0.25
  %v6450 = vmul.f32 %v6322, 0.25
  %v6451 = vmul.f32 %v6323, 0.25
  %v6452 = vmul.f32 %v6324, 0.25
  %v6453 = vmul.f32 %v6325, 0.25
  %v6454 = vmul.f32 %v6326, 0.25
  %v6455 = vmul.f32 %v6327, 0.25
  %v6456 = vmul.f32 %v6328, 0.25
  %v6457 = vmul.f32 %v6329, 0.25
  %v6458 = vmul.f32 %v6330, 0.25
  %v6459 = vmul.f32 %v6331, 0.25
  %v6460 = vmul.f32 %v6332, 0.25
  %v6461 = vmul.f32 %v6333, 0.25
  %v6462 = vmul.f32 %v6334, 0.25
  %v6463 = vmul.f32 %v6335, 0.25
  %v6464 = vmul.f32 %v6336, 0.25
  %v6465 = vmul.f32 %v6337, 0.25
  %v6466 = vmul.f32 %v6338, 0.25
  %v6467 = vmul.f32 %v6339, 0.25
  %v6468 = vmul.f32 %v6340, 0.25
  %v6469 = vmul.f32 %v6341, 0.25
  %v6470 = vmul.f32 %v6342, 0.25
  %v6471 = vmul.f32 %v6343, 0.25
  %v6472 = vmul.f32 %v6344, 0.25
  %v6473 = vmul.f32 %v6345, 0.25
  %v6474 = vmul.f32 %v6346, 0.25
  %v6475 = vmul.f32 %v6347, 0.25
  %v6476 = vmul.f32 %v6348, 0.25
  %v6477 = vmul.f32 %v6349, 0.25
  %v6478 = vmul.f32 %v6350, 0.25
  %v6479 = vmul.f32 %v6351, 0.25
  %v6480 = vmul.f32 %v6352, 0.25
  %v6481 = vmul.f32 %v6353, 0.25
  %v6482 = vmul.f32 %v6354, 0.25
  %v6483 = vmul.f32 %v6355, 0.25
  %v6484 = vmul.f32 %v6356, 0.25
  %v6485 = vmul.f32 %v6357, 0.25
  %v6486 = vmul.f32 %v6358, 0.25
  %v6487 = vmul.f32 %v6359, 0.25
  %v6488 = vmul.f32 %v6360, 0.25
  %v6489 = vmul.f32 %v6361, 0.25
  %v6490 = vmul.f32 %v6362, 0.25
  %v6491 = vmul.f32 %v6363, 0.25
  %v6492 = vmul.f32 %v6364, 0.25
  %v6493 = vmul.f32 %v6365, 0.25
  %v6494 = vmul.f32 %v6366, 0.25
  %v6495 = vmul.f32 %v6367, 0.25
  %v6496 = vmul.f32 %v6368, 0.25
  %v6497 = vmul.f32 %v6369, 0.25
  %v6498 = vmul.f32 %v6370, 0.25
  %v6499 = vmul.f32 %v6371, 0.25
  %v6500 = vmul.f32 %v6372, 0.25
  %v6501 = vmul.f32 %v6373, 0.25
  %v6502 = vmul.f32 %v6374, 0.25
  %v6503 = vmul.f32 %v6375, 0.25
  %v6504 = vmul.f32 %v6376, 0.25
  %v6505 = vmul.f32 %v6377, 0.25
  %v6634 = vlaneseq
  %v6635 = vshrl.u32 %v6634, 7
  %v6636 = vsub.s32 0, %v6635
  %v6637 = vrot.slane %v6378, %v6636
  %v6638 = vlaneseq
  %v6639 = vshrl.u32 %v6638, 7
  %v6640 = vsub.s32 0, %v6639
  %v6641 = vrot.slane %v6379, %v6640
  %v6642 = vlaneseq
  %v6643 = vshrl.u32 %v6642, 7
  %v6644 = vsub.s32 0, %v6643
  %v6645 = vrot.slane %v6380, %v6644
  %v6646 = vlaneseq
  %v6647 = vshrl.u32 %v6646, 7
  %v6648 = vsub.s32 0, %v6647
  %v6649 = vrot.slane %v6381, %v6648
  %v6650 = vlaneseq
  %v6651 = vshrl.u32 %v6650, 7
  %v6652 = vsub.s32 0, %v6651
  %v6653 = vrot.slane %v6382, %v6652
  %v6654 = vlaneseq
  %v6655 = vshrl.u32 %v6654, 7
  %v6656 = vsub.s32 0, %v6655
  %v6657 = vrot.slane %v6383, %v6656
  %v6658 = vlaneseq
  %v6659 = vshrl.u32 %v6658, 7
  %v6660 = vsub.s32 0, %v6659
  %v6661 = vrot.slane %v6384, %v6660
  %v6662 = vlaneseq
  %v6663 = vshrl.u32 %v6662, 7
  %v6664 = vsub.s32 0, %v6663
  %v6665 = vrot.slane %v6385, %v6664
  %v6666 = vlaneseq
  %v6667 = vshrl.u32 %v6666, 7
  %v6668 = vsub.s32 0, %v6667
  %v6669 = vrot.slane %v6386, %v6668
  %v6670 = vlaneseq
  %v6671 = vshrl.u32 %v6670, 7
  %v6672 = vsub.s32 0, %v6671
  %v6673 = vrot.slane %v6387, %v6672
  %v6674 = vlaneseq
  %v6675 = vshrl.u32 %v6674, 7
  %v6676 = vsub.s32 0, %v6675
  %v6677 = vrot.slane %v6388, %v6676
  %v6678 = vlaneseq
  %v6679 = vshrl.u32 %v6678, 7
  %v6680 = vsub.s32 0, %v6679
  %v6681 = vrot.slane %v6389, %v6680
  %v6682 = vlaneseq
  %v6683 = vshrl.u32 %v6682, 7
  %v6684 = vsub.s32 0, %v6683
  %v6685 = vrot.slane %v6390, %v6684
  %v6686 = vlaneseq
  %v6687 = vshrl.u32 %v6686, 7
  %v6688 = vsub.s32 0, %v6687
  %v6689 = vrot.slane %v6391, %v6688
  %v6690 = vlaneseq
  %v6691 = vshrl.u32 %v6690, 7
  %v6692 = vsub.s32 0, %v6691
  %v6693 = vrot.slane %v6392, %v6692
  %v6694 = vlaneseq
  %v6695 = vshrl.u32 %v6694, 7
  %v6696 = vsub.s32 0, %v6695
  %v6697 = vrot.slane %v6393, %v6696
  %v6698 = vlaneseq
  %v6699 = vshrl.u32 %v6698, 7
  %v6700 = vsub.s32 0, %v6699
  %v6701 = vrot.slane %v6394, %v6700
  %v6702 = vlaneseq
  %v6703 = vshrl.u32 %v6702, 7
  %v6704 = vsub.s32 0, %v6703
  %v6705 = vrot.slane %v6395, %v6704
  %v6706 = vlaneseq
  %v6707 = vshrl.u32 %v6706, 7
  %v6708 = vsub.s32 0, %v6707
  %v6709 = vrot.slane %v6396, %v6708
  %v6710 = vlaneseq
  %v6711 = vshrl.u32 %v6710, 7
  %v6712 = vsub.s32 0, %v6711
  %v6713 = vrot.slane %v6397, %v6712
  %v6714 = vlaneseq
  %v6715 = vshrl.u32 %v6714, 7
  %v6716 = vsub.s32 0, %v6715
  %v6717 = vrot.slane %v6398, %v6716
  %v6718 = vlaneseq
  %v6719 = vshrl.u32 %v6718, 7
  %v6720 = vsub.s32 0, %v6719
  %v6721 = vrot.slane %v6399, %v6720
  %v6722 = vlaneseq
  %v6723 = vshrl.u32 %v6722, 7
  %v6724 = vsub.s32 0, %v6723
  %v6725 = vrot.slane %v6400, %v6724
  %v6726 = vlaneseq
  %v6727 = vshrl.u32 %v6726, 7
  %v6728 = vsub.s32 0, %v6727
  %v6729 = vrot.slane %v6401, %v6728
  %v6730 = vlaneseq
  %v6731 = vshrl.u32 %v6730, 7
  %v6732 = vsub.s32 0, %v6731
  %v6733 = vrot.slane %v6402, %v6732
  %v6734 = vlaneseq
  %v6735 = vshrl.u32 %v6734, 7
  %v6736 = vsub.s32 0, %v6735
  %v6737 = vrot.slane %v6403, %v6736
  %v6738 = vlaneseq
  %v6739 = vshrl.u32 %v6738, 7
  %v6740 = vsub.s32 0, %v6739
  %v6741 = vrot.slane %v6404, %v6740
  %v6742 = vlaneseq
  %v6743 = vshrl.u32 %v6742, 7
  %v6744 = vsub.s32 0, %v6743
  %v6745 = vrot.slane %v6405, %v6744
  %v6746 = vlaneseq
  %v6747 = vshrl.u32 %v6746, 7
  %v6748 = vsub.s32 0, %v6747
  %v6749 = vrot.slane %v6406, %v6748
  %v6750 = vlaneseq
  %v6751 = vshrl.u32 %v6750, 7
  %v6752 = vsub.s32 0, %v6751
  %v6753 = vrot.slane %v6407, %v6752
  %v6754 = vlaneseq
  %v6755 = vshrl.u32 %v6754, 7
  %v6756 = vsub.s32 0, %v6755
  %v6757 = vrot.slane %v6408, %v6756
  %v6758 = vlaneseq
  %v6759 = vshrl.u32 %v6758, 7
  %v6760 = vsub.s32 0, %v6759
  %v6761 = vrot.slane %v6409, %v6760
  %v6762 = vlaneseq
  %v6763 = vshrl.u32 %v6762, 7
  %v6764 = vsub.s32 0, %v6763
  %v6765 = vrot.slane %v6410, %v6764
  %v6766 = vlaneseq
  %v6767 = vshrl.u32 %v6766, 7
  %v6768 = vsub.s32 0, %v6767
  %v6769 = vrot.slane %v6411, %v6768
  %v6770 = vlaneseq
  %v6771 = vshrl.u32 %v6770, 7
  %v6772 = vsub.s32 0, %v6771
  %v6773 = vrot.slane %v6412, %v6772
  %v6774 = vlaneseq
  %v6775 = vshrl.u32 %v6774, 7
  %v6776 = vsub.s32 0, %v6775
  %v6777 = vrot.slane %v6413, %v6776
  %v6778 = vlaneseq
  %v6779 = vshrl.u32 %v6778, 7
  %v6780 = vsub.s32 0, %v6779
  %v6781 = vrot.slane %v6414, %v6780
  %v6782 = vlaneseq
  %v6783 = vshrl.u32 %v6782, 7
  %v6784 = vsub.s32 0, %v6783
  %v6785 = vrot.slane %v6415, %v6784
  %v6786 = vlaneseq
  %v6787 = vshrl.u32 %v6786, 7
  %v6788 = vsub.s32 0, %v6787
  %v6789 = vrot.slane %v6416, %v6788
  %v6790 = vlaneseq
  %v6791 = vshrl.u32 %v6790, 7
  %v6792 = vsub.s32 0, %v6791
  %v6793 = vrot.slane %v6417, %v6792
  %v6794 = vlaneseq
  %v6795 = vshrl.u32 %v6794, 7
  %v6796 = vsub.s32 0, %v6795
  %v6797 = vrot.slane %v6418, %v6796
  %v6798 = vlaneseq
  %v6799 = vshrl.u32 %v6798, 7
  %v6800 = vsub.s32 0, %v6799
  %v6801 = vrot.slane %v6419, %v6800
  %v6802 = vlaneseq
  %v6803 = vshrl.u32 %v6802, 7
  %v6804 = vsub.s32 0, %v6803
  %v6805 = vrot.slane %v6420, %v6804
  %v6806 = vlaneseq
  %v6807 = vshrl.u32 %v6806, 7
  %v6808 = vsub.s32 0, %v6807
  %v6809 = vrot.slane %v6421, %v6808
  %v6810 = vlaneseq
  %v6811 = vshrl.u32 %v6810, 7
  %v6812 = vsub.s32 0, %v6811
  %v6813 = vrot.slane %v6422, %v6812
  %v6814 = vlaneseq
  %v6815 = vshrl.u32 %v6814, 7
  %v6816 = vsub.s32 0, %v6815
  %v6817 = vrot.slane %v6423, %v6816
  %v6818 = vlaneseq
  %v6819 = vshrl.u32 %v6818, 7
  %v6820 = vsub.s32 0, %v6819
  %v6821 = vrot.slane %v6424, %v6820
  %v6822 = vlaneseq
  %v6823 = vshrl.u32 %v6822, 7
  %v6824 = vsub.s32 0, %v6823
  %v6825 = vrot.slane %v6425, %v6824
  %v6826 = vlaneseq
  %v6827 = vshrl.u32 %v6826, 7
  %v6828 = vsub.s32 0, %v6827
  %v6829 = vrot.slane %v6426, %v6828
  %v6830 = vlaneseq
  %v6831 = vshrl.u32 %v6830, 7
  %v6832 = vsub.s32 0, %v6831
  %v6833 = vrot.slane %v6427, %v6832
  %v6834 = vlaneseq
  %v6835 = vshrl.u32 %v6834, 7
  %v6836 = vsub.s32 0, %v6835
  %v6837 = vrot.slane %v6428, %v6836
  %v6838 = vlaneseq
  %v6839 = vshrl.u32 %v6838, 7
  %v6840 = vsub.s32 0, %v6839
  %v6841 = vrot.slane %v6429, %v6840
  %v6842 = vlaneseq
  %v6843 = vshrl.u32 %v6842, 7
  %v6844 = vsub.s32 0, %v6843
  %v6845 = vrot.slane %v6430, %v6844
  %v6846 = vlaneseq
  %v6847 = vshrl.u32 %v6846, 7
  %v6848 = vsub.s32 0, %v6847
  %v6849 = vrot.slane %v6431, %v6848
  %v6850 = vlaneseq
  %v6851 = vshrl.u32 %v6850, 7
  %v6852 = vsub.s32 0, %v6851
  %v6853 = vrot.slane %v6432, %v6852
  %v6854 = vlaneseq
  %v6855 = vshrl.u32 %v6854, 7
  %v6856 = vsub.s32 0, %v6855
  %v6857 = vrot.slane %v6433, %v6856
  %v6858 = vlaneseq
  %v6859 = vshrl.u32 %v6858, 7
  %v6860 = vsub.s32 0, %v6859
  %v6861 = vrot.slane %v6434, %v6860
  %v6862 = vlaneseq
  %v6863 = vshrl.u32 %v6862, 7
  %v6864 = vsub.s32 0, %v6863
  %v6865 = vrot.slane %v6435, %v6864
  %v6866 = vlaneseq
  %v6867 = vshrl.u32 %v6866, 7
  %v6868 = vsub.s32 0, %v6867
  %v6869 = vrot.slane %v6436, %v6868
  %v6870 = vlaneseq
  %v6871 = vshrl.u32 %v6870, 7
  %v6872 = vsub.s32 0, %v6871
  %v6873 = vrot.slane %v6437, %v6872
  %v6874 = vlaneseq
  %v6875 = vshrl.u32 %v6874, 7
  %v6876 = vsub.s32 0, %v6875
  %v6877 = vrot.slane %v6438, %v6876
  %v6878 = vlaneseq
  %v6879 = vshrl.u32 %v6878, 7
  %v6880 = vsub.s32 0, %v6879
  %v6881 = vrot.slane %v6439, %v6880
  %v6882 = vlaneseq
  %v6883 = vshrl.u32 %v6882, 7
  %v6884 = vsub.s32 0, %v6883
  %v6885 = vrot.slane %v6440, %v6884
  %v6886 = vlaneseq
  %v6887 = vshrl.u32 %v6886, 7
  %v6888 = vsub.s32 0, %v6887
  %v6889 = vrot.slane %v6441, %v6888
  %v6890 = vlaneseq
  %v6891 = vshrl.u32 %v6890, 7
  %v6892 = vsub.s32 0, %v6891
  %v6893 = vrot.slane %v6442, %v6892
  %v6894 = vlaneseq
  %v6895 = vshrl.u32 %v6894, 7
  %v6896 = vsub.s32 0, %v6895
  %v6897 = vrot.slane %v6443, %v6896
  %v6898 = vlaneseq
  %v6899 = vshrl.u32 %v6898, 7
  %v6900 = vsub.s32 0, %v6899
  %v6901 = vrot.slane %v6444, %v6900
  %v6902 = vlaneseq
  %v6903 = vshrl.u32 %v6902, 7
  %v6904 = vsub.s32 0, %v6903
  %v6905 = vrot.slane %v6445, %v6904
  %v6906 = vlaneseq
  %v6907 = vshrl.u32 %v6906, 7
  %v6908 = vsub.s32 0, %v6907
  %v6909 = vrot.slane %v6446, %v6908
  %v6910 = vlaneseq
  %v6911 = vshrl.u32 %v6910, 7
  %v6912 = vsub.s32 0, %v6911
  %v6913 = vrot.slane %v6447, %v6912
  %v6914 = vlaneseq
  %v6915 = vshrl.u32 %v6914, 7
  %v6916 = vsub.s32 0, %v6915
  %v6917 = vrot.slane %v6448, %v6916
  %v6918 = vlaneseq
  %v6919 = vshrl.u32 %v6918, 7
  %v6920 = vsub.s32 0, %v6919
  %v6921 = vrot.slane %v6449, %v6920
  %v6922 = vlaneseq
  %v6923 = vshrl.u32 %v6922, 7
  %v6924 = vsub.s32 0, %v6923
  %v6925 = vrot.slane %v6450, %v6924
  %v6926 = vlaneseq
  %v6927 = vshrl.u32 %v6926, 7
  %v6928 = vsub.s32 0, %v6927
  %v6929 = vrot.slane %v6451, %v6928
  %v6930 = vlaneseq
  %v6931 = vshrl.u32 %v6930, 7
  %v6932 = vsub.s32 0, %v6931
  %v6933 = vrot.slane %v6452, %v6932
  %v6934 = vlaneseq
  %v6935 = vshrl.u32 %v6934, 7
  %v6936 = vsub.s32 0, %v6935
  %v6937 = vrot.slane %v6453, %v6936
  %v6938 = vlaneseq
  %v6939 = vshrl.u32 %v6938, 7
  %v6940 = vsub.s32 0, %v6939
  %v6941 = vrot.slane %v6454, %v6940
  %v6942 = vlaneseq
  %v6943 = vshrl.u32 %v6942, 7
  %v6944 = vsub.s32 0, %v6943
  %v6945 = vrot.slane %v6455, %v6944
  %v6946 = vlaneseq
  %v6947 = vshrl.u32 %v6946, 7
  %v6948 = vsub.s32 0, %v6947
  %v6949 = vrot.slane %v6456, %v6948
  %v6950 = vlaneseq
  %v6951 = vshrl.u32 %v6950, 7
  %v6952 = vsub.s32 0, %v6951
  %v6953 = vrot.slane %v6457, %v6952
  %v6954 = vlaneseq
  %v6955 = vshrl.u32 %v6954, 7
  %v6956 = vsub.s32 0, %v6955
  %v6957 = vrot.slane %v6458, %v6956
  %v6958 = vlaneseq
  %v6959 = vshrl.u32 %v6958, 7
  %v6960 = vsub.s32 0, %v6959
  %v6961 = vrot.slane %v6459, %v6960
  %v6962 = vlaneseq
  %v6963 = vshrl.u32 %v6962, 7
  %v6964 = vsub.s32 0, %v6963
  %v6965 = vrot.slane %v6460, %v6964
  %v6966 = vlaneseq
  %v6967 = vshrl.u32 %v6966, 7
  %v6968 = vsub.s32 0, %v6967
  %v6969 = vrot.slane %v6461, %v6968
  %v6970 = vlaneseq
  %v6971 = vshrl.u32 %v6970, 7
  %v6972 = vsub.s32 0, %v6971
  %v6973 = vrot.slane %v6462, %v6972
  %v6974 = vlaneseq
  %v6975 = vshrl.u32 %v6974, 7
  %v6976 = vsub.s32 0, %v6975
  %v6977 = vrot.slane %v6463, %v6976
  %v6978 = vlaneseq
  %v6979 = vshrl.u32 %v6978, 7
  %v6980 = vsub.s32 0, %v6979
  %v6981 = vrot.slane %v6464, %v6980
  %v6982 = vlaneseq
  %v6983 = vshrl.u32 %v6982, 7
  %v6984 = vsub.s32 0, %v6983
  %v6985 = vrot.slane %v6465, %v6984
  %v6986 = vlaneseq
  %v6987 = vshrl.u32 %v6986, 7
  %v6988 = vsub.s32 0, %v6987
  %v6989 = vrot.slane %v6466, %v6988
  %v6990 = vlaneseq
  %v6991 = vshrl.u32 %v6990, 7
  %v6992 = vsub.s32 0, %v6991
  %v6993 = vrot.slane %v6467, %v6992
  %v6994 = vlaneseq
  %v6995 = vshrl.u32 %v6994, 7
  %v6996 = vsub.s32 0, %v6995
  %v6997 = vrot.slane %v6468, %v6996
  %v6998 = vlaneseq
  %v6999 = vshrl.u32 %v6998, 7
  %v7000 = vsub.s32 0, %v6999
  %v7001 = vrot.slane %v6469, %v7000
  %v7002 = vlaneseq
  %v7003 = vshrl.u32 %v7002, 7
  %v7004 = vsub.s32 0, %v7003
  %v7005 = vrot.slane %v6470, %v7004
  %v7006 = vlaneseq
  %v7007 = vshrl.u32 %v7006, 7
  %v7008 = vsub.s32 0, %v7007
  %v7009 = vrot.slane %v6471, %v7008
  %v7010 = vlaneseq
  %v7011 = vshrl.u32 %v7010, 7
  %v7012 = vsub.s32 0, %v7011
  %v7013 = vrot.slane %v6472, %v7012
  %v7014 = vlaneseq
  %v7015 = vshrl.u32 %v7014, 7
  %v7016 = vsub.s32 0, %v7015
  %v7017 = vrot.slane %v6473, %v7016
  %v7018 = vlaneseq
  %v7019 = vshrl.u32 %v7018, 7
  %v7020 = vsub.s32 0, %v7019
  %v7021 = vrot.slane %v6474, %v7020
  %v7022 = vlaneseq
  %v7023 = vshrl.u32 %v7022, 7
  %v7024 = vsub.s32 0, %v7023
  %v7025 = vrot.slane %v6475, %v7024
  %v7026 = vlaneseq
  %v7027 = vshrl.u32 %v7026, 7
  %v7028 = vsub.s32 0, %v7027
  %v7029 = vrot.slane %v6476, %v7028
  %v7030 = vlaneseq
  %v7031 = vshrl.u32 %v7030, 7
  %v7032 = vsub.s32 0, %v7031
  %v7033 = vrot.slane %v6477, %v7032
  %v7034 = vlaneseq
  %v7035 = vshrl.u32 %v7034, 7
  %v7036 = vsub.s32 0, %v7035
  %v7037 = vrot.slane %v6478, %v7036
  %v7038 = vlaneseq
  %v7039 = vshrl.u32 %v7038, 7
  %v7040 = vsub.s32 0, %v7039
  %v7041 = vrot.slane %v6479, %v7040
  %v7042 = vlaneseq
  %v7043 = vshrl.u32 %v7042, 7
  %v7044 = vsub.s32 0, %v7043
  %v7045 = vrot.slane %v6480, %v7044
  %v7046 = vlaneseq
  %v7047 = vshrl.u32 %v7046, 7
  %v7048 = vsub.s32 0, %v7047
  %v7049 = vrot.slane %v6481, %v7048
  %v7050 = vlaneseq
  %v7051 = vshrl.u32 %v7050, 7
  %v7052 = vsub.s32 0, %v7051
  %v7053 = vrot.slane %v6482, %v7052
  %v7054 = vlaneseq
  %v7055 = vshrl.u32 %v7054, 7
  %v7056 = vsub.s32 0, %v7055
  %v7057 = vrot.slane %v6483, %v7056
  %v7058 = vlaneseq
  %v7059 = vshrl.u32 %v7058, 7
  %v7060 = vsub.s32 0, %v7059
  %v7061 = vrot.slane %v6484, %v7060
  %v7062 = vlaneseq
  %v7063 = vshrl.u32 %v7062, 7
  %v7064 = vsub.s32 0, %v7063
  %v7065 = vrot.slane %v6485, %v7064
  %v7066 = vlaneseq
  %v7067 = vshrl.u32 %v7066, 7
  %v7068 = vsub.s32 0, %v7067
  %v7069 = vrot.slane %v6486, %v7068
  %v7070 = vlaneseq
  %v7071 = vshrl.u32 %v7070, 7
  %v7072 = vsub.s32 0, %v7071
  %v7073 = vrot.slane %v6487, %v7072
  %v7074 = vlaneseq
  %v7075 = vshrl.u32 %v7074, 7
  %v7076 = vsub.s32 0, %v7075
  %v7077 = vrot.slane %v6488, %v7076
  %v7078 = vlaneseq
  %v7079 = vshrl.u32 %v7078, 7
  %v7080 = vsub.s32 0, %v7079
  %v7081 = vrot.slane %v6489, %v7080
  %v7082 = vlaneseq
  %v7083 = vshrl.u32 %v7082, 7
  %v7084 = vsub.s32 0, %v7083
  %v7085 = vrot.slane %v6490, %v7084
  %v7086 = vlaneseq
  %v7087 = vshrl.u32 %v7086, 7
  %v7088 = vsub.s32 0, %v7087
  %v7089 = vrot.slane %v6491, %v7088
  %v7090 = vlaneseq
  %v7091 = vshrl.u32 %v7090, 7
  %v7092 = vsub.s32 0, %v7091
  %v7093 = vrot.slane %v6492, %v7092
  %v7094 = vlaneseq
  %v7095 = vshrl.u32 %v7094, 7
  %v7096 = vsub.s32 0, %v7095
  %v7097 = vrot.slane %v6493, %v7096
  %v7098 = vlaneseq
  %v7099 = vshrl.u32 %v7098, 7
  %v7100 = vsub.s32 0, %v7099
  %v7101 = vrot.slane %v6494, %v7100
  %v7102 = vlaneseq
  %v7103 = vshrl.u32 %v7102, 7
  %v7104 = vsub.s32 0, %v7103
  %v7105 = vrot.slane %v6495, %v7104
  %v7106 = vlaneseq
  %v7107 = vshrl.u32 %v7106, 7
  %v7108 = vsub.s32 0, %v7107
  %v7109 = vrot.slane %v6496, %v7108
  %v7110 = vlaneseq
  %v7111 = vshrl.u32 %v7110, 7
  %v7112 = vsub.s32 0, %v7111
  %v7113 = vrot.slane %v6497, %v7112
  %v7114 = vlaneseq
  %v7115 = vshrl.u32 %v7114, 7
  %v7116 = vsub.s32 0, %v7115
  %v7117 = vrot.slane %v6498, %v7116
  %v7118 = vlaneseq
  %v7119 = vshrl.u32 %v7118, 7
  %v7120 = vsub.s32 0, %v7119
  %v7121 = vrot.slane %v6499, %v7120
  %v7122 = vlaneseq
  %v7123 = vshrl.u32 %v7122, 7
  %v7124 = vsub.s32 0, %v7123
  %v7125 = vrot.slane %v6500, %v7124
  %v7126 = vlaneseq
  %v7127 = vshrl.u32 %v7126, 7
  %v7128 = vsub.s32 0, %v7127
  %v7129 = vrot.slane %v6501, %v7128
  %v7130 = vlaneseq
  %v7131 = vshrl.u32 %v7130, 7
  %v7132 = vsub.s32 0, %v7131
  %v7133 = vrot.slane %v6502, %v7132
  %v7134 = vlaneseq
  %v7135 = vshrl.u32 %v7134, 7
  %v7136 = vsub.s32 0, %v7135
  %v7137 = vrot.slane %v6503, %v7136
  %v7138 = vlaneseq
  %v7139 = vshrl.u32 %v7138, 7
  %v7140 = vsub.s32 0, %v7139
  %v7141 = vrot.slane %v6504, %v7140
  %v7142 = vlaneseq
  %v7143 = vshrl.u32 %v7142, 7
  %v7144 = vsub.s32 0, %v7143
  %v7145 = vrot.slane %v6505, %v7144
  %vm7146 = vcmask 1041409
  %v7147 = vsel %vm7146, %v6641, %v6637
  %vm7148 = vcmask 1042434
  %v7149 = vsel %vm7148, %v6645, %v7147
  %vm7150 = vcmask 1043459
  %v7151 = vsel %vm7150, %v6649, %v7149
  %vm7152 = vcmask 1044484
  %v7153 = vsel %vm7152, %v6653, %v7151
  %vm7154 = vcmask 1045509
  %v7155 = vsel %vm7154, %v6657, %v7153
  %vm7156 = vcmask 1046534
  %v7157 = vsel %vm7156, %v6661, %v7155
  %vm7158 = vcmask 1047559
  %v7159 = vsel %vm7158, %v6665, %v7157
  %v7160 = vsel %vm7146, %v6673, %v6669
  %v7161 = vsel %vm7148, %v6677, %v7160
  %v7162 = vsel %vm7150, %v6681, %v7161
  %v7163 = vsel %vm7152, %v6685, %v7162
  %v7164 = vsel %vm7154, %v6689, %v7163
  %v7165 = vsel %vm7156, %v6693, %v7164
  %v7166 = vsel %vm7158, %v6697, %v7165
  %v7167 = vsel %vm7146, %v6705, %v6701
  %v7168 = vsel %vm7148, %v6709, %v7167
  %v7169 = vsel %vm7150, %v6713, %v7168
  %v7170 = vsel %vm7152, %v6717, %v7169
  %v7171 = vsel %vm7154, %v6721, %v7170
  %v7172 = vsel %vm7156, %v6725, %v7171
  %v7173 = vsel %vm7158, %v6729, %v7172
  %v7174 = vsel %vm7146, %v6737, %v6733
  %v7175 = vsel %vm7148, %v6741, %v7174
  %v7176 = vsel %vm7150, %v6745, %v7175
  %v7177 = vsel %vm7152, %v6749, %v7176
  %v7178 = vsel %vm7154, %v6753, %v7177
  %v7179 = vsel %vm7156, %v6757, %v7178
  %v7180 = vsel %vm7158, %v6761, %v7179
  %v7181 = vsel %vm7146, %v6769, %v6765
  %v7182 = vsel %vm7148, %v6773, %v7181
  %v7183 = vsel %vm7150, %v6777, %v7182
  %v7184 = vsel %vm7152, %v6781, %v7183
  %v7185 = vsel %vm7154, %v6785, %v7184
  %v7186 = vsel %vm7156, %v6789, %v7185
  %v7187 = vsel %vm7158, %v6793, %v7186
  %v7188 = vsel %vm7146, %v6801, %v6797
  %v7189 = vsel %vm7148, %v6805, %v7188
  %v7190 = vsel %vm7150, %v6809, %v7189
  %v7191 = vsel %vm7152, %v6813, %v7190
  %v7192 = vsel %vm7154, %v6817, %v7191
  %v7193 = vsel %vm7156, %v6821, %v7192
  %v7194 = vsel %vm7158, %v6825, %v7193
  %v7195 = vsel %vm7146, %v6833, %v6829
  %v7196 = vsel %vm7148, %v6837, %v7195
  %v7197 = vsel %vm7150, %v6841, %v7196
  %v7198 = vsel %vm7152, %v6845, %v7197
  %v7199 = vsel %vm7154, %v6849, %v7198
  %v7200 = vsel %vm7156, %v6853, %v7199
  %v7201 = vsel %vm7158, %v6857, %v7200
  %v7202 = vsel %vm7146, %v6865, %v6861
  %v7203 = vsel %vm7148, %v6869, %v7202
  %v7204 = vsel %vm7150, %v6873, %v7203
  %v7205 = vsel %vm7152, %v6877, %v7204
  %v7206 = vsel %vm7154, %v6881, %v7205
  %v7207 = vsel %vm7156, %v6885, %v7206
  %v7208 = vsel %vm7158, %v6889, %v7207
  %v7209 = vsel %vm7146, %v6897, %v6893
  %v7210 = vsel %vm7148, %v6901, %v7209
  %v7211 = vsel %vm7150, %v6905, %v7210
  %v7212 = vsel %vm7152, %v6909, %v7211
  %v7213 = vsel %vm7154, %v6913, %v7212
  %v7214 = vsel %vm7156, %v6917, %v7213
  %v7215 = vsel %vm7158, %v6921, %v7214
  %v7216 = vsel %vm7146, %v6929, %v6925
  %v7217 = vsel %vm7148, %v6933, %v7216
  %v7218 = vsel %vm7150, %v6937, %v7217
  %v7219 = vsel %vm7152, %v6941, %v7218
  %v7220 = vsel %vm7154, %v6945, %v7219
  %v7221 = vsel %vm7156, %v6949, %v7220
  %v7222 = vsel %vm7158, %v6953, %v7221
  %v7223 = vsel %vm7146, %v6961, %v6957
  %v7224 = vsel %vm7148, %v6965, %v7223
  %v7225 = vsel %vm7150, %v6969, %v7224
  %v7226 = vsel %vm7152, %v6973, %v7225
  %v7227 = vsel %vm7154, %v6977, %v7226
  %v7228 = vsel %vm7156, %v6981, %v7227
  %v7229 = vsel %vm7158, %v6985, %v7228
  %v7230 = vsel %vm7146, %v6993, %v6989
  %v7231 = vsel %vm7148, %v6997, %v7230
  %v7232 = vsel %vm7150, %v7001, %v7231
  %v7233 = vsel %vm7152, %v7005, %v7232
  %v7234 = vsel %vm7154, %v7009, %v7233
  %v7235 = vsel %vm7156, %v7013, %v7234
  %v7236 = vsel %vm7158, %v7017, %v7235
  %v7237 = vsel %vm7146, %v7025, %v7021
  %v7238 = vsel %vm7148, %v7029, %v7237
  %v7239 = vsel %vm7150, %v7033, %v7238
  %v7240 = vsel %vm7152, %v7037, %v7239
  %v7241 = vsel %vm7154, %v7041, %v7240
  %v7242 = vsel %vm7156, %v7045, %v7241
  %v7243 = vsel %vm7158, %v7049, %v7242
  %v7244 = vsel %vm7146, %v7057, %v7053
  %v7245 = vsel %vm7148, %v7061, %v7244
  %v7246 = vsel %vm7150, %v7065, %v7245
  %v7247 = vsel %vm7152, %v7069, %v7246
  %v7248 = vsel %vm7154, %v7073, %v7247
  %v7249 = vsel %vm7156, %v7077, %v7248
  %v7250 = vsel %vm7158, %v7081, %v7249
  %v7251 = vsel %vm7146, %v7089, %v7085
  %v7252 = vsel %vm7148, %v7093, %v7251
  %v7253 = vsel %vm7150, %v7097, %v7252
  %v7254 = vsel %vm7152, %v7101, %v7253
  %v7255 = vsel %vm7154, %v7105, %v7254
  %v7256 = vsel %vm7156, %v7109, %v7255
  %v7257 = vsel %vm7158, %v7113, %v7256
  %v7258 = vsel %vm7146, %v7121, %v7117
  %v7259 = vsel %vm7148, %v7125, %v7258
  %v7260 = vsel %vm7150, %v7129, %v7259
  %v7261 = vsel %vm7152, %v7133, %v7260
  %v7262 = vsel %vm7154, %v7137, %v7261
  %v7263 = vsel %vm7156, %v7141, %v7262
  %v7264 = vsel %vm7158, %v7145, %v7263
  %7281 = vst.msk [vmem:[%s3] sm:$0xff] %vm2705, %v7159
  %7282 = vst.msk [vmem:[%s3 + $0x8] sm:$0xff] %vm2705, %v7166
  %7283 = vst.msk [vmem:[%s3 + $0x10] sm:$0xff] %vm2705, %v7173
  %7284 = vst.msk [vmem:[%s3 + $0x18] sm:$0xff] %vm2705, %v7180
  %7285 = vst.msk [vmem:[%s3 + $0x20] sm:$0xff] %vm2705, %v7187
  %7286 = vst.msk [vmem:[%s3 + $0x28] sm:$0xff] %vm2705, %v7194
  %7287 = vst.msk [vmem:[%s3 + $0x30] sm:$0xff] %vm2705, %v7201
  %7288 = vst.msk [vmem:[%s3 + $0x38] sm:$0xff] %vm2705, %v7208
  %7289 = vst.msk [vmem:[%s3 + $0x40] sm:$0xff] %vm2705, %v7215
  %7290 = vst.msk [vmem:[%s3 + $0x48] sm:$0xff] %vm2705, %v7222
  %7291 = vst.msk [vmem:[%s3 + $0x50] sm:$0xff] %vm2705, %v7229
  %7292 = vst.msk [vmem:[%s3 + $0x58] sm:$0xff] %vm2705, %v7236
  %7293 = vst.msk [vmem:[%s3 + $0x60] sm:$0xff] %vm2705, %v7243
  %7294 = vst.msk [vmem:[%s3 + $0x68] sm:$0xff] %vm2705, %v7250
  %7295 = vst.msk [vmem:[%s3 + $0x70] sm:$0xff] %vm2705, %v7257
  %7296 = vst.msk [vmem:[%s3 + $0x78] sm:$0xff] %vm2705, %v7264
  // Predicated region
  $region14: #{grad_splitter_forward.3} parent=0 // pred_check
    _
  $region15: #{grad_splitter_forward.3} parent=0 // pred_check_branch
    %7298 = sbr.rel (0) target = $region17
  $region16: #{grad_splitter_forward.3} parent=0 // pred_region
    _
  $region17: #{grad_splitter_forward.3} parent=0 // pred_fallthru
    _
  // Predicated region
  $region18: #{grad_splitter_forward.3} parent=0 // pred_check
    _
  $region19: #{grad_splitter_forward.3} parent=0 // pred_check_branch
    %7300 = sbr.rel (0) target = $region21
  $region20: #{grad_splitter_forward.3} parent=0 // pred_region
    _
  $region21: #{grad_splitter_forward.3} parent=0 // pred_fallthru
    _

</llo_original>
